<compile_context>
chip_gen: v7x
topology: tpu7x:2x2x1
jax: 0.10.0
libtpu: 0.0.40
codegen_flags: <defaults>
</compile_context>

<pallas_src>
import functools

import jax
import jax.numpy as jnp
from jax.experimental import pallas as pl
from jax.experimental.pallas import tpu as pltpu


def _sigmoid(v):
    return 1.0 / (1.0 + jnp.exp(-v))


def _convgru_kernel(h_ref, x_ref, wzr_ref, bzr_ref, wq_ref, bq_ref, o_ref,
                    hpad_ref, xpad_ref, hexp_ref, xexp_ref, patch_ref,
                    *, H, W, KH, KW, Ch, Cx):
    """Fused ConvGRU step for one batch element.

    h_ref   : (H*W, Ch)             f32 hidden state (flat NHWC rows)
    x_ref   : (H*W, Cx)             f32 input features
    wzr_ref : (KH*KW*(Ch+Cx), 2Ch)  bf16 packed convz|convr weights
    bzr_ref : (1, 2Ch)              f32 packed biases
    wq_ref  : (KH*KW*(Ch+Cx), Ch)   bf16 packed convq weights
    bq_ref  : (1, Ch)               f32
    o_ref   : (H*W, Ch)             f32 new hidden state
    hpad/xpad_ref : (Hp, Wp, C)     f32 zero-halo staging
    hexp/xexp_ref : (Hp, W, KW*C)   bf16 kw-expanded rows (single cast point)
    patch_ref     : (H*W, K)        bf16 im2col patch, cols = [h taps | x taps]
    """
    P = H * W
    ph, pw = (KH - 1) // 2, (KW - 1) // 2
    Hp, Wp = H + KH - 1, W + KW - 1
    Kh = KH * KW * Ch

    # ---- zero only the halo strips (interior is always overwritten) ----
    def zero_halo(pad_ref, C):
        if ph > 0:
            pad_ref[0:ph, :, :] = jnp.zeros((ph, Wp, C), jnp.float32)
            pad_ref[ph + H:Hp, :, :] = jnp.zeros((Hp - ph - H, Wp, C),
                                                 jnp.float32)
        if pw > 0:
            pad_ref[:, 0:pw, :] = jnp.zeros((Hp, pw, C), jnp.float32)
            pad_ref[:, pw + W:Wp, :] = jnp.zeros((Hp, Wp - pw - W, C),
                                                 jnp.float32)

    zero_halo(hpad_ref, Ch)
    zero_halo(xpad_ref, Cx)

    h_flat = h_ref[...]                                   # (P, Ch) f32
    hpad_ref[ph:ph + H, pw:pw + W, :] = h_flat.reshape(H, W, Ch)
    xpad_ref[ph:ph + H, pw:pw + W, :] = x_ref[...].reshape(H, W, Cx)

    # ---- two-stage im2col ----
    # stage (a): kw window expansion + single f32->bf16 cast; bf16 stores are
    #            lane-aligned (offsets kw*C, multiples of 128).
    def expand_w(pad_ref, exp_ref, C):
        for kw in range(KW):
            exp_ref[:, :, kw * C:(kw + 1) * C] = (
                pad_ref[:, kw:kw + W, :].astype(jnp.bfloat16))

    # stage (b): kh assembly into the patch; outer-dim slices + aligned bf16
    #            copies only (no packed-sublane shifted accesses).
    def scatter_h(exp_ref, C, col0):
        for kh in range(KH):
            patch_ref[:, col0 + kh * KW * C: col0 + (kh + 1) * KW * C] = (
                exp_ref[kh:kh + H].reshape(P, KW * C))

    expand_w(hpad_ref, hexp_ref, Ch)
    expand_w(xpad_ref, xexp_ref, Cx)
    scatter_h(hexp_ref, Ch, 0)
    scatter_h(xexp_ref, Cx, Kh)

    # ---- z and r in ONE MXU matmul (K = KH*KW*(Ch+Cx), Cout = 2*Ch) ----
    zr = jnp.dot(patch_ref[...], wzr_ref[...],
                 preferred_element_type=jnp.float32) + bzr_ref[...]
    # sigmoid = exp (EUP) + approximate reciprocal (EUP): no f32 divide on the
    # VALU slots that also carry the im2col copies.
    z = pl.reciprocal(1.0 + jnp.exp(-zr[:, :Ch]), approx=True)
    r = pl.reciprocal(1.0 + jnp.exp(-zr[:, Ch:]), approx=True)

    # ---- q conv: only the h-part columns change (r*h); x columns reused ----
    hpad_ref[ph:ph + H, pw:pw + W, :] = (r * h_flat).reshape(H, W, Ch)
    expand_w(hpad_ref, hexp_ref, Ch)
    scatter_h(hexp_ref, Ch, 0)

    q = jnp.tanh(jnp.dot(patch_ref[...], wq_ref[...],
                         preferred_element_type=jnp.float32) + bq_ref[...])

    # ---- GRU gating (f32), lane-dense (P, Ch) output store ----
    o_ref[...] = (1.0 - z) * h_flat + z * q


def convgru_pallas(h_pc, x_pc, wzr, bzr, wq, bq, *, height, width, kernel_size):
    """h_pc: (N, H*W, Ch) f32; x_pc: (N, H*W, Cx) f32; packed weights as above."""
    N, P, Ch = h_pc.shape
    Cx = x_pc.shape[-1]
    H, W = height, width
    assert P == H * W
    KH = KW = kernel_size
    Hp, Wp = H + KH - 1, W + KW - 1
    K = KH * KW * (Ch + Cx)
    kernel = functools.partial(_convgru_kernel, H=H, W=W, KH=KH, KW=KW,
                               Ch=Ch, Cx=Cx)
    return pl.pallas_call(
        kernel,
        out_shape=jax.ShapeDtypeStruct((N, P, Ch), jnp.float32),
        grid_spec=pltpu.PrefetchScalarGridSpec(
            num_scalar_prefetch=0,
            grid=(N,),
            in_specs=[
                pl.BlockSpec((None, P, Ch), lambda n: (n, 0, 0)),
                pl.BlockSpec((None, P, Cx), lambda n: (n, 0, 0)),
                pl.BlockSpec((K, 2 * Ch), lambda n: (0, 0)),
                pl.BlockSpec((1, 2 * Ch), lambda n: (0, 0)),
                pl.BlockSpec((K, Ch), lambda n: (0, 0)),
                pl.BlockSpec((1, Ch), lambda n: (0, 0)),
            ],
            out_specs=pl.BlockSpec((None, P, Ch), lambda n: (n, 0, 0)),
            scratch_shapes=[
                pltpu.VMEM((Hp, Wp, Ch), jnp.float32),       # padded h / r*h
                pltpu.VMEM((Hp, Wp, Cx), jnp.float32),       # padded x
                pltpu.VMEM((Hp, W, KW * Ch), jnp.bfloat16),  # kw-expanded h
                pltpu.VMEM((Hp, W, KW * Cx), jnp.bfloat16),  # kw-expanded x
                pltpu.VMEM((P, K), jnp.bfloat16),            # im2col patch
            ],
        ),
        input_output_aliases={0: 0},   # hidden state updated in place
        compiler_params=pltpu.CompilerParams(
            dimension_semantics=("parallel",),
            vmem_limit_bytes=32 * 1024 * 1024,
        ),
    )(h_pc, x_pc, wzr, bzr, wq, bq)


# ---------------- parameter handling ----------------
def _init_conv_hwio(key, k, cin, cout):
    """PyTorch Conv2d default init (uniform +/- 1/sqrt(fan_in)), HWIO layout."""
    kw_key, kb_key = jax.random.split(key)
    bound = 1.0 / ((cin * k * k) ** 0.5)
    w = jax.random.uniform(kw_key, (k, k, cin, cout), jnp.float32, -bound, bound)
    b = jax.random.uniform(kb_key, (cout,), jnp.float32, -bound, bound)
    return w, b


def _pack_weight(w_hwio, Ch, Cx):
    """(KH,KW,Ch+Cx,Cout) HWIO -> (KH*KW*(Ch+Cx), Cout), rows = [h taps | x taps]."""
    KH, KW, _, Cout = w_hwio.shape
    wh = w_hwio[:, :, :Ch, :].reshape(KH * KW * Ch, Cout)
    wx = w_hwio[:, :, Ch:, :].reshape(KH * KW * Cx, Cout)
    return jnp.concatenate([wh, wx], axis=0)


class ConvGRUPallas:
    """Pallas port of ConvGRU(hidden+input -> hidden, 'same' padding, stride 1)."""

    def __init__(self, key, *, input_size, hidden_size, kernel_size, padding):
        if kernel_size % 2 != 1 or padding != (kernel_size - 1) // 2:
            # TODO(synk): only odd kernel_size with 'same' padding is supported
            # (the only configuration that keeps the GRU gating shapes consistent).
            raise ValueError("only odd kernel_size with 'same' padding supported")
        self.input_size = input_size
        self.hidden_size = hidden_size
        self.kernel_size = kernel_size
        Ch, Cx = hidden_size, input_size
        cin = Ch + Cx
        kz, kr, kq = jax.random.split(key, 3)
        self.wz_hwio, self.bz = _init_conv_hwio(kz, kernel_size, cin, Ch)
        self.wr_hwio, self.br = _init_conv_hwio(kr, kernel_size, cin, Ch)
        self.wq_hwio, self.bq = _init_conv_hwio(kq, kernel_size, cin, Ch)
        # Packed MXU weights: z and r share an input, so fuse their matmuls.
        self.wzr_packed = jnp.concatenate(
            [_pack_weight(self.wz_hwio, Ch, Cx),
             _pack_weight(self.wr_hwio, Ch, Cx)], axis=1).astype(jnp.bfloat16)
        self.bzr_packed = jnp.concatenate([self.bz, self.br]).reshape(1, 2 * Ch)
        self.wq_packed = _pack_weight(self.wq_hwio, Ch, Cx).astype(jnp.bfloat16)
        self.bq_packed = self.bq.reshape(1, Ch)

    def step_nhwc(self, h_nhwc, x_nhwc):
        """NHWC in / NHWC out.  Use this inside RAFT/LCCRAFT refinement loops so
        the hidden state never round-trips through NCHW transposes."""
        N, H, W, Ch = h_nhwc.shape
        Cx = x_nhwc.shape[-1]
        h_new = convgru_pallas(
            h_nhwc.reshape(N, H * W, Ch),          # free contiguous collapse
            x_nhwc.reshape(N, H * W, Cx),
            self.wzr_packed, self.bzr_packed, self.wq_packed, self.bq_packed,
            height=H, width=W, kernel_size=self.kernel_size)
        return h_new.reshape(N, H, W, Ch)

    def __call__(self, h_nchw, x_nchw):
        # PyTorch-parity NCHW interface (transposes only at this boundary).
        h = jnp.transpose(h_nchw, (0, 2, 3, 1))
        x = jnp.transpose(x_nchw, (0, 2, 3, 1))
        return jnp.transpose(self.step_nhwc(h, x), (0, 3, 1, 2))


# -------- pure-JAX reference (lax.conv) for a correctness check --------
# Mirrors the kernel's bf16-at-the-MXU / f32-accumulation quantization so the
# comparison isolates algorithmic correctness.
def _ref_conv(x_nhwc, w_hwio, b):
    y = jax.lax.conv_general_dilated(
        x_nhwc.astype(jnp.bfloat16), w_hwio.astype(jnp.bfloat16),
        window_strides=(1, 1), padding="SAME",
        dimension_numbers=("NHWC", "HWIO", "NHWC"),
        preferred_element_type=jnp.float32)
    return y + b


def _reference(gru, h_nchw, x_nchw):
    to_nhwc = lambda t: jnp.transpose(t, (0, 2, 3, 1))
    h = to_nhwc(h_nchw)
    x = to_nhwc(x_nchw)
    hx = jnp.concatenate([h, x], axis=-1)
    z = _sigmoid(_ref_conv(hx, gru.wz_hwio, gru.bz))
    r = _sigmoid(_ref_conv(hx, gru.wr_hwio, gru.br))
    q = jnp.tanh(_ref_conv(jnp.concatenate([r * h, x], axis=-1),
                           gru.wq_hwio, gru.bq))
    h_new = (1.0 - z) * h + z * q
    return jnp.transpose(h_new, (0, 3, 1, 2))


if __name__ == "__main__":
    key = jax.random.PRNGKey(0)
    k_params, k_h, k_x = jax.random.split(key, 3)

    N, H, W = 2, 16, 16
    hidden_size, input_size = 128, 128   # RAFT/LCCRAFT-style ConvGRU sizes

    h0 = jax.random.normal(k_h, (N, hidden_size, H, W), jnp.float32)
    x0 = jax.random.normal(k_x, (N, input_size, H, W), jnp.float32)

    gru = ConvGRUPallas(k_params, input_size=input_size, hidden_size=hidden_size,
                        kernel_size=3, padding=1)

    ref = jax.block_until_ready(_reference(gru, h0, x0))

    out = jax.block_until_ready(gru(h0, x0))
    assert out.shape == (N, hidden_size, H, W), out.shape
    assert out.dtype == jnp.float32

    max_err = float(jnp.max(jnp.abs(out - ref)))
    # Tolerance covers bf16 MXU quantization + approximate-reciprocal sigmoid.
    assert max_err < 3e-2, max_err

    print("KERNEL_OK")
</pallas_src>

<mosaic_0001>
module attributes {stable_mosaic.version = 11 : i64} {
  func.func @_convgru_kernel(%arg0: i32, %arg1: memref<1x256x128xf32, #tpu.memory_space<vmem>>, %arg2: memref<1x256x128xf32, #tpu.memory_space<vmem>>, %arg3: memref<2304x256xbf16, #tpu.memory_space<vmem>>, %arg4: memref<1x256xf32, #tpu.memory_space<vmem>>, %arg5: memref<2304x128xbf16, #tpu.memory_space<vmem>>, %arg6: memref<1x128xf32, #tpu.memory_space<vmem>>, %arg7: memref<1x256x128xf32, #tpu.memory_space<vmem>>, %arg8: memref<18x18x128xf32, #tpu.memory_space<vmem>>, %arg9: memref<18x18x128xf32, #tpu.memory_space<vmem>>, %arg10: memref<18x16x384xbf16, #tpu.memory_space<vmem>>, %arg11: memref<18x16x384xbf16, #tpu.memory_space<vmem>>, %arg12: memref<256x2304xbf16, #tpu.memory_space<vmem>>) attributes {dimension_semantics = [#tpu.dimension_semantics<parallel>], iteration_bounds = array<i64: 2>, scalar_prefetch = 0 : i64, scratch_operands = 5 : i64, tpu.core_type = #tpu.core_type<tc>, window_params = [{transform_indices = @transform_0, window_bounds = array<i64: 1, 256, 128>}, {transform_indices = @transform_1, window_bounds = array<i64: 1, 256, 128>}, {pipeline_mode = #tpu.pipeline_mode<synchronous>, transform_indices = @transform_2, window_bounds = array<i64: 2304, 256>}, {pipeline_mode = #tpu.pipeline_mode<synchronous>, transform_indices = @transform_3, window_bounds = array<i64: 1, 256>}, {pipeline_mode = #tpu.pipeline_mode<synchronous>, transform_indices = @transform_4, window_bounds = array<i64: 2304, 128>}, {pipeline_mode = #tpu.pipeline_mode<synchronous>, transform_indices = @transform_5, window_bounds = array<i64: 1, 128>}, {transform_indices = @transform_6, window_bounds = array<i64: 1, 256, 128>}]} {
    %cst = arith.constant 0.000000e+00 : f32
    %0 = vector.broadcast %cst : f32 to vector<1x18x128xf32>
    %c0 = arith.constant 0 : index
    %c0_0 = arith.constant 0 : index
    %c0_1 = arith.constant 0 : index
    %1 = vector.load %arg8[%c0, %c0_0, %c0_1] : memref<18x18x128xf32, #tpu.memory_space<vmem>>, vector<1x18x128xf32>
    tpu.vector_store %arg8[%c0, %c0_0, %c0_1], %0 {strides = array<i32>} : memref<18x18x128xf32, #tpu.memory_space<vmem>>, vector<1x18x128xf32>,
    %cst_2 = arith.constant 0.000000e+00 : f32
    %2 = vector.broadcast %cst_2 : f32 to vector<1x18x128xf32>
    %c17 = arith.constant 17 : index
    %c0_3 = arith.constant 0 : index
    %c0_4 = arith.constant 0 : index
    %3 = vector.load %arg8[%c17, %c0_3, %c0_4] : memref<18x18x128xf32, #tpu.memory_space<vmem>>, vector<1x18x128xf32>
    tpu.vector_store %arg8[%c17, %c0_3, %c0_4], %2 {strides = array<i32>} : memref<18x18x128xf32, #tpu.memory_space<vmem>>, vector<1x18x128xf32>,
    %cst_5 = arith.constant 0.000000e+00 : f32
    %4 = vector.broadcast %cst_5 : f32 to vector<18x1x128xf32>
    %c0_6 = arith.constant 0 : index
    %c0_7 = arith.constant 0 : index
    %c0_8 = arith.constant 0 : index
    %5 = vector.load %arg8[%c0_6, %c0_7, %c0_8] : memref<18x18x128xf32, #tpu.memory_space<vmem>>, vector<18x1x128xf32>
    tpu.vector_store %arg8[%c0_6, %c0_7, %c0_8], %4 {strides = array<i32>} : memref<18x18x128xf32, #tpu.memory_space<vmem>>, vector<18x1x128xf32>,
    %cst_9 = arith.constant 0.000000e+00 : f32
    %6 = vector.broadcast %cst_9 : f32 to vector<18x1x128xf32>
    %c0_10 = arith.constant 0 : index
    %c17_11 = arith.constant 17 : index
    %c0_12 = arith.constant 0 : index
    %7 = vector.load %arg8[%c0_10, %c17_11, %c0_12] : memref<18x18x128xf32, #tpu.memory_space<vmem>>, vector<18x1x128xf32>
    tpu.vector_store %arg8[%c0_10, %c17_11, %c0_12], %6 {strides = array<i32>} : memref<18x18x128xf32, #tpu.memory_space<vmem>>, vector<18x1x128xf32>,
    %cst_13 = arith.constant 0.000000e+00 : f32
    %8 = vector.broadcast %cst_13 : f32 to vector<1x18x128xf32>
    %c0_14 = arith.constant 0 : index
    %c0_15 = arith.constant 0 : index
    %c0_16 = arith.constant 0 : index
    %9 = vector.load %arg9[%c0_14, %c0_15, %c0_16] : memref<18x18x128xf32, #tpu.memory_space<vmem>>, vector<1x18x128xf32>
    tpu.vector_store %arg9[%c0_14, %c0_15, %c0_16], %8 {strides = array<i32>} : memref<18x18x128xf32, #tpu.memory_space<vmem>>, vector<1x18x128xf32>,
    %cst_17 = arith.constant 0.000000e+00 : f32
    %10 = vector.broadcast %cst_17 : f32 to vector<1x18x128xf32>
    %c17_18 = arith.constant 17 : index
    %c0_19 = arith.constant 0 : index
    %c0_20 = arith.constant 0 : index
    %11 = vector.load %arg9[%c17_18, %c0_19, %c0_20] : memref<18x18x128xf32, #tpu.memory_space<vmem>>, vector<1x18x128xf32>
    tpu.vector_store %arg9[%c17_18, %c0_19, %c0_20], %10 {strides = array<i32>} : memref<18x18x128xf32, #tpu.memory_space<vmem>>, vector<1x18x128xf32>,
    %cst_21 = arith.constant 0.000000e+00 : f32
    %12 = vector.broadcast %cst_21 : f32 to vector<18x1x128xf32>
    %c0_22 = arith.constant 0 : index
    %c0_23 = arith.constant 0 : index
    %c0_24 = arith.constant 0 : index
    %13 = vector.load %arg9[%c0_22, %c0_23, %c0_24] : memref<18x18x128xf32, #tpu.memory_space<vmem>>, vector<18x1x128xf32>
    tpu.vector_store %arg9[%c0_22, %c0_23, %c0_24], %12 {strides = array<i32>} : memref<18x18x128xf32, #tpu.memory_space<vmem>>, vector<18x1x128xf32>,
    %cst_25 = arith.constant 0.000000e+00 : f32
    %14 = vector.broadcast %cst_25 : f32 to vector<18x1x128xf32>
    %c0_26 = arith.constant 0 : index
    %c17_27 = arith.constant 17 : index
    %c0_28 = arith.constant 0 : index
    %15 = vector.load %arg9[%c0_26, %c17_27, %c0_28] : memref<18x18x128xf32, #tpu.memory_space<vmem>>, vector<18x1x128xf32>
    tpu.vector_store %arg9[%c0_26, %c17_27, %c0_28], %14 {strides = array<i32>} : memref<18x18x128xf32, #tpu.memory_space<vmem>>, vector<18x1x128xf32>,
    %c0_29 = arith.constant 0 : index
    %c0_30 = arith.constant 0 : index
    %c0_31 = arith.constant 0 : index
    %16 = vector.load %arg1[%c0_29, %c0_30, %c0_31] : memref<1x256x128xf32, #tpu.memory_space<vmem>>, vector<1x256x128xf32>
    %17 = vector.shape_cast %16 : vector<1x256x128xf32> to vector<256x128xf32>
    %18 = vector.shape_cast %17 : vector<256x128xf32> to vector<16x16x128xf32>
    %c1 = arith.constant 1 : index
    %c1_32 = arith.constant 1 : index
    %c0_33 = arith.constant 0 : index
    %19 = vector.load %arg8[%c1, %c1_32, %c0_33] : memref<18x18x128xf32, #tpu.memory_space<vmem>>, vector<16x16x128xf32>
    tpu.vector_store %arg8[%c1, %c1_32, %c0_33], %18 {strides = array<i32>} : memref<18x18x128xf32, #tpu.memory_space<vmem>>, vector<16x16x128xf32>,
    %c0_34 = arith.constant 0 : index
    %c0_35 = arith.constant 0 : index
    %c0_36 = arith.constant 0 : index
    %20 = vector.load %arg2[%c0_34, %c0_35, %c0_36] : memref<1x256x128xf32, #tpu.memory_space<vmem>>, vector<1x256x128xf32>
    %21 = vector.shape_cast %20 : vector<1x256x128xf32> to vector<256x128xf32>
    %22 = vector.shape_cast %21 : vector<256x128xf32> to vector<16x16x128xf32>
    %c1_37 = arith.constant 1 : index
    %c1_38 = arith.constant 1 : index
    %c0_39 = arith.constant 0 : index
    %23 = vector.load %arg9[%c1_37, %c1_38, %c0_39] : memref<18x18x128xf32, #tpu.memory_space<vmem>>, vector<16x16x128xf32>
    tpu.vector_store %arg9[%c1_37, %c1_38, %c0_39], %22 {strides = array<i32>} : memref<18x18x128xf32, #tpu.memory_space<vmem>>, vector<16x16x128xf32>,
    %c0_40 = arith.constant 0 : index
    %c0_41 = arith.constant 0 : index
    %c0_42 = arith.constant 0 : index
    %24 = vector.load %arg8[%c0_40, %c0_41, %c0_42] : memref<18x18x128xf32, #tpu.memory_space<vmem>>, vector<18x16x128xf32>
    %25 = arith.truncf %24 : vector<18x16x128xf32> to vector<18x16x128xbf16>
    %c0_43 = arith.constant 0 : index
    %c0_44 = arith.constant 0 : index
    %c0_45 = arith.constant 0 : index
    %26 = vector.load %arg10[%c0_43, %c0_44, %c0_45] : memref<18x16x384xbf16, #tpu.memory_space<vmem>>, vector<18x16x128xbf16>
    tpu.vector_store %arg10[%c0_43, %c0_44, %c0_45], %25 {strides = array<i32>} : memref<18x16x384xbf16, #tpu.memory_space<vmem>>, vector<18x16x128xbf16>,
    %c0_46 = arith.constant 0 : index
    %c1_47 = arith.constant 1 : index
    %c0_48 = arith.constant 0 : index
    %27 = vector.load %arg8[%c0_46, %c1_47, %c0_48] : memref<18x18x128xf32, #tpu.memory_space<vmem>>, vector<18x16x128xf32>
    %28 = arith.truncf %27 : vector<18x16x128xf32> to vector<18x16x128xbf16>
    %c0_49 = arith.constant 0 : index
    %c0_50 = arith.constant 0 : index
    %c128 = arith.constant 128 : index
    %29 = vector.load %arg10[%c0_49, %c0_50, %c128] : memref<18x16x384xbf16, #tpu.memory_space<vmem>>, vector<18x16x128xbf16>
    tpu.vector_store %arg10[%c0_49, %c0_50, %c128], %28 {strides = array<i32>} : memref<18x16x384xbf16, #tpu.memory_space<vmem>>, vector<18x16x128xbf16>,
    %c0_51 = arith.constant 0 : index
    %c2 = arith.constant 2 : index
    %c0_52 = arith.constant 0 : index
    %30 = vector.load %arg8[%c0_51, %c2, %c0_52] : memref<18x18x128xf32, #tpu.memory_space<vmem>>, vector<18x16x128xf32>
    %31 = arith.truncf %30 : vector<18x16x128xf32> to vector<18x16x128xbf16>
    %c0_53 = arith.constant 0 : index
    %c0_54 = arith.constant 0 : index
    %c256 = arith.constant 256 : index
    %32 = vector.load %arg10[%c0_53, %c0_54, %c256] : memref<18x16x384xbf16, #tpu.memory_space<vmem>>, vector<18x16x128xbf16>
    tpu.vector_store %arg10[%c0_53, %c0_54, %c256], %31 {strides = array<i32>} : memref<18x16x384xbf16, #tpu.memory_space<vmem>>, vector<18x16x128xbf16>,
    %c0_55 = arith.constant 0 : index
    %c0_56 = arith.constant 0 : index
    %c0_57 = arith.constant 0 : index
    %33 = vector.load %arg9[%c0_55, %c0_56, %c0_57] : memref<18x18x128xf32, #tpu.memory_space<vmem>>, vector<18x16x128xf32>
    %34 = arith.truncf %33 : vector<18x16x128xf32> to vector<18x16x128xbf16>
    %c0_58 = arith.constant 0 : index
    %c0_59 = arith.constant 0 : index
    %c0_60 = arith.constant 0 : index
    %35 = vector.load %arg11[%c0_58, %c0_59, %c0_60] : memref<18x16x384xbf16, #tpu.memory_space<vmem>>, vector<18x16x128xbf16>
    tpu.vector_store %arg11[%c0_58, %c0_59, %c0_60], %34 {strides = array<i32>} : memref<18x16x384xbf16, #tpu.memory_space<vmem>>, vector<18x16x128xbf16>,
    %c0_61 = arith.constant 0 : index
    %c1_62 = arith.constant 1 : index
    %c0_63 = arith.constant 0 : index
    %36 = vector.load %arg9[%c0_61, %c1_62, %c0_63] : memref<18x18x128xf32, #tpu.memory_space<vmem>>, vector<18x16x128xf32>
    %37 = arith.truncf %36 : vector<18x16x128xf32> to vector<18x16x128xbf16>
    %c0_64 = arith.constant 0 : index
    %c0_65 = arith.constant 0 : index
    %c128_66 = arith.constant 128 : index
    %38 = vector.load %arg11[%c0_64, %c0_65, %c128_66] : memref<18x16x384xbf16, #tpu.memory_space<vmem>>, vector<18x16x128xbf16>
    tpu.vector_store %arg11[%c0_64, %c0_65, %c128_66], %37 {strides = array<i32>} : memref<18x16x384xbf16, #tpu.memory_space<vmem>>, vector<18x16x128xbf16>,
    %c0_67 = arith.constant 0 : index
    %c2_68 = arith.constant 2 : index
    %c0_69 = arith.constant 0 : index
    %39 = vector.load %arg9[%c0_67, %c2_68, %c0_69] : memref<18x18x128xf32, #tpu.memory_space<vmem>>, vector<18x16x128xf32>
    %40 = arith.truncf %39 : vector<18x16x128xf32> to vector<18x16x128xbf16>
    %c0_70 = arith.constant 0 : index
    %c0_71 = arith.constant 0 : index
    %c256_72 = arith.constant 256 : index
    %41 = vector.load %arg11[%c0_70, %c0_71, %c256_72] : memref<18x16x384xbf16, #tpu.memory_space<vmem>>, vector<18x16x128xbf16>
    tpu.vector_store %arg11[%c0_70, %c0_71, %c256_72], %40 {strides = array<i32>} : memref<18x16x384xbf16, #tpu.memory_space<vmem>>, vector<18x16x128xbf16>,
    %c0_73 = arith.constant 0 : index
    %c0_74 = arith.constant 0 : index
    %c0_75 = arith.constant 0 : index
    %42 = vector.load %arg10[%c0_73, %c0_74, %c0_75] : memref<18x16x384xbf16, #tpu.memory_space<vmem>>, vector<16x16x384xbf16>
    %43 = vector.shape_cast %42 : vector<16x16x384xbf16> to vector<256x384xbf16>
    %c0_76 = arith.constant 0 : index
    %c0_77 = arith.constant 0 : index
    %44 = vector.load %arg12[%c0_76, %c0_77] : memref<256x2304xbf16, #tpu.memory_space<vmem>>, vector<256x384xbf16>
    tpu.vector_store %arg12[%c0_76, %c0_77], %43 {strides = array<i32>} : memref<256x2304xbf16, #tpu.memory_space<vmem>>, vector<256x384xbf16>,
    %c1_78 = arith.constant 1 : index
    %c0_79 = arith.constant 0 : index
    %c0_80 = arith.constant 0 : index
    %45 = vector.load %arg10[%c1_78, %c0_79, %c0_80] : memref<18x16x384xbf16, #tpu.memory_space<vmem>>, vector<16x16x384xbf16>
    %46 = vector.shape_cast %45 : vector<16x16x384xbf16> to vector<256x384xbf16>
    %c0_81 = arith.constant 0 : index
    %c384 = arith.constant 384 : index
    %47 = vector.load %arg12[%c0_81, %c384] : memref<256x2304xbf16, #tpu.memory_space<vmem>>, vector<256x384xbf16>
    tpu.vector_store %arg12[%c0_81, %c384], %46 {strides = array<i32>} : memref<256x2304xbf16, #tpu.memory_space<vmem>>, vector<256x384xbf16>,
    %c2_82 = arith.constant 2 : index
    %c0_83 = arith.constant 0 : index
    %c0_84 = arith.constant 0 : index
    %48 = vector.load %arg10[%c2_82, %c0_83, %c0_84] : memref<18x16x384xbf16, #tpu.memory_space<vmem>>, vector<16x16x384xbf16>
    %49 = vector.shape_cast %48 : vector<16x16x384xbf16> to vector<256x384xbf16>
    %c0_85 = arith.constant 0 : index
    %c768 = arith.constant 768 : index
    %50 = vector.load %arg12[%c0_85, %c768] : memref<256x2304xbf16, #tpu.memory_space<vmem>>, vector<256x384xbf16>
    tpu.vector_store %arg12[%c0_85, %c768], %49 {strides = array<i32>} : memref<256x2304xbf16, #tpu.memory_space<vmem>>, vector<256x384xbf16>,
    %c0_86 = arith.constant 0 : index
    %c0_87 = arith.constant 0 : index
    %c0_88 = arith.constant 0 : index
    %51 = vector.load %arg11[%c0_86, %c0_87, %c0_88] : memref<18x16x384xbf16, #tpu.memory_space<vmem>>, vector<16x16x384xbf16>
    %52 = vector.shape_cast %51 : vector<16x16x384xbf16> to vector<256x384xbf16>
    %c0_89 = arith.constant 0 : index
    %c1152 = arith.constant 1152 : index
    %53 = vector.load %arg12[%c0_89, %c1152] : memref<256x2304xbf16, #tpu.memory_space<vmem>>, vector<256x384xbf16>
    tpu.vector_store %arg12[%c0_89, %c1152], %52 {strides = array<i32>} : memref<256x2304xbf16, #tpu.memory_space<vmem>>, vector<256x384xbf16>,
    %c1_90 = arith.constant 1 : index
    %c0_91 = arith.constant 0 : index
    %c0_92 = arith.constant 0 : index
    %54 = vector.load %arg11[%c1_90, %c0_91, %c0_92] : memref<18x16x384xbf16, #tpu.memory_space<vmem>>, vector<16x16x384xbf16>
    %55 = vector.shape_cast %54 : vector<16x16x384xbf16> to vector<256x384xbf16>
    %c0_93 = arith.constant 0 : index
    %c1536 = arith.constant 1536 : index
    %56 = vector.load %arg12[%c0_93, %c1536] : memref<256x2304xbf16, #tpu.memory_space<vmem>>, vector<256x384xbf16>
    tpu.vector_store %arg12[%c0_93, %c1536], %55 {strides = array<i32>} : memref<256x2304xbf16, #tpu.memory_space<vmem>>, vector<256x384xbf16>,
    %c2_94 = arith.constant 2 : index
    %c0_95 = arith.constant 0 : index
    %c0_96 = arith.constant 0 : index
    %57 = vector.load %arg11[%c2_94, %c0_95, %c0_96] : memref<18x16x384xbf16, #tpu.memory_space<vmem>>, vector<16x16x384xbf16>
    %58 = vector.shape_cast %57 : vector<16x16x384xbf16> to vector<256x384xbf16>
    %c0_97 = arith.constant 0 : index
    %c1920 = arith.constant 1920 : index
    %59 = vector.load %arg12[%c0_97, %c1920] : memref<256x2304xbf16, #tpu.memory_space<vmem>>, vector<256x384xbf16>
    tpu.vector_store %arg12[%c0_97, %c1920], %58 {strides = array<i32>} : memref<256x2304xbf16, #tpu.memory_space<vmem>>, vector<256x384xbf16>,
    %c0_98 = arith.constant 0 : index
    %c0_99 = arith.constant 0 : index
    %60 = vector.load %arg12[%c0_98, %c0_99] : memref<256x2304xbf16, #tpu.memory_space<vmem>>, vector<256x2304xbf16>
    %c0_100 = arith.constant 0 : index
    %c0_101 = arith.constant 0 : index
    %61 = vector.load %arg3[%c0_100, %c0_101] : memref<2304x256xbf16, #tpu.memory_space<vmem>>, vector<2304x256xbf16>
    %cst_102 = arith.constant dense<0.000000e+00> : vector<256x256xf32>
    %62 = tpu.matmul %60, %61, %cst_102 {dimension_numbers = #tpu.dot_dimension_numbers<[1], [0], [0], [1], [0, 0, 1, 1], [], []>} : vector<256x2304xbf16>, vector<2304x256xbf16>, vector<256x256xf32> -> vector<256x256xf32>
    %c0_103 = arith.constant 0 : index
    %c0_104 = arith.constant 0 : index
    %63 = vector.load %arg4[%c0_103, %c0_104] : memref<1x256xf32, #tpu.memory_space<vmem>>, vector<1x256xf32>
    %64 = vector.broadcast %63 : vector<1x256xf32> to vector<256x256xf32>
    %65 = arith.addf %62, %64 : vector<256x256xf32>
    %66 = vector.extract_strided_slice %65 {offsets = [0, 0], sizes = [256, 128], strides = [1, 1]} : vector<256x256xf32> to vector<256x128xf32>
    %cst_105 = arith.constant 0.000000e+00 : f32
    %67 = vector.broadcast %cst_105 : f32 to vector<256x128xf32>
    %68 = arith.subf %67, %66 : vector<256x128xf32>
    %69 = math.exp %68 : vector<256x128xf32>
    %cst_106 = arith.constant 1.000000e+00 : f32
    %70 = vector.broadcast %cst_106 : f32 to vector<256x128xf32>
    %71 = arith.addf %70, %69 : vector<256x128xf32>
    %72 = tpu.reciprocal %71 {approx = true} : vector<256x128xf32> -> vector<256x128xf32>
    %73 = vector.extract_strided_slice %65 {offsets = [0, 128], sizes = [256, 128], strides = [1, 1]} : vector<256x256xf32> to vector<256x128xf32>
    %cst_107 = arith.constant 0.000000e+00 : f32
    %74 = vector.broadcast %cst_107 : f32 to vector<256x128xf32>
    %75 = arith.subf %74, %73 : vector<256x128xf32>
    %76 = math.exp %75 : vector<256x128xf32>
    %cst_108 = arith.constant 1.000000e+00 : f32
    %77 = vector.broadcast %cst_108 : f32 to vector<256x128xf32>
    %78 = arith.addf %77, %76 : vector<256x128xf32>
    %79 = tpu.reciprocal %78 {approx = true} : vector<256x128xf32> -> vector<256x128xf32>
    %80 = arith.mulf %79, %17 : vector<256x128xf32>
    %81 = vector.shape_cast %80 : vector<256x128xf32> to vector<16x16x128xf32>
    %c1_109 = arith.constant 1 : index
    %c1_110 = arith.constant 1 : index
    %c0_111 = arith.constant 0 : index
    %82 = vector.load %arg8[%c1_109, %c1_110, %c0_111] : memref<18x18x128xf32, #tpu.memory_space<vmem>>, vector<16x16x128xf32>
    tpu.vector_store %arg8[%c1_109, %c1_110, %c0_111], %81 {strides = array<i32>} : memref<18x18x128xf32, #tpu.memory_space<vmem>>, vector<16x16x128xf32>,
    %c0_112 = arith.constant 0 : index
    %c0_113 = arith.constant 0 : index
    %c0_114 = arith.constant 0 : index
    %83 = vector.load %arg8[%c0_112, %c0_113, %c0_114] : memref<18x18x128xf32, #tpu.memory_space<vmem>>, vector<18x16x128xf32>
    %84 = arith.truncf %83 : vector<18x16x128xf32> to vector<18x16x128xbf16>
    %c0_115 = arith.constant 0 : index
    %c0_116 = arith.constant 0 : index
    %c0_117 = arith.constant 0 : index
    %85 = vector.load %arg10[%c0_115, %c0_116, %c0_117] : memref<18x16x384xbf16, #tpu.memory_space<vmem>>, vector<18x16x128xbf16>
    tpu.vector_store %arg10[%c0_115, %c0_116, %c0_117], %84 {strides = array<i32>} : memref<18x16x384xbf16, #tpu.memory_space<vmem>>, vector<18x16x128xbf16>,
    %c0_118 = arith.constant 0 : index
    %c1_119 = arith.constant 1 : index
    %c0_120 = arith.constant 0 : index
    %86 = vector.load %arg8[%c0_118, %c1_119, %c0_120] : memref<18x18x128xf32, #tpu.memory_space<vmem>>, vector<18x16x128xf32>
    %87 = arith.truncf %86 : vector<18x16x128xf32> to vector<18x16x128xbf16>
    %c0_121 = arith.constant 0 : index
    %c0_122 = arith.constant 0 : index
    %c128_123 = arith.constant 128 : index
    %88 = vector.load %arg10[%c0_121, %c0_122, %c128_123] : memref<18x16x384xbf16, #tpu.memory_space<vmem>>, vector<18x16x128xbf16>
    tpu.vector_store %arg10[%c0_121, %c0_122, %c128_123], %87 {strides = array<i32>} : memref<18x16x384xbf16, #tpu.memory_space<vmem>>, vector<18x16x128xbf16>,
    %c0_124 = arith.constant 0 : index
    %c2_125 = arith.constant 2 : index
    %c0_126 = arith.constant 0 : index
    %89 = vector.load %arg8[%c0_124, %c2_125, %c0_126] : memref<18x18x128xf32, #tpu.memory_space<vmem>>, vector<18x16x128xf32>
    %90 = arith.truncf %89 : vector<18x16x128xf32> to vector<18x16x128xbf16>
    %c0_127 = arith.constant 0 : index
    %c0_128 = arith.constant 0 : index
    %c256_129 = arith.constant 256 : index
    %91 = vector.load %arg10[%c0_127, %c0_128, %c256_129] : memref<18x16x384xbf16, #tpu.memory_space<vmem>>, vector<18x16x128xbf16>
    tpu.vector_store %arg10[%c0_127, %c0_128, %c256_129], %90 {strides = array<i32>} : memref<18x16x384xbf16, #tpu.memory_space<vmem>>, vector<18x16x128xbf16>,
    %c0_130 = arith.constant 0 : index
    %c0_131 = arith.constant 0 : index
    %c0_132 = arith.constant 0 : index
    %92 = vector.load %arg10[%c0_130, %c0_131, %c0_132] : memref<18x16x384xbf16, #tpu.memory_space<vmem>>, vector<16x16x384xbf16>
    %93 = vector.shape_cast %92 : vector<16x16x384xbf16> to vector<256x384xbf16>
    %c0_133 = arith.constant 0 : index
    %c0_134 = arith.constant 0 : index
    %94 = vector.load %arg12[%c0_133, %c0_134] : memref<256x2304xbf16, #tpu.memory_space<vmem>>, vector<256x384xbf16>
    tpu.vector_store %arg12[%c0_133, %c0_134], %93 {strides = array<i32>} : memref<256x2304xbf16, #tpu.memory_space<vmem>>, vector<256x384xbf16>,
    %c1_135 = arith.constant 1 : index
    %c0_136 = arith.constant 0 : index
    %c0_137 = arith.constant 0 : index
    %95 = vector.load %arg10[%c1_135, %c0_136, %c0_137] : memref<18x16x384xbf16, #tpu.memory_space<vmem>>, vector<16x16x384xbf16>
    %96 = vector.shape_cast %95 : vector<16x16x384xbf16> to vector<256x384xbf16>
    %c0_138 = arith.constant 0 : index
    %c384_139 = arith.constant 384 : index
    %97 = vector.load %arg12[%c0_138, %c384_139] : memref<256x2304xbf16, #tpu.memory_space<vmem>>, vector<256x384xbf16>
    tpu.vector_store %arg12[%c0_138, %c384_139], %96 {strides = array<i32>} : memref<256x2304xbf16, #tpu.memory_space<vmem>>, vector<256x384xbf16>,
    %c2_140 = arith.constant 2 : index
    %c0_141 = arith.constant 0 : index
    %c0_142 = arith.constant 0 : index
    %98 = vector.load %arg10[%c2_140, %c0_141, %c0_142] : memref<18x16x384xbf16, #tpu.memory_space<vmem>>, vector<16x16x384xbf16>
    %99 = vector.shape_cast %98 : vector<16x16x384xbf16> to vector<256x384xbf16>
    %c0_143 = arith.constant 0 : index
    %c768_144 = arith.constant 768 : index
    %100 = vector.load %arg12[%c0_143, %c768_144] : memref<256x2304xbf16, #tpu.memory_space<vmem>>, vector<256x384xbf16>
    tpu.vector_store %arg12[%c0_143, %c768_144], %99 {strides = array<i32>} : memref<256x2304xbf16, #tpu.memory_space<vmem>>, vector<256x384xbf16>,
    %c0_145 = arith.constant 0 : index
    %c0_146 = arith.constant 0 : index
    %101 = vector.load %arg12[%c0_145, %c0_146] : memref<256x2304xbf16, #tpu.memory_space<vmem>>, vector<256x2304xbf16>
    %c0_147 = arith.constant 0 : index
    %c0_148 = arith.constant 0 : index
    %102 = vector.load %arg5[%c0_147, %c0_148] : memref<2304x128xbf16, #tpu.memory_space<vmem>>, vector<2304x128xbf16>
    %cst_149 = arith.constant dense<0.000000e+00> : vector<256x128xf32>
    %103 = tpu.matmul %101, %102, %cst_149 {dimension_numbers = #tpu.dot_dimension_numbers<[1], [0], [0], [1], [0, 0, 1, 1], [], []>} : vector<256x2304xbf16>, vector<2304x128xbf16>, vector<256x128xf32> -> vector<256x128xf32>
    %c0_150 = arith.constant 0 : index
    %c0_151 = arith.constant 0 : index
    %104 = vector.load %arg6[%c0_150, %c0_151] : memref<1x128xf32, #tpu.memory_space<vmem>>, vector<1x128xf32>
    %105 = vector.broadcast %104 : vector<1x128xf32> to vector<256x128xf32>
    %106 = arith.addf %103, %105 : vector<256x128xf32>
    %107 = math.tanh %106 : vector<256x128xf32>
    %cst_152 = arith.constant 1.000000e+00 : f32
    %108 = vector.broadcast %cst_152 : f32 to vector<256x128xf32>
    %109 = arith.subf %108, %72 : vector<256x128xf32>
    %110 = arith.mulf %109, %17 : vector<256x128xf32>
    %111 = arith.mulf %72, %107 : vector<256x128xf32>
    %112 = arith.addf %110, %111 : vector<256x128xf32>
    %c0_153 = arith.constant 0 : index
    %c0_154 = arith.constant 0 : index
    %c0_155 = arith.constant 0 : index
    %113 = vector.load %arg7[%c0_153, %c0_154, %c0_155] : memref<1x256x128xf32, #tpu.memory_space<vmem>>, vector<1x256x128xf32>
    %114 = vector.shape_cast %113 : vector<1x256x128xf32> to vector<256x128xf32>
    %115 = vector.shape_cast %112 : vector<256x128xf32> to vector<1x256x128xf32>
    tpu.vector_store %arg7[%c0_153, %c0_154, %c0_155], %115 {strides = array<i32>} : memref<1x256x128xf32, #tpu.memory_space<vmem>>, vector<1x256x128xf32>,
    return
  }
  func.func @transform_0(%arg0: i32) -> (i32, i32, i32) {
    %c0_i32 = arith.constant 0 : i32
    %c0_i32_0 = arith.constant 0 : i32
    %c0_i32_1 = arith.constant 0 : i32
    return %arg0, %c0_i32, %c0_i32_0 : i32, i32, i32
  }
  func.func @transform_1(%arg0: i32) -> (i32, i32, i32) {
    %c0_i32 = arith.constant 0 : i32
    %c0_i32_0 = arith.constant 0 : i32
    %c0_i32_1 = arith.constant 0 : i32
    return %arg0, %c0_i32, %c0_i32_0 : i32, i32, i32
  }
  func.func @transform_2(%arg0: i32) -> (i32, i32) {
    %c0_i32 = arith.constant 0 : i32
    %c0_i32_0 = arith.constant 0 : i32
    %c0_i32_1 = arith.constant 0 : i32
    return %c0_i32, %c0_i32_0 : i32, i32
  }
  func.func @transform_3(%arg0: i32) -> (i32, i32) {
    %c0_i32 = arith.constant 0 : i32
    %c0_i32_0 = arith.constant 0 : i32
    %c0_i32_1 = arith.constant 0 : i32
    return %c0_i32, %c0_i32_0 : i32, i32
  }
  func.func @transform_4(%arg0: i32) -> (i32, i32) {
    %c0_i32 = arith.constant 0 : i32
    %c0_i32_0 = arith.constant 0 : i32
    %c0_i32_1 = arith.constant 0 : i32
    return %c0_i32, %c0_i32_0 : i32, i32
  }
  func.func @transform_5(%arg0: i32) -> (i32, i32) {
    %c0_i32 = arith.constant 0 : i32
    %c0_i32_0 = arith.constant 0 : i32
    %c0_i32_1 = arith.constant 0 : i32
    return %c0_i32, %c0_i32_0 : i32, i32
  }
  func.func @transform_6(%arg0: i32) -> (i32, i32, i32) {
    %c0_i32 = arith.constant 0 : i32
    %c0_i32_0 = arith.constant 0 : i32
    %c0_i32_1 = arith.constant 0 : i32
    return %arg0, %c0_i32, %c0_i32_0 : i32, i32, i32
  }
}

</mosaic_0001>

<llo_original>
// kernel: tpu_custom_call.1
$region0: #{tpu_custom_call.1}
  #allocation0 [shape = 'u32[]', space=smem, size = 0x4, offset = 0x4, fixed_abs, tag = 'smem constant byte address 0x4 - core index']
  #allocation1 [shape = 'u32[144,128]{1,0:T(1,128)}', space=vmem, size = 0x12000, scoped, tag = 'internal scratch']
  #allocation2 [shape = 'f32[18,18,128]{2,1,0:T(8,128)}', space=vmem, size = 0x36000, scoped, tag = 'scratch operand']
  #allocation3 [shape = 'f32[18,18,128]{2,1,0:T(8,128)}', space=vmem, size = 0x36000, scoped, tag = 'scratch operand']
  #allocation4 [shape = 'bf16[18,16,384]{2,1,0:T(16,128)(2,1)}', space=vmem, size = 0x36000, scoped, tag = 'scratch operand']
  #allocation5 [shape = 'bf16[18,16,384]{2,1,0:T(16,128)(2,1)}', space=vmem, size = 0x36000, scoped, tag = 'scratch operand']
  #allocation6 [shape = 'bf16[256,2304]{1,0:T(16,128)(2,1)}', space=vmem, size = 0x120000, scoped, tag = 'scratch operand']
  %s0 = inlined_call_operand.hbm [shape: f32[2,256,128], index: 0, kind: input, shape index: {}, may-alias: {0,6}]
  %s1 = inlined_call_operand.hbm [shape: f32[2,256,128], index: 1, kind: input, shape index: {}]
  %s2 = inlined_call_operand.hbm [shape: bf16[2304,256], index: 2, kind: input, shape index: {}]
  %s3 = inlined_call_operand.hbm [shape: f32[1,256], index: 3, kind: input, shape index: {}]
  %s4 = inlined_call_operand.hbm [shape: bf16[2304,128], index: 4, kind: input, shape index: {}]
  %s5 = inlined_call_operand.hbm [shape: f32[1,128], index: 5, kind: input, shape index: {}]
  %s6 = inlined_call_operand.hbm [shape: f32[2,256,128], index: 6, kind: output, shape index: {}, may-alias: {0,6}]
  %s7 = sld [smem:[#allocation0]]
  $region81: #{tpu_custom_call.1} parent=0
    _
  %s9 = ssub.s32 1, %s7
  %s10 = scalar_select 0, %s9, %s7
  $region1: #{tpu_custom_call.1} parent=0
    #allocation7 [shape = 'u8[262144]{0}', space=vmem, size = 0x40000, scoped, tag = 'input window, operand 0']
    #allocation8 [shape = 's32[2]{0}', space=sflag, size = 0x8, scoped, tag = 'scoped memory for tpu_custom_call.1']
    #allocation9 [shape = 's32[2]{0}', space=sflag, size = 0x8, scoped, tag = 'scoped memory for tpu_custom_call.1']
    #allocation10 [shape = 'u8[262144]{0}', space=vmem, size = 0x40000, scoped, tag = 'input window, operand 1']
    #allocation11 [shape = 's32[2]{0}', space=sflag, size = 0x8, scoped, tag = 'scoped memory for tpu_custom_call.1']
    #allocation12 [shape = 'u8[1179648]{0}', space=vmem, size = 0x120000, scoped, tag = 'input window, operand 2, single buffered']
    #allocation13 [shape = 'u8[1024]{0}', space=vmem, size = 0x400, scoped, tag = 'input window, operand 3, single buffered']
    #allocation14 [shape = 's32[1]{0}', space=sflag, size = 0x4, scoped, tag = 'scoped memory for tpu_custom_call.1']
    #allocation15 [shape = 'u8[589824]{0}', space=vmem, size = 0x90000, scoped, tag = 'input window, operand 4, single buffered']
    #allocation16 [shape = 'u8[512]{0}', space=vmem, size = 0x400, scoped, tag = 'input window, operand 5, single buffered']
    #allocation17 [shape = 's32[1]{0}', space=sflag, size = 0x4, scoped, tag = 'scoped memory for tpu_custom_call.1']
    #allocation18 [shape = 'u8[262144]{0}', space=vmem, size = 0x40000, scoped, tag = 'output window, operand 0']
    %11 = vsyncpa [#allocation8], 0
    %s12 = scalar_lea.sflag [#allocation8], 1
    %13 = vsyncpa %s12, 0
    %14 = vsyncpa [#allocation11], 0
    %s15 = scalar_lea.sflag [#allocation11], 1
    %16 = vsyncpa %s15, 0
    %17 = vsyncpa [#allocation14], 0
    %18 = vsyncpa [#allocation17], 0
    %19 = vsyncpa [#allocation9], 0
    %s20 = scalar_lea.sflag [#allocation9], 1
    %21 = vsyncpa %s20, 0
    loop: start=0, step=1, limit=4
    $region2: #{tpu_custom_call.1} parent=1 // loop_pre_header
      _
    $region3: #{tpu_custom_call.1} parent=1 // loop_header
      %s23 = sphi 0, %s27
      %p24 = scmp.ge.s32.totalorder %s23, 4
      %s33 = sphi 0, %s35
      %s36 = sphi 0, %s33
      %s37 = sphi 0, %s36
      %s53 = sphi 0, %s37
      %s59 = sphi 0, %s61
      %s62 = sphi 0, %s59
      %s63 = sphi 0, %s62
      %s79 = sphi 0, %s63
      %s83 = sphi 0, %s83
      %s85 = sphi 0, %s83
      %s86 = sphi 0, %s85
      %s100 = sphi 0, %s86
      %s104 = sphi 0, %s104
      %s106 = sphi 0, %s104
      %s107 = sphi 0, %s106
      %s121 = sphi 0, %s107
      %s125 = sphi 0, %s125
      %s127 = sphi 0, %s125
      %s128 = sphi 0, %s127
      %s142 = sphi 0, %s128
      %s146 = sphi 0, %s146
      %s148 = sphi 0, %s146
      %s149 = sphi 0, %s148
      %s163 = sphi 0, %s149
      %s169 = sphi 0, %s171
      %s172 = sphi 0, %s169
      %s173 = sphi 0, %s172
      %s189 = sphi 0, %s173
    $region4: #{tpu_custom_call.1} parent=1 // loop_header_branch
      %26 = sbr.rel (%p24) target = $region8
    $region5: #{tpu_custom_call.1} parent=1 // loop_body
      %s28 = ssub.s32 %s23, 1
      %s29 = ssub.s32 %s23, 2
      %s30 = sadd.s32 %s23, 1
      %s31 = ssub.s32 %s23, %s30
      %p32 = scmp.eq.s32.totalorder %s31, 0
      %s34 = sadd.s32 %s33, 1
      %s35 = scalar_select %p32, %s33, %s34
      %p38 = pneg %p32
      %p39 = scmp.eq.s32.totalorder %s23, 1
      %p40 = por %p38, %p39
      %p41 = scmp.ne.s32.totalorder %s33, %s36
      %p42 = scmp.eq.s32.totalorder %s23, 0
      %p43 = por %p41, %p42
      %p44 = scmp.ne.s32.totalorder %s33, %s36
      %p45 = scmp.eq.s32.totalorder %s28, 1
      %p46 = por %p44, %p45
      %p47 = scmp.ne.s32.totalorder %s36, %s37
      %p48 = scmp.eq.s32.totalorder %s28, 0
      %p49 = por %p47, %p48
      %p50 = scmp.ne.s32.totalorder %s36, %s37
      %p51 = scmp.eq.s32.totalorder %s29, 1
      %p52 = por %p50, %p51
      %p54 = scmp.ne.s32.totalorder %s37, %s53
      %p55 = scmp.eq.s32.totalorder %s29, 0
      %p56 = por %p54, %p55
      %s57 = ssub.s32 %s23, %s30
      %p58 = scmp.eq.s32.totalorder %s57, 0
      %s60 = sadd.s32 %s59, 1
      %s61 = scalar_select %p58, %s59, %s60
      %p64 = pneg %p58
      %p65 = scmp.eq.s32.totalorder %s23, 1
      %p66 = por %p64, %p65
      %p67 = scmp.ne.s32.totalorder %s59, %s62
      %p68 = scmp.eq.s32.totalorder %s23, 0
      %p69 = por %p67, %p68
      %p70 = scmp.ne.s32.totalorder %s59, %s62
      %p71 = scmp.eq.s32.totalorder %s28, 1
      %p72 = por %p70, %p71
      %p73 = scmp.ne.s32.totalorder %s62, %s63
      %p74 = scmp.eq.s32.totalorder %s28, 0
      %p75 = por %p73, %p74
      %p76 = scmp.ne.s32.totalorder %s62, %s63
      %p77 = scmp.eq.s32.totalorder %s29, 1
      %p78 = por %p76, %p77
      %p80 = scmp.ne.s32.totalorder %s63, %s79
      %p81 = scmp.eq.s32.totalorder %s29, 0
      %p82 = por %p80, %p81
      %s84 = sadd.s32 %s83, 1
      %p87 = scmp.eq.s32.totalorder %s23, 1
      %p88 = scmp.ne.s32.totalorder %s83, %s85
      %p89 = scmp.eq.s32.totalorder %s23, 0
      %p90 = por %p88, %p89
      %p91 = scmp.ne.s32.totalorder %s83, %s85
      %p92 = scmp.eq.s32.totalorder %s28, 1
      %p93 = por %p91, %p92
      %p94 = scmp.ne.s32.totalorder %s85, %s86
      %p95 = scmp.eq.s32.totalorder %s28, 0
      %p96 = por %p94, %p95
      %p97 = scmp.ne.s32.totalorder %s85, %s86
      %p98 = scmp.eq.s32.totalorder %s29, 1
      %p99 = por %p97, %p98
      %p101 = scmp.ne.s32.totalorder %s86, %s100
      %p102 = scmp.eq.s32.totalorder %s29, 0
      %p103 = por %p101, %p102
      %s105 = sadd.s32 %s104, 1
      %p108 = scmp.eq.s32.totalorder %s23, 1
      %p109 = scmp.ne.s32.totalorder %s104, %s106
      %p110 = scmp.eq.s32.totalorder %s23, 0
      %p111 = por %p109, %p110
      %p112 = scmp.ne.s32.totalorder %s104, %s106
      %p113 = scmp.eq.s32.totalorder %s28, 1
      %p114 = por %p112, %p113
      %p115 = scmp.ne.s32.totalorder %s106, %s107
      %p116 = scmp.eq.s32.totalorder %s28, 0
      %p117 = por %p115, %p116
      %p118 = scmp.ne.s32.totalorder %s106, %s107
      %p119 = scmp.eq.s32.totalorder %s29, 1
      %p120 = por %p118, %p119
      %p122 = scmp.ne.s32.totalorder %s107, %s121
      %p123 = scmp.eq.s32.totalorder %s29, 0
      %p124 = por %p122, %p123
      %s126 = sadd.s32 %s125, 1
      %p129 = scmp.eq.s32.totalorder %s23, 1
      %p130 = scmp.ne.s32.totalorder %s125, %s127
      %p131 = scmp.eq.s32.totalorder %s23, 0
      %p132 = por %p130, %p131
      %p133 = scmp.ne.s32.totalorder %s125, %s127
      %p134 = scmp.eq.s32.totalorder %s28, 1
      %p135 = por %p133, %p134
      %p136 = scmp.ne.s32.totalorder %s127, %s128
      %p137 = scmp.eq.s32.totalorder %s28, 0
      %p138 = por %p136, %p137
      %p139 = scmp.ne.s32.totalorder %s127, %s128
      %p140 = scmp.eq.s32.totalorder %s29, 1
      %p141 = por %p139, %p140
      %p143 = scmp.ne.s32.totalorder %s128, %s142
      %p144 = scmp.eq.s32.totalorder %s29, 0
      %p145 = por %p143, %p144
      %s147 = sadd.s32 %s146, 1
      %p150 = scmp.eq.s32.totalorder %s23, 1
      %p151 = scmp.ne.s32.totalorder %s146, %s148
      %p152 = scmp.eq.s32.totalorder %s23, 0
      %p153 = por %p151, %p152
      %p154 = scmp.ne.s32.totalorder %s146, %s148
      %p155 = scmp.eq.s32.totalorder %s28, 1
      %p156 = por %p154, %p155
      %p157 = scmp.ne.s32.totalorder %s148, %s149
      %p158 = scmp.eq.s32.totalorder %s28, 0
      %p159 = por %p157, %p158
      %p160 = scmp.ne.s32.totalorder %s148, %s149
      %p161 = scmp.eq.s32.totalorder %s29, 1
      %p162 = por %p160, %p161
      %p164 = scmp.ne.s32.totalorder %s149, %s163
      %p165 = scmp.eq.s32.totalorder %s29, 0
      %p166 = por %p164, %p165
      %s167 = ssub.s32 %s23, %s30
      %p168 = scmp.eq.s32.totalorder %s167, 0
      %s170 = sadd.s32 %s169, 1
      %s171 = scalar_select %p168, %s169, %s170
      %p174 = pneg %p168
      %p175 = scmp.eq.s32.totalorder %s23, 1
      %p176 = por %p174, %p175
      %p177 = scmp.ne.s32.totalorder %s169, %s172
      %p178 = scmp.eq.s32.totalorder %s23, 0
      %p179 = por %p177, %p178
      %p180 = scmp.ne.s32.totalorder %s169, %s172
      %p181 = scmp.eq.s32.totalorder %s28, 1
      %p182 = por %p180, %p181
      %p183 = scmp.ne.s32.totalorder %s172, %s173
      %p184 = scmp.eq.s32.totalorder %s28, 0
      %p185 = por %p183, %p184
      %p186 = scmp.ne.s32.totalorder %s172, %s173
      %p187 = scmp.eq.s32.totalorder %s29, 1
      %p188 = por %p186, %p187
      %p190 = scmp.ne.s32.totalorder %s173, %s189
      %p191 = scmp.eq.s32.totalorder %s29, 0
      %p192 = por %p190, %p191
      %p193 = scmp.le.s32.totalorder 1, %s23
      %p194 = scmp.lt.s32.totalorder %s23, 3
      %p195 = pnand %p193, %p194
      %p196 = pneg %p195
      // Predicated region
      $region9: #{tpu_custom_call.1} parent=5 // pred_check
        _
      $region10: #{tpu_custom_call.1} parent=5 // pred_check_branch
        %198 = sbr.rel (%p195) target = $region12
      $region11: #{tpu_custom_call.1} parent=5 // pred_region
        %s199 = ssub.s32 %s23, 1
        // Predicated region
        $region13: #{tpu_custom_call.1} parent=11 // pred_check
          %p200 = pneg %p96
        $region14: #{tpu_custom_call.1} parent=11 // pred_check_branch
          %202 = sbr.rel (%p200) target = $region16
        $region15: #{tpu_custom_call.1} parent=11 // pred_region
          %s204 = ssub.s32 36864, 36864
          %205 = vsyncadd [#allocation11], %s204
          %s206 = sshll.u32 [#allocation12], 4
          %s207 = int_to_ptr.vmem [resolvable:$true] %s206
          %212 = dma.hbm_to_vmem [thread:$0]  %s2, 36864, %s207, [#allocation11], 128, 128, 8
        $region16: #{tpu_custom_call.1} parent=11 // pred_fallthru
          _
        // Predicated region
        $region17: #{tpu_custom_call.1} parent=11 // pred_check
          %p213 = pneg %p117
        $region18: #{tpu_custom_call.1} parent=11 // pred_check_branch
          %215 = sbr.rel (%p213) target = $region20
        $region19: #{tpu_custom_call.1} parent=11 // pred_region
          %s217 = ssub.s32 32, 32
          %218 = vsyncadd [#allocation14], %s217
          %s220 = sshll.u32 [#allocation13], 4
          %s221 = int_to_ptr.vmem [resolvable:$true] %s220
          %223 = dma.hbm_to_vmem [thread:$0]  %s3, 32, %s221, [#allocation14]
        $region20: #{tpu_custom_call.1} parent=11 // pred_fallthru
          _
        // Predicated region
        $region21: #{tpu_custom_call.1} parent=11 // pred_check
          %p224 = pneg %p138
        $region22: #{tpu_custom_call.1} parent=11 // pred_check_branch
          %226 = sbr.rel (%p224) target = $region24
        $region23: #{tpu_custom_call.1} parent=11 // pred_region
          %s228 = ssub.s32 18432, 18432
          %229 = vsyncadd [#allocation14], %s228
          %s230 = sshll.u32 [#allocation15], 4
          %s231 = int_to_ptr.vmem [resolvable:$true] %s230
          %236 = dma.hbm_to_vmem [thread:$0]  %s4, 18432, %s231, [#allocation14], 64, 64, 4
        $region24: #{tpu_custom_call.1} parent=11 // pred_fallthru
          _
        // Predicated region
        $region25: #{tpu_custom_call.1} parent=11 // pred_check
          %p237 = pneg %p159
        $region26: #{tpu_custom_call.1} parent=11 // pred_check_branch
          %239 = sbr.rel (%p237) target = $region28
        $region27: #{tpu_custom_call.1} parent=11 // pred_region
          %s241 = ssub.s32 16, 16
          %242 = vsyncadd [#allocation17], %s241
          %s244 = sshll.u32 [#allocation16], 4
          %s245 = int_to_ptr.vmem [resolvable:$true] %s244
          %247 = dma.hbm_to_vmem [thread:$0]  %s5, 16, %s245, [#allocation17]
        $region28: #{tpu_custom_call.1} parent=11 // pred_fallthru
          _
      $region12: #{tpu_custom_call.1} parent=5 // pred_fallthru
        _
      %p248 = scmp.lt.s32.totalorder %s23, 2
      // Predicated region
      $region29: #{tpu_custom_call.1} parent=5 // pred_check
        %p249 = pneg %p248
      $region30: #{tpu_custom_call.1} parent=5 // pred_check_branch
        %251 = sbr.rel (%p249) target = $region32
      $region31: #{tpu_custom_call.1} parent=5 // pred_region
        // Predicated region
        $region33: #{tpu_custom_call.1} parent=31 // pred_check
          %p252 = pneg %p43
        $region34: #{tpu_custom_call.1} parent=31 // pred_check_branch
          %254 = sbr.rel (%p252) target = $region36
        $region35: #{tpu_custom_call.1} parent=31 // pred_region
          %s255 = sand.u32 %s33, 1
          %s256 = scalar_lea.sflag [#allocation8], %s255
          %s257 = sand.u32 %s33, 1
          %s258 = smul.addr %s257, 256
          %s259 = scalar_lea.vmem [#allocation7], %s258
          %s261 = ssub.s32 4096, 4096
          %262 = vsyncadd %s256, %s261
          %s263 = smul.addr %s23, 32
          %s264 = smul.addr %s263, 128
          %s265 = scalar_lea.hbm %s0, %s264
          %s266 = sshll.u32 %s259, 4
          %s267 = int_to_ptr.vmem [resolvable:$true] %s266
          %272 = dma.hbm_to_vmem [thread:$0]  %s265, 4096, %s267, %s256, 128, 128, 8
        $region36: #{tpu_custom_call.1} parent=31 // pred_fallthru
          _
        // Predicated region
        $region37: #{tpu_custom_call.1} parent=31 // pred_check
          %p273 = pneg %p69
        $region38: #{tpu_custom_call.1} parent=31 // pred_check_branch
          %275 = sbr.rel (%p273) target = $region40
        $region39: #{tpu_custom_call.1} parent=31 // pred_region
          %s276 = sand.u32 %s23, 1
          %s277 = scalar_lea.sflag [#allocation11], %s276
          %s278 = sand.u32 %s59, 1
          %s279 = smul.addr %s278, 256
          %s280 = scalar_lea.vmem [#allocation10], %s279
          %s282 = ssub.s32 4096, 4096
          %283 = vsyncadd %s277, %s282
          %s284 = smul.addr %s23, 32
          %s285 = smul.addr %s284, 128
          %s286 = scalar_lea.hbm %s1, %s285
          %s287 = sshll.u32 %s280, 4
          %s288 = int_to_ptr.vmem [resolvable:$true] %s287
          %293 = dma.hbm_to_vmem [thread:$0]  %s286, 4096, %s288, %s277, 128, 128, 8
        $region40: #{tpu_custom_call.1} parent=31 // pred_fallthru
          _
      $region32: #{tpu_custom_call.1} parent=5 // pred_fallthru
        _
      %p294 = scmp.le.s32.totalorder 1, %s23
      %p295 = scmp.lt.s32.totalorder %s23, 3
      %p296 = pnand %p294, %p295
      %p297 = pneg %p296
      // Predicated region
      $region41: #{tpu_custom_call.1} parent=5 // pred_check
        _
      $region42: #{tpu_custom_call.1} parent=5 // pred_check_branch
        %299 = sbr.rel (%p296) target = $region44
      $region43: #{tpu_custom_call.1} parent=5 // pred_region
        %s300 = ssub.s32 %s23, 1
        %s301 = sand.u32 %s36, 1
        %s302 = scalar_lea.sflag [#allocation8], %s301
        %s303 = sand.u32 %s36, 1
        %s304 = smul.addr %s303, 256
        %s305 = scalar_lea.vmem [#allocation7], %s304
        // Predicated region
        $region45: #{tpu_custom_call.1} parent=43 // pred_check
          %p306 = pneg %p49
        $region46: #{tpu_custom_call.1} parent=43 // pred_check_branch
          %308 = sbr.rel (%p306) target = $region48
        $region47: #{tpu_custom_call.1} parent=43 // pred_region
          %309 = dma.done %s302, 4096
        $region48: #{tpu_custom_call.1} parent=43 // pred_fallthru
          _
        %s310 = sand.u32 %s28, 1
        %s311 = scalar_lea.sflag [#allocation11], %s310
        %s312 = sand.u32 %s62, 1
        %s313 = smul.addr %s312, 256
        %s314 = scalar_lea.vmem [#allocation10], %s313
        // Predicated region
        $region49: #{tpu_custom_call.1} parent=43 // pred_check
          %p315 = pneg %p75
        $region50: #{tpu_custom_call.1} parent=43 // pred_check_branch
          %317 = sbr.rel (%p315) target = $region52
        $region51: #{tpu_custom_call.1} parent=43 // pred_region
          %318 = dma.done %s311, 4096
        $region52: #{tpu_custom_call.1} parent=43 // pred_fallthru
          _
        // Predicated region
        $region53: #{tpu_custom_call.1} parent=43 // pred_check
          %p319 = pneg %p96
        $region54: #{tpu_custom_call.1} parent=43 // pred_check_branch
          %321 = sbr.rel (%p319) target = $region56
        $region55: #{tpu_custom_call.1} parent=43 // pred_region
          %322 = dma.done [#allocation11], 36864
        $region56: #{tpu_custom_call.1} parent=43 // pred_fallthru
          _
        // Predicated region
        $region57: #{tpu_custom_call.1} parent=43 // pred_check
          %p323 = pneg %p117
        $region58: #{tpu_custom_call.1} parent=43 // pred_check_branch
          %325 = sbr.rel (%p323) target = $region60
        $region59: #{tpu_custom_call.1} parent=43 // pred_region
          %326 = dma.done [#allocation14], 32
        $region60: #{tpu_custom_call.1} parent=43 // pred_fallthru
          _
        // Predicated region
        $region61: #{tpu_custom_call.1} parent=43 // pred_check
          %p327 = pneg %p138
        $region62: #{tpu_custom_call.1} parent=43 // pred_check_branch
          %329 = sbr.rel (%p327) target = $region64
        $region63: #{tpu_custom_call.1} parent=43 // pred_region
          %330 = dma.done [#allocation14], 18432
        $region64: #{tpu_custom_call.1} parent=43 // pred_fallthru
          _
        // Predicated region
        $region65: #{tpu_custom_call.1} parent=43 // pred_check
          %p331 = pneg %p159
        $region66: #{tpu_custom_call.1} parent=43 // pred_check_branch
          %333 = sbr.rel (%p331) target = $region68
        $region67: #{tpu_custom_call.1} parent=43 // pred_region
          %334 = dma.done [#allocation17], 16
        $region68: #{tpu_custom_call.1} parent=43 // pred_fallthru
          _
        %s335 = sand.u32 %s36, 1
        %s336 = scalar_lea.sflag [#allocation8], %s335
        %s337 = sand.u32 %s36, 1
        %s338 = smul.addr %s337, 256
        %s339 = scalar_lea.vmem [#allocation7], %s338
        %p340 = pneg %p49
        %p341 = pneg %p46
        %s342 = sand.u32 %s28, 1
        %s343 = scalar_lea.sflag [#allocation11], %s342
        %s344 = sand.u32 %s62, 1
        %s345 = smul.addr %s344, 256
        %s346 = scalar_lea.vmem [#allocation10], %s345
        %p347 = pneg %p75
        %p348 = pneg %p72
        %p349 = pneg %p96
        %p350 = pneg %p93
        %p351 = pneg %p117
        %p352 = pneg %p114
        %p353 = pneg %p138
        %p354 = pneg %p135
        %p355 = pneg %p159
        %p356 = pneg %p156
        %p357 = pneg %p185
        %p358 = pneg %p182
        %s359 = sand.u32 %s172, 1
        %s360 = scalar_lea.sflag [#allocation9], %s359
        %s361 = sand.u32 %s172, 1
        %s362 = smul.addr %s361, 256
        %s363 = scalar_lea.vmem [#allocation18], %s362
        %365 = vst [vmem:[#allocation2] sm:$0xff] 0.0
        %366 = vst [vmem:[#allocation2 + $0x8] sm:$0xff] 0.0
        %367 = vst [vmem:[#allocation2 + $0x10] sm:$0x3] 0.0
        %s368 = scalar_lea.vmem [#allocation2], 408
        %369 = vst [vmem:[%s368] sm:$0xff] 0.0
        %370 = vst [vmem:[%s368 + $0x8] sm:$0xff] 0.0
        %371 = vst [vmem:[%s368 + $0x10] sm:$0x3] 0.0
        %372 = vst [vmem:[#allocation2] sm:$0x1] 0.0
        %373 = vst [vmem:[#allocation2 + $0x18] sm:$0x1] 0.0
        %374 = vst [vmem:[#allocation2 + $0x30] sm:$0x1] 0.0
        %375 = vst [vmem:[#allocation2 + $0x48] sm:$0x1] 0.0
        %376 = vst [vmem:[#allocation2 + $0x60] sm:$0x1] 0.0
        %377 = vst [vmem:[#allocation2 + $0x78] sm:$0x1] 0.0
        %378 = vst [vmem:[#allocation2 + $0x90] sm:$0x1] 0.0
        %379 = vst [vmem:[#allocation2 + $0xa8] sm:$0x1] 0.0
        %380 = vst [vmem:[#allocation2 + $0xc0] sm:$0x1] 0.0
        %381 = vst [vmem:[#allocation2 + $0xd8] sm:$0x1] 0.0
        %382 = vst [vmem:[#allocation2 + $0xf0] sm:$0x1] 0.0
        %383 = vst [vmem:[#allocation2 + $0x108] sm:$0x1] 0.0
        %384 = vst [vmem:[#allocation2 + $0x120] sm:$0x1] 0.0
        %385 = vst [vmem:[#allocation2 + $0x138] sm:$0x1] 0.0
        %386 = vst [vmem:[#allocation2 + $0x150] sm:$0x1] 0.0
        %387 = vst [vmem:[#allocation2 + $0x168] sm:$0x1] 0.0
        %388 = vst [vmem:[#allocation2 + $0x180] sm:$0x1] 0.0
        %389 = vst [vmem:[#allocation2 + $0x198] sm:$0x1] 0.0
        %390 = vst [vmem:[#allocation2 + $0x11] sm:$0x1] 0.0
        %391 = vst [vmem:[#allocation2 + $0x29] sm:$0x1] 0.0
        %392 = vst [vmem:[#allocation2 + $0x41] sm:$0x1] 0.0
        %393 = vst [vmem:[#allocation2 + $0x59] sm:$0x1] 0.0
        %394 = vst [vmem:[#allocation2 + $0x71] sm:$0x1] 0.0
        %395 = vst [vmem:[#allocation2 + $0x89] sm:$0x1] 0.0
        %396 = vst [vmem:[#allocation2 + $0xa1] sm:$0x1] 0.0
        %397 = vst [vmem:[#allocation2 + $0xb9] sm:$0x1] 0.0
        %398 = vst [vmem:[#allocation2 + $0xd1] sm:$0x1] 0.0
        %399 = vst [vmem:[#allocation2 + $0xe9] sm:$0x1] 0.0
        %400 = vst [vmem:[#allocation2 + $0x101] sm:$0x1] 0.0
        %401 = vst [vmem:[#allocation2 + $0x119] sm:$0x1] 0.0
        %402 = vst [vmem:[#allocation2 + $0x131] sm:$0x1] 0.0
        %403 = vst [vmem:[#allocation2 + $0x149] sm:$0x1] 0.0
        %404 = vst [vmem:[#allocation2 + $0x161] sm:$0x1] 0.0
        %405 = vst [vmem:[#allocation2 + $0x179] sm:$0x1] 0.0
        %406 = vst [vmem:[#allocation2 + $0x191] sm:$0x1] 0.0
        %407 = vst [vmem:[#allocation2 + $0x1a9] sm:$0x1] 0.0
        %408 = vst [vmem:[#allocation3] sm:$0xff] 0.0
        %409 = vst [vmem:[#allocation3 + $0x8] sm:$0xff] 0.0
        %410 = vst [vmem:[#allocation3 + $0x10] sm:$0x3] 0.0
        %s411 = scalar_lea.vmem [#allocation3], 408
        %412 = vst [vmem:[%s411] sm:$0xff] 0.0
        %413 = vst [vmem:[%s411 + $0x8] sm:$0xff] 0.0
        %414 = vst [vmem:[%s411 + $0x10] sm:$0x3] 0.0
        %415 = vst [vmem:[#allocation3] sm:$0x1] 0.0
        %416 = vst [vmem:[#allocation3 + $0x18] sm:$0x1] 0.0
        %417 = vst [vmem:[#allocation3 + $0x30] sm:$0x1] 0.0
        %418 = vst [vmem:[#allocation3 + $0x48] sm:$0x1] 0.0
        %419 = vst [vmem:[#allocation3 + $0x60] sm:$0x1] 0.0
        %420 = vst [vmem:[#allocation3 + $0x78] sm:$0x1] 0.0
        %421 = vst [vmem:[#allocation3 + $0x90] sm:$0x1] 0.0
        %422 = vst [vmem:[#allocation3 + $0xa8] sm:$0x1] 0.0
        %423 = vst [vmem:[#allocation3 + $0xc0] sm:$0x1] 0.0
        %424 = vst [vmem:[#allocation3 + $0xd8] sm:$0x1] 0.0
        %425 = vst [vmem:[#allocation3 + $0xf0] sm:$0x1] 0.0
        %426 = vst [vmem:[#allocation3 + $0x108] sm:$0x1] 0.0
        %427 = vst [vmem:[#allocation3 + $0x120] sm:$0x1] 0.0
        %428 = vst [vmem:[#allocation3 + $0x138] sm:$0x1] 0.0
        %429 = vst [vmem:[#allocation3 + $0x150] sm:$0x1] 0.0
        %430 = vst [vmem:[#allocation3 + $0x168] sm:$0x1] 0.0
        %431 = vst [vmem:[#allocation3 + $0x180] sm:$0x1] 0.0
        %432 = vst [vmem:[#allocation3 + $0x198] sm:$0x1] 0.0
        %433 = vst [vmem:[#allocation3 + $0x11] sm:$0x1] 0.0
        %434 = vst [vmem:[#allocation3 + $0x29] sm:$0x1] 0.0
        %435 = vst [vmem:[#allocation3 + $0x41] sm:$0x1] 0.0
        %436 = vst [vmem:[#allocation3 + $0x59] sm:$0x1] 0.0
        %437 = vst [vmem:[#allocation3 + $0x71] sm:$0x1] 0.0
        %438 = vst [vmem:[#allocation3 + $0x89] sm:$0x1] 0.0
        %439 = vst [vmem:[#allocation3 + $0xa1] sm:$0x1] 0.0
        %440 = vst [vmem:[#allocation3 + $0xb9] sm:$0x1] 0.0
        %441 = vst [vmem:[#allocation3 + $0xd1] sm:$0x1] 0.0
        %442 = vst [vmem:[#allocation3 + $0xe9] sm:$0x1] 0.0
        %443 = vst [vmem:[#allocation3 + $0x101] sm:$0x1] 0.0
        %444 = vst [vmem:[#allocation3 + $0x119] sm:$0x1] 0.0
        %445 = vst [vmem:[#allocation3 + $0x131] sm:$0x1] 0.0
        %446 = vst [vmem:[#allocation3 + $0x149] sm:$0x1] 0.0
        %447 = vst [vmem:[#allocation3 + $0x161] sm:$0x1] 0.0
        %448 = vst [vmem:[#allocation3 + $0x179] sm:$0x1] 0.0
        %449 = vst [vmem:[#allocation3 + $0x191] sm:$0x1] 0.0
        %450 = vst [vmem:[#allocation3 + $0x1a9] sm:$0x1] 0.0
        %v451 = vld [vmem:[%s305] sm:$0xff]
        %v452 = vld [vmem:[%s305 + $0x8] sm:$0xff]
        %v453 = vld [vmem:[%s305 + $0x10] sm:$0xff]
        %v454 = vld [vmem:[%s305 + $0x18] sm:$0xff]
        %v455 = vld [vmem:[%s305 + $0x20] sm:$0xff]
        %v456 = vld [vmem:[%s305 + $0x28] sm:$0xff]
        %v457 = vld [vmem:[%s305 + $0x30] sm:$0xff]
        %v458 = vld [vmem:[%s305 + $0x38] sm:$0xff]
        %v459 = vld [vmem:[%s305 + $0x40] sm:$0xff]
        %v460 = vld [vmem:[%s305 + $0x48] sm:$0xff]
        %v461 = vld [vmem:[%s305 + $0x50] sm:$0xff]
        %v462 = vld [vmem:[%s305 + $0x58] sm:$0xff]
        %v463 = vld [vmem:[%s305 + $0x60] sm:$0xff]
        %v464 = vld [vmem:[%s305 + $0x68] sm:$0xff]
        %v465 = vld [vmem:[%s305 + $0x70] sm:$0xff]
        %v466 = vld [vmem:[%s305 + $0x78] sm:$0xff]
        %v467 = vld [vmem:[%s305 + $0x80] sm:$0xff]
        %v468 = vld [vmem:[%s305 + $0x88] sm:$0xff]
        %v469 = vld [vmem:[%s305 + $0x90] sm:$0xff]
        %v470 = vld [vmem:[%s305 + $0x98] sm:$0xff]
        %v471 = vld [vmem:[%s305 + $0xa0] sm:$0xff]
        %v472 = vld [vmem:[%s305 + $0xa8] sm:$0xff]
        %v473 = vld [vmem:[%s305 + $0xb0] sm:$0xff]
        %v474 = vld [vmem:[%s305 + $0xb8] sm:$0xff]
        %v475 = vld [vmem:[%s305 + $0xc0] sm:$0xff]
        %v476 = vld [vmem:[%s305 + $0xc8] sm:$0xff]
        %v477 = vld [vmem:[%s305 + $0xd0] sm:$0xff]
        %v478 = vld [vmem:[%s305 + $0xd8] sm:$0xff]
        %v479 = vld [vmem:[%s305 + $0xe0] sm:$0xff]
        %v480 = vld [vmem:[%s305 + $0xe8] sm:$0xff]
        %v481 = vld [vmem:[%s305 + $0xf0] sm:$0xff]
        %v482 = vld [vmem:[%s305 + $0xf8] sm:$0xff]
        %s483 = scalar_lea.vmem [#allocation2], 24
        %484 = vst [vmem:[%s483 + $0x1] sm:$0xff] %v451
        %485 = vst [vmem:[%s483 + $0x9] sm:$0xff] %v452
        %486 = vst [vmem:[%s483 + $0x19] sm:$0xff] %v453
        %487 = vst [vmem:[%s483 + $0x21] sm:$0xff] %v454
        %488 = vst [vmem:[%s483 + $0x31] sm:$0xff] %v455
        %489 = vst [vmem:[%s483 + $0x39] sm:$0xff] %v456
        %490 = vst [vmem:[%s483 + $0x49] sm:$0xff] %v457
        %491 = vst [vmem:[%s483 + $0x51] sm:$0xff] %v458
        %492 = vst [vmem:[%s483 + $0x61] sm:$0xff] %v459
        %493 = vst [vmem:[%s483 + $0x69] sm:$0xff] %v460
        %494 = vst [vmem:[%s483 + $0x79] sm:$0xff] %v461
        %495 = vst [vmem:[%s483 + $0x81] sm:$0xff] %v462
        %496 = vst [vmem:[%s483 + $0x91] sm:$0xff] %v463
        %497 = vst [vmem:[%s483 + $0x99] sm:$0xff] %v464
        %498 = vst [vmem:[%s483 + $0xa9] sm:$0xff] %v465
        %499 = vst [vmem:[%s483 + $0xb1] sm:$0xff] %v466
        %500 = vst [vmem:[%s483 + $0xc1] sm:$0xff] %v467
        %501 = vst [vmem:[%s483 + $0xc9] sm:$0xff] %v468
        %502 = vst [vmem:[%s483 + $0xd9] sm:$0xff] %v469
        %503 = vst [vmem:[%s483 + $0xe1] sm:$0xff] %v470
        %504 = vst [vmem:[%s483 + $0xf1] sm:$0xff] %v471
        %505 = vst [vmem:[%s483 + $0xf9] sm:$0xff] %v472
        %506 = vst [vmem:[%s483 + $0x109] sm:$0xff] %v473
        %507 = vst [vmem:[%s483 + $0x111] sm:$0xff] %v474
        %508 = vst [vmem:[%s483 + $0x121] sm:$0xff] %v475
        %509 = vst [vmem:[%s483 + $0x129] sm:$0xff] %v476
        %510 = vst [vmem:[%s483 + $0x139] sm:$0xff] %v477
        %511 = vst [vmem:[%s483 + $0x141] sm:$0xff] %v478
        %512 = vst [vmem:[%s483 + $0x151] sm:$0xff] %v479
        %513 = vst [vmem:[%s483 + $0x159] sm:$0xff] %v480
        %514 = vst [vmem:[%s483 + $0x169] sm:$0xff] %v481
        %515 = vst [vmem:[%s483 + $0x171] sm:$0xff] %v482
        %v516 = vld [vmem:[%s314] sm:$0xff]
        %v517 = vld [vmem:[%s314 + $0x8] sm:$0xff]
        %v518 = vld [vmem:[%s314 + $0x10] sm:$0xff]
        %v519 = vld [vmem:[%s314 + $0x18] sm:$0xff]
        %v520 = vld [vmem:[%s314 + $0x20] sm:$0xff]
        %v521 = vld [vmem:[%s314 + $0x28] sm:$0xff]
        %v522 = vld [vmem:[%s314 + $0x30] sm:$0xff]
        %v523 = vld [vmem:[%s314 + $0x38] sm:$0xff]
        %v524 = vld [vmem:[%s314 + $0x40] sm:$0xff]
        %v525 = vld [vmem:[%s314 + $0x48] sm:$0xff]
        %v526 = vld [vmem:[%s314 + $0x50] sm:$0xff]
        %v527 = vld [vmem:[%s314 + $0x58] sm:$0xff]
        %v528 = vld [vmem:[%s314 + $0x60] sm:$0xff]
        %v529 = vld [vmem:[%s314 + $0x68] sm:$0xff]
        %v530 = vld [vmem:[%s314 + $0x70] sm:$0xff]
        %v531 = vld [vmem:[%s314 + $0x78] sm:$0xff]
        %v532 = vld [vmem:[%s314 + $0x80] sm:$0xff]
        %v533 = vld [vmem:[%s314 + $0x88] sm:$0xff]
        %v534 = vld [vmem:[%s314 + $0x90] sm:$0xff]
        %v535 = vld [vmem:[%s314 + $0x98] sm:$0xff]
        %v536 = vld [vmem:[%s314 + $0xa0] sm:$0xff]
        %v537 = vld [vmem:[%s314 + $0xa8] sm:$0xff]
        %v538 = vld [vmem:[%s314 + $0xb0] sm:$0xff]
        %v539 = vld [vmem:[%s314 + $0xb8] sm:$0xff]
        %v540 = vld [vmem:[%s314 + $0xc0] sm:$0xff]
        %v541 = vld [vmem:[%s314 + $0xc8] sm:$0xff]
        %v542 = vld [vmem:[%s314 + $0xd0] sm:$0xff]
        %v543 = vld [vmem:[%s314 + $0xd8] sm:$0xff]
        %v544 = vld [vmem:[%s314 + $0xe0] sm:$0xff]
        %v545 = vld [vmem:[%s314 + $0xe8] sm:$0xff]
        %v546 = vld [vmem:[%s314 + $0xf0] sm:$0xff]
        %v547 = vld [vmem:[%s314 + $0xf8] sm:$0xff]
        %s548 = scalar_lea.vmem [#allocation3], 24
        %549 = vst [vmem:[%s548 + $0x1] sm:$0xff] %v516
        %550 = vst [vmem:[%s548 + $0x9] sm:$0xff] %v517
        %551 = vst [vmem:[%s548 + $0x19] sm:$0xff] %v518
        %552 = vst [vmem:[%s548 + $0x21] sm:$0xff] %v519
        %553 = vst [vmem:[%s548 + $0x31] sm:$0xff] %v520
        %554 = vst [vmem:[%s548 + $0x39] sm:$0xff] %v521
        %555 = vst [vmem:[%s548 + $0x49] sm:$0xff] %v522
        %556 = vst [vmem:[%s548 + $0x51] sm:$0xff] %v523
        %557 = vst [vmem:[%s548 + $0x61] sm:$0xff] %v524
        %558 = vst [vmem:[%s548 + $0x69] sm:$0xff] %v525
        %559 = vst [vmem:[%s548 + $0x79] sm:$0xff] %v526
        %560 = vst [vmem:[%s548 + $0x81] sm:$0xff] %v527
        %561 = vst [vmem:[%s548 + $0x91] sm:$0xff] %v528
        %562 = vst [vmem:[%s548 + $0x99] sm:$0xff] %v529
        %563 = vst [vmem:[%s548 + $0xa9] sm:$0xff] %v530
        %564 = vst [vmem:[%s548 + $0xb1] sm:$0xff] %v531
        %565 = vst [vmem:[%s548 + $0xc1] sm:$0xff] %v532
        %566 = vst [vmem:[%s548 + $0xc9] sm:$0xff] %v533
        %567 = vst [vmem:[%s548 + $0xd9] sm:$0xff] %v534
        %568 = vst [vmem:[%s548 + $0xe1] sm:$0xff] %v535
        %569 = vst [vmem:[%s548 + $0xf1] sm:$0xff] %v536
        %570 = vst [vmem:[%s548 + $0xf9] sm:$0xff] %v537
        %571 = vst [vmem:[%s548 + $0x109] sm:$0xff] %v538
        %572 = vst [vmem:[%s548 + $0x111] sm:$0xff] %v539
        %573 = vst [vmem:[%s548 + $0x121] sm:$0xff] %v540
        %574 = vst [vmem:[%s548 + $0x129] sm:$0xff] %v541
        %575 = vst [vmem:[%s548 + $0x139] sm:$0xff] %v542
        %576 = vst [vmem:[%s548 + $0x141] sm:$0xff] %v543
        %577 = vst [vmem:[%s548 + $0x151] sm:$0xff] %v544
        %578 = vst [vmem:[%s548 + $0x159] sm:$0xff] %v545
        %579 = vst [vmem:[%s548 + $0x169] sm:$0xff] %v546
        %580 = vst [vmem:[%s548 + $0x171] sm:$0xff] %v547
        %v581 = vld [vmem:[#allocation2] sm:$0xff]
        %v582 = vld [vmem:[#allocation2 + $0x8] sm:$0xff]
        %v583 = vld [vmem:[#allocation2 + $0x18] sm:$0xff]
        %v584 = vld [vmem:[#allocation2 + $0x20] sm:$0xff]
        %v585 = vld [vmem:[#allocation2 + $0x30] sm:$0xff]
        %v586 = vld [vmem:[#allocation2 + $0x38] sm:$0xff]
        %v587 = vld [vmem:[#allocation2 + $0x48] sm:$0xff]
        %v588 = vld [vmem:[#allocation2 + $0x50] sm:$0xff]
        %v589 = vld [vmem:[#allocation2 + $0x60] sm:$0xff]
        %v590 = vld [vmem:[#allocation2 + $0x68] sm:$0xff]
        %v591 = vld [vmem:[#allocation2 + $0x78] sm:$0xff]
        %v592 = vld [vmem:[#allocation2 + $0x80] sm:$0xff]
        %v593 = vld [vmem:[#allocation2 + $0x90] sm:$0xff]
        %v594 = vld [vmem:[#allocation2 + $0x98] sm:$0xff]
        %v595 = vld [vmem:[#allocation2 + $0xa8] sm:$0xff]
        %v596 = vld [vmem:[#allocation2 + $0xb0] sm:$0xff]
        %v597 = vld [vmem:[#allocation2 + $0xc0] sm:$0xff]
        %v598 = vld [vmem:[#allocation2 + $0xc8] sm:$0xff]
        %v599 = vld [vmem:[#allocation2 + $0xd8] sm:$0xff]
        %v600 = vld [vmem:[#allocation2 + $0xe0] sm:$0xff]
        %v601 = vld [vmem:[#allocation2 + $0xf0] sm:$0xff]
        %v602 = vld [vmem:[#allocation2 + $0xf8] sm:$0xff]
        %v603 = vld [vmem:[#allocation2 + $0x108] sm:$0xff]
        %v604 = vld [vmem:[#allocation2 + $0x110] sm:$0xff]
        %v605 = vld [vmem:[#allocation2 + $0x120] sm:$0xff]
        %v606 = vld [vmem:[#allocation2 + $0x128] sm:$0xff]
        %v607 = vld [vmem:[#allocation2 + $0x138] sm:$0xff]
        %v608 = vld [vmem:[#allocation2 + $0x140] sm:$0xff]
        %v609 = vld [vmem:[#allocation2 + $0x150] sm:$0xff]
        %v610 = vld [vmem:[#allocation2 + $0x158] sm:$0xff]
        %v611 = vld [vmem:[#allocation2 + $0x168] sm:$0xff]
        %v612 = vld [vmem:[#allocation2 + $0x170] sm:$0xff]
        %v613 = vld [vmem:[#allocation2 + $0x180] sm:$0xff]
        %v614 = vld [vmem:[#allocation2 + $0x188] sm:$0xff]
        %v615 = vld [vmem:[#allocation2 + $0x198] sm:$0xff]
        %v616 = vld [vmem:[#allocation2 + $0x1a0] sm:$0xff]
        %v617 = vpack.c.bf16 %v582, %v581
        %v618 = vpack.c.bf16 %v584, %v583
        %v619 = vpack.c.bf16 %v586, %v585
        %v620 = vpack.c.bf16 %v588, %v587
        %v621 = vpack.c.bf16 %v590, %v589
        %v622 = vpack.c.bf16 %v592, %v591
        %v623 = vpack.c.bf16 %v594, %v593
        %v624 = vpack.c.bf16 %v596, %v595
        %v625 = vpack.c.bf16 %v598, %v597
        %v626 = vpack.c.bf16 %v600, %v599
        %v627 = vpack.c.bf16 %v602, %v601
        %v628 = vpack.c.bf16 %v604, %v603
        %v629 = vpack.c.bf16 %v606, %v605
        %v630 = vpack.c.bf16 %v608, %v607
        %v631 = vpack.c.bf16 %v610, %v609
        %v632 = vpack.c.bf16 %v612, %v611
        %v633 = vpack.c.bf16 %v614, %v613
        %v634 = vpack.c.bf16 %v616, %v615
        %635 = vst [vmem:[#allocation4] sm:$0xff] %v617
        %636 = vst [vmem:[#allocation4 + $0x18] sm:$0xff] %v618
        %637 = vst [vmem:[#allocation4 + $0x30] sm:$0xff] %v619
        %638 = vst [vmem:[#allocation4 + $0x48] sm:$0xff] %v620
        %639 = vst [vmem:[#allocation4 + $0x60] sm:$0xff] %v621
        %640 = vst [vmem:[#allocation4 + $0x78] sm:$0xff] %v622
        %641 = vst [vmem:[#allocation4 + $0x90] sm:$0xff] %v623
        %642 = vst [vmem:[#allocation4 + $0xa8] sm:$0xff] %v624
        %643 = vst [vmem:[#allocation4 + $0xc0] sm:$0xff] %v625
        %644 = vst [vmem:[#allocation4 + $0xd8] sm:$0xff] %v626
        %645 = vst [vmem:[#allocation4 + $0xf0] sm:$0xff] %v627
        %646 = vst [vmem:[#allocation4 + $0x108] sm:$0xff] %v628
        %647 = vst [vmem:[#allocation4 + $0x120] sm:$0xff] %v629
        %648 = vst [vmem:[#allocation4 + $0x138] sm:$0xff] %v630
        %649 = vst [vmem:[#allocation4 + $0x150] sm:$0xff] %v631
        %650 = vst [vmem:[#allocation4 + $0x168] sm:$0xff] %v632
        %651 = vst [vmem:[#allocation4 + $0x180] sm:$0xff] %v633
        %652 = vst [vmem:[#allocation4 + $0x198] sm:$0xff] %v634
        %v653 = vld [vmem:[#allocation2 + $0x1] sm:$0xff]
        %v654 = vld [vmem:[#allocation2 + $0x9] sm:$0xff]
        %v655 = vld [vmem:[#allocation2 + $0x19] sm:$0xff]
        %v656 = vld [vmem:[#allocation2 + $0x21] sm:$0xff]
        %v657 = vld [vmem:[#allocation2 + $0x31] sm:$0xff]
        %v658 = vld [vmem:[#allocation2 + $0x39] sm:$0xff]
        %v659 = vld [vmem:[#allocation2 + $0x49] sm:$0xff]
        %v660 = vld [vmem:[#allocation2 + $0x51] sm:$0xff]
        %v661 = vld [vmem:[#allocation2 + $0x61] sm:$0xff]
        %v662 = vld [vmem:[#allocation2 + $0x69] sm:$0xff]
        %v663 = vld [vmem:[#allocation2 + $0x79] sm:$0xff]
        %v664 = vld [vmem:[#allocation2 + $0x81] sm:$0xff]
        %v665 = vld [vmem:[#allocation2 + $0x91] sm:$0xff]
        %v666 = vld [vmem:[#allocation2 + $0x99] sm:$0xff]
        %v667 = vld [vmem:[#allocation2 + $0xa9] sm:$0xff]
        %v668 = vld [vmem:[#allocation2 + $0xb1] sm:$0xff]
        %v669 = vld [vmem:[#allocation2 + $0xc1] sm:$0xff]
        %v670 = vld [vmem:[#allocation2 + $0xc9] sm:$0xff]
        %v671 = vld [vmem:[#allocation2 + $0xd9] sm:$0xff]
        %v672 = vld [vmem:[#allocation2 + $0xe1] sm:$0xff]
        %v673 = vld [vmem:[#allocation2 + $0xf1] sm:$0xff]
        %v674 = vld [vmem:[#allocation2 + $0xf9] sm:$0xff]
        %v675 = vld [vmem:[#allocation2 + $0x109] sm:$0xff]
        %v676 = vld [vmem:[#allocation2 + $0x111] sm:$0xff]
        %v677 = vld [vmem:[#allocation2 + $0x121] sm:$0xff]
        %v678 = vld [vmem:[#allocation2 + $0x129] sm:$0xff]
        %v679 = vld [vmem:[#allocation2 + $0x139] sm:$0xff]
        %v680 = vld [vmem:[#allocation2 + $0x141] sm:$0xff]
        %v681 = vld [vmem:[#allocation2 + $0x151] sm:$0xff]
        %v682 = vld [vmem:[#allocation2 + $0x159] sm:$0xff]
        %v683 = vld [vmem:[#allocation2 + $0x169] sm:$0xff]
        %v684 = vld [vmem:[#allocation2 + $0x171] sm:$0xff]
        %v685 = vld [vmem:[#allocation2 + $0x181] sm:$0xff]
        %v686 = vld [vmem:[#allocation2 + $0x189] sm:$0xff]
        %v687 = vld [vmem:[#allocation2 + $0x199] sm:$0xff]
        %v688 = vld [vmem:[#allocation2 + $0x1a1] sm:$0xff]
        %v689 = vpack.c.bf16 %v654, %v653
        %v690 = vpack.c.bf16 %v656, %v655
        %v691 = vpack.c.bf16 %v658, %v657
        %v692 = vpack.c.bf16 %v660, %v659
        %v693 = vpack.c.bf16 %v662, %v661
        %v694 = vpack.c.bf16 %v664, %v663
        %v695 = vpack.c.bf16 %v666, %v665
        %v696 = vpack.c.bf16 %v668, %v667
        %v697 = vpack.c.bf16 %v670, %v669
        %v698 = vpack.c.bf16 %v672, %v671
        %v699 = vpack.c.bf16 %v674, %v673
        %v700 = vpack.c.bf16 %v676, %v675
        %v701 = vpack.c.bf16 %v678, %v677
        %v702 = vpack.c.bf16 %v680, %v679
        %v703 = vpack.c.bf16 %v682, %v681
        %v704 = vpack.c.bf16 %v684, %v683
        %v705 = vpack.c.bf16 %v686, %v685
        %v706 = vpack.c.bf16 %v688, %v687
        %707 = vst [vmem:[#allocation4 + $0x8] sm:$0xff] %v689
        %708 = vst [vmem:[#allocation4 + $0x20] sm:$0xff] %v690
        %709 = vst [vmem:[#allocation4 + $0x38] sm:$0xff] %v691
        %710 = vst [vmem:[#allocation4 + $0x50] sm:$0xff] %v692
        %711 = vst [vmem:[#allocation4 + $0x68] sm:$0xff] %v693
        %712 = vst [vmem:[#allocation4 + $0x80] sm:$0xff] %v694
        %713 = vst [vmem:[#allocation4 + $0x98] sm:$0xff] %v695
        %714 = vst [vmem:[#allocation4 + $0xb0] sm:$0xff] %v696
        %715 = vst [vmem:[#allocation4 + $0xc8] sm:$0xff] %v697
        %716 = vst [vmem:[#allocation4 + $0xe0] sm:$0xff] %v698
        %717 = vst [vmem:[#allocation4 + $0xf8] sm:$0xff] %v699
        %718 = vst [vmem:[#allocation4 + $0x110] sm:$0xff] %v700
        %719 = vst [vmem:[#allocation4 + $0x128] sm:$0xff] %v701
        %720 = vst [vmem:[#allocation4 + $0x140] sm:$0xff] %v702
        %721 = vst [vmem:[#allocation4 + $0x158] sm:$0xff] %v703
        %722 = vst [vmem:[#allocation4 + $0x170] sm:$0xff] %v704
        %723 = vst [vmem:[#allocation4 + $0x188] sm:$0xff] %v705
        %724 = vst [vmem:[#allocation4 + $0x1a0] sm:$0xff] %v706
        %v725 = vld [vmem:[#allocation2 + $0x2] sm:$0xff]
        %v726 = vld [vmem:[#allocation2 + $0xa] sm:$0xff]
        %v727 = vld [vmem:[#allocation2 + $0x1a] sm:$0xff]
        %v728 = vld [vmem:[#allocation2 + $0x22] sm:$0xff]
        %v729 = vld [vmem:[#allocation2 + $0x32] sm:$0xff]
        %v730 = vld [vmem:[#allocation2 + $0x3a] sm:$0xff]
        %v731 = vld [vmem:[#allocation2 + $0x4a] sm:$0xff]
        %v732 = vld [vmem:[#allocation2 + $0x52] sm:$0xff]
        %v733 = vld [vmem:[#allocation2 + $0x62] sm:$0xff]
        %v734 = vld [vmem:[#allocation2 + $0x6a] sm:$0xff]
        %v735 = vld [vmem:[#allocation2 + $0x7a] sm:$0xff]
        %v736 = vld [vmem:[#allocation2 + $0x82] sm:$0xff]
        %v737 = vld [vmem:[#allocation2 + $0x92] sm:$0xff]
        %v738 = vld [vmem:[#allocation2 + $0x9a] sm:$0xff]
        %v739 = vld [vmem:[#allocation2 + $0xaa] sm:$0xff]
        %v740 = vld [vmem:[#allocation2 + $0xb2] sm:$0xff]
        %v741 = vld [vmem:[#allocation2 + $0xc2] sm:$0xff]
        %v742 = vld [vmem:[#allocation2 + $0xca] sm:$0xff]
        %v743 = vld [vmem:[#allocation2 + $0xda] sm:$0xff]
        %v744 = vld [vmem:[#allocation2 + $0xe2] sm:$0xff]
        %v745 = vld [vmem:[#allocation2 + $0xf2] sm:$0xff]
        %v746 = vld [vmem:[#allocation2 + $0xfa] sm:$0xff]
        %v747 = vld [vmem:[#allocation2 + $0x10a] sm:$0xff]
        %v748 = vld [vmem:[#allocation2 + $0x112] sm:$0xff]
        %v749 = vld [vmem:[#allocation2 + $0x122] sm:$0xff]
        %v750 = vld [vmem:[#allocation2 + $0x12a] sm:$0xff]
        %v751 = vld [vmem:[#allocation2 + $0x13a] sm:$0xff]
        %v752 = vld [vmem:[#allocation2 + $0x142] sm:$0xff]
        %v753 = vld [vmem:[#allocation2 + $0x152] sm:$0xff]
        %v754 = vld [vmem:[#allocation2 + $0x15a] sm:$0xff]
        %v755 = vld [vmem:[#allocation2 + $0x16a] sm:$0xff]
        %v756 = vld [vmem:[#allocation2 + $0x172] sm:$0xff]
        %v757 = vld [vmem:[#allocation2 + $0x182] sm:$0xff]
        %v758 = vld [vmem:[#allocation2 + $0x18a] sm:$0xff]
        %v759 = vld [vmem:[#allocation2 + $0x19a] sm:$0xff]
        %v760 = vld [vmem:[#allocation2 + $0x1a2] sm:$0xff]
        %v761 = vpack.c.bf16 %v726, %v725
        %v762 = vpack.c.bf16 %v728, %v727
        %v763 = vpack.c.bf16 %v730, %v729
        %v764 = vpack.c.bf16 %v732, %v731
        %v765 = vpack.c.bf16 %v734, %v733
        %v766 = vpack.c.bf16 %v736, %v735
        %v767 = vpack.c.bf16 %v738, %v737
        %v768 = vpack.c.bf16 %v740, %v739
        %v769 = vpack.c.bf16 %v742, %v741
        %v770 = vpack.c.bf16 %v744, %v743
        %v771 = vpack.c.bf16 %v746, %v745
        %v772 = vpack.c.bf16 %v748, %v747
        %v773 = vpack.c.bf16 %v750, %v749
        %v774 = vpack.c.bf16 %v752, %v751
        %v775 = vpack.c.bf16 %v754, %v753
        %v776 = vpack.c.bf16 %v756, %v755
        %v777 = vpack.c.bf16 %v758, %v757
        %v778 = vpack.c.bf16 %v760, %v759
        %779 = vst [vmem:[#allocation4 + $0x10] sm:$0xff] %v761
        %780 = vst [vmem:[#allocation4 + $0x28] sm:$0xff] %v762
        %781 = vst [vmem:[#allocation4 + $0x40] sm:$0xff] %v763
        %782 = vst [vmem:[#allocation4 + $0x58] sm:$0xff] %v764
        %783 = vst [vmem:[#allocation4 + $0x70] sm:$0xff] %v765
        %784 = vst [vmem:[#allocation4 + $0x88] sm:$0xff] %v766
        %785 = vst [vmem:[#allocation4 + $0xa0] sm:$0xff] %v767
        %786 = vst [vmem:[#allocation4 + $0xb8] sm:$0xff] %v768
        %787 = vst [vmem:[#allocation4 + $0xd0] sm:$0xff] %v769
        %788 = vst [vmem:[#allocation4 + $0xe8] sm:$0xff] %v770
        %789 = vst [vmem:[#allocation4 + $0x100] sm:$0xff] %v771
        %790 = vst [vmem:[#allocation4 + $0x118] sm:$0xff] %v772
        %791 = vst [vmem:[#allocation4 + $0x130] sm:$0xff] %v773
        %792 = vst [vmem:[#allocation4 + $0x148] sm:$0xff] %v774
        %793 = vst [vmem:[#allocation4 + $0x160] sm:$0xff] %v775
        %794 = vst [vmem:[#allocation4 + $0x178] sm:$0xff] %v776
        %795 = vst [vmem:[#allocation4 + $0x190] sm:$0xff] %v777
        %796 = vst [vmem:[#allocation4 + $0x1a8] sm:$0xff] %v778
        %v797 = vld [vmem:[#allocation3] sm:$0xff]
        %v798 = vld [vmem:[#allocation3 + $0x8] sm:$0xff]
        %v799 = vld [vmem:[#allocation3 + $0x18] sm:$0xff]
        %v800 = vld [vmem:[#allocation3 + $0x20] sm:$0xff]
        %v801 = vld [vmem:[#allocation3 + $0x30] sm:$0xff]
        %v802 = vld [vmem:[#allocation3 + $0x38] sm:$0xff]
        %v803 = vld [vmem:[#allocation3 + $0x48] sm:$0xff]
        %v804 = vld [vmem:[#allocation3 + $0x50] sm:$0xff]
        %v805 = vld [vmem:[#allocation3 + $0x60] sm:$0xff]
        %v806 = vld [vmem:[#allocation3 + $0x68] sm:$0xff]
        %v807 = vld [vmem:[#allocation3 + $0x78] sm:$0xff]
        %v808 = vld [vmem:[#allocation3 + $0x80] sm:$0xff]
        %v809 = vld [vmem:[#allocation3 + $0x90] sm:$0xff]
        %v810 = vld [vmem:[#allocation3 + $0x98] sm:$0xff]
        %v811 = vld [vmem:[#allocation3 + $0xa8] sm:$0xff]
        %v812 = vld [vmem:[#allocation3 + $0xb0] sm:$0xff]
        %v813 = vld [vmem:[#allocation3 + $0xc0] sm:$0xff]
        %v814 = vld [vmem:[#allocation3 + $0xc8] sm:$0xff]
        %v815 = vld [vmem:[#allocation3 + $0xd8] sm:$0xff]
        %v816 = vld [vmem:[#allocation3 + $0xe0] sm:$0xff]
        %v817 = vld [vmem:[#allocation3 + $0xf0] sm:$0xff]
        %v818 = vld [vmem:[#allocation3 + $0xf8] sm:$0xff]
        %v819 = vld [vmem:[#allocation3 + $0x108] sm:$0xff]
        %v820 = vld [vmem:[#allocation3 + $0x110] sm:$0xff]
        %v821 = vld [vmem:[#allocation3 + $0x120] sm:$0xff]
        %v822 = vld [vmem:[#allocation3 + $0x128] sm:$0xff]
        %v823 = vld [vmem:[#allocation3 + $0x138] sm:$0xff]
        %v824 = vld [vmem:[#allocation3 + $0x140] sm:$0xff]
        %v825 = vld [vmem:[#allocation3 + $0x150] sm:$0xff]
        %v826 = vld [vmem:[#allocation3 + $0x158] sm:$0xff]
        %v827 = vld [vmem:[#allocation3 + $0x168] sm:$0xff]
        %v828 = vld [vmem:[#allocation3 + $0x170] sm:$0xff]
        %v829 = vld [vmem:[#allocation3 + $0x180] sm:$0xff]
        %v830 = vld [vmem:[#allocation3 + $0x188] sm:$0xff]
        %v831 = vld [vmem:[#allocation3 + $0x198] sm:$0xff]
        %v832 = vld [vmem:[#allocation3 + $0x1a0] sm:$0xff]
        %v833 = vpack.c.bf16 %v798, %v797
        %v834 = vpack.c.bf16 %v800, %v799
        %v835 = vpack.c.bf16 %v802, %v801
        %v836 = vpack.c.bf16 %v804, %v803
        %v837 = vpack.c.bf16 %v806, %v805
        %v838 = vpack.c.bf16 %v808, %v807
        %v839 = vpack.c.bf16 %v810, %v809
        %v840 = vpack.c.bf16 %v812, %v811
        %v841 = vpack.c.bf16 %v814, %v813
        %v842 = vpack.c.bf16 %v816, %v815
        %v843 = vpack.c.bf16 %v818, %v817
        %v844 = vpack.c.bf16 %v820, %v819
        %v845 = vpack.c.bf16 %v822, %v821
        %v846 = vpack.c.bf16 %v824, %v823
        %v847 = vpack.c.bf16 %v826, %v825
        %v848 = vpack.c.bf16 %v828, %v827
        %v849 = vpack.c.bf16 %v830, %v829
        %v850 = vpack.c.bf16 %v832, %v831
        %851 = vst [vmem:[#allocation5] sm:$0xff] %v833
        %852 = vst [vmem:[#allocation5 + $0x18] sm:$0xff] %v834
        %853 = vst [vmem:[#allocation5 + $0x30] sm:$0xff] %v835
        %854 = vst [vmem:[#allocation5 + $0x48] sm:$0xff] %v836
        %855 = vst [vmem:[#allocation5 + $0x60] sm:$0xff] %v837
        %856 = vst [vmem:[#allocation5 + $0x78] sm:$0xff] %v838
        %857 = vst [vmem:[#allocation5 + $0x90] sm:$0xff] %v839
        %858 = vst [vmem:[#allocation5 + $0xa8] sm:$0xff] %v840
        %859 = vst [vmem:[#allocation5 + $0xc0] sm:$0xff] %v841
        %860 = vst [vmem:[#allocation5 + $0xd8] sm:$0xff] %v842
        %861 = vst [vmem:[#allocation5 + $0xf0] sm:$0xff] %v843
        %862 = vst [vmem:[#allocation5 + $0x108] sm:$0xff] %v844
        %863 = vst [vmem:[#allocation5 + $0x120] sm:$0xff] %v845
        %864 = vst [vmem:[#allocation5 + $0x138] sm:$0xff] %v846
        %865 = vst [vmem:[#allocation5 + $0x150] sm:$0xff] %v847
        %866 = vst [vmem:[#allocation5 + $0x168] sm:$0xff] %v848
        %867 = vst [vmem:[#allocation5 + $0x180] sm:$0xff] %v849
        %868 = vst [vmem:[#allocation5 + $0x198] sm:$0xff] %v850
        %v869 = vld [vmem:[#allocation3 + $0x1] sm:$0xff]
        %v870 = vld [vmem:[#allocation3 + $0x9] sm:$0xff]
        %v871 = vld [vmem:[#allocation3 + $0x19] sm:$0xff]
        %v872 = vld [vmem:[#allocation3 + $0x21] sm:$0xff]
        %v873 = vld [vmem:[#allocation3 + $0x31] sm:$0xff]
        %v874 = vld [vmem:[#allocation3 + $0x39] sm:$0xff]
        %v875 = vld [vmem:[#allocation3 + $0x49] sm:$0xff]
        %v876 = vld [vmem:[#allocation3 + $0x51] sm:$0xff]
        %v877 = vld [vmem:[#allocation3 + $0x61] sm:$0xff]
        %v878 = vld [vmem:[#allocation3 + $0x69] sm:$0xff]
        %v879 = vld [vmem:[#allocation3 + $0x79] sm:$0xff]
        %v880 = vld [vmem:[#allocation3 + $0x81] sm:$0xff]
        %v881 = vld [vmem:[#allocation3 + $0x91] sm:$0xff]
        %v882 = vld [vmem:[#allocation3 + $0x99] sm:$0xff]
        %v883 = vld [vmem:[#allocation3 + $0xa9] sm:$0xff]
        %v884 = vld [vmem:[#allocation3 + $0xb1] sm:$0xff]
        %v885 = vld [vmem:[#allocation3 + $0xc1] sm:$0xff]
        %v886 = vld [vmem:[#allocation3 + $0xc9] sm:$0xff]
        %v887 = vld [vmem:[#allocation3 + $0xd9] sm:$0xff]
        %v888 = vld [vmem:[#allocation3 + $0xe1] sm:$0xff]
        %v889 = vld [vmem:[#allocation3 + $0xf1] sm:$0xff]
        %v890 = vld [vmem:[#allocation3 + $0xf9] sm:$0xff]
        %v891 = vld [vmem:[#allocation3 + $0x109] sm:$0xff]
        %v892 = vld [vmem:[#allocation3 + $0x111] sm:$0xff]
        %v893 = vld [vmem:[#allocation3 + $0x121] sm:$0xff]
        %v894 = vld [vmem:[#allocation3 + $0x129] sm:$0xff]
        %v895 = vld [vmem:[#allocation3 + $0x139] sm:$0xff]
        %v896 = vld [vmem:[#allocation3 + $0x141] sm:$0xff]
        %v897 = vld [vmem:[#allocation3 + $0x151] sm:$0xff]
        %v898 = vld [vmem:[#allocation3 + $0x159] sm:$0xff]
        %v899 = vld [vmem:[#allocation3 + $0x169] sm:$0xff]
        %v900 = vld [vmem:[#allocation3 + $0x171] sm:$0xff]
        %v901 = vld [vmem:[#allocation3 + $0x181] sm:$0xff]
        %v902 = vld [vmem:[#allocation3 + $0x189] sm:$0xff]
        %v903 = vld [vmem:[#allocation3 + $0x199] sm:$0xff]
        %v904 = vld [vmem:[#allocation3 + $0x1a1] sm:$0xff]
        %v905 = vpack.c.bf16 %v870, %v869
        %v906 = vpack.c.bf16 %v872, %v871
        %v907 = vpack.c.bf16 %v874, %v873
        %v908 = vpack.c.bf16 %v876, %v875
        %v909 = vpack.c.bf16 %v878, %v877
        %v910 = vpack.c.bf16 %v880, %v879
        %v911 = vpack.c.bf16 %v882, %v881
        %v912 = vpack.c.bf16 %v884, %v883
        %v913 = vpack.c.bf16 %v886, %v885
        %v914 = vpack.c.bf16 %v888, %v887
        %v915 = vpack.c.bf16 %v890, %v889
        %v916 = vpack.c.bf16 %v892, %v891
        %v917 = vpack.c.bf16 %v894, %v893
        %v918 = vpack.c.bf16 %v896, %v895
        %v919 = vpack.c.bf16 %v898, %v897
        %v920 = vpack.c.bf16 %v900, %v899
        %v921 = vpack.c.bf16 %v902, %v901
        %v922 = vpack.c.bf16 %v904, %v903
        %923 = vst [vmem:[#allocation5 + $0x8] sm:$0xff] %v905
        %924 = vst [vmem:[#allocation5 + $0x20] sm:$0xff] %v906
        %925 = vst [vmem:[#allocation5 + $0x38] sm:$0xff] %v907
        %926 = vst [vmem:[#allocation5 + $0x50] sm:$0xff] %v908
        %927 = vst [vmem:[#allocation5 + $0x68] sm:$0xff] %v909
        %928 = vst [vmem:[#allocation5 + $0x80] sm:$0xff] %v910
        %929 = vst [vmem:[#allocation5 + $0x98] sm:$0xff] %v911
        %930 = vst [vmem:[#allocation5 + $0xb0] sm:$0xff] %v912
        %931 = vst [vmem:[#allocation5 + $0xc8] sm:$0xff] %v913
        %932 = vst [vmem:[#allocation5 + $0xe0] sm:$0xff] %v914
        %933 = vst [vmem:[#allocation5 + $0xf8] sm:$0xff] %v915
        %934 = vst [vmem:[#allocation5 + $0x110] sm:$0xff] %v916
        %935 = vst [vmem:[#allocation5 + $0x128] sm:$0xff] %v917
        %936 = vst [vmem:[#allocation5 + $0x140] sm:$0xff] %v918
        %937 = vst [vmem:[#allocation5 + $0x158] sm:$0xff] %v919
        %938 = vst [vmem:[#allocation5 + $0x170] sm:$0xff] %v920
        %939 = vst [vmem:[#allocation5 + $0x188] sm:$0xff] %v921
        %940 = vst [vmem:[#allocation5 + $0x1a0] sm:$0xff] %v922
        %v941 = vld [vmem:[#allocation3 + $0x2] sm:$0xff]
        %v942 = vld [vmem:[#allocation3 + $0xa] sm:$0xff]
        %v943 = vld [vmem:[#allocation3 + $0x1a] sm:$0xff]
        %v944 = vld [vmem:[#allocation3 + $0x22] sm:$0xff]
        %v945 = vld [vmem:[#allocation3 + $0x32] sm:$0xff]
        %v946 = vld [vmem:[#allocation3 + $0x3a] sm:$0xff]
        %v947 = vld [vmem:[#allocation3 + $0x4a] sm:$0xff]
        %v948 = vld [vmem:[#allocation3 + $0x52] sm:$0xff]
        %v949 = vld [vmem:[#allocation3 + $0x62] sm:$0xff]
        %v950 = vld [vmem:[#allocation3 + $0x6a] sm:$0xff]
        %v951 = vld [vmem:[#allocation3 + $0x7a] sm:$0xff]
        %v952 = vld [vmem:[#allocation3 + $0x82] sm:$0xff]
        %v953 = vld [vmem:[#allocation3 + $0x92] sm:$0xff]
        %v954 = vld [vmem:[#allocation3 + $0x9a] sm:$0xff]
        %v955 = vld [vmem:[#allocation3 + $0xaa] sm:$0xff]
        %v956 = vld [vmem:[#allocation3 + $0xb2] sm:$0xff]
        %v957 = vld [vmem:[#allocation3 + $0xc2] sm:$0xff]
        %v958 = vld [vmem:[#allocation3 + $0xca] sm:$0xff]
        %v959 = vld [vmem:[#allocation3 + $0xda] sm:$0xff]
        %v960 = vld [vmem:[#allocation3 + $0xe2] sm:$0xff]
        %v961 = vld [vmem:[#allocation3 + $0xf2] sm:$0xff]
        %v962 = vld [vmem:[#allocation3 + $0xfa] sm:$0xff]
        %v963 = vld [vmem:[#allocation3 + $0x10a] sm:$0xff]
        %v964 = vld [vmem:[#allocation3 + $0x112] sm:$0xff]
        %v965 = vld [vmem:[#allocation3 + $0x122] sm:$0xff]
        %v966 = vld [vmem:[#allocation3 + $0x12a] sm:$0xff]
        %v967 = vld [vmem:[#allocation3 + $0x13a] sm:$0xff]
        %v968 = vld [vmem:[#allocation3 + $0x142] sm:$0xff]
        %v969 = vld [vmem:[#allocation3 + $0x152] sm:$0xff]
        %v970 = vld [vmem:[#allocation3 + $0x15a] sm:$0xff]
        %v971 = vld [vmem:[#allocation3 + $0x16a] sm:$0xff]
        %v972 = vld [vmem:[#allocation3 + $0x172] sm:$0xff]
        %v973 = vld [vmem:[#allocation3 + $0x182] sm:$0xff]
        %v974 = vld [vmem:[#allocation3 + $0x18a] sm:$0xff]
        %v975 = vld [vmem:[#allocation3 + $0x19a] sm:$0xff]
        %v976 = vld [vmem:[#allocation3 + $0x1a2] sm:$0xff]
        %v977 = vpack.c.bf16 %v942, %v941
        %v978 = vpack.c.bf16 %v944, %v943
        %v979 = vpack.c.bf16 %v946, %v945
        %v980 = vpack.c.bf16 %v948, %v947
        %v981 = vpack.c.bf16 %v950, %v949
        %v982 = vpack.c.bf16 %v952, %v951
        %v983 = vpack.c.bf16 %v954, %v953
        %v984 = vpack.c.bf16 %v956, %v955
        %v985 = vpack.c.bf16 %v958, %v957
        %v986 = vpack.c.bf16 %v960, %v959
        %v987 = vpack.c.bf16 %v962, %v961
        %v988 = vpack.c.bf16 %v964, %v963
        %v989 = vpack.c.bf16 %v966, %v965
        %v990 = vpack.c.bf16 %v968, %v967
        %v991 = vpack.c.bf16 %v970, %v969
        %v992 = vpack.c.bf16 %v972, %v971
        %v993 = vpack.c.bf16 %v974, %v973
        %v994 = vpack.c.bf16 %v976, %v975
        %995 = vst [vmem:[#allocation5 + $0x10] sm:$0xff] %v977
        %996 = vst [vmem:[#allocation5 + $0x28] sm:$0xff] %v978
        %997 = vst [vmem:[#allocation5 + $0x40] sm:$0xff] %v979
        %998 = vst [vmem:[#allocation5 + $0x58] sm:$0xff] %v980
        %999 = vst [vmem:[#allocation5 + $0x70] sm:$0xff] %v981
        %1000 = vst [vmem:[#allocation5 + $0x88] sm:$0xff] %v982
        %1001 = vst [vmem:[#allocation5 + $0xa0] sm:$0xff] %v983
        %1002 = vst [vmem:[#allocation5 + $0xb8] sm:$0xff] %v984
        %1003 = vst [vmem:[#allocation5 + $0xd0] sm:$0xff] %v985
        %1004 = vst [vmem:[#allocation5 + $0xe8] sm:$0xff] %v986
        %1005 = vst [vmem:[#allocation5 + $0x100] sm:$0xff] %v987
        %1006 = vst [vmem:[#allocation5 + $0x118] sm:$0xff] %v988
        %1007 = vst [vmem:[#allocation5 + $0x130] sm:$0xff] %v989
        %1008 = vst [vmem:[#allocation5 + $0x148] sm:$0xff] %v990
        %1009 = vst [vmem:[#allocation5 + $0x160] sm:$0xff] %v991
        %1010 = vst [vmem:[#allocation5 + $0x178] sm:$0xff] %v992
        %1011 = vst [vmem:[#allocation5 + $0x190] sm:$0xff] %v993
        %1012 = vst [vmem:[#allocation5 + $0x1a8] sm:$0xff] %v994
        %v1013 = vld [vmem:[#allocation4] sm:$0xff]
        %v1014 = vld [vmem:[#allocation4 + $0x8] sm:$0xff]
        %v1015 = vld [vmem:[#allocation4 + $0x10] sm:$0xff]
        %v1016 = vld [vmem:[#allocation4 + $0x18] sm:$0xff]
        %v1017 = vld [vmem:[#allocation4 + $0x20] sm:$0xff]
        %v1018 = vld [vmem:[#allocation4 + $0x28] sm:$0xff]
        %v1019 = vld [vmem:[#allocation4 + $0x30] sm:$0xff]
        %v1020 = vld [vmem:[#allocation4 + $0x38] sm:$0xff]
        %v1021 = vld [vmem:[#allocation4 + $0x40] sm:$0xff]
        %v1022 = vld [vmem:[#allocation4 + $0x48] sm:$0xff]
        %v1023 = vld [vmem:[#allocation4 + $0x50] sm:$0xff]
        %v1024 = vld [vmem:[#allocation4 + $0x58] sm:$0xff]
        %v1025 = vld [vmem:[#allocation4 + $0x60] sm:$0xff]
        %v1026 = vld [vmem:[#allocation4 + $0x68] sm:$0xff]
        %v1027 = vld [vmem:[#allocation4 + $0x70] sm:$0xff]
        %v1028 = vld [vmem:[#allocation4 + $0x78] sm:$0xff]
        %v1029 = vld [vmem:[#allocation4 + $0x80] sm:$0xff]
        %v1030 = vld [vmem:[#allocation4 + $0x88] sm:$0xff]
        %v1031 = vld [vmem:[#allocation4 + $0x90] sm:$0xff]
        %v1032 = vld [vmem:[#allocation4 + $0x98] sm:$0xff]
        %v1033 = vld [vmem:[#allocation4 + $0xa0] sm:$0xff]
        %v1034 = vld [vmem:[#allocation4 + $0xa8] sm:$0xff]
        %v1035 = vld [vmem:[#allocation4 + $0xb0] sm:$0xff]
        %v1036 = vld [vmem:[#allocation4 + $0xb8] sm:$0xff]
        %v1037 = vld [vmem:[#allocation4 + $0xc0] sm:$0xff]
        %v1038 = vld [vmem:[#allocation4 + $0xc8] sm:$0xff]
        %v1039 = vld [vmem:[#allocation4 + $0xd0] sm:$0xff]
        %v1040 = vld [vmem:[#allocation4 + $0xd8] sm:$0xff]
        %v1041 = vld [vmem:[#allocation4 + $0xe0] sm:$0xff]
        %v1042 = vld [vmem:[#allocation4 + $0xe8] sm:$0xff]
        %v1043 = vld [vmem:[#allocation4 + $0xf0] sm:$0xff]
        %v1044 = vld [vmem:[#allocation4 + $0xf8] sm:$0xff]
        %v1045 = vld [vmem:[#allocation4 + $0x100] sm:$0xff]
        %v1046 = vld [vmem:[#allocation4 + $0x108] sm:$0xff]
        %v1047 = vld [vmem:[#allocation4 + $0x110] sm:$0xff]
        %v1048 = vld [vmem:[#allocation4 + $0x118] sm:$0xff]
        %v1049 = vld [vmem:[#allocation4 + $0x120] sm:$0xff]
        %v1050 = vld [vmem:[#allocation4 + $0x128] sm:$0xff]
        %v1051 = vld [vmem:[#allocation4 + $0x130] sm:$0xff]
        %v1052 = vld [vmem:[#allocation4 + $0x138] sm:$0xff]
        %v1053 = vld [vmem:[#allocation4 + $0x140] sm:$0xff]
        %v1054 = vld [vmem:[#allocation4 + $0x148] sm:$0xff]
        %v1055 = vld [vmem:[#allocation4 + $0x150] sm:$0xff]
        %v1056 = vld [vmem:[#allocation4 + $0x158] sm:$0xff]
        %v1057 = vld [vmem:[#allocation4 + $0x160] sm:$0xff]
        %v1058 = vld [vmem:[#allocation4 + $0x168] sm:$0xff]
        %v1059 = vld [vmem:[#allocation4 + $0x170] sm:$0xff]
        %v1060 = vld [vmem:[#allocation4 + $0x178] sm:$0xff]
        %1061 = vst [vmem:[#allocation6] sm:$0xff] %v1013
        %1062 = vst [vmem:[#allocation6 + $0x8] sm:$0xff] %v1014
        %1063 = vst [vmem:[#allocation6 + $0x10] sm:$0xff] %v1015
        %1064 = vst [vmem:[#allocation6 + $0x90] sm:$0xff] %v1016
        %1065 = vst [vmem:[#allocation6 + $0x98] sm:$0xff] %v1017
        %1066 = vst [vmem:[#allocation6 + $0xa0] sm:$0xff] %v1018
        %1067 = vst [vmem:[#allocation6 + $0x120] sm:$0xff] %v1019
        %1068 = vst [vmem:[#allocation6 + $0x128] sm:$0xff] %v1020
        %1069 = vst [vmem:[#allocation6 + $0x130] sm:$0xff] %v1021
        %1070 = vst [vmem:[#allocation6 + $0x1b0] sm:$0xff] %v1022
        %1071 = vst [vmem:[#allocation6 + $0x1b8] sm:$0xff] %v1023
        %1072 = vst [vmem:[#allocation6 + $0x1c0] sm:$0xff] %v1024
        %1073 = vst [vmem:[#allocation6 + $0x240] sm:$0xff] %v1025
        %1074 = vst [vmem:[#allocation6 + $0x248] sm:$0xff] %v1026
        %1075 = vst [vmem:[#allocation6 + $0x250] sm:$0xff] %v1027
        %1076 = vst [vmem:[#allocation6 + $0x2d0] sm:$0xff] %v1028
        %1077 = vst [vmem:[#allocation6 + $0x2d8] sm:$0xff] %v1029
        %1078 = vst [vmem:[#allocation6 + $0x2e0] sm:$0xff] %v1030
        %1079 = vst [vmem:[#allocation6 + $0x360] sm:$0xff] %v1031
        %1080 = vst [vmem:[#allocation6 + $0x368] sm:$0xff] %v1032
        %1081 = vst [vmem:[#allocation6 + $0x370] sm:$0xff] %v1033
        %1082 = vst [vmem:[#allocation6 + $0x3f0] sm:$0xff] %v1034
        %1083 = vst [vmem:[#allocation6 + $0x3f8] sm:$0xff] %v1035
        %1084 = vst [vmem:[#allocation6 + $0x400] sm:$0xff] %v1036
        %1085 = vst [vmem:[#allocation6 + $0x480] sm:$0xff] %v1037
        %1086 = vst [vmem:[#allocation6 + $0x488] sm:$0xff] %v1038
        %1087 = vst [vmem:[#allocation6 + $0x490] sm:$0xff] %v1039
        %1088 = vst [vmem:[#allocation6 + $0x510] sm:$0xff] %v1040
        %1089 = vst [vmem:[#allocation6 + $0x518] sm:$0xff] %v1041
        %1090 = vst [vmem:[#allocation6 + $0x520] sm:$0xff] %v1042
        %1091 = vst [vmem:[#allocation6 + $0x5a0] sm:$0xff] %v1043
        %1092 = vst [vmem:[#allocation6 + $0x5a8] sm:$0xff] %v1044
        %1093 = vst [vmem:[#allocation6 + $0x5b0] sm:$0xff] %v1045
        %1094 = vst [vmem:[#allocation6 + $0x630] sm:$0xff] %v1046
        %1095 = vst [vmem:[#allocation6 + $0x638] sm:$0xff] %v1047
        %1096 = vst [vmem:[#allocation6 + $0x640] sm:$0xff] %v1048
        %1097 = vst [vmem:[#allocation6 + $0x6c0] sm:$0xff] %v1049
        %1098 = vst [vmem:[#allocation6 + $0x6c8] sm:$0xff] %v1050
        %1099 = vst [vmem:[#allocation6 + $0x6d0] sm:$0xff] %v1051
        %1100 = vst [vmem:[#allocation6 + $0x750] sm:$0xff] %v1052
        %1101 = vst [vmem:[#allocation6 + $0x758] sm:$0xff] %v1053
        %1102 = vst [vmem:[#allocation6 + $0x760] sm:$0xff] %v1054
        %1103 = vst [vmem:[#allocation6 + $0x7e0] sm:$0xff] %v1055
        %1104 = vst [vmem:[#allocation6 + $0x7e8] sm:$0xff] %v1056
        %1105 = vst [vmem:[#allocation6 + $0x7f0] sm:$0xff] %v1057
        %1106 = vst [vmem:[#allocation6 + $0x870] sm:$0xff] %v1058
        %1107 = vst [vmem:[#allocation6 + $0x878] sm:$0xff] %v1059
        %1108 = vst [vmem:[#allocation6 + $0x880] sm:$0xff] %v1060
        %s1109 = scalar_lea.vmem [#allocation4], 24
        %v1110 = vld [vmem:[%s1109] sm:$0xff]
        %v1111 = vld [vmem:[%s1109 + $0x8] sm:$0xff]
        %v1112 = vld [vmem:[%s1109 + $0x10] sm:$0xff]
        %v1113 = vld [vmem:[%s1109 + $0x18] sm:$0xff]
        %v1114 = vld [vmem:[%s1109 + $0x20] sm:$0xff]
        %v1115 = vld [vmem:[%s1109 + $0x28] sm:$0xff]
        %v1116 = vld [vmem:[%s1109 + $0x30] sm:$0xff]
        %v1117 = vld [vmem:[%s1109 + $0x38] sm:$0xff]
        %v1118 = vld [vmem:[%s1109 + $0x40] sm:$0xff]
        %v1119 = vld [vmem:[%s1109 + $0x48] sm:$0xff]
        %v1120 = vld [vmem:[%s1109 + $0x50] sm:$0xff]
        %v1121 = vld [vmem:[%s1109 + $0x58] sm:$0xff]
        %v1122 = vld [vmem:[%s1109 + $0x60] sm:$0xff]
        %v1123 = vld [vmem:[%s1109 + $0x68] sm:$0xff]
        %v1124 = vld [vmem:[%s1109 + $0x70] sm:$0xff]
        %v1125 = vld [vmem:[%s1109 + $0x78] sm:$0xff]
        %v1126 = vld [vmem:[%s1109 + $0x80] sm:$0xff]
        %v1127 = vld [vmem:[%s1109 + $0x88] sm:$0xff]
        %v1128 = vld [vmem:[%s1109 + $0x90] sm:$0xff]
        %v1129 = vld [vmem:[%s1109 + $0x98] sm:$0xff]
        %v1130 = vld [vmem:[%s1109 + $0xa0] sm:$0xff]
        %v1131 = vld [vmem:[%s1109 + $0xa8] sm:$0xff]
        %v1132 = vld [vmem:[%s1109 + $0xb0] sm:$0xff]
        %v1133 = vld [vmem:[%s1109 + $0xb8] sm:$0xff]
        %v1134 = vld [vmem:[%s1109 + $0xc0] sm:$0xff]
        %v1135 = vld [vmem:[%s1109 + $0xc8] sm:$0xff]
        %v1136 = vld [vmem:[%s1109 + $0xd0] sm:$0xff]
        %v1137 = vld [vmem:[%s1109 + $0xd8] sm:$0xff]
        %v1138 = vld [vmem:[%s1109 + $0xe0] sm:$0xff]
        %v1139 = vld [vmem:[%s1109 + $0xe8] sm:$0xff]
        %v1140 = vld [vmem:[%s1109 + $0xf0] sm:$0xff]
        %v1141 = vld [vmem:[%s1109 + $0xf8] sm:$0xff]
        %v1142 = vld [vmem:[%s1109 + $0x100] sm:$0xff]
        %v1143 = vld [vmem:[%s1109 + $0x108] sm:$0xff]
        %v1144 = vld [vmem:[%s1109 + $0x110] sm:$0xff]
        %v1145 = vld [vmem:[%s1109 + $0x118] sm:$0xff]
        %v1146 = vld [vmem:[%s1109 + $0x120] sm:$0xff]
        %v1147 = vld [vmem:[%s1109 + $0x128] sm:$0xff]
        %v1148 = vld [vmem:[%s1109 + $0x130] sm:$0xff]
        %v1149 = vld [vmem:[%s1109 + $0x138] sm:$0xff]
        %v1150 = vld [vmem:[%s1109 + $0x140] sm:$0xff]
        %v1151 = vld [vmem:[%s1109 + $0x148] sm:$0xff]
        %v1152 = vld [vmem:[%s1109 + $0x150] sm:$0xff]
        %v1153 = vld [vmem:[%s1109 + $0x158] sm:$0xff]
        %v1154 = vld [vmem:[%s1109 + $0x160] sm:$0xff]
        %v1155 = vld [vmem:[%s1109 + $0x168] sm:$0xff]
        %v1156 = vld [vmem:[%s1109 + $0x170] sm:$0xff]
        %v1157 = vld [vmem:[%s1109 + $0x178] sm:$0xff]
        %1158 = vst [vmem:[#allocation6 + $0x18] sm:$0xff] %v1110
        %1159 = vst [vmem:[#allocation6 + $0x20] sm:$0xff] %v1111
        %1160 = vst [vmem:[#allocation6 + $0x28] sm:$0xff] %v1112
        %1161 = vst [vmem:[#allocation6 + $0xa8] sm:$0xff] %v1113
        %1162 = vst [vmem:[#allocation6 + $0xb0] sm:$0xff] %v1114
        %1163 = vst [vmem:[#allocation6 + $0xb8] sm:$0xff] %v1115
        %1164 = vst [vmem:[#allocation6 + $0x138] sm:$0xff] %v1116
        %1165 = vst [vmem:[#allocation6 + $0x140] sm:$0xff] %v1117
        %1166 = vst [vmem:[#allocation6 + $0x148] sm:$0xff] %v1118
        %1167 = vst [vmem:[#allocation6 + $0x1c8] sm:$0xff] %v1119
        %1168 = vst [vmem:[#allocation6 + $0x1d0] sm:$0xff] %v1120
        %1169 = vst [vmem:[#allocation6 + $0x1d8] sm:$0xff] %v1121
        %1170 = vst [vmem:[#allocation6 + $0x258] sm:$0xff] %v1122
        %1171 = vst [vmem:[#allocation6 + $0x260] sm:$0xff] %v1123
        %1172 = vst [vmem:[#allocation6 + $0x268] sm:$0xff] %v1124
        %1173 = vst [vmem:[#allocation6 + $0x2e8] sm:$0xff] %v1125
        %1174 = vst [vmem:[#allocation6 + $0x2f0] sm:$0xff] %v1126
        %1175 = vst [vmem:[#allocation6 + $0x2f8] sm:$0xff] %v1127
        %1176 = vst [vmem:[#allocation6 + $0x378] sm:$0xff] %v1128
        %1177 = vst [vmem:[#allocation6 + $0x380] sm:$0xff] %v1129
        %1178 = vst [vmem:[#allocation6 + $0x388] sm:$0xff] %v1130
        %1179 = vst [vmem:[#allocation6 + $0x408] sm:$0xff] %v1131
        %1180 = vst [vmem:[#allocation6 + $0x410] sm:$0xff] %v1132
        %1181 = vst [vmem:[#allocation6 + $0x418] sm:$0xff] %v1133
        %1182 = vst [vmem:[#allocation6 + $0x498] sm:$0xff] %v1134
        %1183 = vst [vmem:[#allocation6 + $0x4a0] sm:$0xff] %v1135
        %1184 = vst [vmem:[#allocation6 + $0x4a8] sm:$0xff] %v1136
        %1185 = vst [vmem:[#allocation6 + $0x528] sm:$0xff] %v1137
        %1186 = vst [vmem:[#allocation6 + $0x530] sm:$0xff] %v1138
        %1187 = vst [vmem:[#allocation6 + $0x538] sm:$0xff] %v1139
        %1188 = vst [vmem:[#allocation6 + $0x5b8] sm:$0xff] %v1140
        %1189 = vst [vmem:[#allocation6 + $0x5c0] sm:$0xff] %v1141
        %1190 = vst [vmem:[#allocation6 + $0x5c8] sm:$0xff] %v1142
        %1191 = vst [vmem:[#allocation6 + $0x648] sm:$0xff] %v1143
        %1192 = vst [vmem:[#allocation6 + $0x650] sm:$0xff] %v1144
        %1193 = vst [vmem:[#allocation6 + $0x658] sm:$0xff] %v1145
        %1194 = vst [vmem:[#allocation6 + $0x6d8] sm:$0xff] %v1146
        %1195 = vst [vmem:[#allocation6 + $0x6e0] sm:$0xff] %v1147
        %1196 = vst [vmem:[#allocation6 + $0x6e8] sm:$0xff] %v1148
        %1197 = vst [vmem:[#allocation6 + $0x768] sm:$0xff] %v1149
        %1198 = vst [vmem:[#allocation6 + $0x770] sm:$0xff] %v1150
        %1199 = vst [vmem:[#allocation6 + $0x778] sm:$0xff] %v1151
        %1200 = vst [vmem:[#allocation6 + $0x7f8] sm:$0xff] %v1152
        %1201 = vst [vmem:[#allocation6 + $0x800] sm:$0xff] %v1153
        %1202 = vst [vmem:[#allocation6 + $0x808] sm:$0xff] %v1154
        %1203 = vst [vmem:[#allocation6 + $0x888] sm:$0xff] %v1155
        %1204 = vst [vmem:[#allocation6 + $0x890] sm:$0xff] %v1156
        %1205 = vst [vmem:[#allocation6 + $0x898] sm:$0xff] %v1157
        %s1206 = scalar_lea.vmem [#allocation4], 48
        %v1207 = vld [vmem:[%s1206] sm:$0xff]
        %v1208 = vld [vmem:[%s1206 + $0x8] sm:$0xff]
        %v1209 = vld [vmem:[%s1206 + $0x10] sm:$0xff]
        %v1210 = vld [vmem:[%s1206 + $0x18] sm:$0xff]
        %v1211 = vld [vmem:[%s1206 + $0x20] sm:$0xff]
        %v1212 = vld [vmem:[%s1206 + $0x28] sm:$0xff]
        %v1213 = vld [vmem:[%s1206 + $0x30] sm:$0xff]
        %v1214 = vld [vmem:[%s1206 + $0x38] sm:$0xff]
        %v1215 = vld [vmem:[%s1206 + $0x40] sm:$0xff]
        %v1216 = vld [vmem:[%s1206 + $0x48] sm:$0xff]
        %v1217 = vld [vmem:[%s1206 + $0x50] sm:$0xff]
        %v1218 = vld [vmem:[%s1206 + $0x58] sm:$0xff]
        %v1219 = vld [vmem:[%s1206 + $0x60] sm:$0xff]
        %v1220 = vld [vmem:[%s1206 + $0x68] sm:$0xff]
        %v1221 = vld [vmem:[%s1206 + $0x70] sm:$0xff]
        %v1222 = vld [vmem:[%s1206 + $0x78] sm:$0xff]
        %v1223 = vld [vmem:[%s1206 + $0x80] sm:$0xff]
        %v1224 = vld [vmem:[%s1206 + $0x88] sm:$0xff]
        %v1225 = vld [vmem:[%s1206 + $0x90] sm:$0xff]
        %v1226 = vld [vmem:[%s1206 + $0x98] sm:$0xff]
        %v1227 = vld [vmem:[%s1206 + $0xa0] sm:$0xff]
        %v1228 = vld [vmem:[%s1206 + $0xa8] sm:$0xff]
        %v1229 = vld [vmem:[%s1206 + $0xb0] sm:$0xff]
        %v1230 = vld [vmem:[%s1206 + $0xb8] sm:$0xff]
        %v1231 = vld [vmem:[%s1206 + $0xc0] sm:$0xff]
        %v1232 = vld [vmem:[%s1206 + $0xc8] sm:$0xff]
        %v1233 = vld [vmem:[%s1206 + $0xd0] sm:$0xff]
        %v1234 = vld [vmem:[%s1206 + $0xd8] sm:$0xff]
        %v1235 = vld [vmem:[%s1206 + $0xe0] sm:$0xff]
        %v1236 = vld [vmem:[%s1206 + $0xe8] sm:$0xff]
        %v1237 = vld [vmem:[%s1206 + $0xf0] sm:$0xff]
        %v1238 = vld [vmem:[%s1206 + $0xf8] sm:$0xff]
        %v1239 = vld [vmem:[%s1206 + $0x100] sm:$0xff]
        %v1240 = vld [vmem:[%s1206 + $0x108] sm:$0xff]
        %v1241 = vld [vmem:[%s1206 + $0x110] sm:$0xff]
        %v1242 = vld [vmem:[%s1206 + $0x118] sm:$0xff]
        %v1243 = vld [vmem:[%s1206 + $0x120] sm:$0xff]
        %v1244 = vld [vmem:[%s1206 + $0x128] sm:$0xff]
        %v1245 = vld [vmem:[%s1206 + $0x130] sm:$0xff]
        %v1246 = vld [vmem:[%s1206 + $0x138] sm:$0xff]
        %v1247 = vld [vmem:[%s1206 + $0x140] sm:$0xff]
        %v1248 = vld [vmem:[%s1206 + $0x148] sm:$0xff]
        %v1249 = vld [vmem:[%s1206 + $0x150] sm:$0xff]
        %v1250 = vld [vmem:[%s1206 + $0x158] sm:$0xff]
        %v1251 = vld [vmem:[%s1206 + $0x160] sm:$0xff]
        %v1252 = vld [vmem:[%s1206 + $0x168] sm:$0xff]
        %v1253 = vld [vmem:[%s1206 + $0x170] sm:$0xff]
        %v1254 = vld [vmem:[%s1206 + $0x178] sm:$0xff]
        %1255 = vst [vmem:[#allocation6 + $0x30] sm:$0xff] %v1207
        %1256 = vst [vmem:[#allocation6 + $0x38] sm:$0xff] %v1208
        %1257 = vst [vmem:[#allocation6 + $0x40] sm:$0xff] %v1209
        %1258 = vst [vmem:[#allocation6 + $0xc0] sm:$0xff] %v1210
        %1259 = vst [vmem:[#allocation6 + $0xc8] sm:$0xff] %v1211
        %1260 = vst [vmem:[#allocation6 + $0xd0] sm:$0xff] %v1212
        %1261 = vst [vmem:[#allocation6 + $0x150] sm:$0xff] %v1213
        %1262 = vst [vmem:[#allocation6 + $0x158] sm:$0xff] %v1214
        %1263 = vst [vmem:[#allocation6 + $0x160] sm:$0xff] %v1215
        %1264 = vst [vmem:[#allocation6 + $0x1e0] sm:$0xff] %v1216
        %1265 = vst [vmem:[#allocation6 + $0x1e8] sm:$0xff] %v1217
        %1266 = vst [vmem:[#allocation6 + $0x1f0] sm:$0xff] %v1218
        %1267 = vst [vmem:[#allocation6 + $0x270] sm:$0xff] %v1219
        %1268 = vst [vmem:[#allocation6 + $0x278] sm:$0xff] %v1220
        %1269 = vst [vmem:[#allocation6 + $0x280] sm:$0xff] %v1221
        %1270 = vst [vmem:[#allocation6 + $0x300] sm:$0xff] %v1222
        %1271 = vst [vmem:[#allocation6 + $0x308] sm:$0xff] %v1223
        %1272 = vst [vmem:[#allocation6 + $0x310] sm:$0xff] %v1224
        %1273 = vst [vmem:[#allocation6 + $0x390] sm:$0xff] %v1225
        %1274 = vst [vmem:[#allocation6 + $0x398] sm:$0xff] %v1226
        %1275 = vst [vmem:[#allocation6 + $0x3a0] sm:$0xff] %v1227
        %1276 = vst [vmem:[#allocation6 + $0x420] sm:$0xff] %v1228
        %1277 = vst [vmem:[#allocation6 + $0x428] sm:$0xff] %v1229
        %1278 = vst [vmem:[#allocation6 + $0x430] sm:$0xff] %v1230
        %1279 = vst [vmem:[#allocation6 + $0x4b0] sm:$0xff] %v1231
        %1280 = vst [vmem:[#allocation6 + $0x4b8] sm:$0xff] %v1232
        %1281 = vst [vmem:[#allocation6 + $0x4c0] sm:$0xff] %v1233
        %1282 = vst [vmem:[#allocation6 + $0x540] sm:$0xff] %v1234
        %1283 = vst [vmem:[#allocation6 + $0x548] sm:$0xff] %v1235
        %1284 = vst [vmem:[#allocation6 + $0x550] sm:$0xff] %v1236
        %1285 = vst [vmem:[#allocation6 + $0x5d0] sm:$0xff] %v1237
        %1286 = vst [vmem:[#allocation6 + $0x5d8] sm:$0xff] %v1238
        %1287 = vst [vmem:[#allocation6 + $0x5e0] sm:$0xff] %v1239
        %1288 = vst [vmem:[#allocation6 + $0x660] sm:$0xff] %v1240
        %1289 = vst [vmem:[#allocation6 + $0x668] sm:$0xff] %v1241
        %1290 = vst [vmem:[#allocation6 + $0x670] sm:$0xff] %v1242
        %1291 = vst [vmem:[#allocation6 + $0x6f0] sm:$0xff] %v1243
        %1292 = vst [vmem:[#allocation6 + $0x6f8] sm:$0xff] %v1244
        %1293 = vst [vmem:[#allocation6 + $0x700] sm:$0xff] %v1245
        %1294 = vst [vmem:[#allocation6 + $0x780] sm:$0xff] %v1246
        %1295 = vst [vmem:[#allocation6 + $0x788] sm:$0xff] %v1247
        %1296 = vst [vmem:[#allocation6 + $0x790] sm:$0xff] %v1248
        %1297 = vst [vmem:[#allocation6 + $0x810] sm:$0xff] %v1249
        %1298 = vst [vmem:[#allocation6 + $0x818] sm:$0xff] %v1250
        %1299 = vst [vmem:[#allocation6 + $0x820] sm:$0xff] %v1251
        %1300 = vst [vmem:[#allocation6 + $0x8a0] sm:$0xff] %v1252
        %1301 = vst [vmem:[#allocation6 + $0x8a8] sm:$0xff] %v1253
        %1302 = vst [vmem:[#allocation6 + $0x8b0] sm:$0xff] %v1254
        %v1303 = vld [vmem:[#allocation5] sm:$0xff]
        %v1304 = vld [vmem:[#allocation5 + $0x8] sm:$0xff]
        %v1305 = vld [vmem:[#allocation5 + $0x10] sm:$0xff]
        %v1306 = vld [vmem:[#allocation5 + $0x18] sm:$0xff]
        %v1307 = vld [vmem:[#allocation5 + $0x20] sm:$0xff]
        %v1308 = vld [vmem:[#allocation5 + $0x28] sm:$0xff]
        %v1309 = vld [vmem:[#allocation5 + $0x30] sm:$0xff]
        %v1310 = vld [vmem:[#allocation5 + $0x38] sm:$0xff]
        %v1311 = vld [vmem:[#allocation5 + $0x40] sm:$0xff]
        %v1312 = vld [vmem:[#allocation5 + $0x48] sm:$0xff]
        %v1313 = vld [vmem:[#allocation5 + $0x50] sm:$0xff]
        %v1314 = vld [vmem:[#allocation5 + $0x58] sm:$0xff]
        %v1315 = vld [vmem:[#allocation5 + $0x60] sm:$0xff]
        %v1316 = vld [vmem:[#allocation5 + $0x68] sm:$0xff]
        %v1317 = vld [vmem:[#allocation5 + $0x70] sm:$0xff]
        %v1318 = vld [vmem:[#allocation5 + $0x78] sm:$0xff]
        %v1319 = vld [vmem:[#allocation5 + $0x80] sm:$0xff]
        %v1320 = vld [vmem:[#allocation5 + $0x88] sm:$0xff]
        %v1321 = vld [vmem:[#allocation5 + $0x90] sm:$0xff]
        %v1322 = vld [vmem:[#allocation5 + $0x98] sm:$0xff]
        %v1323 = vld [vmem:[#allocation5 + $0xa0] sm:$0xff]
        %v1324 = vld [vmem:[#allocation5 + $0xa8] sm:$0xff]
        %v1325 = vld [vmem:[#allocation5 + $0xb0] sm:$0xff]
        %v1326 = vld [vmem:[#allocation5 + $0xb8] sm:$0xff]
        %v1327 = vld [vmem:[#allocation5 + $0xc0] sm:$0xff]
        %v1328 = vld [vmem:[#allocation5 + $0xc8] sm:$0xff]
        %v1329 = vld [vmem:[#allocation5 + $0xd0] sm:$0xff]
        %v1330 = vld [vmem:[#allocation5 + $0xd8] sm:$0xff]
        %v1331 = vld [vmem:[#allocation5 + $0xe0] sm:$0xff]
        %v1332 = vld [vmem:[#allocation5 + $0xe8] sm:$0xff]
        %v1333 = vld [vmem:[#allocation5 + $0xf0] sm:$0xff]
        %v1334 = vld [vmem:[#allocation5 + $0xf8] sm:$0xff]
        %v1335 = vld [vmem:[#allocation5 + $0x100] sm:$0xff]
        %v1336 = vld [vmem:[#allocation5 + $0x108] sm:$0xff]
        %v1337 = vld [vmem:[#allocation5 + $0x110] sm:$0xff]
        %v1338 = vld [vmem:[#allocation5 + $0x118] sm:$0xff]
        %v1339 = vld [vmem:[#allocation5 + $0x120] sm:$0xff]
        %v1340 = vld [vmem:[#allocation5 + $0x128] sm:$0xff]
        %v1341 = vld [vmem:[#allocation5 + $0x130] sm:$0xff]
        %v1342 = vld [vmem:[#allocation5 + $0x138] sm:$0xff]
        %v1343 = vld [vmem:[#allocation5 + $0x140] sm:$0xff]
        %v1344 = vld [vmem:[#allocation5 + $0x148] sm:$0xff]
        %v1345 = vld [vmem:[#allocation5 + $0x150] sm:$0xff]
        %v1346 = vld [vmem:[#allocation5 + $0x158] sm:$0xff]
        %v1347 = vld [vmem:[#allocation5 + $0x160] sm:$0xff]
        %v1348 = vld [vmem:[#allocation5 + $0x168] sm:$0xff]
        %v1349 = vld [vmem:[#allocation5 + $0x170] sm:$0xff]
        %v1350 = vld [vmem:[#allocation5 + $0x178] sm:$0xff]
        %1351 = vst [vmem:[#allocation6 + $0x48] sm:$0xff] %v1303
        %1352 = vst [vmem:[#allocation6 + $0x50] sm:$0xff] %v1304
        %1353 = vst [vmem:[#allocation6 + $0x58] sm:$0xff] %v1305
        %1354 = vst [vmem:[#allocation6 + $0xd8] sm:$0xff] %v1306
        %1355 = vst [vmem:[#allocation6 + $0xe0] sm:$0xff] %v1307
        %1356 = vst [vmem:[#allocation6 + $0xe8] sm:$0xff] %v1308
        %1357 = vst [vmem:[#allocation6 + $0x168] sm:$0xff] %v1309
        %1358 = vst [vmem:[#allocation6 + $0x170] sm:$0xff] %v1310
        %1359 = vst [vmem:[#allocation6 + $0x178] sm:$0xff] %v1311
        %1360 = vst [vmem:[#allocation6 + $0x1f8] sm:$0xff] %v1312
        %1361 = vst [vmem:[#allocation6 + $0x200] sm:$0xff] %v1313
        %1362 = vst [vmem:[#allocation6 + $0x208] sm:$0xff] %v1314
        %1363 = vst [vmem:[#allocation6 + $0x288] sm:$0xff] %v1315
        %1364 = vst [vmem:[#allocation6 + $0x290] sm:$0xff] %v1316
        %1365 = vst [vmem:[#allocation6 + $0x298] sm:$0xff] %v1317
        %1366 = vst [vmem:[#allocation6 + $0x318] sm:$0xff] %v1318
        %1367 = vst [vmem:[#allocation6 + $0x320] sm:$0xff] %v1319
        %1368 = vst [vmem:[#allocation6 + $0x328] sm:$0xff] %v1320
        %1369 = vst [vmem:[#allocation6 + $0x3a8] sm:$0xff] %v1321
        %1370 = vst [vmem:[#allocation6 + $0x3b0] sm:$0xff] %v1322
        %1371 = vst [vmem:[#allocation6 + $0x3b8] sm:$0xff] %v1323
        %1372 = vst [vmem:[#allocation6 + $0x438] sm:$0xff] %v1324
        %1373 = vst [vmem:[#allocation6 + $0x440] sm:$0xff] %v1325
        %1374 = vst [vmem:[#allocation6 + $0x448] sm:$0xff] %v1326
        %1375 = vst [vmem:[#allocation6 + $0x4c8] sm:$0xff] %v1327
        %1376 = vst [vmem:[#allocation6 + $0x4d0] sm:$0xff] %v1328
        %1377 = vst [vmem:[#allocation6 + $0x4d8] sm:$0xff] %v1329
        %1378 = vst [vmem:[#allocation6 + $0x558] sm:$0xff] %v1330
        %1379 = vst [vmem:[#allocation6 + $0x560] sm:$0xff] %v1331
        %1380 = vst [vmem:[#allocation6 + $0x568] sm:$0xff] %v1332
        %1381 = vst [vmem:[#allocation6 + $0x5e8] sm:$0xff] %v1333
        %1382 = vst [vmem:[#allocation6 + $0x5f0] sm:$0xff] %v1334
        %1383 = vst [vmem:[#allocation6 + $0x5f8] sm:$0xff] %v1335
        %1384 = vst [vmem:[#allocation6 + $0x678] sm:$0xff] %v1336
        %1385 = vst [vmem:[#allocation6 + $0x680] sm:$0xff] %v1337
        %1386 = vst [vmem:[#allocation6 + $0x688] sm:$0xff] %v1338
        %1387 = vst [vmem:[#allocation6 + $0x708] sm:$0xff] %v1339
        %1388 = vst [vmem:[#allocation6 + $0x710] sm:$0xff] %v1340
        %1389 = vst [vmem:[#allocation6 + $0x718] sm:$0xff] %v1341
        %1390 = vst [vmem:[#allocation6 + $0x798] sm:$0xff] %v1342
        %1391 = vst [vmem:[#allocation6 + $0x7a0] sm:$0xff] %v1343
        %1392 = vst [vmem:[#allocation6 + $0x7a8] sm:$0xff] %v1344
        %1393 = vst [vmem:[#allocation6 + $0x828] sm:$0xff] %v1345
        %1394 = vst [vmem:[#allocation6 + $0x830] sm:$0xff] %v1346
        %1395 = vst [vmem:[#allocation6 + $0x838] sm:$0xff] %v1347
        %1396 = vst [vmem:[#allocation6 + $0x8b8] sm:$0xff] %v1348
        %1397 = vst [vmem:[#allocation6 + $0x8c0] sm:$0xff] %v1349
        %1398 = vst [vmem:[#allocation6 + $0x8c8] sm:$0xff] %v1350
        %s1399 = scalar_lea.vmem [#allocation5], 24
        %v1400 = vld [vmem:[%s1399] sm:$0xff]
        %v1401 = vld [vmem:[%s1399 + $0x8] sm:$0xff]
        %v1402 = vld [vmem:[%s1399 + $0x10] sm:$0xff]
        %v1403 = vld [vmem:[%s1399 + $0x18] sm:$0xff]
        %v1404 = vld [vmem:[%s1399 + $0x20] sm:$0xff]
        %v1405 = vld [vmem:[%s1399 + $0x28] sm:$0xff]
        %v1406 = vld [vmem:[%s1399 + $0x30] sm:$0xff]
        %v1407 = vld [vmem:[%s1399 + $0x38] sm:$0xff]
        %v1408 = vld [vmem:[%s1399 + $0x40] sm:$0xff]
        %v1409 = vld [vmem:[%s1399 + $0x48] sm:$0xff]
        %v1410 = vld [vmem:[%s1399 + $0x50] sm:$0xff]
        %v1411 = vld [vmem:[%s1399 + $0x58] sm:$0xff]
        %v1412 = vld [vmem:[%s1399 + $0x60] sm:$0xff]
        %v1413 = vld [vmem:[%s1399 + $0x68] sm:$0xff]
        %v1414 = vld [vmem:[%s1399 + $0x70] sm:$0xff]
        %v1415 = vld [vmem:[%s1399 + $0x78] sm:$0xff]
        %v1416 = vld [vmem:[%s1399 + $0x80] sm:$0xff]
        %v1417 = vld [vmem:[%s1399 + $0x88] sm:$0xff]
        %v1418 = vld [vmem:[%s1399 + $0x90] sm:$0xff]
        %v1419 = vld [vmem:[%s1399 + $0x98] sm:$0xff]
        %v1420 = vld [vmem:[%s1399 + $0xa0] sm:$0xff]
        %v1421 = vld [vmem:[%s1399 + $0xa8] sm:$0xff]
        %v1422 = vld [vmem:[%s1399 + $0xb0] sm:$0xff]
        %v1423 = vld [vmem:[%s1399 + $0xb8] sm:$0xff]
        %v1424 = vld [vmem:[%s1399 + $0xc0] sm:$0xff]
        %v1425 = vld [vmem:[%s1399 + $0xc8] sm:$0xff]
        %v1426 = vld [vmem:[%s1399 + $0xd0] sm:$0xff]
        %v1427 = vld [vmem:[%s1399 + $0xd8] sm:$0xff]
        %v1428 = vld [vmem:[%s1399 + $0xe0] sm:$0xff]
        %v1429 = vld [vmem:[%s1399 + $0xe8] sm:$0xff]
        %v1430 = vld [vmem:[%s1399 + $0xf0] sm:$0xff]
        %v1431 = vld [vmem:[%s1399 + $0xf8] sm:$0xff]
        %v1432 = vld [vmem:[%s1399 + $0x100] sm:$0xff]
        %v1433 = vld [vmem:[%s1399 + $0x108] sm:$0xff]
        %v1434 = vld [vmem:[%s1399 + $0x110] sm:$0xff]
        %v1435 = vld [vmem:[%s1399 + $0x118] sm:$0xff]
        %v1436 = vld [vmem:[%s1399 + $0x120] sm:$0xff]
        %v1437 = vld [vmem:[%s1399 + $0x128] sm:$0xff]
        %v1438 = vld [vmem:[%s1399 + $0x130] sm:$0xff]
        %v1439 = vld [vmem:[%s1399 + $0x138] sm:$0xff]
        %v1440 = vld [vmem:[%s1399 + $0x140] sm:$0xff]
        %v1441 = vld [vmem:[%s1399 + $0x148] sm:$0xff]
        %v1442 = vld [vmem:[%s1399 + $0x150] sm:$0xff]
        %v1443 = vld [vmem:[%s1399 + $0x158] sm:$0xff]
        %v1444 = vld [vmem:[%s1399 + $0x160] sm:$0xff]
        %v1445 = vld [vmem:[%s1399 + $0x168] sm:$0xff]
        %v1446 = vld [vmem:[%s1399 + $0x170] sm:$0xff]
        %v1447 = vld [vmem:[%s1399 + $0x178] sm:$0xff]
        %1448 = vst [vmem:[#allocation6 + $0x60] sm:$0xff] %v1400
        %1449 = vst [vmem:[#allocation6 + $0x68] sm:$0xff] %v1401
        %1450 = vst [vmem:[#allocation6 + $0x70] sm:$0xff] %v1402
        %1451 = vst [vmem:[#allocation6 + $0xf0] sm:$0xff] %v1403
        %1452 = vst [vmem:[#allocation6 + $0xf8] sm:$0xff] %v1404
        %1453 = vst [vmem:[#allocation6 + $0x100] sm:$0xff] %v1405
        %1454 = vst [vmem:[#allocation6 + $0x180] sm:$0xff] %v1406
        %1455 = vst [vmem:[#allocation6 + $0x188] sm:$0xff] %v1407
        %1456 = vst [vmem:[#allocation6 + $0x190] sm:$0xff] %v1408
        %1457 = vst [vmem:[#allocation6 + $0x210] sm:$0xff] %v1409
        %1458 = vst [vmem:[#allocation6 + $0x218] sm:$0xff] %v1410
        %1459 = vst [vmem:[#allocation6 + $0x220] sm:$0xff] %v1411
        %1460 = vst [vmem:[#allocation6 + $0x2a0] sm:$0xff] %v1412
        %1461 = vst [vmem:[#allocation6 + $0x2a8] sm:$0xff] %v1413
        %1462 = vst [vmem:[#allocation6 + $0x2b0] sm:$0xff] %v1414
        %1463 = vst [vmem:[#allocation6 + $0x330] sm:$0xff] %v1415
        %1464 = vst [vmem:[#allocation6 + $0x338] sm:$0xff] %v1416
        %1465 = vst [vmem:[#allocation6 + $0x340] sm:$0xff] %v1417
        %1466 = vst [vmem:[#allocation6 + $0x3c0] sm:$0xff] %v1418
        %1467 = vst [vmem:[#allocation6 + $0x3c8] sm:$0xff] %v1419
        %1468 = vst [vmem:[#allocation6 + $0x3d0] sm:$0xff] %v1420
        %1469 = vst [vmem:[#allocation6 + $0x450] sm:$0xff] %v1421
        %1470 = vst [vmem:[#allocation6 + $0x458] sm:$0xff] %v1422
        %1471 = vst [vmem:[#allocation6 + $0x460] sm:$0xff] %v1423
        %1472 = vst [vmem:[#allocation6 + $0x4e0] sm:$0xff] %v1424
        %1473 = vst [vmem:[#allocation6 + $0x4e8] sm:$0xff] %v1425
        %1474 = vst [vmem:[#allocation6 + $0x4f0] sm:$0xff] %v1426
        %1475 = vst [vmem:[#allocation6 + $0x570] sm:$0xff] %v1427
        %1476 = vst [vmem:[#allocation6 + $0x578] sm:$0xff] %v1428
        %1477 = vst [vmem:[#allocation6 + $0x580] sm:$0xff] %v1429
        %1478 = vst [vmem:[#allocation6 + $0x600] sm:$0xff] %v1430
        %1479 = vst [vmem:[#allocation6 + $0x608] sm:$0xff] %v1431
        %1480 = vst [vmem:[#allocation6 + $0x610] sm:$0xff] %v1432
        %1481 = vst [vmem:[#allocation6 + $0x690] sm:$0xff] %v1433
        %1482 = vst [vmem:[#allocation6 + $0x698] sm:$0xff] %v1434
        %1483 = vst [vmem:[#allocation6 + $0x6a0] sm:$0xff] %v1435
        %1484 = vst [vmem:[#allocation6 + $0x720] sm:$0xff] %v1436
        %1485 = vst [vmem:[#allocation6 + $0x728] sm:$0xff] %v1437
        %1486 = vst [vmem:[#allocation6 + $0x730] sm:$0xff] %v1438
        %1487 = vst [vmem:[#allocation6 + $0x7b0] sm:$0xff] %v1439
        %1488 = vst [vmem:[#allocation6 + $0x7b8] sm:$0xff] %v1440
        %1489 = vst [vmem:[#allocation6 + $0x7c0] sm:$0xff] %v1441
        %1490 = vst [vmem:[#allocation6 + $0x840] sm:$0xff] %v1442
        %1491 = vst [vmem:[#allocation6 + $0x848] sm:$0xff] %v1443
        %1492 = vst [vmem:[#allocation6 + $0x850] sm:$0xff] %v1444
        %1493 = vst [vmem:[#allocation6 + $0x8d0] sm:$0xff] %v1445
        %1494 = vst [vmem:[#allocation6 + $0x8d8] sm:$0xff] %v1446
        %1495 = vst [vmem:[#allocation6 + $0x8e0] sm:$0xff] %v1447
        %s1496 = scalar_lea.vmem [#allocation5], 48
        %v1497 = vld [vmem:[%s1496] sm:$0xff]
        %v1498 = vld [vmem:[%s1496 + $0x8] sm:$0xff]
        %v1499 = vld [vmem:[%s1496 + $0x10] sm:$0xff]
        %v1500 = vld [vmem:[%s1496 + $0x18] sm:$0xff]
        %v1501 = vld [vmem:[%s1496 + $0x20] sm:$0xff]
        %v1502 = vld [vmem:[%s1496 + $0x28] sm:$0xff]
        %v1503 = vld [vmem:[%s1496 + $0x30] sm:$0xff]
        %v1504 = vld [vmem:[%s1496 + $0x38] sm:$0xff]
        %v1505 = vld [vmem:[%s1496 + $0x40] sm:$0xff]
        %v1506 = vld [vmem:[%s1496 + $0x48] sm:$0xff]
        %v1507 = vld [vmem:[%s1496 + $0x50] sm:$0xff]
        %v1508 = vld [vmem:[%s1496 + $0x58] sm:$0xff]
        %v1509 = vld [vmem:[%s1496 + $0x60] sm:$0xff]
        %v1510 = vld [vmem:[%s1496 + $0x68] sm:$0xff]
        %v1511 = vld [vmem:[%s1496 + $0x70] sm:$0xff]
        %v1512 = vld [vmem:[%s1496 + $0x78] sm:$0xff]
        %v1513 = vld [vmem:[%s1496 + $0x80] sm:$0xff]
        %v1514 = vld [vmem:[%s1496 + $0x88] sm:$0xff]
        %v1515 = vld [vmem:[%s1496 + $0x90] sm:$0xff]
        %v1516 = vld [vmem:[%s1496 + $0x98] sm:$0xff]
        %v1517 = vld [vmem:[%s1496 + $0xa0] sm:$0xff]
        %v1518 = vld [vmem:[%s1496 + $0xa8] sm:$0xff]
        %v1519 = vld [vmem:[%s1496 + $0xb0] sm:$0xff]
        %v1520 = vld [vmem:[%s1496 + $0xb8] sm:$0xff]
        %v1521 = vld [vmem:[%s1496 + $0xc0] sm:$0xff]
        %v1522 = vld [vmem:[%s1496 + $0xc8] sm:$0xff]
        %v1523 = vld [vmem:[%s1496 + $0xd0] sm:$0xff]
        %v1524 = vld [vmem:[%s1496 + $0xd8] sm:$0xff]
        %v1525 = vld [vmem:[%s1496 + $0xe0] sm:$0xff]
        %v1526 = vld [vmem:[%s1496 + $0xe8] sm:$0xff]
        %v1527 = vld [vmem:[%s1496 + $0xf0] sm:$0xff]
        %v1528 = vld [vmem:[%s1496 + $0xf8] sm:$0xff]
        %v1529 = vld [vmem:[%s1496 + $0x100] sm:$0xff]
        %v1530 = vld [vmem:[%s1496 + $0x108] sm:$0xff]
        %v1531 = vld [vmem:[%s1496 + $0x110] sm:$0xff]
        %v1532 = vld [vmem:[%s1496 + $0x118] sm:$0xff]
        %v1533 = vld [vmem:[%s1496 + $0x120] sm:$0xff]
        %v1534 = vld [vmem:[%s1496 + $0x128] sm:$0xff]
        %v1535 = vld [vmem:[%s1496 + $0x130] sm:$0xff]
        %v1536 = vld [vmem:[%s1496 + $0x138] sm:$0xff]
        %v1537 = vld [vmem:[%s1496 + $0x140] sm:$0xff]
        %v1538 = vld [vmem:[%s1496 + $0x148] sm:$0xff]
        %v1539 = vld [vmem:[%s1496 + $0x150] sm:$0xff]
        %v1540 = vld [vmem:[%s1496 + $0x158] sm:$0xff]
        %v1541 = vld [vmem:[%s1496 + $0x160] sm:$0xff]
        %v1542 = vld [vmem:[%s1496 + $0x168] sm:$0xff]
        %v1543 = vld [vmem:[%s1496 + $0x170] sm:$0xff]
        %v1544 = vld [vmem:[%s1496 + $0x178] sm:$0xff]
        %1545 = vst [vmem:[#allocation6 + $0x78] sm:$0xff] %v1497
        %1546 = vst [vmem:[#allocation6 + $0x80] sm:$0xff] %v1498
        %1547 = vst [vmem:[#allocation6 + $0x88] sm:$0xff] %v1499
        %1548 = vst [vmem:[#allocation6 + $0x108] sm:$0xff] %v1500
        %1549 = vst [vmem:[#allocation6 + $0x110] sm:$0xff] %v1501
        %1550 = vst [vmem:[#allocation6 + $0x118] sm:$0xff] %v1502
        %1551 = vst [vmem:[#allocation6 + $0x198] sm:$0xff] %v1503
        %1552 = vst [vmem:[#allocation6 + $0x1a0] sm:$0xff] %v1504
        %1553 = vst [vmem:[#allocation6 + $0x1a8] sm:$0xff] %v1505
        %1554 = vst [vmem:[#allocation6 + $0x228] sm:$0xff] %v1506
        %1555 = vst [vmem:[#allocation6 + $0x230] sm:$0xff] %v1507
        %1556 = vst [vmem:[#allocation6 + $0x238] sm:$0xff] %v1508
        %1557 = vst [vmem:[#allocation6 + $0x2b8] sm:$0xff] %v1509
        %1558 = vst [vmem:[#allocation6 + $0x2c0] sm:$0xff] %v1510
        %1559 = vst [vmem:[#allocation6 + $0x2c8] sm:$0xff] %v1511
        %1560 = vst [vmem:[#allocation6 + $0x348] sm:$0xff] %v1512
        %1561 = vst [vmem:[#allocation6 + $0x350] sm:$0xff] %v1513
        %1562 = vst [vmem:[#allocation6 + $0x358] sm:$0xff] %v1514
        %1563 = vst [vmem:[#allocation6 + $0x3d8] sm:$0xff] %v1515
        %1564 = vst [vmem:[#allocation6 + $0x3e0] sm:$0xff] %v1516
        %1565 = vst [vmem:[#allocation6 + $0x3e8] sm:$0xff] %v1517
        %1566 = vst [vmem:[#allocation6 + $0x468] sm:$0xff] %v1518
        %1567 = vst [vmem:[#allocation6 + $0x470] sm:$0xff] %v1519
        %1568 = vst [vmem:[#allocation6 + $0x478] sm:$0xff] %v1520
        %1569 = vst [vmem:[#allocation6 + $0x4f8] sm:$0xff] %v1521
        %1570 = vst [vmem:[#allocation6 + $0x500] sm:$0xff] %v1522
        %1571 = vst [vmem:[#allocation6 + $0x508] sm:$0xff] %v1523
        %1572 = vst [vmem:[#allocation6 + $0x588] sm:$0xff] %v1524
        %1573 = vst [vmem:[#allocation6 + $0x590] sm:$0xff] %v1525
        %1574 = vst [vmem:[#allocation6 + $0x598] sm:$0xff] %v1526
        %1575 = vst [vmem:[#allocation6 + $0x618] sm:$0xff] %v1527
        %1576 = vst [vmem:[#allocation6 + $0x620] sm:$0xff] %v1528
        %1577 = vst [vmem:[#allocation6 + $0x628] sm:$0xff] %v1529
        %1578 = vst [vmem:[#allocation6 + $0x6a8] sm:$0xff] %v1530
        %1579 = vst [vmem:[#allocation6 + $0x6b0] sm:$0xff] %v1531
        %1580 = vst [vmem:[#allocation6 + $0x6b8] sm:$0xff] %v1532
        %1581 = vst [vmem:[#allocation6 + $0x738] sm:$0xff] %v1533
        %1582 = vst [vmem:[#allocation6 + $0x740] sm:$0xff] %v1534
        %1583 = vst [vmem:[#allocation6 + $0x748] sm:$0xff] %v1535
        %1584 = vst [vmem:[#allocation6 + $0x7c8] sm:$0xff] %v1536
        %1585 = vst [vmem:[#allocation6 + $0x7d0] sm:$0xff] %v1537
        %1586 = vst [vmem:[#allocation6 + $0x7d8] sm:$0xff] %v1538
        %1587 = vst [vmem:[#allocation6 + $0x858] sm:$0xff] %v1539
        %1588 = vst [vmem:[#allocation6 + $0x860] sm:$0xff] %v1540
        %1589 = vst [vmem:[#allocation6 + $0x868] sm:$0xff] %v1541
        %1590 = vst [vmem:[#allocation6 + $0x8e8] sm:$0xff] %v1542
        %1591 = vst [vmem:[#allocation6 + $0x8f0] sm:$0xff] %v1543
        %1592 = vst [vmem:[#allocation6 + $0x8f8] sm:$0xff] %v1544
        %v1593 = vld [vmem:[#allocation6] sm:$0xff]
        %v1594 = vld [vmem:[#allocation6 + $0x8] sm:$0xff]
        %v1595 = vld [vmem:[#allocation6 + $0x10] sm:$0xff]
        %v1596 = vld [vmem:[#allocation6 + $0x18] sm:$0xff]
        %v1597 = vld [vmem:[#allocation6 + $0x20] sm:$0xff]
        %v1598 = vld [vmem:[#allocation6 + $0x28] sm:$0xff]
        %v1599 = vld [vmem:[#allocation6 + $0x30] sm:$0xff]
        %v1600 = vld [vmem:[#allocation6 + $0x38] sm:$0xff]
        %v1601 = vld [vmem:[#allocation6 + $0x40] sm:$0xff]
        %v1602 = vld [vmem:[#allocation6 + $0x48] sm:$0xff]
        %v1603 = vld [vmem:[#allocation6 + $0x50] sm:$0xff]
        %v1604 = vld [vmem:[#allocation6 + $0x58] sm:$0xff]
        %v1605 = vld [vmem:[#allocation6 + $0x60] sm:$0xff]
        %v1606 = vld [vmem:[#allocation6 + $0x68] sm:$0xff]
        %v1607 = vld [vmem:[#allocation6 + $0x70] sm:$0xff]
        %v1608 = vld [vmem:[#allocation6 + $0x78] sm:$0xff]
        %v1609 = vld [vmem:[#allocation6 + $0x80] sm:$0xff]
        %v1610 = vld [vmem:[#allocation6 + $0x88] sm:$0xff]
        %v1611 = vld [vmem:[#allocation6 + $0x90] sm:$0xff]
        %v1612 = vld [vmem:[#allocation6 + $0x98] sm:$0xff]
        %v1613 = vld [vmem:[#allocation6 + $0xa0] sm:$0xff]
        %v1614 = vld [vmem:[#allocation6 + $0xa8] sm:$0xff]
        %v1615 = vld [vmem:[#allocation6 + $0xb0] sm:$0xff]
        %v1616 = vld [vmem:[#allocation6 + $0xb8] sm:$0xff]
        %v1617 = vld [vmem:[#allocation6 + $0xc0] sm:$0xff]
        %v1618 = vld [vmem:[#allocation6 + $0xc8] sm:$0xff]
        %v1619 = vld [vmem:[#allocation6 + $0xd0] sm:$0xff]
        %v1620 = vld [vmem:[#allocation6 + $0xd8] sm:$0xff]
        %v1621 = vld [vmem:[#allocation6 + $0xe0] sm:$0xff]
        %v1622 = vld [vmem:[#allocation6 + $0xe8] sm:$0xff]
        %v1623 = vld [vmem:[#allocation6 + $0xf0] sm:$0xff]
        %v1624 = vld [vmem:[#allocation6 + $0xf8] sm:$0xff]
        %v1625 = vld [vmem:[#allocation6 + $0x100] sm:$0xff]
        %v1626 = vld [vmem:[#allocation6 + $0x108] sm:$0xff]
        %v1627 = vld [vmem:[#allocation6 + $0x110] sm:$0xff]
        %v1628 = vld [vmem:[#allocation6 + $0x118] sm:$0xff]
        %v1629 = vld [vmem:[#allocation6 + $0x120] sm:$0xff]
        %v1630 = vld [vmem:[#allocation6 + $0x128] sm:$0xff]
        %v1631 = vld [vmem:[#allocation6 + $0x130] sm:$0xff]
        %v1632 = vld [vmem:[#allocation6 + $0x138] sm:$0xff]
        %v1633 = vld [vmem:[#allocation6 + $0x140] sm:$0xff]
        %v1634 = vld [vmem:[#allocation6 + $0x148] sm:$0xff]
        %v1635 = vld [vmem:[#allocation6 + $0x150] sm:$0xff]
        %v1636 = vld [vmem:[#allocation6 + $0x158] sm:$0xff]
        %v1637 = vld [vmem:[#allocation6 + $0x160] sm:$0xff]
        %v1638 = vld [vmem:[#allocation6 + $0x168] sm:$0xff]
        %v1639 = vld [vmem:[#allocation6 + $0x170] sm:$0xff]
        %v1640 = vld [vmem:[#allocation6 + $0x178] sm:$0xff]
        %v1641 = vld [vmem:[#allocation6 + $0x180] sm:$0xff]
        %v1642 = vld [vmem:[#allocation6 + $0x188] sm:$0xff]
        %v1643 = vld [vmem:[#allocation6 + $0x190] sm:$0xff]
        %v1644 = vld [vmem:[#allocation6 + $0x198] sm:$0xff]
        %v1645 = vld [vmem:[#allocation6 + $0x1a0] sm:$0xff]
        %v1646 = vld [vmem:[#allocation6 + $0x1a8] sm:$0xff]
        %v1647 = vld [vmem:[#allocation6 + $0x1b0] sm:$0xff]
        %v1648 = vld [vmem:[#allocation6 + $0x1b8] sm:$0xff]
        %v1649 = vld [vmem:[#allocation6 + $0x1c0] sm:$0xff]
        %v1650 = vld [vmem:[#allocation6 + $0x1c8] sm:$0xff]
        %v1651 = vld [vmem:[#allocation6 + $0x1d0] sm:$0xff]
        %v1652 = vld [vmem:[#allocation6 + $0x1d8] sm:$0xff]
        %v1653 = vld [vmem:[#allocation6 + $0x1e0] sm:$0xff]
        %v1654 = vld [vmem:[#allocation6 + $0x1e8] sm:$0xff]
        %v1655 = vld [vmem:[#allocation6 + $0x1f0] sm:$0xff]
        %v1656 = vld [vmem:[#allocation6 + $0x1f8] sm:$0xff]
        %v1657 = vld [vmem:[#allocation6 + $0x200] sm:$0xff]
        %v1658 = vld [vmem:[#allocation6 + $0x208] sm:$0xff]
        %v1659 = vld [vmem:[#allocation6 + $0x210] sm:$0xff]
        %v1660 = vld [vmem:[#allocation6 + $0x218] sm:$0xff]
        %v1661 = vld [vmem:[#allocation6 + $0x220] sm:$0xff]
        %v1662 = vld [vmem:[#allocation6 + $0x228] sm:$0xff]
        %v1663 = vld [vmem:[#allocation6 + $0x230] sm:$0xff]
        %v1664 = vld [vmem:[#allocation6 + $0x238] sm:$0xff]
        %v1665 = vld [vmem:[#allocation6 + $0x240] sm:$0xff]
        %v1666 = vld [vmem:[#allocation6 + $0x248] sm:$0xff]
        %v1667 = vld [vmem:[#allocation6 + $0x250] sm:$0xff]
        %v1668 = vld [vmem:[#allocation6 + $0x258] sm:$0xff]
        %v1669 = vld [vmem:[#allocation6 + $0x260] sm:$0xff]
        %v1670 = vld [vmem:[#allocation6 + $0x268] sm:$0xff]
        %v1671 = vld [vmem:[#allocation6 + $0x270] sm:$0xff]
        %v1672 = vld [vmem:[#allocation6 + $0x278] sm:$0xff]
        %v1673 = vld [vmem:[#allocation6 + $0x280] sm:$0xff]
        %v1674 = vld [vmem:[#allocation6 + $0x288] sm:$0xff]
        %v1675 = vld [vmem:[#allocation6 + $0x290] sm:$0xff]
        %v1676 = vld [vmem:[#allocation6 + $0x298] sm:$0xff]
        %v1677 = vld [vmem:[#allocation6 + $0x2a0] sm:$0xff]
        %v1678 = vld [vmem:[#allocation6 + $0x2a8] sm:$0xff]
        %v1679 = vld [vmem:[#allocation6 + $0x2b0] sm:$0xff]
        %v1680 = vld [vmem:[#allocation6 + $0x2b8] sm:$0xff]
        %v1681 = vld [vmem:[#allocation6 + $0x2c0] sm:$0xff]
        %v1682 = vld [vmem:[#allocation6 + $0x2c8] sm:$0xff]
        %v1683 = vld [vmem:[#allocation6 + $0x2d0] sm:$0xff]
        %v1684 = vld [vmem:[#allocation6 + $0x2d8] sm:$0xff]
        %v1685 = vld [vmem:[#allocation6 + $0x2e0] sm:$0xff]
        %v1686 = vld [vmem:[#allocation6 + $0x2e8] sm:$0xff]
        %v1687 = vld [vmem:[#allocation6 + $0x2f0] sm:$0xff]
        %v1688 = vld [vmem:[#allocation6 + $0x2f8] sm:$0xff]
        %v1689 = vld [vmem:[#allocation6 + $0x300] sm:$0xff]
        %v1690 = vld [vmem:[#allocation6 + $0x308] sm:$0xff]
        %v1691 = vld [vmem:[#allocation6 + $0x310] sm:$0xff]
        %v1692 = vld [vmem:[#allocation6 + $0x318] sm:$0xff]
        %v1693 = vld [vmem:[#allocation6 + $0x320] sm:$0xff]
        %v1694 = vld [vmem:[#allocation6 + $0x328] sm:$0xff]
        %v1695 = vld [vmem:[#allocation6 + $0x330] sm:$0xff]
        %v1696 = vld [vmem:[#allocation6 + $0x338] sm:$0xff]
        %v1697 = vld [vmem:[#allocation6 + $0x340] sm:$0xff]
        %v1698 = vld [vmem:[#allocation6 + $0x348] sm:$0xff]
        %v1699 = vld [vmem:[#allocation6 + $0x350] sm:$0xff]
        %v1700 = vld [vmem:[#allocation6 + $0x358] sm:$0xff]
        %v1701 = vld [vmem:[#allocation6 + $0x360] sm:$0xff]
        %v1702 = vld [vmem:[#allocation6 + $0x368] sm:$0xff]
        %v1703 = vld [vmem:[#allocation6 + $0x370] sm:$0xff]
        %v1704 = vld [vmem:[#allocation6 + $0x378] sm:$0xff]
        %v1705 = vld [vmem:[#allocation6 + $0x380] sm:$0xff]
        %v1706 = vld [vmem:[#allocation6 + $0x388] sm:$0xff]
        %v1707 = vld [vmem:[#allocation6 + $0x390] sm:$0xff]
        %v1708 = vld [vmem:[#allocation6 + $0x398] sm:$0xff]
        %v1709 = vld [vmem:[#allocation6 + $0x3a0] sm:$0xff]
        %v1710 = vld [vmem:[#allocation6 + $0x3a8] sm:$0xff]
        %v1711 = vld [vmem:[#allocation6 + $0x3b0] sm:$0xff]
        %v1712 = vld [vmem:[#allocation6 + $0x3b8] sm:$0xff]
        %v1713 = vld [vmem:[#allocation6 + $0x3c0] sm:$0xff]
        %v1714 = vld [vmem:[#allocation6 + $0x3c8] sm:$0xff]
        %v1715 = vld [vmem:[#allocation6 + $0x3d0] sm:$0xff]
        %v1716 = vld [vmem:[#allocation6 + $0x3d8] sm:$0xff]
        %v1717 = vld [vmem:[#allocation6 + $0x3e0] sm:$0xff]
        %v1718 = vld [vmem:[#allocation6 + $0x3e8] sm:$0xff]
        %v1719 = vld [vmem:[#allocation6 + $0x3f0] sm:$0xff]
        %v1720 = vld [vmem:[#allocation6 + $0x3f8] sm:$0xff]
        %v1721 = vld [vmem:[#allocation6 + $0x400] sm:$0xff]
        %v1722 = vld [vmem:[#allocation6 + $0x408] sm:$0xff]
        %v1723 = vld [vmem:[#allocation6 + $0x410] sm:$0xff]
        %v1724 = vld [vmem:[#allocation6 + $0x418] sm:$0xff]
        %v1725 = vld [vmem:[#allocation6 + $0x420] sm:$0xff]
        %v1726 = vld [vmem:[#allocation6 + $0x428] sm:$0xff]
        %v1727 = vld [vmem:[#allocation6 + $0x430] sm:$0xff]
        %v1728 = vld [vmem:[#allocation6 + $0x438] sm:$0xff]
        %v1729 = vld [vmem:[#allocation6 + $0x440] sm:$0xff]
        %v1730 = vld [vmem:[#allocation6 + $0x448] sm:$0xff]
        %v1731 = vld [vmem:[#allocation6 + $0x450] sm:$0xff]
        %v1732 = vld [vmem:[#allocation6 + $0x458] sm:$0xff]
        %v1733 = vld [vmem:[#allocation6 + $0x460] sm:$0xff]
        %v1734 = vld [vmem:[#allocation6 + $0x468] sm:$0xff]
        %v1735 = vld [vmem:[#allocation6 + $0x470] sm:$0xff]
        %v1736 = vld [vmem:[#allocation6 + $0x478] sm:$0xff]
        %v1737 = vld [vmem:[#allocation6 + $0x480] sm:$0xff]
        %v1738 = vld [vmem:[#allocation6 + $0x488] sm:$0xff]
        %v1739 = vld [vmem:[#allocation6 + $0x490] sm:$0xff]
        %v1740 = vld [vmem:[#allocation6 + $0x498] sm:$0xff]
        %v1741 = vld [vmem:[#allocation6 + $0x4a0] sm:$0xff]
        %v1742 = vld [vmem:[#allocation6 + $0x4a8] sm:$0xff]
        %v1743 = vld [vmem:[#allocation6 + $0x4b0] sm:$0xff]
        %v1744 = vld [vmem:[#allocation6 + $0x4b8] sm:$0xff]
        %v1745 = vld [vmem:[#allocation6 + $0x4c0] sm:$0xff]
        %v1746 = vld [vmem:[#allocation6 + $0x4c8] sm:$0xff]
        %v1747 = vld [vmem:[#allocation6 + $0x4d0] sm:$0xff]
        %v1748 = vld [vmem:[#allocation6 + $0x4d8] sm:$0xff]
        %v1749 = vld [vmem:[#allocation6 + $0x4e0] sm:$0xff]
        %v1750 = vld [vmem:[#allocation6 + $0x4e8] sm:$0xff]
        %v1751 = vld [vmem:[#allocation6 + $0x4f0] sm:$0xff]
        %v1752 = vld [vmem:[#allocation6 + $0x4f8] sm:$0xff]
        %v1753 = vld [vmem:[#allocation6 + $0x500] sm:$0xff]
        %v1754 = vld [vmem:[#allocation6 + $0x508] sm:$0xff]
        %v1755 = vld [vmem:[#allocation6 + $0x510] sm:$0xff]
        %v1756 = vld [vmem:[#allocation6 + $0x518] sm:$0xff]
        %v1757 = vld [vmem:[#allocation6 + $0x520] sm:$0xff]
        %v1758 = vld [vmem:[#allocation6 + $0x528] sm:$0xff]
        %v1759 = vld [vmem:[#allocation6 + $0x530] sm:$0xff]
        %v1760 = vld [vmem:[#allocation6 + $0x538] sm:$0xff]
        %v1761 = vld [vmem:[#allocation6 + $0x540] sm:$0xff]
        %v1762 = vld [vmem:[#allocation6 + $0x548] sm:$0xff]
        %v1763 = vld [vmem:[#allocation6 + $0x550] sm:$0xff]
        %v1764 = vld [vmem:[#allocation6 + $0x558] sm:$0xff]
        %v1765 = vld [vmem:[#allocation6 + $0x560] sm:$0xff]
        %v1766 = vld [vmem:[#allocation6 + $0x568] sm:$0xff]
        %v1767 = vld [vmem:[#allocation6 + $0x570] sm:$0xff]
        %v1768 = vld [vmem:[#allocation6 + $0x578] sm:$0xff]
        %v1769 = vld [vmem:[#allocation6 + $0x580] sm:$0xff]
        %v1770 = vld [vmem:[#allocation6 + $0x588] sm:$0xff]
        %v1771 = vld [vmem:[#allocation6 + $0x590] sm:$0xff]
        %v1772 = vld [vmem:[#allocation6 + $0x598] sm:$0xff]
        %v1773 = vld [vmem:[#allocation6 + $0x5a0] sm:$0xff]
        %v1774 = vld [vmem:[#allocation6 + $0x5a8] sm:$0xff]
        %v1775 = vld [vmem:[#allocation6 + $0x5b0] sm:$0xff]
        %v1776 = vld [vmem:[#allocation6 + $0x5b8] sm:$0xff]
        %v1777 = vld [vmem:[#allocation6 + $0x5c0] sm:$0xff]
        %v1778 = vld [vmem:[#allocation6 + $0x5c8] sm:$0xff]
        %v1779 = vld [vmem:[#allocation6 + $0x5d0] sm:$0xff]
        %v1780 = vld [vmem:[#allocation6 + $0x5d8] sm:$0xff]
        %v1781 = vld [vmem:[#allocation6 + $0x5e0] sm:$0xff]
        %v1782 = vld [vmem:[#allocation6 + $0x5e8] sm:$0xff]
        %v1783 = vld [vmem:[#allocation6 + $0x5f0] sm:$0xff]
        %v1784 = vld [vmem:[#allocation6 + $0x5f8] sm:$0xff]
        %v1785 = vld [vmem:[#allocation6 + $0x600] sm:$0xff]
        %v1786 = vld [vmem:[#allocation6 + $0x608] sm:$0xff]
        %v1787 = vld [vmem:[#allocation6 + $0x610] sm:$0xff]
        %v1788 = vld [vmem:[#allocation6 + $0x618] sm:$0xff]
        %v1789 = vld [vmem:[#allocation6 + $0x620] sm:$0xff]
        %v1790 = vld [vmem:[#allocation6 + $0x628] sm:$0xff]
        %v1791 = vld [vmem:[#allocation6 + $0x630] sm:$0xff]
        %v1792 = vld [vmem:[#allocation6 + $0x638] sm:$0xff]
        %v1793 = vld [vmem:[#allocation6 + $0x640] sm:$0xff]
        %v1794 = vld [vmem:[#allocation6 + $0x648] sm:$0xff]
        %v1795 = vld [vmem:[#allocation6 + $0x650] sm:$0xff]
        %v1796 = vld [vmem:[#allocation6 + $0x658] sm:$0xff]
        %v1797 = vld [vmem:[#allocation6 + $0x660] sm:$0xff]
        %v1798 = vld [vmem:[#allocation6 + $0x668] sm:$0xff]
        %v1799 = vld [vmem:[#allocation6 + $0x670] sm:$0xff]
        %v1800 = vld [vmem:[#allocation6 + $0x678] sm:$0xff]
        %v1801 = vld [vmem:[#allocation6 + $0x680] sm:$0xff]
        %v1802 = vld [vmem:[#allocation6 + $0x688] sm:$0xff]
        %v1803 = vld [vmem:[#allocation6 + $0x690] sm:$0xff]
        %v1804 = vld [vmem:[#allocation6 + $0x698] sm:$0xff]
        %v1805 = vld [vmem:[#allocation6 + $0x6a0] sm:$0xff]
        %v1806 = vld [vmem:[#allocation6 + $0x6a8] sm:$0xff]
        %v1807 = vld [vmem:[#allocation6 + $0x6b0] sm:$0xff]
        %v1808 = vld [vmem:[#allocation6 + $0x6b8] sm:$0xff]
        %v1809 = vld [vmem:[#allocation6 + $0x6c0] sm:$0xff]
        %v1810 = vld [vmem:[#allocation6 + $0x6c8] sm:$0xff]
        %v1811 = vld [vmem:[#allocation6 + $0x6d0] sm:$0xff]
        %v1812 = vld [vmem:[#allocation6 + $0x6d8] sm:$0xff]
        %v1813 = vld [vmem:[#allocation6 + $0x6e0] sm:$0xff]
        %v1814 = vld [vmem:[#allocation6 + $0x6e8] sm:$0xff]
        %v1815 = vld [vmem:[#allocation6 + $0x6f0] sm:$0xff]
        %v1816 = vld [vmem:[#allocation6 + $0x6f8] sm:$0xff]
        %v1817 = vld [vmem:[#allocation6 + $0x700] sm:$0xff]
        %v1818 = vld [vmem:[#allocation6 + $0x708] sm:$0xff]
        %v1819 = vld [vmem:[#allocation6 + $0x710] sm:$0xff]
        %v1820 = vld [vmem:[#allocation6 + $0x718] sm:$0xff]
        %v1821 = vld [vmem:[#allocation6 + $0x720] sm:$0xff]
        %v1822 = vld [vmem:[#allocation6 + $0x728] sm:$0xff]
        %v1823 = vld [vmem:[#allocation6 + $0x730] sm:$0xff]
        %v1824 = vld [vmem:[#allocation6 + $0x738] sm:$0xff]
        %v1825 = vld [vmem:[#allocation6 + $0x740] sm:$0xff]
        %v1826 = vld [vmem:[#allocation6 + $0x748] sm:$0xff]
        %v1827 = vld [vmem:[#allocation6 + $0x750] sm:$0xff]
        %v1828 = vld [vmem:[#allocation6 + $0x758] sm:$0xff]
        %v1829 = vld [vmem:[#allocation6 + $0x760] sm:$0xff]
        %v1830 = vld [vmem:[#allocation6 + $0x768] sm:$0xff]
        %v1831 = vld [vmem:[#allocation6 + $0x770] sm:$0xff]
        %v1832 = vld [vmem:[#allocation6 + $0x778] sm:$0xff]
        %v1833 = vld [vmem:[#allocation6 + $0x780] sm:$0xff]
        %v1834 = vld [vmem:[#allocation6 + $0x788] sm:$0xff]
        %v1835 = vld [vmem:[#allocation6 + $0x790] sm:$0xff]
        %v1836 = vld [vmem:[#allocation6 + $0x798] sm:$0xff]
        %v1837 = vld [vmem:[#allocation6 + $0x7a0] sm:$0xff]
        %v1838 = vld [vmem:[#allocation6 + $0x7a8] sm:$0xff]
        %v1839 = vld [vmem:[#allocation6 + $0x7b0] sm:$0xff]
        %v1840 = vld [vmem:[#allocation6 + $0x7b8] sm:$0xff]
        %v1841 = vld [vmem:[#allocation6 + $0x7c0] sm:$0xff]
        %v1842 = vld [vmem:[#allocation6 + $0x7c8] sm:$0xff]
        %v1843 = vld [vmem:[#allocation6 + $0x7d0] sm:$0xff]
        %v1844 = vld [vmem:[#allocation6 + $0x7d8] sm:$0xff]
        %v1845 = vld [vmem:[#allocation6 + $0x7e0] sm:$0xff]
        %v1846 = vld [vmem:[#allocation6 + $0x7e8] sm:$0xff]
        %v1847 = vld [vmem:[#allocation6 + $0x7f0] sm:$0xff]
        %v1848 = vld [vmem:[#allocation6 + $0x7f8] sm:$0xff]
        %v1849 = vld [vmem:[#allocation6 + $0x800] sm:$0xff]
        %v1850 = vld [vmem:[#allocation6 + $0x808] sm:$0xff]
        %v1851 = vld [vmem:[#allocation6 + $0x810] sm:$0xff]
        %v1852 = vld [vmem:[#allocation6 + $0x818] sm:$0xff]
        %v1853 = vld [vmem:[#allocation6 + $0x820] sm:$0xff]
        %v1854 = vld [vmem:[#allocation6 + $0x828] sm:$0xff]
        %v1855 = vld [vmem:[#allocation6 + $0x830] sm:$0xff]
        %v1856 = vld [vmem:[#allocation6 + $0x838] sm:$0xff]
        %v1857 = vld [vmem:[#allocation6 + $0x840] sm:$0xff]
        %v1858 = vld [vmem:[#allocation6 + $0x848] sm:$0xff]
        %v1859 = vld [vmem:[#allocation6 + $0x850] sm:$0xff]
        %v1860 = vld [vmem:[#allocation6 + $0x858] sm:$0xff]
        %v1861 = vld [vmem:[#allocation6 + $0x860] sm:$0xff]
        %v1862 = vld [vmem:[#allocation6 + $0x868] sm:$0xff]
        %v1863 = vld [vmem:[#allocation6 + $0x870] sm:$0xff]
        %v1864 = vld [vmem:[#allocation6 + $0x878] sm:$0xff]
        %v1865 = vld [vmem:[#allocation6 + $0x880] sm:$0xff]
        %v1866 = vld [vmem:[#allocation6 + $0x888] sm:$0xff]
        %v1867 = vld [vmem:[#allocation6 + $0x890] sm:$0xff]
        %v1868 = vld [vmem:[#allocation6 + $0x898] sm:$0xff]
        %v1869 = vld [vmem:[#allocation6 + $0x8a0] sm:$0xff]
        %v1870 = vld [vmem:[#allocation6 + $0x8a8] sm:$0xff]
        %v1871 = vld [vmem:[#allocation6 + $0x8b0] sm:$0xff]
        %v1872 = vld [vmem:[#allocation6 + $0x8b8] sm:$0xff]
        %v1873 = vld [vmem:[#allocation6 + $0x8c0] sm:$0xff]
        %v1874 = vld [vmem:[#allocation6 + $0x8c8] sm:$0xff]
        %v1875 = vld [vmem:[#allocation6 + $0x8d0] sm:$0xff]
        %v1876 = vld [vmem:[#allocation6 + $0x8d8] sm:$0xff]
        %v1877 = vld [vmem:[#allocation6 + $0x8e0] sm:$0xff]
        %v1878 = vld [vmem:[#allocation6 + $0x8e8] sm:$0xff]
        %v1879 = vld [vmem:[#allocation6 + $0x8f0] sm:$0xff]
        %v1880 = vld [vmem:[#allocation6 + $0x8f8] sm:$0xff]
        %v1881 = vld [vmem:[#allocation12] sm:$0xff]
        %v1882 = vld [vmem:[#allocation12 + $0x8] sm:$0xff]
        %v1883 = vld [vmem:[#allocation12 + $0x10] sm:$0xff]
        %v1884 = vld [vmem:[#allocation12 + $0x18] sm:$0xff]
        %v1885 = vld [vmem:[#allocation12 + $0x20] sm:$0xff]
        %v1886 = vld [vmem:[#allocation12 + $0x28] sm:$0xff]
        %v1887 = vld [vmem:[#allocation12 + $0x30] sm:$0xff]
        %v1888 = vld [vmem:[#allocation12 + $0x38] sm:$0xff]
        %v1889 = vld [vmem:[#allocation12 + $0x40] sm:$0xff]
        %v1890 = vld [vmem:[#allocation12 + $0x48] sm:$0xff]
        %v1891 = vld [vmem:[#allocation12 + $0x50] sm:$0xff]
        %v1892 = vld [vmem:[#allocation12 + $0x58] sm:$0xff]
        %v1893 = vld [vmem:[#allocation12 + $0x60] sm:$0xff]
        %v1894 = vld [vmem:[#allocation12 + $0x68] sm:$0xff]
        %v1895 = vld [vmem:[#allocation12 + $0x70] sm:$0xff]
        %v1896 = vld [vmem:[#allocation12 + $0x78] sm:$0xff]
        %v1897 = vld [vmem:[#allocation12 + $0x80] sm:$0xff]
        %v1898 = vld [vmem:[#allocation12 + $0x88] sm:$0xff]
        %v1899 = vld [vmem:[#allocation12 + $0x90] sm:$0xff]
        %v1900 = vld [vmem:[#allocation12 + $0x98] sm:$0xff]
        %v1901 = vld [vmem:[#allocation12 + $0xa0] sm:$0xff]
        %v1902 = vld [vmem:[#allocation12 + $0xa8] sm:$0xff]
        %v1903 = vld [vmem:[#allocation12 + $0xb0] sm:$0xff]
        %v1904 = vld [vmem:[#allocation12 + $0xb8] sm:$0xff]
        %v1905 = vld [vmem:[#allocation12 + $0xc0] sm:$0xff]
        %v1906 = vld [vmem:[#allocation12 + $0xc8] sm:$0xff]
        %v1907 = vld [vmem:[#allocation12 + $0xd0] sm:$0xff]
        %v1908 = vld [vmem:[#allocation12 + $0xd8] sm:$0xff]
        %v1909 = vld [vmem:[#allocation12 + $0xe0] sm:$0xff]
        %v1910 = vld [vmem:[#allocation12 + $0xe8] sm:$0xff]
        %v1911 = vld [vmem:[#allocation12 + $0xf0] sm:$0xff]
        %v1912 = vld [vmem:[#allocation12 + $0xf8] sm:$0xff]
        %v1913 = vld [vmem:[#allocation12 + $0x100] sm:$0xff]
        %v1914 = vld [vmem:[#allocation12 + $0x108] sm:$0xff]
        %v1915 = vld [vmem:[#allocation12 + $0x110] sm:$0xff]
        %v1916 = vld [vmem:[#allocation12 + $0x118] sm:$0xff]
        %v1917 = vld [vmem:[#allocation12 + $0x120] sm:$0xff]
        %v1918 = vld [vmem:[#allocation12 + $0x128] sm:$0xff]
        %v1919 = vld [vmem:[#allocation12 + $0x130] sm:$0xff]
        %v1920 = vld [vmem:[#allocation12 + $0x138] sm:$0xff]
        %v1921 = vld [vmem:[#allocation12 + $0x140] sm:$0xff]
        %v1922 = vld [vmem:[#allocation12 + $0x148] sm:$0xff]
        %v1923 = vld [vmem:[#allocation12 + $0x150] sm:$0xff]
        %v1924 = vld [vmem:[#allocation12 + $0x158] sm:$0xff]
        %v1925 = vld [vmem:[#allocation12 + $0x160] sm:$0xff]
        %v1926 = vld [vmem:[#allocation12 + $0x168] sm:$0xff]
        %v1927 = vld [vmem:[#allocation12 + $0x170] sm:$0xff]
        %v1928 = vld [vmem:[#allocation12 + $0x178] sm:$0xff]
        %v1929 = vld [vmem:[#allocation12 + $0x180] sm:$0xff]
        %v1930 = vld [vmem:[#allocation12 + $0x188] sm:$0xff]
        %v1931 = vld [vmem:[#allocation12 + $0x190] sm:$0xff]
        %v1932 = vld [vmem:[#allocation12 + $0x198] sm:$0xff]
        %v1933 = vld [vmem:[#allocation12 + $0x1a0] sm:$0xff]
        %v1934 = vld [vmem:[#allocation12 + $0x1a8] sm:$0xff]
        %v1935 = vld [vmem:[#allocation12 + $0x1b0] sm:$0xff]
        %v1936 = vld [vmem:[#allocation12 + $0x1b8] sm:$0xff]
        %v1937 = vld [vmem:[#allocation12 + $0x1c0] sm:$0xff]
        %v1938 = vld [vmem:[#allocation12 + $0x1c8] sm:$0xff]
        %v1939 = vld [vmem:[#allocation12 + $0x1d0] sm:$0xff]
        %v1940 = vld [vmem:[#allocation12 + $0x1d8] sm:$0xff]
        %v1941 = vld [vmem:[#allocation12 + $0x1e0] sm:$0xff]
        %v1942 = vld [vmem:[#allocation12 + $0x1e8] sm:$0xff]
        %v1943 = vld [vmem:[#allocation12 + $0x1f0] sm:$0xff]
        %v1944 = vld [vmem:[#allocation12 + $0x1f8] sm:$0xff]
        %v1945 = vld [vmem:[#allocation12 + $0x200] sm:$0xff]
        %v1946 = vld [vmem:[#allocation12 + $0x208] sm:$0xff]
        %v1947 = vld [vmem:[#allocation12 + $0x210] sm:$0xff]
        %v1948 = vld [vmem:[#allocation12 + $0x218] sm:$0xff]
        %v1949 = vld [vmem:[#allocation12 + $0x220] sm:$0xff]
        %v1950 = vld [vmem:[#allocation12 + $0x228] sm:$0xff]
        %v1951 = vld [vmem:[#allocation12 + $0x230] sm:$0xff]
        %v1952 = vld [vmem:[#allocation12 + $0x238] sm:$0xff]
        %v1953 = vld [vmem:[#allocation12 + $0x240] sm:$0xff]
        %v1954 = vld [vmem:[#allocation12 + $0x248] sm:$0xff]
        %v1955 = vld [vmem:[#allocation12 + $0x250] sm:$0xff]
        %v1956 = vld [vmem:[#allocation12 + $0x258] sm:$0xff]
        %v1957 = vld [vmem:[#allocation12 + $0x260] sm:$0xff]
        %v1958 = vld [vmem:[#allocation12 + $0x268] sm:$0xff]
        %v1959 = vld [vmem:[#allocation12 + $0x270] sm:$0xff]
        %v1960 = vld [vmem:[#allocation12 + $0x278] sm:$0xff]
        %v1961 = vld [vmem:[#allocation12 + $0x280] sm:$0xff]
        %v1962 = vld [vmem:[#allocation12 + $0x288] sm:$0xff]
        %v1963 = vld [vmem:[#allocation12 + $0x290] sm:$0xff]
        %v1964 = vld [vmem:[#allocation12 + $0x298] sm:$0xff]
        %v1965 = vld [vmem:[#allocation12 + $0x2a0] sm:$0xff]
        %v1966 = vld [vmem:[#allocation12 + $0x2a8] sm:$0xff]
        %v1967 = vld [vmem:[#allocation12 + $0x2b0] sm:$0xff]
        %v1968 = vld [vmem:[#allocation12 + $0x2b8] sm:$0xff]
        %v1969 = vld [vmem:[#allocation12 + $0x2c0] sm:$0xff]
        %v1970 = vld [vmem:[#allocation12 + $0x2c8] sm:$0xff]
        %v1971 = vld [vmem:[#allocation12 + $0x2d0] sm:$0xff]
        %v1972 = vld [vmem:[#allocation12 + $0x2d8] sm:$0xff]
        %v1973 = vld [vmem:[#allocation12 + $0x2e0] sm:$0xff]
        %v1974 = vld [vmem:[#allocation12 + $0x2e8] sm:$0xff]
        %v1975 = vld [vmem:[#allocation12 + $0x2f0] sm:$0xff]
        %v1976 = vld [vmem:[#allocation12 + $0x2f8] sm:$0xff]
        %v1977 = vld [vmem:[#allocation12 + $0x300] sm:$0xff]
        %v1978 = vld [vmem:[#allocation12 + $0x308] sm:$0xff]
        %v1979 = vld [vmem:[#allocation12 + $0x310] sm:$0xff]
        %v1980 = vld [vmem:[#allocation12 + $0x318] sm:$0xff]
        %v1981 = vld [vmem:[#allocation12 + $0x320] sm:$0xff]
        %v1982 = vld [vmem:[#allocation12 + $0x328] sm:$0xff]
        %v1983 = vld [vmem:[#allocation12 + $0x330] sm:$0xff]
        %v1984 = vld [vmem:[#allocation12 + $0x338] sm:$0xff]
        %v1985 = vld [vmem:[#allocation12 + $0x340] sm:$0xff]
        %v1986 = vld [vmem:[#allocation12 + $0x348] sm:$0xff]
        %v1987 = vld [vmem:[#allocation12 + $0x350] sm:$0xff]
        %v1988 = vld [vmem:[#allocation12 + $0x358] sm:$0xff]
        %v1989 = vld [vmem:[#allocation12 + $0x360] sm:$0xff]
        %v1990 = vld [vmem:[#allocation12 + $0x368] sm:$0xff]
        %v1991 = vld [vmem:[#allocation12 + $0x370] sm:$0xff]
        %v1992 = vld [vmem:[#allocation12 + $0x378] sm:$0xff]
        %v1993 = vld [vmem:[#allocation12 + $0x380] sm:$0xff]
        %v1994 = vld [vmem:[#allocation12 + $0x388] sm:$0xff]
        %v1995 = vld [vmem:[#allocation12 + $0x390] sm:$0xff]
        %v1996 = vld [vmem:[#allocation12 + $0x398] sm:$0xff]
        %v1997 = vld [vmem:[#allocation12 + $0x3a0] sm:$0xff]
        %v1998 = vld [vmem:[#allocation12 + $0x3a8] sm:$0xff]
        %v1999 = vld [vmem:[#allocation12 + $0x3b0] sm:$0xff]
        %v2000 = vld [vmem:[#allocation12 + $0x3b8] sm:$0xff]
        %v2001 = vld [vmem:[#allocation12 + $0x3c0] sm:$0xff]
        %v2002 = vld [vmem:[#allocation12 + $0x3c8] sm:$0xff]
        %v2003 = vld [vmem:[#allocation12 + $0x3d0] sm:$0xff]
        %v2004 = vld [vmem:[#allocation12 + $0x3d8] sm:$0xff]
        %v2005 = vld [vmem:[#allocation12 + $0x3e0] sm:$0xff]
        %v2006 = vld [vmem:[#allocation12 + $0x3e8] sm:$0xff]
        %v2007 = vld [vmem:[#allocation12 + $0x3f0] sm:$0xff]
        %v2008 = vld [vmem:[#allocation12 + $0x3f8] sm:$0xff]
        %v2009 = vld [vmem:[#allocation12 + $0x400] sm:$0xff]
        %v2010 = vld [vmem:[#allocation12 + $0x408] sm:$0xff]
        %v2011 = vld [vmem:[#allocation12 + $0x410] sm:$0xff]
        %v2012 = vld [vmem:[#allocation12 + $0x418] sm:$0xff]
        %v2013 = vld [vmem:[#allocation12 + $0x420] sm:$0xff]
        %v2014 = vld [vmem:[#allocation12 + $0x428] sm:$0xff]
        %v2015 = vld [vmem:[#allocation12 + $0x430] sm:$0xff]
        %v2016 = vld [vmem:[#allocation12 + $0x438] sm:$0xff]
        %v2017 = vld [vmem:[#allocation12 + $0x440] sm:$0xff]
        %v2018 = vld [vmem:[#allocation12 + $0x448] sm:$0xff]
        %v2019 = vld [vmem:[#allocation12 + $0x450] sm:$0xff]
        %v2020 = vld [vmem:[#allocation12 + $0x458] sm:$0xff]
        %v2021 = vld [vmem:[#allocation12 + $0x460] sm:$0xff]
        %v2022 = vld [vmem:[#allocation12 + $0x468] sm:$0xff]
        %v2023 = vld [vmem:[#allocation12 + $0x470] sm:$0xff]
        %v2024 = vld [vmem:[#allocation12 + $0x478] sm:$0xff]
        %v2025 = vld [vmem:[#allocation12 + $0x480] sm:$0xff]
        %v2026 = vld [vmem:[#allocation12 + $0x488] sm:$0xff]
        %v2027 = vld [vmem:[#allocation12 + $0x490] sm:$0xff]
        %v2028 = vld [vmem:[#allocation12 + $0x498] sm:$0xff]
        %v2029 = vld [vmem:[#allocation12 + $0x4a0] sm:$0xff]
        %v2030 = vld [vmem:[#allocation12 + $0x4a8] sm:$0xff]
        %v2031 = vld [vmem:[#allocation12 + $0x4b0] sm:$0xff]
        %v2032 = vld [vmem:[#allocation12 + $0x4b8] sm:$0xff]
        %v2033 = vld [vmem:[#allocation12 + $0x4c0] sm:$0xff]
        %v2034 = vld [vmem:[#allocation12 + $0x4c8] sm:$0xff]
        %v2035 = vld [vmem:[#allocation12 + $0x4d0] sm:$0xff]
        %v2036 = vld [vmem:[#allocation12 + $0x4d8] sm:$0xff]
        %v2037 = vld [vmem:[#allocation12 + $0x4e0] sm:$0xff]
        %v2038 = vld [vmem:[#allocation12 + $0x4e8] sm:$0xff]
        %v2039 = vld [vmem:[#allocation12 + $0x4f0] sm:$0xff]
        %v2040 = vld [vmem:[#allocation12 + $0x4f8] sm:$0xff]
        %v2041 = vld [vmem:[#allocation12 + $0x500] sm:$0xff]
        %v2042 = vld [vmem:[#allocation12 + $0x508] sm:$0xff]
        %v2043 = vld [vmem:[#allocation12 + $0x510] sm:$0xff]
        %v2044 = vld [vmem:[#allocation12 + $0x518] sm:$0xff]
        %v2045 = vld [vmem:[#allocation12 + $0x520] sm:$0xff]
        %v2046 = vld [vmem:[#allocation12 + $0x528] sm:$0xff]
        %v2047 = vld [vmem:[#allocation12 + $0x530] sm:$0xff]
        %v2048 = vld [vmem:[#allocation12 + $0x538] sm:$0xff]
        %v2049 = vld [vmem:[#allocation12 + $0x540] sm:$0xff]
        %v2050 = vld [vmem:[#allocation12 + $0x548] sm:$0xff]
        %v2051 = vld [vmem:[#allocation12 + $0x550] sm:$0xff]
        %v2052 = vld [vmem:[#allocation12 + $0x558] sm:$0xff]
        %v2053 = vld [vmem:[#allocation12 + $0x560] sm:$0xff]
        %v2054 = vld [vmem:[#allocation12 + $0x568] sm:$0xff]
        %v2055 = vld [vmem:[#allocation12 + $0x570] sm:$0xff]
        %v2056 = vld [vmem:[#allocation12 + $0x578] sm:$0xff]
        %v2057 = vld [vmem:[#allocation12 + $0x580] sm:$0xff]
        %v2058 = vld [vmem:[#allocation12 + $0x588] sm:$0xff]
        %v2059 = vld [vmem:[#allocation12 + $0x590] sm:$0xff]
        %v2060 = vld [vmem:[#allocation12 + $0x598] sm:$0xff]
        %v2061 = vld [vmem:[#allocation12 + $0x5a0] sm:$0xff]
        %v2062 = vld [vmem:[#allocation12 + $0x5a8] sm:$0xff]
        %v2063 = vld [vmem:[#allocation12 + $0x5b0] sm:$0xff]
        %v2064 = vld [vmem:[#allocation12 + $0x5b8] sm:$0xff]
        %v2065 = vld [vmem:[#allocation12 + $0x5c0] sm:$0xff]
        %v2066 = vld [vmem:[#allocation12 + $0x5c8] sm:$0xff]
        %v2067 = vld [vmem:[#allocation12 + $0x5d0] sm:$0xff]
        %v2068 = vld [vmem:[#allocation12 + $0x5d8] sm:$0xff]
        %v2069 = vld [vmem:[#allocation12 + $0x5e0] sm:$0xff]
        %v2070 = vld [vmem:[#allocation12 + $0x5e8] sm:$0xff]
        %v2071 = vld [vmem:[#allocation12 + $0x5f0] sm:$0xff]
        %v2072 = vld [vmem:[#allocation12 + $0x5f8] sm:$0xff]
        %v2073 = vld [vmem:[#allocation12 + $0x600] sm:$0xff]
        %v2074 = vld [vmem:[#allocation12 + $0x608] sm:$0xff]
        %v2075 = vld [vmem:[#allocation12 + $0x610] sm:$0xff]
        %v2076 = vld [vmem:[#allocation12 + $0x618] sm:$0xff]
        %v2077 = vld [vmem:[#allocation12 + $0x620] sm:$0xff]
        %v2078 = vld [vmem:[#allocation12 + $0x628] sm:$0xff]
        %v2079 = vld [vmem:[#allocation12 + $0x630] sm:$0xff]
        %v2080 = vld [vmem:[#allocation12 + $0x638] sm:$0xff]
        %v2081 = vld [vmem:[#allocation12 + $0x640] sm:$0xff]
        %v2082 = vld [vmem:[#allocation12 + $0x648] sm:$0xff]
        %v2083 = vld [vmem:[#allocation12 + $0x650] sm:$0xff]
        %v2084 = vld [vmem:[#allocation12 + $0x658] sm:$0xff]
        %v2085 = vld [vmem:[#allocation12 + $0x660] sm:$0xff]
        %v2086 = vld [vmem:[#allocation12 + $0x668] sm:$0xff]
        %v2087 = vld [vmem:[#allocation12 + $0x670] sm:$0xff]
        %v2088 = vld [vmem:[#allocation12 + $0x678] sm:$0xff]
        %v2089 = vld [vmem:[#allocation12 + $0x680] sm:$0xff]
        %v2090 = vld [vmem:[#allocation12 + $0x688] sm:$0xff]
        %v2091 = vld [vmem:[#allocation12 + $0x690] sm:$0xff]
        %v2092 = vld [vmem:[#allocation12 + $0x698] sm:$0xff]
        %v2093 = vld [vmem:[#allocation12 + $0x6a0] sm:$0xff]
        %v2094 = vld [vmem:[#allocation12 + $0x6a8] sm:$0xff]
        %v2095 = vld [vmem:[#allocation12 + $0x6b0] sm:$0xff]
        %v2096 = vld [vmem:[#allocation12 + $0x6b8] sm:$0xff]
        %v2097 = vld [vmem:[#allocation12 + $0x6c0] sm:$0xff]
        %v2098 = vld [vmem:[#allocation12 + $0x6c8] sm:$0xff]
        %v2099 = vld [vmem:[#allocation12 + $0x6d0] sm:$0xff]
        %v2100 = vld [vmem:[#allocation12 + $0x6d8] sm:$0xff]
        %v2101 = vld [vmem:[#allocation12 + $0x6e0] sm:$0xff]
        %v2102 = vld [vmem:[#allocation12 + $0x6e8] sm:$0xff]
        %v2103 = vld [vmem:[#allocation12 + $0x6f0] sm:$0xff]
        %v2104 = vld [vmem:[#allocation12 + $0x6f8] sm:$0xff]
        %v2105 = vld [vmem:[#allocation12 + $0x700] sm:$0xff]
        %v2106 = vld [vmem:[#allocation12 + $0x708] sm:$0xff]
        %v2107 = vld [vmem:[#allocation12 + $0x710] sm:$0xff]
        %v2108 = vld [vmem:[#allocation12 + $0x718] sm:$0xff]
        %v2109 = vld [vmem:[#allocation12 + $0x720] sm:$0xff]
        %v2110 = vld [vmem:[#allocation12 + $0x728] sm:$0xff]
        %v2111 = vld [vmem:[#allocation12 + $0x730] sm:$0xff]
        %v2112 = vld [vmem:[#allocation12 + $0x738] sm:$0xff]
        %v2113 = vld [vmem:[#allocation12 + $0x740] sm:$0xff]
        %v2114 = vld [vmem:[#allocation12 + $0x748] sm:$0xff]
        %v2115 = vld [vmem:[#allocation12 + $0x750] sm:$0xff]
        %v2116 = vld [vmem:[#allocation12 + $0x758] sm:$0xff]
        %v2117 = vld [vmem:[#allocation12 + $0x760] sm:$0xff]
        %v2118 = vld [vmem:[#allocation12 + $0x768] sm:$0xff]
        %v2119 = vld [vmem:[#allocation12 + $0x770] sm:$0xff]
        %v2120 = vld [vmem:[#allocation12 + $0x778] sm:$0xff]
        %v2121 = vld [vmem:[#allocation12 + $0x780] sm:$0xff]
        %v2122 = vld [vmem:[#allocation12 + $0x788] sm:$0xff]
        %v2123 = vld [vmem:[#allocation12 + $0x790] sm:$0xff]
        %v2124 = vld [vmem:[#allocation12 + $0x798] sm:$0xff]
        %v2125 = vld [vmem:[#allocation12 + $0x7a0] sm:$0xff]
        %v2126 = vld [vmem:[#allocation12 + $0x7a8] sm:$0xff]
        %v2127 = vld [vmem:[#allocation12 + $0x7b0] sm:$0xff]
        %v2128 = vld [vmem:[#allocation12 + $0x7b8] sm:$0xff]
        %v2129 = vld [vmem:[#allocation12 + $0x7c0] sm:$0xff]
        %v2130 = vld [vmem:[#allocation12 + $0x7c8] sm:$0xff]
        %v2131 = vld [vmem:[#allocation12 + $0x7d0] sm:$0xff]
        %v2132 = vld [vmem:[#allocation12 + $0x7d8] sm:$0xff]
        %v2133 = vld [vmem:[#allocation12 + $0x7e0] sm:$0xff]
        %v2134 = vld [vmem:[#allocation12 + $0x7e8] sm:$0xff]
        %v2135 = vld [vmem:[#allocation12 + $0x7f0] sm:$0xff]
        %v2136 = vld [vmem:[#allocation12 + $0x7f8] sm:$0xff]
        %v2137 = vld [vmem:[#allocation12 + $0x800] sm:$0xff]
        %v2138 = vld [vmem:[#allocation12 + $0x808] sm:$0xff]
        %v2139 = vld [vmem:[#allocation12 + $0x810] sm:$0xff]
        %v2140 = vld [vmem:[#allocation12 + $0x818] sm:$0xff]
        %v2141 = vld [vmem:[#allocation12 + $0x820] sm:$0xff]
        %v2142 = vld [vmem:[#allocation12 + $0x828] sm:$0xff]
        %v2143 = vld [vmem:[#allocation12 + $0x830] sm:$0xff]
        %v2144 = vld [vmem:[#allocation12 + $0x838] sm:$0xff]
        %v2145 = vld [vmem:[#allocation12 + $0x840] sm:$0xff]
        %v2146 = vld [vmem:[#allocation12 + $0x848] sm:$0xff]
        %v2147 = vld [vmem:[#allocation12 + $0x850] sm:$0xff]
        %v2148 = vld [vmem:[#allocation12 + $0x858] sm:$0xff]
        %v2149 = vld [vmem:[#allocation12 + $0x860] sm:$0xff]
        %v2150 = vld [vmem:[#allocation12 + $0x868] sm:$0xff]
        %v2151 = vld [vmem:[#allocation12 + $0x870] sm:$0xff]
        %v2152 = vld [vmem:[#allocation12 + $0x878] sm:$0xff]
        %v2153 = vld [vmem:[#allocation12 + $0x880] sm:$0xff]
        %v2154 = vld [vmem:[#allocation12 + $0x888] sm:$0xff]
        %v2155 = vld [vmem:[#allocation12 + $0x890] sm:$0xff]
        %v2156 = vld [vmem:[#allocation12 + $0x898] sm:$0xff]
        %v2157 = vld [vmem:[#allocation12 + $0x8a0] sm:$0xff]
        %v2158 = vld [vmem:[#allocation12 + $0x8a8] sm:$0xff]
        %v2159 = vld [vmem:[#allocation12 + $0x8b0] sm:$0xff]
        %v2160 = vld [vmem:[#allocation12 + $0x8b8] sm:$0xff]
        %v2161 = vld [vmem:[#allocation12 + $0x8c0] sm:$0xff]
        %v2162 = vld [vmem:[#allocation12 + $0x8c8] sm:$0xff]
        %v2163 = vld [vmem:[#allocation12 + $0x8d0] sm:$0xff]
        %v2164 = vld [vmem:[#allocation12 + $0x8d8] sm:$0xff]
        %v2165 = vld [vmem:[#allocation12 + $0x8e0] sm:$0xff]
        %v2166 = vld [vmem:[#allocation12 + $0x8e8] sm:$0xff]
        %v2167 = vld [vmem:[#allocation12 + $0x8f0] sm:$0xff]
        %v2168 = vld [vmem:[#allocation12 + $0x8f8] sm:$0xff]
        %v2169 = vld [vmem:[#allocation13] sm:$0x3]
        %v2171 = vlaneseq
        %v2172 = vshrl.u32 %v2171, 7
        %v2173 = vsub.s32 0, %v2172
        %v2174 = vrot.slane %v2169, %v2173
        %v2175 = vlaneseq
        %v2176 = vshrl.u32 %v2175, 7
        %v2177 = vsub.s32 1, %v2176
        %v2178 = vrot.slane %v2169, %v2177
        %v2469 = vunpack.c.l.b16 %v1881
        %v2470 = vunpack.c.h.b16 %v1881
        %v2471 = vunpack.c.l.b16 %v1882
        %v2472 = vunpack.c.h.b16 %v1882
        %v2473 = vunpack.c.l.b16 %v1883
        %v2474 = vunpack.c.h.b16 %v1883
        %v2475 = vunpack.c.l.b16 %v1884
        %v2476 = vunpack.c.h.b16 %v1884
        %v2477 = vunpack.c.l.b16 %v1885
        %v2478 = vunpack.c.h.b16 %v1885
        %v2479 = vunpack.c.l.b16 %v1886
        %v2480 = vunpack.c.h.b16 %v1886
        %v2481 = vunpack.c.l.b16 %v1887
        %v2482 = vunpack.c.h.b16 %v1887
        %v2483 = vunpack.c.l.b16 %v1888
        %v2484 = vunpack.c.h.b16 %v1888
        %v2485 = vunpack.c.l.b16 %v1889
        %v2486 = vunpack.c.h.b16 %v1889
        %v2487 = vunpack.c.l.b16 %v1890
        %v2488 = vunpack.c.h.b16 %v1890
        %v2489 = vunpack.c.l.b16 %v1891
        %v2490 = vunpack.c.h.b16 %v1891
        %v2491 = vunpack.c.l.b16 %v1892
        %v2492 = vunpack.c.h.b16 %v1892
        %v2493 = vunpack.c.l.b16 %v1893
        %v2494 = vunpack.c.h.b16 %v1893
        %v2495 = vunpack.c.l.b16 %v1894
        %v2496 = vunpack.c.h.b16 %v1894
        %v2497 = vunpack.c.l.b16 %v1895
        %v2498 = vunpack.c.h.b16 %v1895
        %v2499 = vunpack.c.l.b16 %v1896
        %v2500 = vunpack.c.h.b16 %v1896
        %v2501 = vunpack.c.l.b16 %v1897
        %v2502 = vunpack.c.h.b16 %v1897
        %v2503 = vunpack.c.l.b16 %v1898
        %v2504 = vunpack.c.h.b16 %v1898
        %v2505 = vunpack.c.l.b16 %v1899
        %v2506 = vunpack.c.h.b16 %v1899
        %v2507 = vunpack.c.l.b16 %v1900
        %v2508 = vunpack.c.h.b16 %v1900
        %v2509 = vunpack.c.l.b16 %v1901
        %v2510 = vunpack.c.h.b16 %v1901
        %v2511 = vunpack.c.l.b16 %v1902
        %v2512 = vunpack.c.h.b16 %v1902
        %v2513 = vunpack.c.l.b16 %v1903
        %v2514 = vunpack.c.h.b16 %v1903
        %v2515 = vunpack.c.l.b16 %v1904
        %v2516 = vunpack.c.h.b16 %v1904
        %v2517 = vunpack.c.l.b16 %v1905
        %v2518 = vunpack.c.h.b16 %v1905
        %v2519 = vunpack.c.l.b16 %v1906
        %v2520 = vunpack.c.h.b16 %v1906
        %v2521 = vunpack.c.l.b16 %v1907
        %v2522 = vunpack.c.h.b16 %v1907
        %v2523 = vunpack.c.l.b16 %v1908
        %v2524 = vunpack.c.h.b16 %v1908
        %v2525 = vunpack.c.l.b16 %v1909
        %v2526 = vunpack.c.h.b16 %v1909
        %v2527 = vunpack.c.l.b16 %v1910
        %v2528 = vunpack.c.h.b16 %v1910
        %v2529 = vunpack.c.l.b16 %v1911
        %v2530 = vunpack.c.h.b16 %v1911
        %v2531 = vunpack.c.l.b16 %v1912
        %v2532 = vunpack.c.h.b16 %v1912
        %v2533 = vunpack.c.l.b16 %v1913
        %v2534 = vunpack.c.h.b16 %v1913
        %v2535 = vunpack.c.l.b16 %v1914
        %v2536 = vunpack.c.h.b16 %v1914
        %v2537 = vunpack.c.l.b16 %v1915
        %v2538 = vunpack.c.h.b16 %v1915
        %v2539 = vunpack.c.l.b16 %v1916
        %v2540 = vunpack.c.h.b16 %v1916
        %v2541 = vunpack.c.l.b16 %v1917
        %v2542 = vunpack.c.h.b16 %v1917
        %v2543 = vunpack.c.l.b16 %v1918
        %v2544 = vunpack.c.h.b16 %v1918
        %v2545 = vunpack.c.l.b16 %v1919
        %v2546 = vunpack.c.h.b16 %v1919
        %v2547 = vunpack.c.l.b16 %v1920
        %v2548 = vunpack.c.h.b16 %v1920
        %v2549 = vunpack.c.l.b16 %v1921
        %v2550 = vunpack.c.h.b16 %v1921
        %v2551 = vunpack.c.l.b16 %v1922
        %v2552 = vunpack.c.h.b16 %v1922
        %v2553 = vunpack.c.l.b16 %v1923
        %v2554 = vunpack.c.h.b16 %v1923
        %v2555 = vunpack.c.l.b16 %v1924
        %v2556 = vunpack.c.h.b16 %v1924
        %v2557 = vunpack.c.l.b16 %v1925
        %v2558 = vunpack.c.h.b16 %v1925
        %v2559 = vunpack.c.l.b16 %v1926
        %v2560 = vunpack.c.h.b16 %v1926
        %v2561 = vunpack.c.l.b16 %v1927
        %v2562 = vunpack.c.h.b16 %v1927
        %v2563 = vunpack.c.l.b16 %v1928
        %v2564 = vunpack.c.h.b16 %v1928
        %v2565 = vunpack.c.l.b16 %v1929
        %v2566 = vunpack.c.h.b16 %v1929
        %v2567 = vunpack.c.l.b16 %v1930
        %v2568 = vunpack.c.h.b16 %v1930
        %v2569 = vunpack.c.l.b16 %v1931
        %v2570 = vunpack.c.h.b16 %v1931
        %v2571 = vunpack.c.l.b16 %v1932
        %v2572 = vunpack.c.h.b16 %v1932
        %v2573 = vunpack.c.l.b16 %v1933
        %v2574 = vunpack.c.h.b16 %v1933
        %v2575 = vunpack.c.l.b16 %v1934
        %v2576 = vunpack.c.h.b16 %v1934
        %v2577 = vunpack.c.l.b16 %v1935
        %v2578 = vunpack.c.h.b16 %v1935
        %v2579 = vunpack.c.l.b16 %v1936
        %v2580 = vunpack.c.h.b16 %v1936
        %v2581 = vunpack.c.l.b16 %v1937
        %v2582 = vunpack.c.h.b16 %v1937
        %v2583 = vunpack.c.l.b16 %v1938
        %v2584 = vunpack.c.h.b16 %v1938
        %v2585 = vunpack.c.l.b16 %v1939
        %v2586 = vunpack.c.h.b16 %v1939
        %v2587 = vunpack.c.l.b16 %v1940
        %v2588 = vunpack.c.h.b16 %v1940
        %v2589 = vunpack.c.l.b16 %v1941
        %v2590 = vunpack.c.h.b16 %v1941
        %v2591 = vunpack.c.l.b16 %v1942
        %v2592 = vunpack.c.h.b16 %v1942
        %v2593 = vunpack.c.l.b16 %v1943
        %v2594 = vunpack.c.h.b16 %v1943
        %v2595 = vunpack.c.l.b16 %v1944
        %v2596 = vunpack.c.h.b16 %v1944
        %v2597 = vunpack.c.l.b16 %v1945
        %v2598 = vunpack.c.h.b16 %v1945
        %v2599 = vunpack.c.l.b16 %v1946
        %v2600 = vunpack.c.h.b16 %v1946
        %v2601 = vunpack.c.l.b16 %v1947
        %v2602 = vunpack.c.h.b16 %v1947
        %v2603 = vunpack.c.l.b16 %v1948
        %v2604 = vunpack.c.h.b16 %v1948
        %v2605 = vunpack.c.l.b16 %v1949
        %v2606 = vunpack.c.h.b16 %v1949
        %v2607 = vunpack.c.l.b16 %v1950
        %v2608 = vunpack.c.h.b16 %v1950
        %v2609 = vunpack.c.l.b16 %v1951
        %v2610 = vunpack.c.h.b16 %v1951
        %v2611 = vunpack.c.l.b16 %v1952
        %v2612 = vunpack.c.h.b16 %v1952
        %v2613 = vunpack.c.l.b16 %v1953
        %v2614 = vunpack.c.h.b16 %v1953
        %v2615 = vunpack.c.l.b16 %v1954
        %v2616 = vunpack.c.h.b16 %v1954
        %v2617 = vunpack.c.l.b16 %v1955
        %v2618 = vunpack.c.h.b16 %v1955
        %v2619 = vunpack.c.l.b16 %v1956
        %v2620 = vunpack.c.h.b16 %v1956
        %v2621 = vunpack.c.l.b16 %v1957
        %v2622 = vunpack.c.h.b16 %v1957
        %v2623 = vunpack.c.l.b16 %v1958
        %v2624 = vunpack.c.h.b16 %v1958
        %v2625 = vunpack.c.l.b16 %v1959
        %v2626 = vunpack.c.h.b16 %v1959
        %v2627 = vunpack.c.l.b16 %v1960
        %v2628 = vunpack.c.h.b16 %v1960
        %v2629 = vunpack.c.l.b16 %v1961
        %v2630 = vunpack.c.h.b16 %v1961
        %v2631 = vunpack.c.l.b16 %v1962
        %v2632 = vunpack.c.h.b16 %v1962
        %v2633 = vunpack.c.l.b16 %v1963
        %v2634 = vunpack.c.h.b16 %v1963
        %v2635 = vunpack.c.l.b16 %v1964
        %v2636 = vunpack.c.h.b16 %v1964
        %v2637 = vunpack.c.l.b16 %v1965
        %v2638 = vunpack.c.h.b16 %v1965
        %v2639 = vunpack.c.l.b16 %v1966
        %v2640 = vunpack.c.h.b16 %v1966
        %v2641 = vunpack.c.l.b16 %v1967
        %v2642 = vunpack.c.h.b16 %v1967
        %v2643 = vunpack.c.l.b16 %v1968
        %v2644 = vunpack.c.h.b16 %v1968
        %v2645 = vunpack.c.l.b16 %v1969
        %v2646 = vunpack.c.h.b16 %v1969
        %v2647 = vunpack.c.l.b16 %v1970
        %v2648 = vunpack.c.h.b16 %v1970
        %v2649 = vunpack.c.l.b16 %v1971
        %v2650 = vunpack.c.h.b16 %v1971
        %v2651 = vunpack.c.l.b16 %v1972
        %v2652 = vunpack.c.h.b16 %v1972
        %v2653 = vunpack.c.l.b16 %v1973
        %v2654 = vunpack.c.h.b16 %v1973
        %v2655 = vunpack.c.l.b16 %v1974
        %v2656 = vunpack.c.h.b16 %v1974
        %v2657 = vunpack.c.l.b16 %v1975
        %v2658 = vunpack.c.h.b16 %v1975
        %v2659 = vunpack.c.l.b16 %v1976
        %v2660 = vunpack.c.h.b16 %v1976
        %v2661 = vunpack.c.l.b16 %v1977
        %v2662 = vunpack.c.h.b16 %v1977
        %v2663 = vunpack.c.l.b16 %v1978
        %v2664 = vunpack.c.h.b16 %v1978
        %v2665 = vunpack.c.l.b16 %v1979
        %v2666 = vunpack.c.h.b16 %v1979
        %v2667 = vunpack.c.l.b16 %v1980
        %v2668 = vunpack.c.h.b16 %v1980
        %v2669 = vunpack.c.l.b16 %v1981
        %v2670 = vunpack.c.h.b16 %v1981
        %v2671 = vunpack.c.l.b16 %v1982
        %v2672 = vunpack.c.h.b16 %v1982
        %v2673 = vunpack.c.l.b16 %v1983
        %v2674 = vunpack.c.h.b16 %v1983
        %v2675 = vunpack.c.l.b16 %v1984
        %v2676 = vunpack.c.h.b16 %v1984
        %v2677 = vunpack.c.l.b16 %v1985
        %v2678 = vunpack.c.h.b16 %v1985
        %v2679 = vunpack.c.l.b16 %v1986
        %v2680 = vunpack.c.h.b16 %v1986
        %v2681 = vunpack.c.l.b16 %v1987
        %v2682 = vunpack.c.h.b16 %v1987
        %v2683 = vunpack.c.l.b16 %v1988
        %v2684 = vunpack.c.h.b16 %v1988
        %v2685 = vunpack.c.l.b16 %v1989
        %v2686 = vunpack.c.h.b16 %v1989
        %v2687 = vunpack.c.l.b16 %v1990
        %v2688 = vunpack.c.h.b16 %v1990
        %v2689 = vunpack.c.l.b16 %v1991
        %v2690 = vunpack.c.h.b16 %v1991
        %v2691 = vunpack.c.l.b16 %v1992
        %v2692 = vunpack.c.h.b16 %v1992
        %v2693 = vunpack.c.l.b16 %v1993
        %v2694 = vunpack.c.h.b16 %v1993
        %v2695 = vunpack.c.l.b16 %v1994
        %v2696 = vunpack.c.h.b16 %v1994
        %v2697 = vunpack.c.l.b16 %v1995
        %v2698 = vunpack.c.h.b16 %v1995
        %v2699 = vunpack.c.l.b16 %v1996
        %v2700 = vunpack.c.h.b16 %v1996
        %v2701 = vunpack.c.l.b16 %v1997
        %v2702 = vunpack.c.h.b16 %v1997
        %v2703 = vunpack.c.l.b16 %v1998
        %v2704 = vunpack.c.h.b16 %v1998
        %v2705 = vunpack.c.l.b16 %v1999
        %v2706 = vunpack.c.h.b16 %v1999
        %v2707 = vunpack.c.l.b16 %v2000
        %v2708 = vunpack.c.h.b16 %v2000
        %v2709 = vunpack.c.l.b16 %v2001
        %v2710 = vunpack.c.h.b16 %v2001
        %v2711 = vunpack.c.l.b16 %v2002
        %v2712 = vunpack.c.h.b16 %v2002
        %v2713 = vunpack.c.l.b16 %v2003
        %v2714 = vunpack.c.h.b16 %v2003
        %v2715 = vunpack.c.l.b16 %v2004
        %v2716 = vunpack.c.h.b16 %v2004
        %v2717 = vunpack.c.l.b16 %v2005
        %v2718 = vunpack.c.h.b16 %v2005
        %v2719 = vunpack.c.l.b16 %v2006
        %v2720 = vunpack.c.h.b16 %v2006
        %v2721 = vunpack.c.l.b16 %v2007
        %v2722 = vunpack.c.h.b16 %v2007
        %v2723 = vunpack.c.l.b16 %v2008
        %v2724 = vunpack.c.h.b16 %v2008
        %v2725 = vunpack.c.l.b16 %v2009
        %v2726 = vunpack.c.h.b16 %v2009
        %v2727 = vunpack.c.l.b16 %v2010
        %v2728 = vunpack.c.h.b16 %v2010
        %v2729 = vunpack.c.l.b16 %v2011
        %v2730 = vunpack.c.h.b16 %v2011
        %v2731 = vunpack.c.l.b16 %v2012
        %v2732 = vunpack.c.h.b16 %v2012
        %v2733 = vunpack.c.l.b16 %v2013
        %v2734 = vunpack.c.h.b16 %v2013
        %v2735 = vunpack.c.l.b16 %v2014
        %v2736 = vunpack.c.h.b16 %v2014
        %v2737 = vunpack.c.l.b16 %v2015
        %v2738 = vunpack.c.h.b16 %v2015
        %v2739 = vunpack.c.l.b16 %v2016
        %v2740 = vunpack.c.h.b16 %v2016
        %v2741 = vunpack.c.l.b16 %v2017
        %v2742 = vunpack.c.h.b16 %v2017
        %v2743 = vunpack.c.l.b16 %v2018
        %v2744 = vunpack.c.h.b16 %v2018
        %v2745 = vunpack.c.l.b16 %v2019
        %v2746 = vunpack.c.h.b16 %v2019
        %v2747 = vunpack.c.l.b16 %v2020
        %v2748 = vunpack.c.h.b16 %v2020
        %v2749 = vunpack.c.l.b16 %v2021
        %v2750 = vunpack.c.h.b16 %v2021
        %v2751 = vunpack.c.l.b16 %v2022
        %v2752 = vunpack.c.h.b16 %v2022
        %v2753 = vunpack.c.l.b16 %v2023
        %v2754 = vunpack.c.h.b16 %v2023
        %v2755 = vunpack.c.l.b16 %v2024
        %v2756 = vunpack.c.h.b16 %v2024
        %v2757 = vunpack.c.l.b16 %v2025
        %v2758 = vunpack.c.h.b16 %v2025
        %v2759 = vunpack.c.l.b16 %v2026
        %v2760 = vunpack.c.h.b16 %v2026
        %v2761 = vunpack.c.l.b16 %v2027
        %v2762 = vunpack.c.h.b16 %v2027
        %v2763 = vunpack.c.l.b16 %v2028
        %v2764 = vunpack.c.h.b16 %v2028
        %v2765 = vunpack.c.l.b16 %v2029
        %v2766 = vunpack.c.h.b16 %v2029
        %v2767 = vunpack.c.l.b16 %v2030
        %v2768 = vunpack.c.h.b16 %v2030
        %v2769 = vunpack.c.l.b16 %v2031
        %v2770 = vunpack.c.h.b16 %v2031
        %v2771 = vunpack.c.l.b16 %v2032
        %v2772 = vunpack.c.h.b16 %v2032
        %v2773 = vunpack.c.l.b16 %v2033
        %v2774 = vunpack.c.h.b16 %v2033
        %v2775 = vunpack.c.l.b16 %v2034
        %v2776 = vunpack.c.h.b16 %v2034
        %v2777 = vunpack.c.l.b16 %v2035
        %v2778 = vunpack.c.h.b16 %v2035
        %v2779 = vunpack.c.l.b16 %v2036
        %v2780 = vunpack.c.h.b16 %v2036
        %v2781 = vunpack.c.l.b16 %v2037
        %v2782 = vunpack.c.h.b16 %v2037
        %v2783 = vunpack.c.l.b16 %v2038
        %v2784 = vunpack.c.h.b16 %v2038
        %v2785 = vunpack.c.l.b16 %v2039
        %v2786 = vunpack.c.h.b16 %v2039
        %v2787 = vunpack.c.l.b16 %v2040
        %v2788 = vunpack.c.h.b16 %v2040
        %v2789 = vunpack.c.l.b16 %v2041
        %v2790 = vunpack.c.h.b16 %v2041
        %v2791 = vunpack.c.l.b16 %v2042
        %v2792 = vunpack.c.h.b16 %v2042
        %v2793 = vunpack.c.l.b16 %v2043
        %v2794 = vunpack.c.h.b16 %v2043
        %v2795 = vunpack.c.l.b16 %v2044
        %v2796 = vunpack.c.h.b16 %v2044
        %v2797 = vunpack.c.l.b16 %v2045
        %v2798 = vunpack.c.h.b16 %v2045
        %v2799 = vunpack.c.l.b16 %v2046
        %v2800 = vunpack.c.h.b16 %v2046
        %v2801 = vunpack.c.l.b16 %v2047
        %v2802 = vunpack.c.h.b16 %v2047
        %v2803 = vunpack.c.l.b16 %v2048
        %v2804 = vunpack.c.h.b16 %v2048
        %v2805 = vunpack.c.l.b16 %v2049
        %v2806 = vunpack.c.h.b16 %v2049
        %v2807 = vunpack.c.l.b16 %v2050
        %v2808 = vunpack.c.h.b16 %v2050
        %v2809 = vunpack.c.l.b16 %v2051
        %v2810 = vunpack.c.h.b16 %v2051
        %v2811 = vunpack.c.l.b16 %v2052
        %v2812 = vunpack.c.h.b16 %v2052
        %v2813 = vunpack.c.l.b16 %v2053
        %v2814 = vunpack.c.h.b16 %v2053
        %v2815 = vunpack.c.l.b16 %v2054
        %v2816 = vunpack.c.h.b16 %v2054
        %v2817 = vunpack.c.l.b16 %v2055
        %v2818 = vunpack.c.h.b16 %v2055
        %v2819 = vunpack.c.l.b16 %v2056
        %v2820 = vunpack.c.h.b16 %v2056
        %v2821 = vunpack.c.l.b16 %v2057
        %v2822 = vunpack.c.h.b16 %v2057
        %v2823 = vunpack.c.l.b16 %v2058
        %v2824 = vunpack.c.h.b16 %v2058
        %v2825 = vunpack.c.l.b16 %v2059
        %v2826 = vunpack.c.h.b16 %v2059
        %v2827 = vunpack.c.l.b16 %v2060
        %v2828 = vunpack.c.h.b16 %v2060
        %v2829 = vunpack.c.l.b16 %v2061
        %v2830 = vunpack.c.h.b16 %v2061
        %v2831 = vunpack.c.l.b16 %v2062
        %v2832 = vunpack.c.h.b16 %v2062
        %v2833 = vunpack.c.l.b16 %v2063
        %v2834 = vunpack.c.h.b16 %v2063
        %v2835 = vunpack.c.l.b16 %v2064
        %v2836 = vunpack.c.h.b16 %v2064
        %v2837 = vunpack.c.l.b16 %v2065
        %v2838 = vunpack.c.h.b16 %v2065
        %v2839 = vunpack.c.l.b16 %v2066
        %v2840 = vunpack.c.h.b16 %v2066
        %v2841 = vunpack.c.l.b16 %v2067
        %v2842 = vunpack.c.h.b16 %v2067
        %v2843 = vunpack.c.l.b16 %v2068
        %v2844 = vunpack.c.h.b16 %v2068
        %v2845 = vunpack.c.l.b16 %v2069
        %v2846 = vunpack.c.h.b16 %v2069
        %v2847 = vunpack.c.l.b16 %v2070
        %v2848 = vunpack.c.h.b16 %v2070
        %v2849 = vunpack.c.l.b16 %v2071
        %v2850 = vunpack.c.h.b16 %v2071
        %v2851 = vunpack.c.l.b16 %v2072
        %v2852 = vunpack.c.h.b16 %v2072
        %v2853 = vunpack.c.l.b16 %v2073
        %v2854 = vunpack.c.h.b16 %v2073
        %v2855 = vunpack.c.l.b16 %v2074
        %v2856 = vunpack.c.h.b16 %v2074
        %v2857 = vunpack.c.l.b16 %v2075
        %v2858 = vunpack.c.h.b16 %v2075
        %v2859 = vunpack.c.l.b16 %v2076
        %v2860 = vunpack.c.h.b16 %v2076
        %v2861 = vunpack.c.l.b16 %v2077
        %v2862 = vunpack.c.h.b16 %v2077
        %v2863 = vunpack.c.l.b16 %v2078
        %v2864 = vunpack.c.h.b16 %v2078
        %v2865 = vunpack.c.l.b16 %v2079
        %v2866 = vunpack.c.h.b16 %v2079
        %v2867 = vunpack.c.l.b16 %v2080
        %v2868 = vunpack.c.h.b16 %v2080
        %v2869 = vunpack.c.l.b16 %v2081
        %v2870 = vunpack.c.h.b16 %v2081
        %v2871 = vunpack.c.l.b16 %v2082
        %v2872 = vunpack.c.h.b16 %v2082
        %v2873 = vunpack.c.l.b16 %v2083
        %v2874 = vunpack.c.h.b16 %v2083
        %v2875 = vunpack.c.l.b16 %v2084
        %v2876 = vunpack.c.h.b16 %v2084
        %v2877 = vunpack.c.l.b16 %v2085
        %v2878 = vunpack.c.h.b16 %v2085
        %v2879 = vunpack.c.l.b16 %v2086
        %v2880 = vunpack.c.h.b16 %v2086
        %v2881 = vunpack.c.l.b16 %v2087
        %v2882 = vunpack.c.h.b16 %v2087
        %v2883 = vunpack.c.l.b16 %v2088
        %v2884 = vunpack.c.h.b16 %v2088
        %v2885 = vunpack.c.l.b16 %v2089
        %v2886 = vunpack.c.h.b16 %v2089
        %v2887 = vunpack.c.l.b16 %v2090
        %v2888 = vunpack.c.h.b16 %v2090
        %v2889 = vunpack.c.l.b16 %v2091
        %v2890 = vunpack.c.h.b16 %v2091
        %v2891 = vunpack.c.l.b16 %v2092
        %v2892 = vunpack.c.h.b16 %v2092
        %v2893 = vunpack.c.l.b16 %v2093
        %v2894 = vunpack.c.h.b16 %v2093
        %v2895 = vunpack.c.l.b16 %v2094
        %v2896 = vunpack.c.h.b16 %v2094
        %v2897 = vunpack.c.l.b16 %v2095
        %v2898 = vunpack.c.h.b16 %v2095
        %v2899 = vunpack.c.l.b16 %v2096
        %v2900 = vunpack.c.h.b16 %v2096
        %v2901 = vunpack.c.l.b16 %v2097
        %v2902 = vunpack.c.h.b16 %v2097
        %v2903 = vunpack.c.l.b16 %v2098
        %v2904 = vunpack.c.h.b16 %v2098
        %v2905 = vunpack.c.l.b16 %v2099
        %v2906 = vunpack.c.h.b16 %v2099
        %v2907 = vunpack.c.l.b16 %v2100
        %v2908 = vunpack.c.h.b16 %v2100
        %v2909 = vunpack.c.l.b16 %v2101
        %v2910 = vunpack.c.h.b16 %v2101
        %v2911 = vunpack.c.l.b16 %v2102
        %v2912 = vunpack.c.h.b16 %v2102
        %v2913 = vunpack.c.l.b16 %v2103
        %v2914 = vunpack.c.h.b16 %v2103
        %v2915 = vunpack.c.l.b16 %v2104
        %v2916 = vunpack.c.h.b16 %v2104
        %v2917 = vunpack.c.l.b16 %v2105
        %v2918 = vunpack.c.h.b16 %v2105
        %v2919 = vunpack.c.l.b16 %v2106
        %v2920 = vunpack.c.h.b16 %v2106
        %v2921 = vunpack.c.l.b16 %v2107
        %v2922 = vunpack.c.h.b16 %v2107
        %v2923 = vunpack.c.l.b16 %v2108
        %v2924 = vunpack.c.h.b16 %v2108
        %v2925 = vunpack.c.l.b16 %v2109
        %v2926 = vunpack.c.h.b16 %v2109
        %v2927 = vunpack.c.l.b16 %v2110
        %v2928 = vunpack.c.h.b16 %v2110
        %v2929 = vunpack.c.l.b16 %v2111
        %v2930 = vunpack.c.h.b16 %v2111
        %v2931 = vunpack.c.l.b16 %v2112
        %v2932 = vunpack.c.h.b16 %v2112
        %v2933 = vunpack.c.l.b16 %v2113
        %v2934 = vunpack.c.h.b16 %v2113
        %v2935 = vunpack.c.l.b16 %v2114
        %v2936 = vunpack.c.h.b16 %v2114
        %v2937 = vunpack.c.l.b16 %v2115
        %v2938 = vunpack.c.h.b16 %v2115
        %v2939 = vunpack.c.l.b16 %v2116
        %v2940 = vunpack.c.h.b16 %v2116
        %v2941 = vunpack.c.l.b16 %v2117
        %v2942 = vunpack.c.h.b16 %v2117
        %v2943 = vunpack.c.l.b16 %v2118
        %v2944 = vunpack.c.h.b16 %v2118
        %v2945 = vunpack.c.l.b16 %v2119
        %v2946 = vunpack.c.h.b16 %v2119
        %v2947 = vunpack.c.l.b16 %v2120
        %v2948 = vunpack.c.h.b16 %v2120
        %v2949 = vunpack.c.l.b16 %v2121
        %v2950 = vunpack.c.h.b16 %v2121
        %v2951 = vunpack.c.l.b16 %v2122
        %v2952 = vunpack.c.h.b16 %v2122
        %v2953 = vunpack.c.l.b16 %v2123
        %v2954 = vunpack.c.h.b16 %v2123
        %v2955 = vunpack.c.l.b16 %v2124
        %v2956 = vunpack.c.h.b16 %v2124
        %v2957 = vunpack.c.l.b16 %v2125
        %v2958 = vunpack.c.h.b16 %v2125
        %v2959 = vunpack.c.l.b16 %v2126
        %v2960 = vunpack.c.h.b16 %v2126
        %v2961 = vunpack.c.l.b16 %v2127
        %v2962 = vunpack.c.h.b16 %v2127
        %v2963 = vunpack.c.l.b16 %v2128
        %v2964 = vunpack.c.h.b16 %v2128
        %v2965 = vunpack.c.l.b16 %v2129
        %v2966 = vunpack.c.h.b16 %v2129
        %v2967 = vunpack.c.l.b16 %v2130
        %v2968 = vunpack.c.h.b16 %v2130
        %v2969 = vunpack.c.l.b16 %v2131
        %v2970 = vunpack.c.h.b16 %v2131
        %v2971 = vunpack.c.l.b16 %v2132
        %v2972 = vunpack.c.h.b16 %v2132
        %v2973 = vunpack.c.l.b16 %v2133
        %v2974 = vunpack.c.h.b16 %v2133
        %v2975 = vunpack.c.l.b16 %v2134
        %v2976 = vunpack.c.h.b16 %v2134
        %v2977 = vunpack.c.l.b16 %v2135
        %v2978 = vunpack.c.h.b16 %v2135
        %v2979 = vunpack.c.l.b16 %v2136
        %v2980 = vunpack.c.h.b16 %v2136
        %v2981 = vunpack.c.l.b16 %v2137
        %v2982 = vunpack.c.h.b16 %v2137
        %v2983 = vunpack.c.l.b16 %v2138
        %v2984 = vunpack.c.h.b16 %v2138
        %v2985 = vunpack.c.l.b16 %v2139
        %v2986 = vunpack.c.h.b16 %v2139
        %v2987 = vunpack.c.l.b16 %v2140
        %v2988 = vunpack.c.h.b16 %v2140
        %v2989 = vunpack.c.l.b16 %v2141
        %v2990 = vunpack.c.h.b16 %v2141
        %v2991 = vunpack.c.l.b16 %v2142
        %v2992 = vunpack.c.h.b16 %v2142
        %v2993 = vunpack.c.l.b16 %v2143
        %v2994 = vunpack.c.h.b16 %v2143
        %v2995 = vunpack.c.l.b16 %v2144
        %v2996 = vunpack.c.h.b16 %v2144
        %v2997 = vunpack.c.l.b16 %v2145
        %v2998 = vunpack.c.h.b16 %v2145
        %v2999 = vunpack.c.l.b16 %v2146
        %v3000 = vunpack.c.h.b16 %v2146
        %v3001 = vunpack.c.l.b16 %v2147
        %v3002 = vunpack.c.h.b16 %v2147
        %v3003 = vunpack.c.l.b16 %v2148
        %v3004 = vunpack.c.h.b16 %v2148
        %v3005 = vunpack.c.l.b16 %v2149
        %v3006 = vunpack.c.h.b16 %v2149
        %v3007 = vunpack.c.l.b16 %v2150
        %v3008 = vunpack.c.h.b16 %v2150
        %v3009 = vunpack.c.l.b16 %v2151
        %v3010 = vunpack.c.h.b16 %v2151
        %v3011 = vunpack.c.l.b16 %v2152
        %v3012 = vunpack.c.h.b16 %v2152
        %v3013 = vunpack.c.l.b16 %v2153
        %v3014 = vunpack.c.h.b16 %v2153
        %v3015 = vunpack.c.l.b16 %v2154
        %v3016 = vunpack.c.h.b16 %v2154
        %v3017 = vunpack.c.l.b16 %v2155
        %v3018 = vunpack.c.h.b16 %v2155
        %v3019 = vunpack.c.l.b16 %v2156
        %v3020 = vunpack.c.h.b16 %v2156
        %v3021 = vunpack.c.l.b16 %v2157
        %v3022 = vunpack.c.h.b16 %v2157
        %v3023 = vunpack.c.l.b16 %v2158
        %v3024 = vunpack.c.h.b16 %v2158
        %v3025 = vunpack.c.l.b16 %v2159
        %v3026 = vunpack.c.h.b16 %v2159
        %v3027 = vunpack.c.l.b16 %v2160
        %v3028 = vunpack.c.h.b16 %v2160
        %v3029 = vunpack.c.l.b16 %v2161
        %v3030 = vunpack.c.h.b16 %v2161
        %v3031 = vunpack.c.l.b16 %v2162
        %v3032 = vunpack.c.h.b16 %v2162
        %v3033 = vunpack.c.l.b16 %v2163
        %v3034 = vunpack.c.h.b16 %v2163
        %v3035 = vunpack.c.l.b16 %v2164
        %v3036 = vunpack.c.h.b16 %v2164
        %v3037 = vunpack.c.l.b16 %v2165
        %v3038 = vunpack.c.h.b16 %v2165
        %v3039 = vunpack.c.l.b16 %v2166
        %v3040 = vunpack.c.h.b16 %v2166
        %v3041 = vunpack.c.l.b16 %v2167
        %v3042 = vunpack.c.h.b16 %v2167
        %v3043 = vunpack.c.l.b16 %v2168
        %v3044 = vunpack.c.h.b16 %v2168
        %v3045 = vpack.c.b16 %v2471, %v2469
        %v3046 = vpack.c.b16 %v2472, %v2470
        %v3047 = vpack.c.b16 %v2475, %v2473
        %v3048 = vpack.c.b16 %v2476, %v2474
        %v3049 = vpack.c.b16 %v2479, %v2477
        %v3050 = vpack.c.b16 %v2480, %v2478
        %v3051 = vpack.c.b16 %v2483, %v2481
        %v3052 = vpack.c.b16 %v2484, %v2482
        %v3053 = vpack.c.b16 %v2487, %v2485
        %v3054 = vpack.c.b16 %v2488, %v2486
        %v3055 = vpack.c.b16 %v2491, %v2489
        %v3056 = vpack.c.b16 %v2492, %v2490
        %v3057 = vpack.c.b16 %v2495, %v2493
        %v3058 = vpack.c.b16 %v2496, %v2494
        %v3059 = vpack.c.b16 %v2499, %v2497
        %v3060 = vpack.c.b16 %v2500, %v2498
        %v3061 = vpack.c.b16 %v2503, %v2501
        %v3062 = vpack.c.b16 %v2504, %v2502
        %v3063 = vpack.c.b16 %v2507, %v2505
        %v3064 = vpack.c.b16 %v2508, %v2506
        %v3065 = vpack.c.b16 %v2511, %v2509
        %v3066 = vpack.c.b16 %v2512, %v2510
        %v3067 = vpack.c.b16 %v2515, %v2513
        %v3068 = vpack.c.b16 %v2516, %v2514
        %v3069 = vpack.c.b16 %v2519, %v2517
        %v3070 = vpack.c.b16 %v2520, %v2518
        %v3071 = vpack.c.b16 %v2523, %v2521
        %v3072 = vpack.c.b16 %v2524, %v2522
        %v3073 = vpack.c.b16 %v2527, %v2525
        %v3074 = vpack.c.b16 %v2528, %v2526
        %v3075 = vpack.c.b16 %v2531, %v2529
        %v3076 = vpack.c.b16 %v2532, %v2530
        %v3077 = vpack.c.b16 %v2535, %v2533
        %v3078 = vpack.c.b16 %v2536, %v2534
        %v3079 = vpack.c.b16 %v2539, %v2537
        %v3080 = vpack.c.b16 %v2540, %v2538
        %v3081 = vpack.c.b16 %v2543, %v2541
        %v3082 = vpack.c.b16 %v2544, %v2542
        %v3083 = vpack.c.b16 %v2547, %v2545
        %v3084 = vpack.c.b16 %v2548, %v2546
        %v3085 = vpack.c.b16 %v2551, %v2549
        %v3086 = vpack.c.b16 %v2552, %v2550
        %v3087 = vpack.c.b16 %v2555, %v2553
        %v3088 = vpack.c.b16 %v2556, %v2554
        %v3089 = vpack.c.b16 %v2559, %v2557
        %v3090 = vpack.c.b16 %v2560, %v2558
        %v3091 = vpack.c.b16 %v2563, %v2561
        %v3092 = vpack.c.b16 %v2564, %v2562
        %v3093 = vpack.c.b16 %v2567, %v2565
        %v3094 = vpack.c.b16 %v2568, %v2566
        %v3095 = vpack.c.b16 %v2571, %v2569
        %v3096 = vpack.c.b16 %v2572, %v2570
        %v3097 = vpack.c.b16 %v2575, %v2573
        %v3098 = vpack.c.b16 %v2576, %v2574
        %v3099 = vpack.c.b16 %v2579, %v2577
        %v3100 = vpack.c.b16 %v2580, %v2578
        %v3101 = vpack.c.b16 %v2583, %v2581
        %v3102 = vpack.c.b16 %v2584, %v2582
        %v3103 = vpack.c.b16 %v2587, %v2585
        %v3104 = vpack.c.b16 %v2588, %v2586
        %v3105 = vpack.c.b16 %v2591, %v2589
        %v3106 = vpack.c.b16 %v2592, %v2590
        %v3107 = vpack.c.b16 %v2595, %v2593
        %v3108 = vpack.c.b16 %v2596, %v2594
        %v3109 = vpack.c.b16 %v2599, %v2597
        %v3110 = vpack.c.b16 %v2600, %v2598
        %v3111 = vpack.c.b16 %v2603, %v2601
        %v3112 = vpack.c.b16 %v2604, %v2602
        %v3113 = vpack.c.b16 %v2607, %v2605
        %v3114 = vpack.c.b16 %v2608, %v2606
        %v3115 = vpack.c.b16 %v2611, %v2609
        %v3116 = vpack.c.b16 %v2612, %v2610
        %v3117 = vpack.c.b16 %v2615, %v2613
        %v3118 = vpack.c.b16 %v2616, %v2614
        %v3119 = vpack.c.b16 %v2619, %v2617
        %v3120 = vpack.c.b16 %v2620, %v2618
        %v3121 = vpack.c.b16 %v2623, %v2621
        %v3122 = vpack.c.b16 %v2624, %v2622
        %v3123 = vpack.c.b16 %v2627, %v2625
        %v3124 = vpack.c.b16 %v2628, %v2626
        %v3125 = vpack.c.b16 %v2631, %v2629
        %v3126 = vpack.c.b16 %v2632, %v2630
        %v3127 = vpack.c.b16 %v2635, %v2633
        %v3128 = vpack.c.b16 %v2636, %v2634
        %v3129 = vpack.c.b16 %v2639, %v2637
        %v3130 = vpack.c.b16 %v2640, %v2638
        %v3131 = vpack.c.b16 %v2643, %v2641
        %v3132 = vpack.c.b16 %v2644, %v2642
        %v3133 = vpack.c.b16 %v2647, %v2645
        %v3134 = vpack.c.b16 %v2648, %v2646
        %v3135 = vpack.c.b16 %v2651, %v2649
        %v3136 = vpack.c.b16 %v2652, %v2650
        %v3137 = vpack.c.b16 %v2655, %v2653
        %v3138 = vpack.c.b16 %v2656, %v2654
        %v3139 = vpack.c.b16 %v2659, %v2657
        %v3140 = vpack.c.b16 %v2660, %v2658
        %v3141 = vpack.c.b16 %v2663, %v2661
        %v3142 = vpack.c.b16 %v2664, %v2662
        %v3143 = vpack.c.b16 %v2667, %v2665
        %v3144 = vpack.c.b16 %v2668, %v2666
        %v3145 = vpack.c.b16 %v2671, %v2669
        %v3146 = vpack.c.b16 %v2672, %v2670
        %v3147 = vpack.c.b16 %v2675, %v2673
        %v3148 = vpack.c.b16 %v2676, %v2674
        %v3149 = vpack.c.b16 %v2679, %v2677
        %v3150 = vpack.c.b16 %v2680, %v2678
        %v3151 = vpack.c.b16 %v2683, %v2681
        %v3152 = vpack.c.b16 %v2684, %v2682
        %v3153 = vpack.c.b16 %v2687, %v2685
        %v3154 = vpack.c.b16 %v2688, %v2686
        %v3155 = vpack.c.b16 %v2691, %v2689
        %v3156 = vpack.c.b16 %v2692, %v2690
        %v3157 = vpack.c.b16 %v2695, %v2693
        %v3158 = vpack.c.b16 %v2696, %v2694
        %v3159 = vpack.c.b16 %v2699, %v2697
        %v3160 = vpack.c.b16 %v2700, %v2698
        %v3161 = vpack.c.b16 %v2703, %v2701
        %v3162 = vpack.c.b16 %v2704, %v2702
        %v3163 = vpack.c.b16 %v2707, %v2705
        %v3164 = vpack.c.b16 %v2708, %v2706
        %v3165 = vpack.c.b16 %v2711, %v2709
        %v3166 = vpack.c.b16 %v2712, %v2710
        %v3167 = vpack.c.b16 %v2715, %v2713
        %v3168 = vpack.c.b16 %v2716, %v2714
        %v3169 = vpack.c.b16 %v2719, %v2717
        %v3170 = vpack.c.b16 %v2720, %v2718
        %v3171 = vpack.c.b16 %v2723, %v2721
        %v3172 = vpack.c.b16 %v2724, %v2722
        %v3173 = vpack.c.b16 %v2727, %v2725
        %v3174 = vpack.c.b16 %v2728, %v2726
        %v3175 = vpack.c.b16 %v2731, %v2729
        %v3176 = vpack.c.b16 %v2732, %v2730
        %v3177 = vpack.c.b16 %v2735, %v2733
        %v3178 = vpack.c.b16 %v2736, %v2734
        %v3179 = vpack.c.b16 %v2739, %v2737
        %v3180 = vpack.c.b16 %v2740, %v2738
        %v3181 = vpack.c.b16 %v2743, %v2741
        %v3182 = vpack.c.b16 %v2744, %v2742
        %v3183 = vpack.c.b16 %v2747, %v2745
        %v3184 = vpack.c.b16 %v2748, %v2746
        %v3185 = vpack.c.b16 %v2751, %v2749
        %v3186 = vpack.c.b16 %v2752, %v2750
        %v3187 = vpack.c.b16 %v2755, %v2753
        %v3188 = vpack.c.b16 %v2756, %v2754
        %v3189 = vpack.c.b16 %v2759, %v2757
        %v3190 = vpack.c.b16 %v2760, %v2758
        %v3191 = vpack.c.b16 %v2763, %v2761
        %v3192 = vpack.c.b16 %v2764, %v2762
        %v3193 = vpack.c.b16 %v2767, %v2765
        %v3194 = vpack.c.b16 %v2768, %v2766
        %v3195 = vpack.c.b16 %v2771, %v2769
        %v3196 = vpack.c.b16 %v2772, %v2770
        %v3197 = vpack.c.b16 %v2775, %v2773
        %v3198 = vpack.c.b16 %v2776, %v2774
        %v3199 = vpack.c.b16 %v2779, %v2777
        %v3200 = vpack.c.b16 %v2780, %v2778
        %v3201 = vpack.c.b16 %v2783, %v2781
        %v3202 = vpack.c.b16 %v2784, %v2782
        %v3203 = vpack.c.b16 %v2787, %v2785
        %v3204 = vpack.c.b16 %v2788, %v2786
        %v3205 = vpack.c.b16 %v2791, %v2789
        %v3206 = vpack.c.b16 %v2792, %v2790
        %v3207 = vpack.c.b16 %v2795, %v2793
        %v3208 = vpack.c.b16 %v2796, %v2794
        %v3209 = vpack.c.b16 %v2799, %v2797
        %v3210 = vpack.c.b16 %v2800, %v2798
        %v3211 = vpack.c.b16 %v2803, %v2801
        %v3212 = vpack.c.b16 %v2804, %v2802
        %v3213 = vpack.c.b16 %v2807, %v2805
        %v3214 = vpack.c.b16 %v2808, %v2806
        %v3215 = vpack.c.b16 %v2811, %v2809
        %v3216 = vpack.c.b16 %v2812, %v2810
        %v3217 = vpack.c.b16 %v2815, %v2813
        %v3218 = vpack.c.b16 %v2816, %v2814
        %v3219 = vpack.c.b16 %v2819, %v2817
        %v3220 = vpack.c.b16 %v2820, %v2818
        %v3221 = vpack.c.b16 %v2823, %v2821
        %v3222 = vpack.c.b16 %v2824, %v2822
        %v3223 = vpack.c.b16 %v2827, %v2825
        %v3224 = vpack.c.b16 %v2828, %v2826
        %v3225 = vpack.c.b16 %v2831, %v2829
        %v3226 = vpack.c.b16 %v2832, %v2830
        %v3227 = vpack.c.b16 %v2835, %v2833
        %v3228 = vpack.c.b16 %v2836, %v2834
        %v3229 = vpack.c.b16 %v2839, %v2837
        %v3230 = vpack.c.b16 %v2840, %v2838
        %v3231 = vpack.c.b16 %v2843, %v2841
        %v3232 = vpack.c.b16 %v2844, %v2842
        %v3233 = vpack.c.b16 %v2847, %v2845
        %v3234 = vpack.c.b16 %v2848, %v2846
        %v3235 = vpack.c.b16 %v2851, %v2849
        %v3236 = vpack.c.b16 %v2852, %v2850
        %v3237 = vpack.c.b16 %v2855, %v2853
        %v3238 = vpack.c.b16 %v2856, %v2854
        %v3239 = vpack.c.b16 %v2859, %v2857
        %v3240 = vpack.c.b16 %v2860, %v2858
        %v3241 = vpack.c.b16 %v2863, %v2861
        %v3242 = vpack.c.b16 %v2864, %v2862
        %v3243 = vpack.c.b16 %v2867, %v2865
        %v3244 = vpack.c.b16 %v2868, %v2866
        %v3245 = vpack.c.b16 %v2871, %v2869
        %v3246 = vpack.c.b16 %v2872, %v2870
        %v3247 = vpack.c.b16 %v2875, %v2873
        %v3248 = vpack.c.b16 %v2876, %v2874
        %v3249 = vpack.c.b16 %v2879, %v2877
        %v3250 = vpack.c.b16 %v2880, %v2878
        %v3251 = vpack.c.b16 %v2883, %v2881
        %v3252 = vpack.c.b16 %v2884, %v2882
        %v3253 = vpack.c.b16 %v2887, %v2885
        %v3254 = vpack.c.b16 %v2888, %v2886
        %v3255 = vpack.c.b16 %v2891, %v2889
        %v3256 = vpack.c.b16 %v2892, %v2890
        %v3257 = vpack.c.b16 %v2895, %v2893
        %v3258 = vpack.c.b16 %v2896, %v2894
        %v3259 = vpack.c.b16 %v2899, %v2897
        %v3260 = vpack.c.b16 %v2900, %v2898
        %v3261 = vpack.c.b16 %v2903, %v2901
        %v3262 = vpack.c.b16 %v2904, %v2902
        %v3263 = vpack.c.b16 %v2907, %v2905
        %v3264 = vpack.c.b16 %v2908, %v2906
        %v3265 = vpack.c.b16 %v2911, %v2909
        %v3266 = vpack.c.b16 %v2912, %v2910
        %v3267 = vpack.c.b16 %v2915, %v2913
        %v3268 = vpack.c.b16 %v2916, %v2914
        %v3269 = vpack.c.b16 %v2919, %v2917
        %v3270 = vpack.c.b16 %v2920, %v2918
        %v3271 = vpack.c.b16 %v2923, %v2921
        %v3272 = vpack.c.b16 %v2924, %v2922
        %v3273 = vpack.c.b16 %v2927, %v2925
        %v3274 = vpack.c.b16 %v2928, %v2926
        %v3275 = vpack.c.b16 %v2931, %v2929
        %v3276 = vpack.c.b16 %v2932, %v2930
        %v3277 = vpack.c.b16 %v2935, %v2933
        %v3278 = vpack.c.b16 %v2936, %v2934
        %v3279 = vpack.c.b16 %v2939, %v2937
        %v3280 = vpack.c.b16 %v2940, %v2938
        %v3281 = vpack.c.b16 %v2943, %v2941
        %v3282 = vpack.c.b16 %v2944, %v2942
        %v3283 = vpack.c.b16 %v2947, %v2945
        %v3284 = vpack.c.b16 %v2948, %v2946
        %v3285 = vpack.c.b16 %v2951, %v2949
        %v3286 = vpack.c.b16 %v2952, %v2950
        %v3287 = vpack.c.b16 %v2955, %v2953
        %v3288 = vpack.c.b16 %v2956, %v2954
        %v3289 = vpack.c.b16 %v2959, %v2957
        %v3290 = vpack.c.b16 %v2960, %v2958
        %v3291 = vpack.c.b16 %v2963, %v2961
        %v3292 = vpack.c.b16 %v2964, %v2962
        %v3293 = vpack.c.b16 %v2967, %v2965
        %v3294 = vpack.c.b16 %v2968, %v2966
        %v3295 = vpack.c.b16 %v2971, %v2969
        %v3296 = vpack.c.b16 %v2972, %v2970
        %v3297 = vpack.c.b16 %v2975, %v2973
        %v3298 = vpack.c.b16 %v2976, %v2974
        %v3299 = vpack.c.b16 %v2979, %v2977
        %v3300 = vpack.c.b16 %v2980, %v2978
        %v3301 = vpack.c.b16 %v2983, %v2981
        %v3302 = vpack.c.b16 %v2984, %v2982
        %v3303 = vpack.c.b16 %v2987, %v2985
        %v3304 = vpack.c.b16 %v2988, %v2986
        %v3305 = vpack.c.b16 %v2991, %v2989
        %v3306 = vpack.c.b16 %v2992, %v2990
        %v3307 = vpack.c.b16 %v2995, %v2993
        %v3308 = vpack.c.b16 %v2996, %v2994
        %v3309 = vpack.c.b16 %v2999, %v2997
        %v3310 = vpack.c.b16 %v3000, %v2998
        %v3311 = vpack.c.b16 %v3003, %v3001
        %v3312 = vpack.c.b16 %v3004, %v3002
        %v3313 = vpack.c.b16 %v3007, %v3005
        %v3314 = vpack.c.b16 %v3008, %v3006
        %v3315 = vpack.c.b16 %v3011, %v3009
        %v3316 = vpack.c.b16 %v3012, %v3010
        %v3317 = vpack.c.b16 %v3015, %v3013
        %v3318 = vpack.c.b16 %v3016, %v3014
        %v3319 = vpack.c.b16 %v3019, %v3017
        %v3320 = vpack.c.b16 %v3020, %v3018
        %v3321 = vpack.c.b16 %v3023, %v3021
        %v3322 = vpack.c.b16 %v3024, %v3022
        %v3323 = vpack.c.b16 %v3027, %v3025
        %v3324 = vpack.c.b16 %v3028, %v3026
        %v3325 = vpack.c.b16 %v3031, %v3029
        %v3326 = vpack.c.b16 %v3032, %v3030
        %v3327 = vpack.c.b16 %v3035, %v3033
        %v3328 = vpack.c.b16 %v3036, %v3034
        %v3329 = vpack.c.b16 %v3039, %v3037
        %v3330 = vpack.c.b16 %v3040, %v3038
        %v3331 = vpack.c.b16 %v3043, %v3041
        %v3332 = vpack.c.b16 %v3044, %v3042
        %3621 = vmatprep.subr.bf16.mxu0 %v3046
        %3622 = vmatpush1.bf16.msra.mxu0 %v3045
        %3623 = vmatprep.subr.bf16.mxu0 %v3048
        %3624 = vmatpush1.bf16.msra.mxu0 %v3047
        %3625 = vmatprep.subr.bf16.mxu0 %v3050
        %3626 = vmatpush1.bf16.msra.mxu0 %v3049
        %3627 = vmatprep.subr.bf16.mxu0 %v3052
        %3628 = vmatpush1.bf16.msra.mxu0 %v3051
        %3629 = vmatprep.subr.bf16.mxu0 %v3054
        %3630 = vmatpush1.bf16.msra.mxu0 %v3053
        %3631 = vmatprep.subr.bf16.mxu0 %v3056
        %3632 = vmatpush1.bf16.msra.mxu0 %v3055
        %3633 = vmatprep.subr.bf16.mxu0 %v3058
        %3634 = vmatpush1.bf16.msra.mxu0 %v3057
        %3635 = vmatprep.subr.bf16.mxu0 %v3060
        %3636 = vmatpush1.bf16.msra.mxu0 %v3059
        %3637 = vmatprep.subr.bf16.mxu0 %v3062
        %3638 = vmatpush1.bf16.msra.mxu0 %v3061
        %3639 = vmatprep.subr.bf16.mxu0 %v3064
        %3640 = vmatpush1.bf16.msra.mxu0 %v3063
        %3641 = vmatprep.subr.bf16.mxu0 %v3066
        %3642 = vmatpush1.bf16.msra.mxu0 %v3065
        %3643 = vmatprep.subr.bf16.mxu0 %v3068
        %3644 = vmatpush1.bf16.msra.mxu0 %v3067
        %3645 = vmatprep.subr.bf16.mxu0 %v3070
        %3646 = vmatpush1.bf16.msra.mxu0 %v3069
        %3647 = vmatprep.subr.bf16.mxu0 %v3072
        %3648 = vmatpush1.bf16.msra.mxu0 %v3071
        %3649 = vmatprep.subr.bf16.mxu0 %v3074
        %3650 = vmatpush1.bf16.msra.mxu0 %v3073
        %3651 = vmatprep.subr.bf16.mxu0 %v3076
        %3652 = vmatpush1.bf16.msra.mxu0 %v3075
        %3653 = vmatprep.mubr.bf16.mxu0 %v1594
        %3654 = vmatmul.mubr.bf16.gmra.mrb[0].mxu0 %v1593
        %v3655 = vpop.f32.mrb[0].mxu0
        %v3656 = vadd.f32 %v2174, %v3655
        %v3657 = vpop.f32.mrb[0].mxu0
        %v3658 = vadd.f32 %v2178, %v3657
        %v3659 = vpop.f32.mrb[0].mxu0
        %v3660 = vadd.f32 %v2174, %v3659
        %v3661 = vpop.f32.mrb[0].mxu0
        %v3662 = vadd.f32 %v2178, %v3661
        %3663 = vmatprep.mubr.bf16.mxu0 %v1612
        %3664 = vmatmul.mubr.bf16.gmra.mrb[0].mxu0 %v1611
        %v3665 = vpop.f32.mrb[0].mxu0
        %v3666 = vadd.f32 %v2174, %v3665
        %v3667 = vpop.f32.mrb[0].mxu0
        %v3668 = vadd.f32 %v2178, %v3667
        %v3669 = vpop.f32.mrb[0].mxu0
        %v3670 = vadd.f32 %v2174, %v3669
        %v3671 = vpop.f32.mrb[0].mxu0
        %v3672 = vadd.f32 %v2178, %v3671
        %3673 = vmatprep.mubr.bf16.mxu0 %v1630
        %3674 = vmatmul.mubr.bf16.gmra.mrb[0].mxu0 %v1629
        %v3675 = vpop.f32.mrb[0].mxu0
        %v3676 = vadd.f32 %v2174, %v3675
        %v3677 = vpop.f32.mrb[0].mxu0
        %v3678 = vadd.f32 %v2178, %v3677
        %v3679 = vpop.f32.mrb[0].mxu0
        %v3680 = vadd.f32 %v2174, %v3679
        %v3681 = vpop.f32.mrb[0].mxu0
        %v3682 = vadd.f32 %v2178, %v3681
        %3683 = vmatprep.mubr.bf16.mxu0 %v1648
        %3684 = vmatmul.mubr.bf16.gmra.mrb[0].mxu0 %v1647
        %v3685 = vpop.f32.mrb[0].mxu0
        %v3686 = vadd.f32 %v2174, %v3685
        %v3687 = vpop.f32.mrb[0].mxu0
        %v3688 = vadd.f32 %v2178, %v3687
        %v3689 = vpop.f32.mrb[0].mxu0
        %v3690 = vadd.f32 %v2174, %v3689
        %v3691 = vpop.f32.mrb[0].mxu0
        %v3692 = vadd.f32 %v2178, %v3691
        %3693 = vmatprep.mubr.bf16.mxu0 %v1666
        %3694 = vmatmul.mubr.bf16.gmra.mrb[0].mxu0 %v1665
        %v3695 = vpop.f32.mrb[0].mxu0
        %v3696 = vadd.f32 %v2174, %v3695
        %v3697 = vpop.f32.mrb[0].mxu0
        %v3698 = vadd.f32 %v2178, %v3697
        %v3699 = vpop.f32.mrb[0].mxu0
        %v3700 = vadd.f32 %v2174, %v3699
        %v3701 = vpop.f32.mrb[0].mxu0
        %v3702 = vadd.f32 %v2178, %v3701
        %3703 = vmatprep.mubr.bf16.mxu0 %v1684
        %3704 = vmatmul.mubr.bf16.gmra.mrb[0].mxu0 %v1683
        %v3705 = vpop.f32.mrb[0].mxu0
        %v3706 = vadd.f32 %v2174, %v3705
        %v3707 = vpop.f32.mrb[0].mxu0
        %v3708 = vadd.f32 %v2178, %v3707
        %v3709 = vpop.f32.mrb[0].mxu0
        %v3710 = vadd.f32 %v2174, %v3709
        %v3711 = vpop.f32.mrb[0].mxu0
        %v3712 = vadd.f32 %v2178, %v3711
        %3713 = vmatprep.mubr.bf16.mxu0 %v1702
        %3714 = vmatmul.mubr.bf16.gmra.mrb[0].mxu0 %v1701
        %v3715 = vpop.f32.mrb[0].mxu0
        %v3716 = vadd.f32 %v2174, %v3715
        %v3717 = vpop.f32.mrb[0].mxu0
        %v3718 = vadd.f32 %v2178, %v3717
        %v3719 = vpop.f32.mrb[0].mxu0
        %v3720 = vadd.f32 %v2174, %v3719
        %v3721 = vpop.f32.mrb[0].mxu0
        %v3722 = vadd.f32 %v2178, %v3721
        %3723 = vmatprep.mubr.bf16.mxu0 %v1720
        %3724 = vmatmul.mubr.bf16.gmra.mrb[0].mxu0 %v1719
        %v3725 = vpop.f32.mrb[0].mxu0
        %v3726 = vadd.f32 %v2174, %v3725
        %v3727 = vpop.f32.mrb[0].mxu0
        %v3728 = vadd.f32 %v2178, %v3727
        %v3729 = vpop.f32.mrb[0].mxu0
        %v3730 = vadd.f32 %v2174, %v3729
        %v3731 = vpop.f32.mrb[0].mxu0
        %v3732 = vadd.f32 %v2178, %v3731
        %3733 = vmatprep.mubr.bf16.mxu0 %v1738
        %3734 = vmatmul.mubr.bf16.gmra.mrb[0].mxu0 %v1737
        %v3735 = vpop.f32.mrb[0].mxu0
        %v3736 = vadd.f32 %v2174, %v3735
        %v3737 = vpop.f32.mrb[0].mxu0
        %v3738 = vadd.f32 %v2178, %v3737
        %v3739 = vpop.f32.mrb[0].mxu0
        %v3740 = vadd.f32 %v2174, %v3739
        %v3741 = vpop.f32.mrb[0].mxu0
        %v3742 = vadd.f32 %v2178, %v3741
        %3743 = vmatprep.mubr.bf16.mxu0 %v1756
        %3744 = vmatmul.mubr.bf16.gmra.mrb[0].mxu0 %v1755
        %v3745 = vpop.f32.mrb[0].mxu0
        %v3746 = vadd.f32 %v2174, %v3745
        %v3747 = vpop.f32.mrb[0].mxu0
        %v3748 = vadd.f32 %v2178, %v3747
        %v3749 = vpop.f32.mrb[0].mxu0
        %v3750 = vadd.f32 %v2174, %v3749
        %v3751 = vpop.f32.mrb[0].mxu0
        %v3752 = vadd.f32 %v2178, %v3751
        %3753 = vmatprep.mubr.bf16.mxu0 %v1774
        %3754 = vmatmul.mubr.bf16.gmra.mrb[0].mxu0 %v1773
        %v3755 = vpop.f32.mrb[0].mxu0
        %v3756 = vadd.f32 %v2174, %v3755
        %v3757 = vpop.f32.mrb[0].mxu0
        %v3758 = vadd.f32 %v2178, %v3757
        %v3759 = vpop.f32.mrb[0].mxu0
        %v3760 = vadd.f32 %v2174, %v3759
        %v3761 = vpop.f32.mrb[0].mxu0
        %v3762 = vadd.f32 %v2178, %v3761
        %3763 = vmatprep.mubr.bf16.mxu0 %v1792
        %3764 = vmatmul.mubr.bf16.gmra.mrb[0].mxu0 %v1791
        %v3765 = vpop.f32.mrb[0].mxu0
        %v3766 = vadd.f32 %v2174, %v3765
        %v3767 = vpop.f32.mrb[0].mxu0
        %v3768 = vadd.f32 %v2178, %v3767
        %v3769 = vpop.f32.mrb[0].mxu0
        %v3770 = vadd.f32 %v2174, %v3769
        %v3771 = vpop.f32.mrb[0].mxu0
        %v3772 = vadd.f32 %v2178, %v3771
        %3773 = vmatprep.mubr.bf16.mxu0 %v1810
        %3774 = vmatmul.mubr.bf16.gmra.mrb[0].mxu0 %v1809
        %v3775 = vpop.f32.mrb[0].mxu0
        %v3776 = vadd.f32 %v2174, %v3775
        %v3777 = vpop.f32.mrb[0].mxu0
        %v3778 = vadd.f32 %v2178, %v3777
        %v3779 = vpop.f32.mrb[0].mxu0
        %v3780 = vadd.f32 %v2174, %v3779
        %v3781 = vpop.f32.mrb[0].mxu0
        %v3782 = vadd.f32 %v2178, %v3781
        %3783 = vmatprep.mubr.bf16.mxu0 %v1828
        %3784 = vmatmul.mubr.bf16.gmra.mrb[0].mxu0 %v1827
        %v3785 = vpop.f32.mrb[0].mxu0
        %v3786 = vadd.f32 %v2174, %v3785
        %v3787 = vpop.f32.mrb[0].mxu0
        %v3788 = vadd.f32 %v2178, %v3787
        %v3789 = vpop.f32.mrb[0].mxu0
        %v3790 = vadd.f32 %v2174, %v3789
        %v3791 = vpop.f32.mrb[0].mxu0
        %v3792 = vadd.f32 %v2178, %v3791
        %3793 = vmatprep.mubr.bf16.mxu0 %v1846
        %3794 = vmatmul.mubr.bf16.gmra.mrb[0].mxu0 %v1845
        %v3795 = vpop.f32.mrb[0].mxu0
        %v3796 = vadd.f32 %v2174, %v3795
        %v3797 = vpop.f32.mrb[0].mxu0
        %v3798 = vadd.f32 %v2178, %v3797
        %v3799 = vpop.f32.mrb[0].mxu0
        %v3800 = vadd.f32 %v2174, %v3799
        %v3801 = vpop.f32.mrb[0].mxu0
        %v3802 = vadd.f32 %v2178, %v3801
        %3803 = vmatprep.mubr.bf16.mxu0 %v1864
        %3804 = vmatmul.mubr.bf16.gmra.mrb[0].mxu0 %v1863
        %v3805 = vpop.f32.mrb[0].mxu0
        %v3806 = vadd.f32 %v2174, %v3805
        %v3807 = vpop.f32.mrb[0].mxu0
        %v3808 = vadd.f32 %v2178, %v3807
        %v3809 = vpop.f32.mrb[0].mxu0
        %v3810 = vadd.f32 %v2174, %v3809
        %v3811 = vpop.f32.mrb[0].mxu0
        %v3812 = vadd.f32 %v2178, %v3811
        %3813 = vdwg.mxu0
        %3814 = vmatprep.subr.bf16.mxu0 %v3078
        %3815 = vmatpush1.bf16.msra.mxu0 %v3077
        %3816 = vmatprep.subr.bf16.mxu0 %v3080
        %3817 = vmatpush1.bf16.msra.mxu0 %v3079
        %3818 = vmatprep.subr.bf16.mxu0 %v3082
        %3819 = vmatpush1.bf16.msra.mxu0 %v3081
        %3820 = vmatprep.subr.bf16.mxu0 %v3084
        %3821 = vmatpush1.bf16.msra.mxu0 %v3083
        %3822 = vmatprep.subr.bf16.mxu0 %v3086
        %3823 = vmatpush1.bf16.msra.mxu0 %v3085
        %3824 = vmatprep.subr.bf16.mxu0 %v3088
        %3825 = vmatpush1.bf16.msra.mxu0 %v3087
        %3826 = vmatprep.subr.bf16.mxu0 %v3090
        %3827 = vmatpush1.bf16.msra.mxu0 %v3089
        %3828 = vmatprep.subr.bf16.mxu0 %v3092
        %3829 = vmatpush1.bf16.msra.mxu0 %v3091
        %3830 = vmatprep.subr.bf16.mxu0 %v3094
        %3831 = vmatpush1.bf16.msra.mxu0 %v3093
        %3832 = vmatprep.subr.bf16.mxu0 %v3096
        %3833 = vmatpush1.bf16.msra.mxu0 %v3095
        %3834 = vmatprep.subr.bf16.mxu0 %v3098
        %3835 = vmatpush1.bf16.msra.mxu0 %v3097
        %3836 = vmatprep.subr.bf16.mxu0 %v3100
        %3837 = vmatpush1.bf16.msra.mxu0 %v3099
        %3838 = vmatprep.subr.bf16.mxu0 %v3102
        %3839 = vmatpush1.bf16.msra.mxu0 %v3101
        %3840 = vmatprep.subr.bf16.mxu0 %v3104
        %3841 = vmatpush1.bf16.msra.mxu0 %v3103
        %3842 = vmatprep.subr.bf16.mxu0 %v3106
        %3843 = vmatpush1.bf16.msra.mxu0 %v3105
        %3844 = vmatprep.subr.bf16.mxu0 %v3108
        %3845 = vmatpush1.bf16.msra.mxu0 %v3107
        %3846 = vmatprep.mubr.bf16.mxu0 %v1596
        %3847 = vmatmul.mubr.bf16.gmra.mrb[0].mxu0 %v1595
        %v3848 = vpop.f32.mrb[0].mxu0
        %v3849 = vadd.f32 %v3656, %v3848
        %v3850 = vpop.f32.mrb[0].mxu0
        %v3851 = vadd.f32 %v3658, %v3850
        %v3852 = vpop.f32.mrb[0].mxu0
        %v3853 = vadd.f32 %v3660, %v3852
        %v3854 = vpop.f32.mrb[0].mxu0
        %v3855 = vadd.f32 %v3662, %v3854
        %3856 = vmatprep.mubr.bf16.mxu0 %v1614
        %3857 = vmatmul.mubr.bf16.gmra.mrb[0].mxu0 %v1613
        %v3858 = vpop.f32.mrb[0].mxu0
        %v3859 = vadd.f32 %v3666, %v3858
        %v3860 = vpop.f32.mrb[0].mxu0
        %v3861 = vadd.f32 %v3668, %v3860
        %v3862 = vpop.f32.mrb[0].mxu0
        %v3863 = vadd.f32 %v3670, %v3862
        %v3864 = vpop.f32.mrb[0].mxu0
        %v3865 = vadd.f32 %v3672, %v3864
        %3866 = vmatprep.mubr.bf16.mxu0 %v1632
        %3867 = vmatmul.mubr.bf16.gmra.mrb[0].mxu0 %v1631
        %v3868 = vpop.f32.mrb[0].mxu0
        %v3869 = vadd.f32 %v3676, %v3868
        %v3870 = vpop.f32.mrb[0].mxu0
        %v3871 = vadd.f32 %v3678, %v3870
        %v3872 = vpop.f32.mrb[0].mxu0
        %v3873 = vadd.f32 %v3680, %v3872
        %v3874 = vpop.f32.mrb[0].mxu0
        %v3875 = vadd.f32 %v3682, %v3874
        %3876 = vmatprep.mubr.bf16.mxu0 %v1650
        %3877 = vmatmul.mubr.bf16.gmra.mrb[0].mxu0 %v1649
        %v3878 = vpop.f32.mrb[0].mxu0
        %v3879 = vadd.f32 %v3686, %v3878
        %v3880 = vpop.f32.mrb[0].mxu0
        %v3881 = vadd.f32 %v3688, %v3880
        %v3882 = vpop.f32.mrb[0].mxu0
        %v3883 = vadd.f32 %v3690, %v3882
        %v3884 = vpop.f32.mrb[0].mxu0
        %v3885 = vadd.f32 %v3692, %v3884
        %3886 = vmatprep.mubr.bf16.mxu0 %v1668
        %3887 = vmatmul.mubr.bf16.gmra.mrb[0].mxu0 %v1667
        %v3888 = vpop.f32.mrb[0].mxu0
        %v3889 = vadd.f32 %v3696, %v3888
        %v3890 = vpop.f32.mrb[0].mxu0
        %v3891 = vadd.f32 %v3698, %v3890
        %v3892 = vpop.f32.mrb[0].mxu0
        %v3893 = vadd.f32 %v3700, %v3892
        %v3894 = vpop.f32.mrb[0].mxu0
        %v3895 = vadd.f32 %v3702, %v3894
        %3896 = vmatprep.mubr.bf16.mxu0 %v1686
        %3897 = vmatmul.mubr.bf16.gmra.mrb[0].mxu0 %v1685
        %v3898 = vpop.f32.mrb[0].mxu0
        %v3899 = vadd.f32 %v3706, %v3898
        %v3900 = vpop.f32.mrb[0].mxu0
        %v3901 = vadd.f32 %v3708, %v3900
        %v3902 = vpop.f32.mrb[0].mxu0
        %v3903 = vadd.f32 %v3710, %v3902
        %v3904 = vpop.f32.mrb[0].mxu0
        %v3905 = vadd.f32 %v3712, %v3904
        %3906 = vmatprep.mubr.bf16.mxu0 %v1704
        %3907 = vmatmul.mubr.bf16.gmra.mrb[0].mxu0 %v1703
        %v3908 = vpop.f32.mrb[0].mxu0
        %v3909 = vadd.f32 %v3716, %v3908
        %v3910 = vpop.f32.mrb[0].mxu0
        %v3911 = vadd.f32 %v3718, %v3910
        %v3912 = vpop.f32.mrb[0].mxu0
        %v3913 = vadd.f32 %v3720, %v3912
        %v3914 = vpop.f32.mrb[0].mxu0
        %v3915 = vadd.f32 %v3722, %v3914
        %3916 = vmatprep.mubr.bf16.mxu0 %v1722
        %3917 = vmatmul.mubr.bf16.gmra.mrb[0].mxu0 %v1721
        %v3918 = vpop.f32.mrb[0].mxu0
        %v3919 = vadd.f32 %v3726, %v3918
        %v3920 = vpop.f32.mrb[0].mxu0
        %v3921 = vadd.f32 %v3728, %v3920
        %v3922 = vpop.f32.mrb[0].mxu0
        %v3923 = vadd.f32 %v3730, %v3922
        %v3924 = vpop.f32.mrb[0].mxu0
        %v3925 = vadd.f32 %v3732, %v3924
        %3926 = vmatprep.mubr.bf16.mxu0 %v1740
        %3927 = vmatmul.mubr.bf16.gmra.mrb[0].mxu0 %v1739
        %v3928 = vpop.f32.mrb[0].mxu0
        %v3929 = vadd.f32 %v3736, %v3928
        %v3930 = vpop.f32.mrb[0].mxu0
        %v3931 = vadd.f32 %v3738, %v3930
        %v3932 = vpop.f32.mrb[0].mxu0
        %v3933 = vadd.f32 %v3740, %v3932
        %v3934 = vpop.f32.mrb[0].mxu0
        %v3935 = vadd.f32 %v3742, %v3934
        %3936 = vmatprep.mubr.bf16.mxu0 %v1758
        %3937 = vmatmul.mubr.bf16.gmra.mrb[0].mxu0 %v1757
        %v3938 = vpop.f32.mrb[0].mxu0
        %v3939 = vadd.f32 %v3746, %v3938
        %v3940 = vpop.f32.mrb[0].mxu0
        %v3941 = vadd.f32 %v3748, %v3940
        %v3942 = vpop.f32.mrb[0].mxu0
        %v3943 = vadd.f32 %v3750, %v3942
        %v3944 = vpop.f32.mrb[0].mxu0
        %v3945 = vadd.f32 %v3752, %v3944
        %3946 = vmatprep.mubr.bf16.mxu0 %v1776
        %3947 = vmatmul.mubr.bf16.gmra.mrb[0].mxu0 %v1775
        %v3948 = vpop.f32.mrb[0].mxu0
        %v3949 = vadd.f32 %v3756, %v3948
        %v3950 = vpop.f32.mrb[0].mxu0
        %v3951 = vadd.f32 %v3758, %v3950
        %v3952 = vpop.f32.mrb[0].mxu0
        %v3953 = vadd.f32 %v3760, %v3952
        %v3954 = vpop.f32.mrb[0].mxu0
        %v3955 = vadd.f32 %v3762, %v3954
        %3956 = vmatprep.mubr.bf16.mxu0 %v1794
        %3957 = vmatmul.mubr.bf16.gmra.mrb[0].mxu0 %v1793
        %v3958 = vpop.f32.mrb[0].mxu0
        %v3959 = vadd.f32 %v3766, %v3958
        %v3960 = vpop.f32.mrb[0].mxu0
        %v3961 = vadd.f32 %v3768, %v3960
        %v3962 = vpop.f32.mrb[0].mxu0
        %v3963 = vadd.f32 %v3770, %v3962
        %v3964 = vpop.f32.mrb[0].mxu0
        %v3965 = vadd.f32 %v3772, %v3964
        %3966 = vmatprep.mubr.bf16.mxu0 %v1812
        %3967 = vmatmul.mubr.bf16.gmra.mrb[0].mxu0 %v1811
        %v3968 = vpop.f32.mrb[0].mxu0
        %v3969 = vadd.f32 %v3776, %v3968
        %v3970 = vpop.f32.mrb[0].mxu0
        %v3971 = vadd.f32 %v3778, %v3970
        %v3972 = vpop.f32.mrb[0].mxu0
        %v3973 = vadd.f32 %v3780, %v3972
        %v3974 = vpop.f32.mrb[0].mxu0
        %v3975 = vadd.f32 %v3782, %v3974
        %3976 = vmatprep.mubr.bf16.mxu0 %v1830
        %3977 = vmatmul.mubr.bf16.gmra.mrb[0].mxu0 %v1829
        %v3978 = vpop.f32.mrb[0].mxu0
        %v3979 = vadd.f32 %v3786, %v3978
        %v3980 = vpop.f32.mrb[0].mxu0
        %v3981 = vadd.f32 %v3788, %v3980
        %v3982 = vpop.f32.mrb[0].mxu0
        %v3983 = vadd.f32 %v3790, %v3982
        %v3984 = vpop.f32.mrb[0].mxu0
        %v3985 = vadd.f32 %v3792, %v3984
        %3986 = vmatprep.mubr.bf16.mxu0 %v1848
        %3987 = vmatmul.mubr.bf16.gmra.mrb[0].mxu0 %v1847
        %v3988 = vpop.f32.mrb[0].mxu0
        %v3989 = vadd.f32 %v3796, %v3988
        %v3990 = vpop.f32.mrb[0].mxu0
        %v3991 = vadd.f32 %v3798, %v3990
        %v3992 = vpop.f32.mrb[0].mxu0
        %v3993 = vadd.f32 %v3800, %v3992
        %v3994 = vpop.f32.mrb[0].mxu0
        %v3995 = vadd.f32 %v3802, %v3994
        %3996 = vmatprep.mubr.bf16.mxu0 %v1866
        %3997 = vmatmul.mubr.bf16.gmra.mrb[0].mxu0 %v1865
        %v3998 = vpop.f32.mrb[0].mxu0
        %v3999 = vadd.f32 %v3806, %v3998
        %v4000 = vpop.f32.mrb[0].mxu0
        %v4001 = vadd.f32 %v3808, %v4000
        %v4002 = vpop.f32.mrb[0].mxu0
        %v4003 = vadd.f32 %v3810, %v4002
        %v4004 = vpop.f32.mrb[0].mxu0
        %v4005 = vadd.f32 %v3812, %v4004
        %4006 = vdwg.mxu0
        %4007 = vmatprep.subr.bf16.mxu0 %v3110
        %4008 = vmatpush1.bf16.msra.mxu0 %v3109
        %4009 = vmatprep.subr.bf16.mxu0 %v3112
        %4010 = vmatpush1.bf16.msra.mxu0 %v3111
        %4011 = vmatprep.subr.bf16.mxu0 %v3114
        %4012 = vmatpush1.bf16.msra.mxu0 %v3113
        %4013 = vmatprep.subr.bf16.mxu0 %v3116
        %4014 = vmatpush1.bf16.msra.mxu0 %v3115
        %4015 = vmatprep.subr.bf16.mxu0 %v3118
        %4016 = vmatpush1.bf16.msra.mxu0 %v3117
        %4017 = vmatprep.subr.bf16.mxu0 %v3120
        %4018 = vmatpush1.bf16.msra.mxu0 %v3119
        %4019 = vmatprep.subr.bf16.mxu0 %v3122
        %4020 = vmatpush1.bf16.msra.mxu0 %v3121
        %4021 = vmatprep.subr.bf16.mxu0 %v3124
        %4022 = vmatpush1.bf16.msra.mxu0 %v3123
        %4023 = vmatprep.subr.bf16.mxu0 %v3126
        %4024 = vmatpush1.bf16.msra.mxu0 %v3125
        %4025 = vmatprep.subr.bf16.mxu0 %v3128
        %4026 = vmatpush1.bf16.msra.mxu0 %v3127
        %4027 = vmatprep.subr.bf16.mxu0 %v3130
        %4028 = vmatpush1.bf16.msra.mxu0 %v3129
        %4029 = vmatprep.subr.bf16.mxu0 %v3132
        %4030 = vmatpush1.bf16.msra.mxu0 %v3131
        %4031 = vmatprep.subr.bf16.mxu0 %v3134
        %4032 = vmatpush1.bf16.msra.mxu0 %v3133
        %4033 = vmatprep.subr.bf16.mxu0 %v3136
        %4034 = vmatpush1.bf16.msra.mxu0 %v3135
        %4035 = vmatprep.subr.bf16.mxu0 %v3138
        %4036 = vmatpush1.bf16.msra.mxu0 %v3137
        %4037 = vmatprep.subr.bf16.mxu0 %v3140
        %4038 = vmatpush1.bf16.msra.mxu0 %v3139
        %4039 = vmatprep.mubr.bf16.mxu0 %v1598
        %4040 = vmatmul.mubr.bf16.gmra.mrb[0].mxu0 %v1597
        %v4041 = vpop.f32.mrb[0].mxu0
        %v4042 = vadd.f32 %v3849, %v4041
        %v4043 = vpop.f32.mrb[0].mxu0
        %v4044 = vadd.f32 %v3851, %v4043
        %v4045 = vpop.f32.mrb[0].mxu0
        %v4046 = vadd.f32 %v3853, %v4045
        %v4047 = vpop.f32.mrb[0].mxu0
        %v4048 = vadd.f32 %v3855, %v4047
        %4049 = vmatprep.mubr.bf16.mxu0 %v1616
        %4050 = vmatmul.mubr.bf16.gmra.mrb[0].mxu0 %v1615
        %v4051 = vpop.f32.mrb[0].mxu0
        %v4052 = vadd.f32 %v3859, %v4051
        %v4053 = vpop.f32.mrb[0].mxu0
        %v4054 = vadd.f32 %v3861, %v4053
        %v4055 = vpop.f32.mrb[0].mxu0
        %v4056 = vadd.f32 %v3863, %v4055
        %v4057 = vpop.f32.mrb[0].mxu0
        %v4058 = vadd.f32 %v3865, %v4057
        %4059 = vmatprep.mubr.bf16.mxu0 %v1634
        %4060 = vmatmul.mubr.bf16.gmra.mrb[0].mxu0 %v1633
        %v4061 = vpop.f32.mrb[0].mxu0
        %v4062 = vadd.f32 %v3869, %v4061
        %v4063 = vpop.f32.mrb[0].mxu0
        %v4064 = vadd.f32 %v3871, %v4063
        %v4065 = vpop.f32.mrb[0].mxu0
        %v4066 = vadd.f32 %v3873, %v4065
        %v4067 = vpop.f32.mrb[0].mxu0
        %v4068 = vadd.f32 %v3875, %v4067
        %4069 = vmatprep.mubr.bf16.mxu0 %v1652
        %4070 = vmatmul.mubr.bf16.gmra.mrb[0].mxu0 %v1651
        %v4071 = vpop.f32.mrb[0].mxu0
        %v4072 = vadd.f32 %v3879, %v4071
        %v4073 = vpop.f32.mrb[0].mxu0
        %v4074 = vadd.f32 %v3881, %v4073
        %v4075 = vpop.f32.mrb[0].mxu0
        %v4076 = vadd.f32 %v3883, %v4075
        %v4077 = vpop.f32.mrb[0].mxu0
        %v4078 = vadd.f32 %v3885, %v4077
        %4079 = vmatprep.mubr.bf16.mxu0 %v1670
        %4080 = vmatmul.mubr.bf16.gmra.mrb[0].mxu0 %v1669
        %v4081 = vpop.f32.mrb[0].mxu0
        %v4082 = vadd.f32 %v3889, %v4081
        %v4083 = vpop.f32.mrb[0].mxu0
        %v4084 = vadd.f32 %v3891, %v4083
        %v4085 = vpop.f32.mrb[0].mxu0
        %v4086 = vadd.f32 %v3893, %v4085
        %v4087 = vpop.f32.mrb[0].mxu0
        %v4088 = vadd.f32 %v3895, %v4087
        %4089 = vmatprep.mubr.bf16.mxu0 %v1688
        %4090 = vmatmul.mubr.bf16.gmra.mrb[0].mxu0 %v1687
        %v4091 = vpop.f32.mrb[0].mxu0
        %v4092 = vadd.f32 %v3899, %v4091
        %v4093 = vpop.f32.mrb[0].mxu0
        %v4094 = vadd.f32 %v3901, %v4093
        %v4095 = vpop.f32.mrb[0].mxu0
        %v4096 = vadd.f32 %v3903, %v4095
        %v4097 = vpop.f32.mrb[0].mxu0
        %v4098 = vadd.f32 %v3905, %v4097
        %4099 = vmatprep.mubr.bf16.mxu0 %v1706
        %4100 = vmatmul.mubr.bf16.gmra.mrb[0].mxu0 %v1705
        %v4101 = vpop.f32.mrb[0].mxu0
        %v4102 = vadd.f32 %v3909, %v4101
        %v4103 = vpop.f32.mrb[0].mxu0
        %v4104 = vadd.f32 %v3911, %v4103
        %v4105 = vpop.f32.mrb[0].mxu0
        %v4106 = vadd.f32 %v3913, %v4105
        %v4107 = vpop.f32.mrb[0].mxu0
        %v4108 = vadd.f32 %v3915, %v4107
        %4109 = vmatprep.mubr.bf16.mxu0 %v1724
        %4110 = vmatmul.mubr.bf16.gmra.mrb[0].mxu0 %v1723
        %v4111 = vpop.f32.mrb[0].mxu0
        %v4112 = vadd.f32 %v3919, %v4111
        %v4113 = vpop.f32.mrb[0].mxu0
        %v4114 = vadd.f32 %v3921, %v4113
        %v4115 = vpop.f32.mrb[0].mxu0
        %v4116 = vadd.f32 %v3923, %v4115
        %v4117 = vpop.f32.mrb[0].mxu0
        %v4118 = vadd.f32 %v3925, %v4117
        %4119 = vmatprep.mubr.bf16.mxu0 %v1742
        %4120 = vmatmul.mubr.bf16.gmra.mrb[0].mxu0 %v1741
        %v4121 = vpop.f32.mrb[0].mxu0
        %v4122 = vadd.f32 %v3929, %v4121
        %v4123 = vpop.f32.mrb[0].mxu0
        %v4124 = vadd.f32 %v3931, %v4123
        %v4125 = vpop.f32.mrb[0].mxu0
        %v4126 = vadd.f32 %v3933, %v4125
        %v4127 = vpop.f32.mrb[0].mxu0
        %v4128 = vadd.f32 %v3935, %v4127
        %4129 = vmatprep.mubr.bf16.mxu0 %v1760
        %4130 = vmatmul.mubr.bf16.gmra.mrb[0].mxu0 %v1759
        %v4131 = vpop.f32.mrb[0].mxu0
        %v4132 = vadd.f32 %v3939, %v4131
        %v4133 = vpop.f32.mrb[0].mxu0
        %v4134 = vadd.f32 %v3941, %v4133
        %v4135 = vpop.f32.mrb[0].mxu0
        %v4136 = vadd.f32 %v3943, %v4135
        %v4137 = vpop.f32.mrb[0].mxu0
        %v4138 = vadd.f32 %v3945, %v4137
        %4139 = vmatprep.mubr.bf16.mxu0 %v1778
        %4140 = vmatmul.mubr.bf16.gmra.mrb[0].mxu0 %v1777
        %v4141 = vpop.f32.mrb[0].mxu0
        %v4142 = vadd.f32 %v3949, %v4141
        %v4143 = vpop.f32.mrb[0].mxu0
        %v4144 = vadd.f32 %v3951, %v4143
        %v4145 = vpop.f32.mrb[0].mxu0
        %v4146 = vadd.f32 %v3953, %v4145
        %v4147 = vpop.f32.mrb[0].mxu0
        %v4148 = vadd.f32 %v3955, %v4147
        %4149 = vmatprep.mubr.bf16.mxu0 %v1796
        %4150 = vmatmul.mubr.bf16.gmra.mrb[0].mxu0 %v1795
        %v4151 = vpop.f32.mrb[0].mxu0
        %v4152 = vadd.f32 %v3959, %v4151
        %v4153 = vpop.f32.mrb[0].mxu0
        %v4154 = vadd.f32 %v3961, %v4153
        %v4155 = vpop.f32.mrb[0].mxu0
        %v4156 = vadd.f32 %v3963, %v4155
        %v4157 = vpop.f32.mrb[0].mxu0
        %v4158 = vadd.f32 %v3965, %v4157
        %4159 = vmatprep.mubr.bf16.mxu0 %v1814
        %4160 = vmatmul.mubr.bf16.gmra.mrb[0].mxu0 %v1813
        %v4161 = vpop.f32.mrb[0].mxu0
        %v4162 = vadd.f32 %v3969, %v4161
        %v4163 = vpop.f32.mrb[0].mxu0
        %v4164 = vadd.f32 %v3971, %v4163
        %v4165 = vpop.f32.mrb[0].mxu0
        %v4166 = vadd.f32 %v3973, %v4165
        %v4167 = vpop.f32.mrb[0].mxu0
        %v4168 = vadd.f32 %v3975, %v4167
        %4169 = vmatprep.mubr.bf16.mxu0 %v1832
        %4170 = vmatmul.mubr.bf16.gmra.mrb[0].mxu0 %v1831
        %v4171 = vpop.f32.mrb[0].mxu0
        %v4172 = vadd.f32 %v3979, %v4171
        %v4173 = vpop.f32.mrb[0].mxu0
        %v4174 = vadd.f32 %v3981, %v4173
        %v4175 = vpop.f32.mrb[0].mxu0
        %v4176 = vadd.f32 %v3983, %v4175
        %v4177 = vpop.f32.mrb[0].mxu0
        %v4178 = vadd.f32 %v3985, %v4177
        %4179 = vmatprep.mubr.bf16.mxu0 %v1850
        %4180 = vmatmul.mubr.bf16.gmra.mrb[0].mxu0 %v1849
        %v4181 = vpop.f32.mrb[0].mxu0
        %v4182 = vadd.f32 %v3989, %v4181
        %v4183 = vpop.f32.mrb[0].mxu0
        %v4184 = vadd.f32 %v3991, %v4183
        %v4185 = vpop.f32.mrb[0].mxu0
        %v4186 = vadd.f32 %v3993, %v4185
        %v4187 = vpop.f32.mrb[0].mxu0
        %v4188 = vadd.f32 %v3995, %v4187
        %4189 = vmatprep.mubr.bf16.mxu0 %v1868
        %4190 = vmatmul.mubr.bf16.gmra.mrb[0].mxu0 %v1867
        %v4191 = vpop.f32.mrb[0].mxu0
        %v4192 = vadd.f32 %v3999, %v4191
        %v4193 = vpop.f32.mrb[0].mxu0
        %v4194 = vadd.f32 %v4001, %v4193
        %v4195 = vpop.f32.mrb[0].mxu0
        %v4196 = vadd.f32 %v4003, %v4195
        %v4197 = vpop.f32.mrb[0].mxu0
        %v4198 = vadd.f32 %v4005, %v4197
        %4199 = vdwg.mxu0
        %4200 = vmatprep.subr.bf16.mxu0 %v3142
        %4201 = vmatpush1.bf16.msra.mxu0 %v3141
        %4202 = vmatprep.subr.bf16.mxu0 %v3144
        %4203 = vmatpush1.bf16.msra.mxu0 %v3143
        %4204 = vmatprep.subr.bf16.mxu0 %v3146
        %4205 = vmatpush1.bf16.msra.mxu0 %v3145
        %4206 = vmatprep.subr.bf16.mxu0 %v3148
        %4207 = vmatpush1.bf16.msra.mxu0 %v3147
        %4208 = vmatprep.subr.bf16.mxu0 %v3150
        %4209 = vmatpush1.bf16.msra.mxu0 %v3149
        %4210 = vmatprep.subr.bf16.mxu0 %v3152
        %4211 = vmatpush1.bf16.msra.mxu0 %v3151
        %4212 = vmatprep.subr.bf16.mxu0 %v3154
        %4213 = vmatpush1.bf16.msra.mxu0 %v3153
        %4214 = vmatprep.subr.bf16.mxu0 %v3156
        %4215 = vmatpush1.bf16.msra.mxu0 %v3155
        %4216 = vmatprep.subr.bf16.mxu0 %v3158
        %4217 = vmatpush1.bf16.msra.mxu0 %v3157
        %4218 = vmatprep.subr.bf16.mxu0 %v3160
        %4219 = vmatpush1.bf16.msra.mxu0 %v3159
        %4220 = vmatprep.subr.bf16.mxu0 %v3162
        %4221 = vmatpush1.bf16.msra.mxu0 %v3161
        %4222 = vmatprep.subr.bf16.mxu0 %v3164
        %4223 = vmatpush1.bf16.msra.mxu0 %v3163
        %4224 = vmatprep.subr.bf16.mxu0 %v3166
        %4225 = vmatpush1.bf16.msra.mxu0 %v3165
        %4226 = vmatprep.subr.bf16.mxu0 %v3168
        %4227 = vmatpush1.bf16.msra.mxu0 %v3167
        %4228 = vmatprep.subr.bf16.mxu0 %v3170
        %4229 = vmatpush1.bf16.msra.mxu0 %v3169
        %4230 = vmatprep.subr.bf16.mxu0 %v3172
        %4231 = vmatpush1.bf16.msra.mxu0 %v3171
        %4232 = vmatprep.mubr.bf16.mxu0 %v1600
        %4233 = vmatmul.mubr.bf16.gmra.mrb[0].mxu0 %v1599
        %v4234 = vpop.f32.mrb[0].mxu0
        %v4235 = vadd.f32 %v4042, %v4234
        %v4236 = vpop.f32.mrb[0].mxu0
        %v4237 = vadd.f32 %v4044, %v4236
        %v4238 = vpop.f32.mrb[0].mxu0
        %v4239 = vadd.f32 %v4046, %v4238
        %v4240 = vpop.f32.mrb[0].mxu0
        %v4241 = vadd.f32 %v4048, %v4240
        %4242 = vmatprep.mubr.bf16.mxu0 %v1618
        %4243 = vmatmul.mubr.bf16.gmra.mrb[0].mxu0 %v1617
        %v4244 = vpop.f32.mrb[0].mxu0
        %v4245 = vadd.f32 %v4052, %v4244
        %v4246 = vpop.f32.mrb[0].mxu0
        %v4247 = vadd.f32 %v4054, %v4246
        %v4248 = vpop.f32.mrb[0].mxu0
        %v4249 = vadd.f32 %v4056, %v4248
        %v4250 = vpop.f32.mrb[0].mxu0
        %v4251 = vadd.f32 %v4058, %v4250
        %4252 = vmatprep.mubr.bf16.mxu0 %v1636
        %4253 = vmatmul.mubr.bf16.gmra.mrb[0].mxu0 %v1635
        %v4254 = vpop.f32.mrb[0].mxu0
        %v4255 = vadd.f32 %v4062, %v4254
        %v4256 = vpop.f32.mrb[0].mxu0
        %v4257 = vadd.f32 %v4064, %v4256
        %v4258 = vpop.f32.mrb[0].mxu0
        %v4259 = vadd.f32 %v4066, %v4258
        %v4260 = vpop.f32.mrb[0].mxu0
        %v4261 = vadd.f32 %v4068, %v4260
        %4262 = vmatprep.mubr.bf16.mxu0 %v1654
        %4263 = vmatmul.mubr.bf16.gmra.mrb[0].mxu0 %v1653
        %v4264 = vpop.f32.mrb[0].mxu0
        %v4265 = vadd.f32 %v4072, %v4264
        %v4266 = vpop.f32.mrb[0].mxu0
        %v4267 = vadd.f32 %v4074, %v4266
        %v4268 = vpop.f32.mrb[0].mxu0
        %v4269 = vadd.f32 %v4076, %v4268
        %v4270 = vpop.f32.mrb[0].mxu0
        %v4271 = vadd.f32 %v4078, %v4270
        %4272 = vmatprep.mubr.bf16.mxu0 %v1672
        %4273 = vmatmul.mubr.bf16.gmra.mrb[0].mxu0 %v1671
        %v4274 = vpop.f32.mrb[0].mxu0
        %v4275 = vadd.f32 %v4082, %v4274
        %v4276 = vpop.f32.mrb[0].mxu0
        %v4277 = vadd.f32 %v4084, %v4276
        %v4278 = vpop.f32.mrb[0].mxu0
        %v4279 = vadd.f32 %v4086, %v4278
        %v4280 = vpop.f32.mrb[0].mxu0
        %v4281 = vadd.f32 %v4088, %v4280
        %4282 = vmatprep.mubr.bf16.mxu0 %v1690
        %4283 = vmatmul.mubr.bf16.gmra.mrb[0].mxu0 %v1689
        %v4284 = vpop.f32.mrb[0].mxu0
        %v4285 = vadd.f32 %v4092, %v4284
        %v4286 = vpop.f32.mrb[0].mxu0
        %v4287 = vadd.f32 %v4094, %v4286
        %v4288 = vpop.f32.mrb[0].mxu0
        %v4289 = vadd.f32 %v4096, %v4288
        %v4290 = vpop.f32.mrb[0].mxu0
        %v4291 = vadd.f32 %v4098, %v4290
        %4292 = vmatprep.mubr.bf16.mxu0 %v1708
        %4293 = vmatmul.mubr.bf16.gmra.mrb[0].mxu0 %v1707
        %v4294 = vpop.f32.mrb[0].mxu0
        %v4295 = vadd.f32 %v4102, %v4294
        %v4296 = vpop.f32.mrb[0].mxu0
        %v4297 = vadd.f32 %v4104, %v4296
        %v4298 = vpop.f32.mrb[0].mxu0
        %v4299 = vadd.f32 %v4106, %v4298
        %v4300 = vpop.f32.mrb[0].mxu0
        %v4301 = vadd.f32 %v4108, %v4300
        %4302 = vmatprep.mubr.bf16.mxu0 %v1726
        %4303 = vmatmul.mubr.bf16.gmra.mrb[0].mxu0 %v1725
        %v4304 = vpop.f32.mrb[0].mxu0
        %v4305 = vadd.f32 %v4112, %v4304
        %v4306 = vpop.f32.mrb[0].mxu0
        %v4307 = vadd.f32 %v4114, %v4306
        %v4308 = vpop.f32.mrb[0].mxu0
        %v4309 = vadd.f32 %v4116, %v4308
        %v4310 = vpop.f32.mrb[0].mxu0
        %v4311 = vadd.f32 %v4118, %v4310
        %4312 = vmatprep.mubr.bf16.mxu0 %v1744
        %4313 = vmatmul.mubr.bf16.gmra.mrb[0].mxu0 %v1743
        %v4314 = vpop.f32.mrb[0].mxu0
        %v4315 = vadd.f32 %v4122, %v4314
        %v4316 = vpop.f32.mrb[0].mxu0
        %v4317 = vadd.f32 %v4124, %v4316
        %v4318 = vpop.f32.mrb[0].mxu0
        %v4319 = vadd.f32 %v4126, %v4318
        %v4320 = vpop.f32.mrb[0].mxu0
        %v4321 = vadd.f32 %v4128, %v4320
        %4322 = vmatprep.mubr.bf16.mxu0 %v1762
        %4323 = vmatmul.mubr.bf16.gmra.mrb[0].mxu0 %v1761
        %v4324 = vpop.f32.mrb[0].mxu0
        %v4325 = vadd.f32 %v4132, %v4324
        %v4326 = vpop.f32.mrb[0].mxu0
        %v4327 = vadd.f32 %v4134, %v4326
        %v4328 = vpop.f32.mrb[0].mxu0
        %v4329 = vadd.f32 %v4136, %v4328
        %v4330 = vpop.f32.mrb[0].mxu0
        %v4331 = vadd.f32 %v4138, %v4330
        %4332 = vmatprep.mubr.bf16.mxu0 %v1780
        %4333 = vmatmul.mubr.bf16.gmra.mrb[0].mxu0 %v1779
        %v4334 = vpop.f32.mrb[0].mxu0
        %v4335 = vadd.f32 %v4142, %v4334
        %v4336 = vpop.f32.mrb[0].mxu0
        %v4337 = vadd.f32 %v4144, %v4336
        %v4338 = vpop.f32.mrb[0].mxu0
        %v4339 = vadd.f32 %v4146, %v4338
        %v4340 = vpop.f32.mrb[0].mxu0
        %v4341 = vadd.f32 %v4148, %v4340
        %4342 = vmatprep.mubr.bf16.mxu0 %v1798
        %4343 = vmatmul.mubr.bf16.gmra.mrb[0].mxu0 %v1797
        %v4344 = vpop.f32.mrb[0].mxu0
        %v4345 = vadd.f32 %v4152, %v4344
        %v4346 = vpop.f32.mrb[0].mxu0
        %v4347 = vadd.f32 %v4154, %v4346
        %v4348 = vpop.f32.mrb[0].mxu0
        %v4349 = vadd.f32 %v4156, %v4348
        %v4350 = vpop.f32.mrb[0].mxu0
        %v4351 = vadd.f32 %v4158, %v4350
        %4352 = vmatprep.mubr.bf16.mxu0 %v1816
        %4353 = vmatmul.mubr.bf16.gmra.mrb[0].mxu0 %v1815
        %v4354 = vpop.f32.mrb[0].mxu0
        %v4355 = vadd.f32 %v4162, %v4354
        %v4356 = vpop.f32.mrb[0].mxu0
        %v4357 = vadd.f32 %v4164, %v4356
        %v4358 = vpop.f32.mrb[0].mxu0
        %v4359 = vadd.f32 %v4166, %v4358
        %v4360 = vpop.f32.mrb[0].mxu0
        %v4361 = vadd.f32 %v4168, %v4360
        %4362 = vmatprep.mubr.bf16.mxu0 %v1834
        %4363 = vmatmul.mubr.bf16.gmra.mrb[0].mxu0 %v1833
        %v4364 = vpop.f32.mrb[0].mxu0
        %v4365 = vadd.f32 %v4172, %v4364
        %v4366 = vpop.f32.mrb[0].mxu0
        %v4367 = vadd.f32 %v4174, %v4366
        %v4368 = vpop.f32.mrb[0].mxu0
        %v4369 = vadd.f32 %v4176, %v4368
        %v4370 = vpop.f32.mrb[0].mxu0
        %v4371 = vadd.f32 %v4178, %v4370
        %4372 = vmatprep.mubr.bf16.mxu0 %v1852
        %4373 = vmatmul.mubr.bf16.gmra.mrb[0].mxu0 %v1851
        %v4374 = vpop.f32.mrb[0].mxu0
        %v4375 = vadd.f32 %v4182, %v4374
        %v4376 = vpop.f32.mrb[0].mxu0
        %v4377 = vadd.f32 %v4184, %v4376
        %v4378 = vpop.f32.mrb[0].mxu0
        %v4379 = vadd.f32 %v4186, %v4378
        %v4380 = vpop.f32.mrb[0].mxu0
        %v4381 = vadd.f32 %v4188, %v4380
        %4382 = vmatprep.mubr.bf16.mxu0 %v1870
        %4383 = vmatmul.mubr.bf16.gmra.mrb[0].mxu0 %v1869
        %v4384 = vpop.f32.mrb[0].mxu0
        %v4385 = vadd.f32 %v4192, %v4384
        %v4386 = vpop.f32.mrb[0].mxu0
        %v4387 = vadd.f32 %v4194, %v4386
        %v4388 = vpop.f32.mrb[0].mxu0
        %v4389 = vadd.f32 %v4196, %v4388
        %v4390 = vpop.f32.mrb[0].mxu0
        %v4391 = vadd.f32 %v4198, %v4390
        %4392 = vdwg.mxu0
        %4393 = vmatprep.subr.bf16.mxu0 %v3174
        %4394 = vmatpush1.bf16.msra.mxu0 %v3173
        %4395 = vmatprep.subr.bf16.mxu0 %v3176
        %4396 = vmatpush1.bf16.msra.mxu0 %v3175
        %4397 = vmatprep.subr.bf16.mxu0 %v3178
        %4398 = vmatpush1.bf16.msra.mxu0 %v3177
        %4399 = vmatprep.subr.bf16.mxu0 %v3180
        %4400 = vmatpush1.bf16.msra.mxu0 %v3179
        %4401 = vmatprep.subr.bf16.mxu0 %v3182
        %4402 = vmatpush1.bf16.msra.mxu0 %v3181
        %4403 = vmatprep.subr.bf16.mxu0 %v3184
        %4404 = vmatpush1.bf16.msra.mxu0 %v3183
        %4405 = vmatprep.subr.bf16.mxu0 %v3186
        %4406 = vmatpush1.bf16.msra.mxu0 %v3185
        %4407 = vmatprep.subr.bf16.mxu0 %v3188
        %4408 = vmatpush1.bf16.msra.mxu0 %v3187
        %4409 = vmatprep.subr.bf16.mxu0 %v3190
        %4410 = vmatpush1.bf16.msra.mxu0 %v3189
        %4411 = vmatprep.subr.bf16.mxu0 %v3192
        %4412 = vmatpush1.bf16.msra.mxu0 %v3191
        %4413 = vmatprep.subr.bf16.mxu0 %v3194
        %4414 = vmatpush1.bf16.msra.mxu0 %v3193
        %4415 = vmatprep.subr.bf16.mxu0 %v3196
        %4416 = vmatpush1.bf16.msra.mxu0 %v3195
        %4417 = vmatprep.subr.bf16.mxu0 %v3198
        %4418 = vmatpush1.bf16.msra.mxu0 %v3197
        %4419 = vmatprep.subr.bf16.mxu0 %v3200
        %4420 = vmatpush1.bf16.msra.mxu0 %v3199
        %4421 = vmatprep.subr.bf16.mxu0 %v3202
        %4422 = vmatpush1.bf16.msra.mxu0 %v3201
        %4423 = vmatprep.subr.bf16.mxu0 %v3204
        %4424 = vmatpush1.bf16.msra.mxu0 %v3203
        %4425 = vmatprep.mubr.bf16.mxu0 %v1602
        %4426 = vmatmul.mubr.bf16.gmra.mrb[0].mxu0 %v1601
        %v4427 = vpop.f32.mrb[0].mxu0
        %v4428 = vadd.f32 %v4235, %v4427
        %v4429 = vpop.f32.mrb[0].mxu0
        %v4430 = vadd.f32 %v4237, %v4429
        %v4431 = vpop.f32.mrb[0].mxu0
        %v4432 = vadd.f32 %v4239, %v4431
        %v4433 = vpop.f32.mrb[0].mxu0
        %v4434 = vadd.f32 %v4241, %v4433
        %4435 = vmatprep.mubr.bf16.mxu0 %v1620
        %4436 = vmatmul.mubr.bf16.gmra.mrb[0].mxu0 %v1619
        %v4437 = vpop.f32.mrb[0].mxu0
        %v4438 = vadd.f32 %v4245, %v4437
        %v4439 = vpop.f32.mrb[0].mxu0
        %v4440 = vadd.f32 %v4247, %v4439
        %v4441 = vpop.f32.mrb[0].mxu0
        %v4442 = vadd.f32 %v4249, %v4441
        %v4443 = vpop.f32.mrb[0].mxu0
        %v4444 = vadd.f32 %v4251, %v4443
        %4445 = vmatprep.mubr.bf16.mxu0 %v1638
        %4446 = vmatmul.mubr.bf16.gmra.mrb[0].mxu0 %v1637
        %v4447 = vpop.f32.mrb[0].mxu0
        %v4448 = vadd.f32 %v4255, %v4447
        %v4449 = vpop.f32.mrb[0].mxu0
        %v4450 = vadd.f32 %v4257, %v4449
        %v4451 = vpop.f32.mrb[0].mxu0
        %v4452 = vadd.f32 %v4259, %v4451
        %v4453 = vpop.f32.mrb[0].mxu0
        %v4454 = vadd.f32 %v4261, %v4453
        %4455 = vmatprep.mubr.bf16.mxu0 %v1656
        %4456 = vmatmul.mubr.bf16.gmra.mrb[0].mxu0 %v1655
        %v4457 = vpop.f32.mrb[0].mxu0
        %v4458 = vadd.f32 %v4265, %v4457
        %v4459 = vpop.f32.mrb[0].mxu0
        %v4460 = vadd.f32 %v4267, %v4459
        %v4461 = vpop.f32.mrb[0].mxu0
        %v4462 = vadd.f32 %v4269, %v4461
        %v4463 = vpop.f32.mrb[0].mxu0
        %v4464 = vadd.f32 %v4271, %v4463
        %4465 = vmatprep.mubr.bf16.mxu0 %v1674
        %4466 = vmatmul.mubr.bf16.gmra.mrb[0].mxu0 %v1673
        %v4467 = vpop.f32.mrb[0].mxu0
        %v4468 = vadd.f32 %v4275, %v4467
        %v4469 = vpop.f32.mrb[0].mxu0
        %v4470 = vadd.f32 %v4277, %v4469
        %v4471 = vpop.f32.mrb[0].mxu0
        %v4472 = vadd.f32 %v4279, %v4471
        %v4473 = vpop.f32.mrb[0].mxu0
        %v4474 = vadd.f32 %v4281, %v4473
        %4475 = vmatprep.mubr.bf16.mxu0 %v1692
        %4476 = vmatmul.mubr.bf16.gmra.mrb[0].mxu0 %v1691
        %v4477 = vpop.f32.mrb[0].mxu0
        %v4478 = vadd.f32 %v4285, %v4477
        %v4479 = vpop.f32.mrb[0].mxu0
        %v4480 = vadd.f32 %v4287, %v4479
        %v4481 = vpop.f32.mrb[0].mxu0
        %v4482 = vadd.f32 %v4289, %v4481
        %v4483 = vpop.f32.mrb[0].mxu0
        %v4484 = vadd.f32 %v4291, %v4483
        %4485 = vmatprep.mubr.bf16.mxu0 %v1710
        %4486 = vmatmul.mubr.bf16.gmra.mrb[0].mxu0 %v1709
        %v4487 = vpop.f32.mrb[0].mxu0
        %v4488 = vadd.f32 %v4295, %v4487
        %v4489 = vpop.f32.mrb[0].mxu0
        %v4490 = vadd.f32 %v4297, %v4489
        %v4491 = vpop.f32.mrb[0].mxu0
        %v4492 = vadd.f32 %v4299, %v4491
        %v4493 = vpop.f32.mrb[0].mxu0
        %v4494 = vadd.f32 %v4301, %v4493
        %4495 = vmatprep.mubr.bf16.mxu0 %v1728
        %4496 = vmatmul.mubr.bf16.gmra.mrb[0].mxu0 %v1727
        %v4497 = vpop.f32.mrb[0].mxu0
        %v4498 = vadd.f32 %v4305, %v4497
        %v4499 = vpop.f32.mrb[0].mxu0
        %v4500 = vadd.f32 %v4307, %v4499
        %v4501 = vpop.f32.mrb[0].mxu0
        %v4502 = vadd.f32 %v4309, %v4501
        %v4503 = vpop.f32.mrb[0].mxu0
        %v4504 = vadd.f32 %v4311, %v4503
        %4505 = vmatprep.mubr.bf16.mxu0 %v1746
        %4506 = vmatmul.mubr.bf16.gmra.mrb[0].mxu0 %v1745
        %v4507 = vpop.f32.mrb[0].mxu0
        %v4508 = vadd.f32 %v4315, %v4507
        %v4509 = vpop.f32.mrb[0].mxu0
        %v4510 = vadd.f32 %v4317, %v4509
        %v4511 = vpop.f32.mrb[0].mxu0
        %v4512 = vadd.f32 %v4319, %v4511
        %v4513 = vpop.f32.mrb[0].mxu0
        %v4514 = vadd.f32 %v4321, %v4513
        %4515 = vmatprep.mubr.bf16.mxu0 %v1764
        %4516 = vmatmul.mubr.bf16.gmra.mrb[0].mxu0 %v1763
        %v4517 = vpop.f32.mrb[0].mxu0
        %v4518 = vadd.f32 %v4325, %v4517
        %v4519 = vpop.f32.mrb[0].mxu0
        %v4520 = vadd.f32 %v4327, %v4519
        %v4521 = vpop.f32.mrb[0].mxu0
        %v4522 = vadd.f32 %v4329, %v4521
        %v4523 = vpop.f32.mrb[0].mxu0
        %v4524 = vadd.f32 %v4331, %v4523
        %4525 = vmatprep.mubr.bf16.mxu0 %v1782
        %4526 = vmatmul.mubr.bf16.gmra.mrb[0].mxu0 %v1781
        %v4527 = vpop.f32.mrb[0].mxu0
        %v4528 = vadd.f32 %v4335, %v4527
        %v4529 = vpop.f32.mrb[0].mxu0
        %v4530 = vadd.f32 %v4337, %v4529
        %v4531 = vpop.f32.mrb[0].mxu0
        %v4532 = vadd.f32 %v4339, %v4531
        %v4533 = vpop.f32.mrb[0].mxu0
        %v4534 = vadd.f32 %v4341, %v4533
        %4535 = vmatprep.mubr.bf16.mxu0 %v1800
        %4536 = vmatmul.mubr.bf16.gmra.mrb[0].mxu0 %v1799
        %v4537 = vpop.f32.mrb[0].mxu0
        %v4538 = vadd.f32 %v4345, %v4537
        %v4539 = vpop.f32.mrb[0].mxu0
        %v4540 = vadd.f32 %v4347, %v4539
        %v4541 = vpop.f32.mrb[0].mxu0
        %v4542 = vadd.f32 %v4349, %v4541
        %v4543 = vpop.f32.mrb[0].mxu0
        %v4544 = vadd.f32 %v4351, %v4543
        %4545 = vmatprep.mubr.bf16.mxu0 %v1818
        %4546 = vmatmul.mubr.bf16.gmra.mrb[0].mxu0 %v1817
        %v4547 = vpop.f32.mrb[0].mxu0
        %v4548 = vadd.f32 %v4355, %v4547
        %v4549 = vpop.f32.mrb[0].mxu0
        %v4550 = vadd.f32 %v4357, %v4549
        %v4551 = vpop.f32.mrb[0].mxu0
        %v4552 = vadd.f32 %v4359, %v4551
        %v4553 = vpop.f32.mrb[0].mxu0
        %v4554 = vadd.f32 %v4361, %v4553
        %4555 = vmatprep.mubr.bf16.mxu0 %v1836
        %4556 = vmatmul.mubr.bf16.gmra.mrb[0].mxu0 %v1835
        %v4557 = vpop.f32.mrb[0].mxu0
        %v4558 = vadd.f32 %v4365, %v4557
        %v4559 = vpop.f32.mrb[0].mxu0
        %v4560 = vadd.f32 %v4367, %v4559
        %v4561 = vpop.f32.mrb[0].mxu0
        %v4562 = vadd.f32 %v4369, %v4561
        %v4563 = vpop.f32.mrb[0].mxu0
        %v4564 = vadd.f32 %v4371, %v4563
        %4565 = vmatprep.mubr.bf16.mxu0 %v1854
        %4566 = vmatmul.mubr.bf16.gmra.mrb[0].mxu0 %v1853
        %v4567 = vpop.f32.mrb[0].mxu0
        %v4568 = vadd.f32 %v4375, %v4567
        %v4569 = vpop.f32.mrb[0].mxu0
        %v4570 = vadd.f32 %v4377, %v4569
        %v4571 = vpop.f32.mrb[0].mxu0
        %v4572 = vadd.f32 %v4379, %v4571
        %v4573 = vpop.f32.mrb[0].mxu0
        %v4574 = vadd.f32 %v4381, %v4573
        %4575 = vmatprep.mubr.bf16.mxu0 %v1872
        %4576 = vmatmul.mubr.bf16.gmra.mrb[0].mxu0 %v1871
        %v4577 = vpop.f32.mrb[0].mxu0
        %v4578 = vadd.f32 %v4385, %v4577
        %v4579 = vpop.f32.mrb[0].mxu0
        %v4580 = vadd.f32 %v4387, %v4579
        %v4581 = vpop.f32.mrb[0].mxu0
        %v4582 = vadd.f32 %v4389, %v4581
        %v4583 = vpop.f32.mrb[0].mxu0
        %v4584 = vadd.f32 %v4391, %v4583
        %4585 = vdwg.mxu0
        %4586 = vmatprep.subr.bf16.mxu0 %v3206
        %4587 = vmatpush1.bf16.msra.mxu0 %v3205
        %4588 = vmatprep.subr.bf16.mxu0 %v3208
        %4589 = vmatpush1.bf16.msra.mxu0 %v3207
        %4590 = vmatprep.subr.bf16.mxu0 %v3210
        %4591 = vmatpush1.bf16.msra.mxu0 %v3209
        %4592 = vmatprep.subr.bf16.mxu0 %v3212
        %4593 = vmatpush1.bf16.msra.mxu0 %v3211
        %4594 = vmatprep.subr.bf16.mxu0 %v3214
        %4595 = vmatpush1.bf16.msra.mxu0 %v3213
        %4596 = vmatprep.subr.bf16.mxu0 %v3216
        %4597 = vmatpush1.bf16.msra.mxu0 %v3215
        %4598 = vmatprep.subr.bf16.mxu0 %v3218
        %4599 = vmatpush1.bf16.msra.mxu0 %v3217
        %4600 = vmatprep.subr.bf16.mxu0 %v3220
        %4601 = vmatpush1.bf16.msra.mxu0 %v3219
        %4602 = vmatprep.subr.bf16.mxu0 %v3222
        %4603 = vmatpush1.bf16.msra.mxu0 %v3221
        %4604 = vmatprep.subr.bf16.mxu0 %v3224
        %4605 = vmatpush1.bf16.msra.mxu0 %v3223
        %4606 = vmatprep.subr.bf16.mxu0 %v3226
        %4607 = vmatpush1.bf16.msra.mxu0 %v3225
        %4608 = vmatprep.subr.bf16.mxu0 %v3228
        %4609 = vmatpush1.bf16.msra.mxu0 %v3227
        %4610 = vmatprep.subr.bf16.mxu0 %v3230
        %4611 = vmatpush1.bf16.msra.mxu0 %v3229
        %4612 = vmatprep.subr.bf16.mxu0 %v3232
        %4613 = vmatpush1.bf16.msra.mxu0 %v3231
        %4614 = vmatprep.subr.bf16.mxu0 %v3234
        %4615 = vmatpush1.bf16.msra.mxu0 %v3233
        %4616 = vmatprep.subr.bf16.mxu0 %v3236
        %4617 = vmatpush1.bf16.msra.mxu0 %v3235
        %4618 = vmatprep.mubr.bf16.mxu0 %v1604
        %4619 = vmatmul.mubr.bf16.gmra.mrb[0].mxu0 %v1603
        %v4620 = vpop.f32.mrb[0].mxu0
        %v4621 = vadd.f32 %v4428, %v4620
        %v4622 = vpop.f32.mrb[0].mxu0
        %v4623 = vadd.f32 %v4430, %v4622
        %v4624 = vpop.f32.mrb[0].mxu0
        %v4625 = vadd.f32 %v4432, %v4624
        %v4626 = vpop.f32.mrb[0].mxu0
        %v4627 = vadd.f32 %v4434, %v4626
        %4628 = vmatprep.mubr.bf16.mxu0 %v1622
        %4629 = vmatmul.mubr.bf16.gmra.mrb[0].mxu0 %v1621
        %v4630 = vpop.f32.mrb[0].mxu0
        %v4631 = vadd.f32 %v4438, %v4630
        %v4632 = vpop.f32.mrb[0].mxu0
        %v4633 = vadd.f32 %v4440, %v4632
        %v4634 = vpop.f32.mrb[0].mxu0
        %v4635 = vadd.f32 %v4442, %v4634
        %v4636 = vpop.f32.mrb[0].mxu0
        %v4637 = vadd.f32 %v4444, %v4636
        %4638 = vmatprep.mubr.bf16.mxu0 %v1640
        %4639 = vmatmul.mubr.bf16.gmra.mrb[0].mxu0 %v1639
        %v4640 = vpop.f32.mrb[0].mxu0
        %v4641 = vadd.f32 %v4448, %v4640
        %v4642 = vpop.f32.mrb[0].mxu0
        %v4643 = vadd.f32 %v4450, %v4642
        %v4644 = vpop.f32.mrb[0].mxu0
        %v4645 = vadd.f32 %v4452, %v4644
        %v4646 = vpop.f32.mrb[0].mxu0
        %v4647 = vadd.f32 %v4454, %v4646
        %4648 = vmatprep.mubr.bf16.mxu0 %v1658
        %4649 = vmatmul.mubr.bf16.gmra.mrb[0].mxu0 %v1657
        %v4650 = vpop.f32.mrb[0].mxu0
        %v4651 = vadd.f32 %v4458, %v4650
        %v4652 = vpop.f32.mrb[0].mxu0
        %v4653 = vadd.f32 %v4460, %v4652
        %v4654 = vpop.f32.mrb[0].mxu0
        %v4655 = vadd.f32 %v4462, %v4654
        %v4656 = vpop.f32.mrb[0].mxu0
        %v4657 = vadd.f32 %v4464, %v4656
        %4658 = vmatprep.mubr.bf16.mxu0 %v1676
        %4659 = vmatmul.mubr.bf16.gmra.mrb[0].mxu0 %v1675
        %v4660 = vpop.f32.mrb[0].mxu0
        %v4661 = vadd.f32 %v4468, %v4660
        %v4662 = vpop.f32.mrb[0].mxu0
        %v4663 = vadd.f32 %v4470, %v4662
        %v4664 = vpop.f32.mrb[0].mxu0
        %v4665 = vadd.f32 %v4472, %v4664
        %v4666 = vpop.f32.mrb[0].mxu0
        %v4667 = vadd.f32 %v4474, %v4666
        %4668 = vmatprep.mubr.bf16.mxu0 %v1694
        %4669 = vmatmul.mubr.bf16.gmra.mrb[0].mxu0 %v1693
        %v4670 = vpop.f32.mrb[0].mxu0
        %v4671 = vadd.f32 %v4478, %v4670
        %v4672 = vpop.f32.mrb[0].mxu0
        %v4673 = vadd.f32 %v4480, %v4672
        %v4674 = vpop.f32.mrb[0].mxu0
        %v4675 = vadd.f32 %v4482, %v4674
        %v4676 = vpop.f32.mrb[0].mxu0
        %v4677 = vadd.f32 %v4484, %v4676
        %4678 = vmatprep.mubr.bf16.mxu0 %v1712
        %4679 = vmatmul.mubr.bf16.gmra.mrb[0].mxu0 %v1711
        %v4680 = vpop.f32.mrb[0].mxu0
        %v4681 = vadd.f32 %v4488, %v4680
        %v4682 = vpop.f32.mrb[0].mxu0
        %v4683 = vadd.f32 %v4490, %v4682
        %v4684 = vpop.f32.mrb[0].mxu0
        %v4685 = vadd.f32 %v4492, %v4684
        %v4686 = vpop.f32.mrb[0].mxu0
        %v4687 = vadd.f32 %v4494, %v4686
        %4688 = vmatprep.mubr.bf16.mxu0 %v1730
        %4689 = vmatmul.mubr.bf16.gmra.mrb[0].mxu0 %v1729
        %v4690 = vpop.f32.mrb[0].mxu0
        %v4691 = vadd.f32 %v4498, %v4690
        %v4692 = vpop.f32.mrb[0].mxu0
        %v4693 = vadd.f32 %v4500, %v4692
        %v4694 = vpop.f32.mrb[0].mxu0
        %v4695 = vadd.f32 %v4502, %v4694
        %v4696 = vpop.f32.mrb[0].mxu0
        %v4697 = vadd.f32 %v4504, %v4696
        %4698 = vmatprep.mubr.bf16.mxu0 %v1748
        %4699 = vmatmul.mubr.bf16.gmra.mrb[0].mxu0 %v1747
        %v4700 = vpop.f32.mrb[0].mxu0
        %v4701 = vadd.f32 %v4508, %v4700
        %v4702 = vpop.f32.mrb[0].mxu0
        %v4703 = vadd.f32 %v4510, %v4702
        %v4704 = vpop.f32.mrb[0].mxu0
        %v4705 = vadd.f32 %v4512, %v4704
        %v4706 = vpop.f32.mrb[0].mxu0
        %v4707 = vadd.f32 %v4514, %v4706
        %4708 = vmatprep.mubr.bf16.mxu0 %v1766
        %4709 = vmatmul.mubr.bf16.gmra.mrb[0].mxu0 %v1765
        %v4710 = vpop.f32.mrb[0].mxu0
        %v4711 = vadd.f32 %v4518, %v4710
        %v4712 = vpop.f32.mrb[0].mxu0
        %v4713 = vadd.f32 %v4520, %v4712
        %v4714 = vpop.f32.mrb[0].mxu0
        %v4715 = vadd.f32 %v4522, %v4714
        %v4716 = vpop.f32.mrb[0].mxu0
        %v4717 = vadd.f32 %v4524, %v4716
        %4718 = vmatprep.mubr.bf16.mxu0 %v1784
        %4719 = vmatmul.mubr.bf16.gmra.mrb[0].mxu0 %v1783
        %v4720 = vpop.f32.mrb[0].mxu0
        %v4721 = vadd.f32 %v4528, %v4720
        %v4722 = vpop.f32.mrb[0].mxu0
        %v4723 = vadd.f32 %v4530, %v4722
        %v4724 = vpop.f32.mrb[0].mxu0
        %v4725 = vadd.f32 %v4532, %v4724
        %v4726 = vpop.f32.mrb[0].mxu0
        %v4727 = vadd.f32 %v4534, %v4726
        %4728 = vmatprep.mubr.bf16.mxu0 %v1802
        %4729 = vmatmul.mubr.bf16.gmra.mrb[0].mxu0 %v1801
        %v4730 = vpop.f32.mrb[0].mxu0
        %v4731 = vadd.f32 %v4538, %v4730
        %v4732 = vpop.f32.mrb[0].mxu0
        %v4733 = vadd.f32 %v4540, %v4732
        %v4734 = vpop.f32.mrb[0].mxu0
        %v4735 = vadd.f32 %v4542, %v4734
        %v4736 = vpop.f32.mrb[0].mxu0
        %v4737 = vadd.f32 %v4544, %v4736
        %4738 = vmatprep.mubr.bf16.mxu0 %v1820
        %4739 = vmatmul.mubr.bf16.gmra.mrb[0].mxu0 %v1819
        %v4740 = vpop.f32.mrb[0].mxu0
        %v4741 = vadd.f32 %v4548, %v4740
        %v4742 = vpop.f32.mrb[0].mxu0
        %v4743 = vadd.f32 %v4550, %v4742
        %v4744 = vpop.f32.mrb[0].mxu0
        %v4745 = vadd.f32 %v4552, %v4744
        %v4746 = vpop.f32.mrb[0].mxu0
        %v4747 = vadd.f32 %v4554, %v4746
        %4748 = vmatprep.mubr.bf16.mxu0 %v1838
        %4749 = vmatmul.mubr.bf16.gmra.mrb[0].mxu0 %v1837
        %v4750 = vpop.f32.mrb[0].mxu0
        %v4751 = vadd.f32 %v4558, %v4750
        %v4752 = vpop.f32.mrb[0].mxu0
        %v4753 = vadd.f32 %v4560, %v4752
        %v4754 = vpop.f32.mrb[0].mxu0
        %v4755 = vadd.f32 %v4562, %v4754
        %v4756 = vpop.f32.mrb[0].mxu0
        %v4757 = vadd.f32 %v4564, %v4756
        %4758 = vmatprep.mubr.bf16.mxu0 %v1856
        %4759 = vmatmul.mubr.bf16.gmra.mrb[0].mxu0 %v1855
        %v4760 = vpop.f32.mrb[0].mxu0
        %v4761 = vadd.f32 %v4568, %v4760
        %v4762 = vpop.f32.mrb[0].mxu0
        %v4763 = vadd.f32 %v4570, %v4762
        %v4764 = vpop.f32.mrb[0].mxu0
        %v4765 = vadd.f32 %v4572, %v4764
        %v4766 = vpop.f32.mrb[0].mxu0
        %v4767 = vadd.f32 %v4574, %v4766
        %4768 = vmatprep.mubr.bf16.mxu0 %v1874
        %4769 = vmatmul.mubr.bf16.gmra.mrb[0].mxu0 %v1873
        %v4770 = vpop.f32.mrb[0].mxu0
        %v4771 = vadd.f32 %v4578, %v4770
        %v4772 = vpop.f32.mrb[0].mxu0
        %v4773 = vadd.f32 %v4580, %v4772
        %v4774 = vpop.f32.mrb[0].mxu0
        %v4775 = vadd.f32 %v4582, %v4774
        %v4776 = vpop.f32.mrb[0].mxu0
        %v4777 = vadd.f32 %v4584, %v4776
        %4778 = vdwg.mxu0
        %4779 = vmatprep.subr.bf16.mxu0 %v3238
        %4780 = vmatpush1.bf16.msra.mxu0 %v3237
        %4781 = vmatprep.subr.bf16.mxu0 %v3240
        %4782 = vmatpush1.bf16.msra.mxu0 %v3239
        %4783 = vmatprep.subr.bf16.mxu0 %v3242
        %4784 = vmatpush1.bf16.msra.mxu0 %v3241
        %4785 = vmatprep.subr.bf16.mxu0 %v3244
        %4786 = vmatpush1.bf16.msra.mxu0 %v3243
        %4787 = vmatprep.subr.bf16.mxu0 %v3246
        %4788 = vmatpush1.bf16.msra.mxu0 %v3245
        %4789 = vmatprep.subr.bf16.mxu0 %v3248
        %4790 = vmatpush1.bf16.msra.mxu0 %v3247
        %4791 = vmatprep.subr.bf16.mxu0 %v3250
        %4792 = vmatpush1.bf16.msra.mxu0 %v3249
        %4793 = vmatprep.subr.bf16.mxu0 %v3252
        %4794 = vmatpush1.bf16.msra.mxu0 %v3251
        %4795 = vmatprep.subr.bf16.mxu0 %v3254
        %4796 = vmatpush1.bf16.msra.mxu0 %v3253
        %4797 = vmatprep.subr.bf16.mxu0 %v3256
        %4798 = vmatpush1.bf16.msra.mxu0 %v3255
        %4799 = vmatprep.subr.bf16.mxu0 %v3258
        %4800 = vmatpush1.bf16.msra.mxu0 %v3257
        %4801 = vmatprep.subr.bf16.mxu0 %v3260
        %4802 = vmatpush1.bf16.msra.mxu0 %v3259
        %4803 = vmatprep.subr.bf16.mxu0 %v3262
        %4804 = vmatpush1.bf16.msra.mxu0 %v3261
        %4805 = vmatprep.subr.bf16.mxu0 %v3264
        %4806 = vmatpush1.bf16.msra.mxu0 %v3263
        %4807 = vmatprep.subr.bf16.mxu0 %v3266
        %4808 = vmatpush1.bf16.msra.mxu0 %v3265
        %4809 = vmatprep.subr.bf16.mxu0 %v3268
        %4810 = vmatpush1.bf16.msra.mxu0 %v3267
        %4811 = vmatprep.mubr.bf16.mxu0 %v1606
        %4812 = vmatmul.mubr.bf16.gmra.mrb[0].mxu0 %v1605
        %v4813 = vpop.f32.mrb[0].mxu0
        %v4814 = vadd.f32 %v4621, %v4813
        %v4815 = vpop.f32.mrb[0].mxu0
        %v4816 = vadd.f32 %v4623, %v4815
        %v4817 = vpop.f32.mrb[0].mxu0
        %v4818 = vadd.f32 %v4625, %v4817
        %v4819 = vpop.f32.mrb[0].mxu0
        %v4820 = vadd.f32 %v4627, %v4819
        %4821 = vmatprep.mubr.bf16.mxu0 %v1624
        %4822 = vmatmul.mubr.bf16.gmra.mrb[0].mxu0 %v1623
        %v4823 = vpop.f32.mrb[0].mxu0
        %v4824 = vadd.f32 %v4631, %v4823
        %v4825 = vpop.f32.mrb[0].mxu0
        %v4826 = vadd.f32 %v4633, %v4825
        %v4827 = vpop.f32.mrb[0].mxu0
        %v4828 = vadd.f32 %v4635, %v4827
        %v4829 = vpop.f32.mrb[0].mxu0
        %v4830 = vadd.f32 %v4637, %v4829
        %4831 = vmatprep.mubr.bf16.mxu0 %v1642
        %4832 = vmatmul.mubr.bf16.gmra.mrb[0].mxu0 %v1641
        %v4833 = vpop.f32.mrb[0].mxu0
        %v4834 = vadd.f32 %v4641, %v4833
        %v4835 = vpop.f32.mrb[0].mxu0
        %v4836 = vadd.f32 %v4643, %v4835
        %v4837 = vpop.f32.mrb[0].mxu0
        %v4838 = vadd.f32 %v4645, %v4837
        %v4839 = vpop.f32.mrb[0].mxu0
        %v4840 = vadd.f32 %v4647, %v4839
        %4841 = vmatprep.mubr.bf16.mxu0 %v1660
        %4842 = vmatmul.mubr.bf16.gmra.mrb[0].mxu0 %v1659
        %v4843 = vpop.f32.mrb[0].mxu0
        %v4844 = vadd.f32 %v4651, %v4843
        %v4845 = vpop.f32.mrb[0].mxu0
        %v4846 = vadd.f32 %v4653, %v4845
        %v4847 = vpop.f32.mrb[0].mxu0
        %v4848 = vadd.f32 %v4655, %v4847
        %v4849 = vpop.f32.mrb[0].mxu0
        %v4850 = vadd.f32 %v4657, %v4849
        %4851 = vmatprep.mubr.bf16.mxu0 %v1678
        %4852 = vmatmul.mubr.bf16.gmra.mrb[0].mxu0 %v1677
        %v4853 = vpop.f32.mrb[0].mxu0
        %v4854 = vadd.f32 %v4661, %v4853
        %v4855 = vpop.f32.mrb[0].mxu0
        %v4856 = vadd.f32 %v4663, %v4855
        %v4857 = vpop.f32.mrb[0].mxu0
        %v4858 = vadd.f32 %v4665, %v4857
        %v4859 = vpop.f32.mrb[0].mxu0
        %v4860 = vadd.f32 %v4667, %v4859
        %4861 = vmatprep.mubr.bf16.mxu0 %v1696
        %4862 = vmatmul.mubr.bf16.gmra.mrb[0].mxu0 %v1695
        %v4863 = vpop.f32.mrb[0].mxu0
        %v4864 = vadd.f32 %v4671, %v4863
        %v4865 = vpop.f32.mrb[0].mxu0
        %v4866 = vadd.f32 %v4673, %v4865
        %v4867 = vpop.f32.mrb[0].mxu0
        %v4868 = vadd.f32 %v4675, %v4867
        %v4869 = vpop.f32.mrb[0].mxu0
        %v4870 = vadd.f32 %v4677, %v4869
        %4871 = vmatprep.mubr.bf16.mxu0 %v1714
        %4872 = vmatmul.mubr.bf16.gmra.mrb[0].mxu0 %v1713
        %v4873 = vpop.f32.mrb[0].mxu0
        %v4874 = vadd.f32 %v4681, %v4873
        %v4875 = vpop.f32.mrb[0].mxu0
        %v4876 = vadd.f32 %v4683, %v4875
        %v4877 = vpop.f32.mrb[0].mxu0
        %v4878 = vadd.f32 %v4685, %v4877
        %v4879 = vpop.f32.mrb[0].mxu0
        %v4880 = vadd.f32 %v4687, %v4879
        %4881 = vmatprep.mubr.bf16.mxu0 %v1732
        %4882 = vmatmul.mubr.bf16.gmra.mrb[0].mxu0 %v1731
        %v4883 = vpop.f32.mrb[0].mxu0
        %v4884 = vadd.f32 %v4691, %v4883
        %v4885 = vpop.f32.mrb[0].mxu0
        %v4886 = vadd.f32 %v4693, %v4885
        %v4887 = vpop.f32.mrb[0].mxu0
        %v4888 = vadd.f32 %v4695, %v4887
        %v4889 = vpop.f32.mrb[0].mxu0
        %v4890 = vadd.f32 %v4697, %v4889
        %4891 = vmatprep.mubr.bf16.mxu0 %v1750
        %4892 = vmatmul.mubr.bf16.gmra.mrb[0].mxu0 %v1749
        %v4893 = vpop.f32.mrb[0].mxu0
        %v4894 = vadd.f32 %v4701, %v4893
        %v4895 = vpop.f32.mrb[0].mxu0
        %v4896 = vadd.f32 %v4703, %v4895
        %v4897 = vpop.f32.mrb[0].mxu0
        %v4898 = vadd.f32 %v4705, %v4897
        %v4899 = vpop.f32.mrb[0].mxu0
        %v4900 = vadd.f32 %v4707, %v4899
        %4901 = vmatprep.mubr.bf16.mxu0 %v1768
        %4902 = vmatmul.mubr.bf16.gmra.mrb[0].mxu0 %v1767
        %v4903 = vpop.f32.mrb[0].mxu0
        %v4904 = vadd.f32 %v4711, %v4903
        %v4905 = vpop.f32.mrb[0].mxu0
        %v4906 = vadd.f32 %v4713, %v4905
        %v4907 = vpop.f32.mrb[0].mxu0
        %v4908 = vadd.f32 %v4715, %v4907
        %v4909 = vpop.f32.mrb[0].mxu0
        %v4910 = vadd.f32 %v4717, %v4909
        %4911 = vmatprep.mubr.bf16.mxu0 %v1786
        %4912 = vmatmul.mubr.bf16.gmra.mrb[0].mxu0 %v1785
        %v4913 = vpop.f32.mrb[0].mxu0
        %v4914 = vadd.f32 %v4721, %v4913
        %v4915 = vpop.f32.mrb[0].mxu0
        %v4916 = vadd.f32 %v4723, %v4915
        %v4917 = vpop.f32.mrb[0].mxu0
        %v4918 = vadd.f32 %v4725, %v4917
        %v4919 = vpop.f32.mrb[0].mxu0
        %v4920 = vadd.f32 %v4727, %v4919
        %4921 = vmatprep.mubr.bf16.mxu0 %v1804
        %4922 = vmatmul.mubr.bf16.gmra.mrb[0].mxu0 %v1803
        %v4923 = vpop.f32.mrb[0].mxu0
        %v4924 = vadd.f32 %v4731, %v4923
        %v4925 = vpop.f32.mrb[0].mxu0
        %v4926 = vadd.f32 %v4733, %v4925
        %v4927 = vpop.f32.mrb[0].mxu0
        %v4928 = vadd.f32 %v4735, %v4927
        %v4929 = vpop.f32.mrb[0].mxu0
        %v4930 = vadd.f32 %v4737, %v4929
        %4931 = vmatprep.mubr.bf16.mxu0 %v1822
        %4932 = vmatmul.mubr.bf16.gmra.mrb[0].mxu0 %v1821
        %v4933 = vpop.f32.mrb[0].mxu0
        %v4934 = vadd.f32 %v4741, %v4933
        %v4935 = vpop.f32.mrb[0].mxu0
        %v4936 = vadd.f32 %v4743, %v4935
        %v4937 = vpop.f32.mrb[0].mxu0
        %v4938 = vadd.f32 %v4745, %v4937
        %v4939 = vpop.f32.mrb[0].mxu0
        %v4940 = vadd.f32 %v4747, %v4939
        %4941 = vmatprep.mubr.bf16.mxu0 %v1840
        %4942 = vmatmul.mubr.bf16.gmra.mrb[0].mxu0 %v1839
        %v4943 = vpop.f32.mrb[0].mxu0
        %v4944 = vadd.f32 %v4751, %v4943
        %v4945 = vpop.f32.mrb[0].mxu0
        %v4946 = vadd.f32 %v4753, %v4945
        %v4947 = vpop.f32.mrb[0].mxu0
        %v4948 = vadd.f32 %v4755, %v4947
        %v4949 = vpop.f32.mrb[0].mxu0
        %v4950 = vadd.f32 %v4757, %v4949
        %4951 = vmatprep.mubr.bf16.mxu0 %v1858
        %4952 = vmatmul.mubr.bf16.gmra.mrb[0].mxu0 %v1857
        %v4953 = vpop.f32.mrb[0].mxu0
        %v4954 = vadd.f32 %v4761, %v4953
        %v4955 = vpop.f32.mrb[0].mxu0
        %v4956 = vadd.f32 %v4763, %v4955
        %v4957 = vpop.f32.mrb[0].mxu0
        %v4958 = vadd.f32 %v4765, %v4957
        %v4959 = vpop.f32.mrb[0].mxu0
        %v4960 = vadd.f32 %v4767, %v4959
        %4961 = vmatprep.mubr.bf16.mxu0 %v1876
        %4962 = vmatmul.mubr.bf16.gmra.mrb[0].mxu0 %v1875
        %v4963 = vpop.f32.mrb[0].mxu0
        %v4964 = vadd.f32 %v4771, %v4963
        %v4965 = vpop.f32.mrb[0].mxu0
        %v4966 = vadd.f32 %v4773, %v4965
        %v4967 = vpop.f32.mrb[0].mxu0
        %v4968 = vadd.f32 %v4775, %v4967
        %v4969 = vpop.f32.mrb[0].mxu0
        %v4970 = vadd.f32 %v4777, %v4969
        %4971 = vdwg.mxu0
        %4972 = vmatprep.subr.bf16.mxu0 %v3270
        %4973 = vmatpush1.bf16.msra.mxu0 %v3269
        %4974 = vmatprep.subr.bf16.mxu0 %v3272
        %4975 = vmatpush1.bf16.msra.mxu0 %v3271
        %4976 = vmatprep.subr.bf16.mxu0 %v3274
        %4977 = vmatpush1.bf16.msra.mxu0 %v3273
        %4978 = vmatprep.subr.bf16.mxu0 %v3276
        %4979 = vmatpush1.bf16.msra.mxu0 %v3275
        %4980 = vmatprep.subr.bf16.mxu0 %v3278
        %4981 = vmatpush1.bf16.msra.mxu0 %v3277
        %4982 = vmatprep.subr.bf16.mxu0 %v3280
        %4983 = vmatpush1.bf16.msra.mxu0 %v3279
        %4984 = vmatprep.subr.bf16.mxu0 %v3282
        %4985 = vmatpush1.bf16.msra.mxu0 %v3281
        %4986 = vmatprep.subr.bf16.mxu0 %v3284
        %4987 = vmatpush1.bf16.msra.mxu0 %v3283
        %4988 = vmatprep.subr.bf16.mxu0 %v3286
        %4989 = vmatpush1.bf16.msra.mxu0 %v3285
        %4990 = vmatprep.subr.bf16.mxu0 %v3288
        %4991 = vmatpush1.bf16.msra.mxu0 %v3287
        %4992 = vmatprep.subr.bf16.mxu0 %v3290
        %4993 = vmatpush1.bf16.msra.mxu0 %v3289
        %4994 = vmatprep.subr.bf16.mxu0 %v3292
        %4995 = vmatpush1.bf16.msra.mxu0 %v3291
        %4996 = vmatprep.subr.bf16.mxu0 %v3294
        %4997 = vmatpush1.bf16.msra.mxu0 %v3293
        %4998 = vmatprep.subr.bf16.mxu0 %v3296
        %4999 = vmatpush1.bf16.msra.mxu0 %v3295
        %5000 = vmatprep.subr.bf16.mxu0 %v3298
        %5001 = vmatpush1.bf16.msra.mxu0 %v3297
        %5002 = vmatprep.subr.bf16.mxu0 %v3300
        %5003 = vmatpush1.bf16.msra.mxu0 %v3299
        %5004 = vmatprep.mubr.bf16.mxu0 %v1608
        %5005 = vmatmul.mubr.bf16.gmra.mrb[0].mxu0 %v1607
        %v5006 = vpop.f32.mrb[0].mxu0
        %v5007 = vadd.f32 %v4814, %v5006
        %v5008 = vpop.f32.mrb[0].mxu0
        %v5009 = vadd.f32 %v4816, %v5008
        %v5010 = vpop.f32.mrb[0].mxu0
        %v5011 = vadd.f32 %v4818, %v5010
        %v5012 = vpop.f32.mrb[0].mxu0
        %v5013 = vadd.f32 %v4820, %v5012
        %5014 = vmatprep.mubr.bf16.mxu0 %v1626
        %5015 = vmatmul.mubr.bf16.gmra.mrb[0].mxu0 %v1625
        %v5016 = vpop.f32.mrb[0].mxu0
        %v5017 = vadd.f32 %v4824, %v5016
        %v5018 = vpop.f32.mrb[0].mxu0
        %v5019 = vadd.f32 %v4826, %v5018
        %v5020 = vpop.f32.mrb[0].mxu0
        %v5021 = vadd.f32 %v4828, %v5020
        %v5022 = vpop.f32.mrb[0].mxu0
        %v5023 = vadd.f32 %v4830, %v5022
        %5024 = vmatprep.mubr.bf16.mxu0 %v1644
        %5025 = vmatmul.mubr.bf16.gmra.mrb[0].mxu0 %v1643
        %v5026 = vpop.f32.mrb[0].mxu0
        %v5027 = vadd.f32 %v4834, %v5026
        %v5028 = vpop.f32.mrb[0].mxu0
        %v5029 = vadd.f32 %v4836, %v5028
        %v5030 = vpop.f32.mrb[0].mxu0
        %v5031 = vadd.f32 %v4838, %v5030
        %v5032 = vpop.f32.mrb[0].mxu0
        %v5033 = vadd.f32 %v4840, %v5032
        %5034 = vmatprep.mubr.bf16.mxu0 %v1662
        %5035 = vmatmul.mubr.bf16.gmra.mrb[0].mxu0 %v1661
        %v5036 = vpop.f32.mrb[0].mxu0
        %v5037 = vadd.f32 %v4844, %v5036
        %v5038 = vpop.f32.mrb[0].mxu0
        %v5039 = vadd.f32 %v4846, %v5038
        %v5040 = vpop.f32.mrb[0].mxu0
        %v5041 = vadd.f32 %v4848, %v5040
        %v5042 = vpop.f32.mrb[0].mxu0
        %v5043 = vadd.f32 %v4850, %v5042
        %5044 = vmatprep.mubr.bf16.mxu0 %v1680
        %5045 = vmatmul.mubr.bf16.gmra.mrb[0].mxu0 %v1679
        %v5046 = vpop.f32.mrb[0].mxu0
        %v5047 = vadd.f32 %v4854, %v5046
        %v5048 = vpop.f32.mrb[0].mxu0
        %v5049 = vadd.f32 %v4856, %v5048
        %v5050 = vpop.f32.mrb[0].mxu0
        %v5051 = vadd.f32 %v4858, %v5050
        %v5052 = vpop.f32.mrb[0].mxu0
        %v5053 = vadd.f32 %v4860, %v5052
        %5054 = vmatprep.mubr.bf16.mxu0 %v1698
        %5055 = vmatmul.mubr.bf16.gmra.mrb[0].mxu0 %v1697
        %v5056 = vpop.f32.mrb[0].mxu0
        %v5057 = vadd.f32 %v4864, %v5056
        %v5058 = vpop.f32.mrb[0].mxu0
        %v5059 = vadd.f32 %v4866, %v5058
        %v5060 = vpop.f32.mrb[0].mxu0
        %v5061 = vadd.f32 %v4868, %v5060
        %v5062 = vpop.f32.mrb[0].mxu0
        %v5063 = vadd.f32 %v4870, %v5062
        %5064 = vmatprep.mubr.bf16.mxu0 %v1716
        %5065 = vmatmul.mubr.bf16.gmra.mrb[0].mxu0 %v1715
        %v5066 = vpop.f32.mrb[0].mxu0
        %v5067 = vadd.f32 %v4874, %v5066
        %v5068 = vpop.f32.mrb[0].mxu0
        %v5069 = vadd.f32 %v4876, %v5068
        %v5070 = vpop.f32.mrb[0].mxu0
        %v5071 = vadd.f32 %v4878, %v5070
        %v5072 = vpop.f32.mrb[0].mxu0
        %v5073 = vadd.f32 %v4880, %v5072
        %5074 = vmatprep.mubr.bf16.mxu0 %v1734
        %5075 = vmatmul.mubr.bf16.gmra.mrb[0].mxu0 %v1733
        %v5076 = vpop.f32.mrb[0].mxu0
        %v5077 = vadd.f32 %v4884, %v5076
        %v5078 = vpop.f32.mrb[0].mxu0
        %v5079 = vadd.f32 %v4886, %v5078
        %v5080 = vpop.f32.mrb[0].mxu0
        %v5081 = vadd.f32 %v4888, %v5080
        %v5082 = vpop.f32.mrb[0].mxu0
        %v5083 = vadd.f32 %v4890, %v5082
        %5084 = vmatprep.mubr.bf16.mxu0 %v1752
        %5085 = vmatmul.mubr.bf16.gmra.mrb[0].mxu0 %v1751
        %v5086 = vpop.f32.mrb[0].mxu0
        %v5087 = vadd.f32 %v4894, %v5086
        %v5088 = vpop.f32.mrb[0].mxu0
        %v5089 = vadd.f32 %v4896, %v5088
        %v5090 = vpop.f32.mrb[0].mxu0
        %v5091 = vadd.f32 %v4898, %v5090
        %v5092 = vpop.f32.mrb[0].mxu0
        %v5093 = vadd.f32 %v4900, %v5092
        %5094 = vmatprep.mubr.bf16.mxu0 %v1770
        %5095 = vmatmul.mubr.bf16.gmra.mrb[0].mxu0 %v1769
        %v5096 = vpop.f32.mrb[0].mxu0
        %v5097 = vadd.f32 %v4904, %v5096
        %v5098 = vpop.f32.mrb[0].mxu0
        %v5099 = vadd.f32 %v4906, %v5098
        %v5100 = vpop.f32.mrb[0].mxu0
        %v5101 = vadd.f32 %v4908, %v5100
        %v5102 = vpop.f32.mrb[0].mxu0
        %v5103 = vadd.f32 %v4910, %v5102
        %5104 = vmatprep.mubr.bf16.mxu0 %v1788
        %5105 = vmatmul.mubr.bf16.gmra.mrb[0].mxu0 %v1787
        %v5106 = vpop.f32.mrb[0].mxu0
        %v5107 = vadd.f32 %v4914, %v5106
        %v5108 = vpop.f32.mrb[0].mxu0
        %v5109 = vadd.f32 %v4916, %v5108
        %v5110 = vpop.f32.mrb[0].mxu0
        %v5111 = vadd.f32 %v4918, %v5110
        %v5112 = vpop.f32.mrb[0].mxu0
        %v5113 = vadd.f32 %v4920, %v5112
        %5114 = vmatprep.mubr.bf16.mxu0 %v1806
        %5115 = vmatmul.mubr.bf16.gmra.mrb[0].mxu0 %v1805
        %v5116 = vpop.f32.mrb[0].mxu0
        %v5117 = vadd.f32 %v4924, %v5116
        %v5118 = vpop.f32.mrb[0].mxu0
        %v5119 = vadd.f32 %v4926, %v5118
        %v5120 = vpop.f32.mrb[0].mxu0
        %v5121 = vadd.f32 %v4928, %v5120
        %v5122 = vpop.f32.mrb[0].mxu0
        %v5123 = vadd.f32 %v4930, %v5122
        %5124 = vmatprep.mubr.bf16.mxu0 %v1824
        %5125 = vmatmul.mubr.bf16.gmra.mrb[0].mxu0 %v1823
        %v5126 = vpop.f32.mrb[0].mxu0
        %v5127 = vadd.f32 %v4934, %v5126
        %v5128 = vpop.f32.mrb[0].mxu0
        %v5129 = vadd.f32 %v4936, %v5128
        %v5130 = vpop.f32.mrb[0].mxu0
        %v5131 = vadd.f32 %v4938, %v5130
        %v5132 = vpop.f32.mrb[0].mxu0
        %v5133 = vadd.f32 %v4940, %v5132
        %5134 = vmatprep.mubr.bf16.mxu0 %v1842
        %5135 = vmatmul.mubr.bf16.gmra.mrb[0].mxu0 %v1841
        %v5136 = vpop.f32.mrb[0].mxu0
        %v5137 = vadd.f32 %v4944, %v5136
        %v5138 = vpop.f32.mrb[0].mxu0
        %v5139 = vadd.f32 %v4946, %v5138
        %v5140 = vpop.f32.mrb[0].mxu0
        %v5141 = vadd.f32 %v4948, %v5140
        %v5142 = vpop.f32.mrb[0].mxu0
        %v5143 = vadd.f32 %v4950, %v5142
        %5144 = vmatprep.mubr.bf16.mxu0 %v1860
        %5145 = vmatmul.mubr.bf16.gmra.mrb[0].mxu0 %v1859
        %v5146 = vpop.f32.mrb[0].mxu0
        %v5147 = vadd.f32 %v4954, %v5146
        %v5148 = vpop.f32.mrb[0].mxu0
        %v5149 = vadd.f32 %v4956, %v5148
        %v5150 = vpop.f32.mrb[0].mxu0
        %v5151 = vadd.f32 %v4958, %v5150
        %v5152 = vpop.f32.mrb[0].mxu0
        %v5153 = vadd.f32 %v4960, %v5152
        %5154 = vmatprep.mubr.bf16.mxu0 %v1878
        %5155 = vmatmul.mubr.bf16.gmra.mrb[0].mxu0 %v1877
        %v5156 = vpop.f32.mrb[0].mxu0
        %v5157 = vadd.f32 %v4964, %v5156
        %v5158 = vpop.f32.mrb[0].mxu0
        %v5159 = vadd.f32 %v4966, %v5158
        %v5160 = vpop.f32.mrb[0].mxu0
        %v5161 = vadd.f32 %v4968, %v5160
        %v5162 = vpop.f32.mrb[0].mxu0
        %v5163 = vadd.f32 %v4970, %v5162
        %5164 = vdwg.mxu0
        %5165 = vmatprep.subr.bf16.mxu0 %v3302
        %5166 = vmatpush1.bf16.msra.mxu0 %v3301
        %5167 = vmatprep.subr.bf16.mxu0 %v3304
        %5168 = vmatpush1.bf16.msra.mxu0 %v3303
        %5169 = vmatprep.subr.bf16.mxu0 %v3306
        %5170 = vmatpush1.bf16.msra.mxu0 %v3305
        %5171 = vmatprep.subr.bf16.mxu0 %v3308
        %5172 = vmatpush1.bf16.msra.mxu0 %v3307
        %5173 = vmatprep.subr.bf16.mxu0 %v3310
        %5174 = vmatpush1.bf16.msra.mxu0 %v3309
        %5175 = vmatprep.subr.bf16.mxu0 %v3312
        %5176 = vmatpush1.bf16.msra.mxu0 %v3311
        %5177 = vmatprep.subr.bf16.mxu0 %v3314
        %5178 = vmatpush1.bf16.msra.mxu0 %v3313
        %5179 = vmatprep.subr.bf16.mxu0 %v3316
        %5180 = vmatpush1.bf16.msra.mxu0 %v3315
        %5181 = vmatprep.subr.bf16.mxu0 %v3318
        %5182 = vmatpush1.bf16.msra.mxu0 %v3317
        %5183 = vmatprep.subr.bf16.mxu0 %v3320
        %5184 = vmatpush1.bf16.msra.mxu0 %v3319
        %5185 = vmatprep.subr.bf16.mxu0 %v3322
        %5186 = vmatpush1.bf16.msra.mxu0 %v3321
        %5187 = vmatprep.subr.bf16.mxu0 %v3324
        %5188 = vmatpush1.bf16.msra.mxu0 %v3323
        %5189 = vmatprep.subr.bf16.mxu0 %v3326
        %5190 = vmatpush1.bf16.msra.mxu0 %v3325
        %5191 = vmatprep.subr.bf16.mxu0 %v3328
        %5192 = vmatpush1.bf16.msra.mxu0 %v3327
        %5193 = vmatprep.subr.bf16.mxu0 %v3330
        %5194 = vmatpush1.bf16.msra.mxu0 %v3329
        %5195 = vmatprep.subr.bf16.mxu0 %v3332
        %5196 = vmatpush1.bf16.msra.mxu0 %v3331
        %5197 = vmatprep.mubr.bf16.mxu0 %v1610
        %5198 = vmatmul.mubr.bf16.gmra.mrb[0].mxu0 %v1609
        %v5199 = vpop.f32.mrb[0].mxu0
        %v5200 = vadd.f32 %v5007, %v5199
        %v5201 = vpop.f32.mrb[0].mxu0
        %v5202 = vadd.f32 %v5009, %v5201
        %v5203 = vpop.f32.mrb[0].mxu0
        %v5204 = vadd.f32 %v5011, %v5203
        %v5205 = vpop.f32.mrb[0].mxu0
        %v5206 = vadd.f32 %v5013, %v5205
        %5207 = vmatprep.mubr.bf16.mxu0 %v1628
        %5208 = vmatmul.mubr.bf16.gmra.mrb[0].mxu0 %v1627
        %v5209 = vpop.f32.mrb[0].mxu0
        %v5210 = vadd.f32 %v5017, %v5209
        %v5211 = vpop.f32.mrb[0].mxu0
        %v5212 = vadd.f32 %v5019, %v5211
        %v5213 = vpop.f32.mrb[0].mxu0
        %v5214 = vadd.f32 %v5021, %v5213
        %v5215 = vpop.f32.mrb[0].mxu0
        %v5216 = vadd.f32 %v5023, %v5215
        %5217 = vmatprep.mubr.bf16.mxu0 %v1646
        %5218 = vmatmul.mubr.bf16.gmra.mrb[0].mxu0 %v1645
        %v5219 = vpop.f32.mrb[0].mxu0
        %v5220 = vadd.f32 %v5027, %v5219
        %v5221 = vpop.f32.mrb[0].mxu0
        %v5222 = vadd.f32 %v5029, %v5221
        %v5223 = vpop.f32.mrb[0].mxu0
        %v5224 = vadd.f32 %v5031, %v5223
        %v5225 = vpop.f32.mrb[0].mxu0
        %v5226 = vadd.f32 %v5033, %v5225
        %5227 = vmatprep.mubr.bf16.mxu0 %v1664
        %5228 = vmatmul.mubr.bf16.gmra.mrb[0].mxu0 %v1663
        %v5229 = vpop.f32.mrb[0].mxu0
        %v5230 = vadd.f32 %v5037, %v5229
        %v5231 = vpop.f32.mrb[0].mxu0
        %v5232 = vadd.f32 %v5039, %v5231
        %v5233 = vpop.f32.mrb[0].mxu0
        %v5234 = vadd.f32 %v5041, %v5233
        %v5235 = vpop.f32.mrb[0].mxu0
        %v5236 = vadd.f32 %v5043, %v5235
        %5237 = vmatprep.mubr.bf16.mxu0 %v1682
        %5238 = vmatmul.mubr.bf16.gmra.mrb[0].mxu0 %v1681
        %v5239 = vpop.f32.mrb[0].mxu0
        %v5240 = vadd.f32 %v5047, %v5239
        %v5241 = vpop.f32.mrb[0].mxu0
        %v5242 = vadd.f32 %v5049, %v5241
        %v5243 = vpop.f32.mrb[0].mxu0
        %v5244 = vadd.f32 %v5051, %v5243
        %v5245 = vpop.f32.mrb[0].mxu0
        %v5246 = vadd.f32 %v5053, %v5245
        %5247 = vmatprep.mubr.bf16.mxu0 %v1700
        %5248 = vmatmul.mubr.bf16.gmra.mrb[0].mxu0 %v1699
        %v5249 = vpop.f32.mrb[0].mxu0
        %v5250 = vadd.f32 %v5057, %v5249
        %v5251 = vpop.f32.mrb[0].mxu0
        %v5252 = vadd.f32 %v5059, %v5251
        %v5253 = vpop.f32.mrb[0].mxu0
        %v5254 = vadd.f32 %v5061, %v5253
        %v5255 = vpop.f32.mrb[0].mxu0
        %v5256 = vadd.f32 %v5063, %v5255
        %5257 = vmatprep.mubr.bf16.mxu0 %v1718
        %5258 = vmatmul.mubr.bf16.gmra.mrb[0].mxu0 %v1717
        %v5259 = vpop.f32.mrb[0].mxu0
        %v5260 = vadd.f32 %v5067, %v5259
        %v5261 = vpop.f32.mrb[0].mxu0
        %v5262 = vadd.f32 %v5069, %v5261
        %v5263 = vpop.f32.mrb[0].mxu0
        %v5264 = vadd.f32 %v5071, %v5263
        %v5265 = vpop.f32.mrb[0].mxu0
        %v5266 = vadd.f32 %v5073, %v5265
        %5267 = vmatprep.mubr.bf16.mxu0 %v1736
        %5268 = vmatmul.mubr.bf16.gmra.mrb[0].mxu0 %v1735
        %v5269 = vpop.f32.mrb[0].mxu0
        %v5270 = vadd.f32 %v5077, %v5269
        %v5271 = vpop.f32.mrb[0].mxu0
        %v5272 = vadd.f32 %v5079, %v5271
        %v5273 = vpop.f32.mrb[0].mxu0
        %v5274 = vadd.f32 %v5081, %v5273
        %v5275 = vpop.f32.mrb[0].mxu0
        %v5276 = vadd.f32 %v5083, %v5275
        %5277 = vmatprep.mubr.bf16.mxu0 %v1754
        %5278 = vmatmul.mubr.bf16.gmra.mrb[0].mxu0 %v1753
        %v5279 = vpop.f32.mrb[0].mxu0
        %v5280 = vadd.f32 %v5087, %v5279
        %v5281 = vpop.f32.mrb[0].mxu0
        %v5282 = vadd.f32 %v5089, %v5281
        %v5283 = vpop.f32.mrb[0].mxu0
        %v5284 = vadd.f32 %v5091, %v5283
        %v5285 = vpop.f32.mrb[0].mxu0
        %v5286 = vadd.f32 %v5093, %v5285
        %5287 = vmatprep.mubr.bf16.mxu0 %v1772
        %5288 = vmatmul.mubr.bf16.gmra.mrb[0].mxu0 %v1771
        %v5289 = vpop.f32.mrb[0].mxu0
        %v5290 = vadd.f32 %v5097, %v5289
        %v5291 = vpop.f32.mrb[0].mxu0
        %v5292 = vadd.f32 %v5099, %v5291
        %v5293 = vpop.f32.mrb[0].mxu0
        %v5294 = vadd.f32 %v5101, %v5293
        %v5295 = vpop.f32.mrb[0].mxu0
        %v5296 = vadd.f32 %v5103, %v5295
        %5297 = vmatprep.mubr.bf16.mxu0 %v1790
        %5298 = vmatmul.mubr.bf16.gmra.mrb[0].mxu0 %v1789
        %v5299 = vpop.f32.mrb[0].mxu0
        %v5300 = vadd.f32 %v5107, %v5299
        %v5301 = vpop.f32.mrb[0].mxu0
        %v5302 = vadd.f32 %v5109, %v5301
        %v5303 = vpop.f32.mrb[0].mxu0
        %v5304 = vadd.f32 %v5111, %v5303
        %v5305 = vpop.f32.mrb[0].mxu0
        %v5306 = vadd.f32 %v5113, %v5305
        %5307 = vmatprep.mubr.bf16.mxu0 %v1808
        %5308 = vmatmul.mubr.bf16.gmra.mrb[0].mxu0 %v1807
        %v5309 = vpop.f32.mrb[0].mxu0
        %v5310 = vadd.f32 %v5117, %v5309
        %v5311 = vpop.f32.mrb[0].mxu0
        %v5312 = vadd.f32 %v5119, %v5311
        %v5313 = vpop.f32.mrb[0].mxu0
        %v5314 = vadd.f32 %v5121, %v5313
        %v5315 = vpop.f32.mrb[0].mxu0
        %v5316 = vadd.f32 %v5123, %v5315
        %5317 = vmatprep.mubr.bf16.mxu0 %v1826
        %5318 = vmatmul.mubr.bf16.gmra.mrb[0].mxu0 %v1825
        %v5319 = vpop.f32.mrb[0].mxu0
        %v5320 = vadd.f32 %v5127, %v5319
        %v5321 = vpop.f32.mrb[0].mxu0
        %v5322 = vadd.f32 %v5129, %v5321
        %v5323 = vpop.f32.mrb[0].mxu0
        %v5324 = vadd.f32 %v5131, %v5323
        %v5325 = vpop.f32.mrb[0].mxu0
        %v5326 = vadd.f32 %v5133, %v5325
        %5327 = vmatprep.mubr.bf16.mxu0 %v1844
        %5328 = vmatmul.mubr.bf16.gmra.mrb[0].mxu0 %v1843
        %v5329 = vpop.f32.mrb[0].mxu0
        %v5330 = vadd.f32 %v5137, %v5329
        %v5331 = vpop.f32.mrb[0].mxu0
        %v5332 = vadd.f32 %v5139, %v5331
        %v5333 = vpop.f32.mrb[0].mxu0
        %v5334 = vadd.f32 %v5141, %v5333
        %v5335 = vpop.f32.mrb[0].mxu0
        %v5336 = vadd.f32 %v5143, %v5335
        %5337 = vmatprep.mubr.bf16.mxu0 %v1862
        %5338 = vmatmul.mubr.bf16.gmra.mrb[0].mxu0 %v1861
        %v5339 = vpop.f32.mrb[0].mxu0
        %v5340 = vadd.f32 %v5147, %v5339
        %v5341 = vpop.f32.mrb[0].mxu0
        %v5342 = vadd.f32 %v5149, %v5341
        %v5343 = vpop.f32.mrb[0].mxu0
        %v5344 = vadd.f32 %v5151, %v5343
        %v5345 = vpop.f32.mrb[0].mxu0
        %v5346 = vadd.f32 %v5153, %v5345
        %5347 = vmatprep.mubr.bf16.mxu0 %v1880
        %5348 = vmatmul.mubr.bf16.gmra.mrb[0].mxu0 %v1879
        %v5349 = vpop.f32.mrb[0].mxu0
        %v5350 = vadd.f32 %v5157, %v5349
        %v5351 = vpop.f32.mrb[0].mxu0
        %v5352 = vadd.f32 %v5159, %v5351
        %v5353 = vpop.f32.mrb[0].mxu0
        %v5354 = vadd.f32 %v5161, %v5353
        %v5355 = vpop.f32.mrb[0].mxu0
        %v5356 = vadd.f32 %v5163, %v5355
        %5357 = vdwg.mxu0
        %v5358 = vsub.f32 0.0, %v5200
        %v5359 = vsub.f32 0.0, %v5204
        %v5360 = vsub.f32 0.0, %v5210
        %v5361 = vsub.f32 0.0, %v5214
        %v5362 = vsub.f32 0.0, %v5220
        %v5363 = vsub.f32 0.0, %v5224
        %v5364 = vsub.f32 0.0, %v5230
        %v5365 = vsub.f32 0.0, %v5234
        %v5366 = vsub.f32 0.0, %v5240
        %v5367 = vsub.f32 0.0, %v5244
        %v5368 = vsub.f32 0.0, %v5250
        %v5369 = vsub.f32 0.0, %v5254
        %v5370 = vsub.f32 0.0, %v5260
        %v5371 = vsub.f32 0.0, %v5264
        %v5372 = vsub.f32 0.0, %v5270
        %v5373 = vsub.f32 0.0, %v5274
        %v5374 = vsub.f32 0.0, %v5280
        %v5375 = vsub.f32 0.0, %v5284
        %v5376 = vsub.f32 0.0, %v5290
        %v5377 = vsub.f32 0.0, %v5294
        %v5378 = vsub.f32 0.0, %v5300
        %v5379 = vsub.f32 0.0, %v5304
        %v5380 = vsub.f32 0.0, %v5310
        %v5381 = vsub.f32 0.0, %v5314
        %v5382 = vsub.f32 0.0, %v5320
        %v5383 = vsub.f32 0.0, %v5324
        %v5384 = vsub.f32 0.0, %v5330
        %v5385 = vsub.f32 0.0, %v5334
        %v5386 = vsub.f32 0.0, %v5340
        %v5387 = vsub.f32 0.0, %v5344
        %v5388 = vsub.f32 0.0, %v5350
        %v5389 = vsub.f32 0.0, %v5354
        %v5390 = vmul.f32 %v5358, 1.442695
        %v5391 = vpow.pop %v5390
        %v5392 = vmul.f32 %v5359, 1.442695
        %v5393 = vpow.pop %v5392
        %v5394 = vmul.f32 %v5360, 1.442695
        %v5395 = vpow.pop %v5394
        %v5396 = vmul.f32 %v5361, 1.442695
        %v5397 = vpow.pop %v5396
        %v5398 = vmul.f32 %v5362, 1.442695
        %v5399 = vpow.pop %v5398
        %v5400 = vmul.f32 %v5363, 1.442695
        %v5401 = vpow.pop %v5400
        %v5402 = vmul.f32 %v5364, 1.442695
        %v5403 = vpow.pop %v5402
        %v5404 = vmul.f32 %v5365, 1.442695
        %v5405 = vpow.pop %v5404
        %v5406 = vmul.f32 %v5366, 1.442695
        %v5407 = vpow.pop %v5406
        %v5408 = vmul.f32 %v5367, 1.442695
        %v5409 = vpow.pop %v5408
        %v5410 = vmul.f32 %v5368, 1.442695
        %v5411 = vpow.pop %v5410
        %v5412 = vmul.f32 %v5369, 1.442695
        %v5413 = vpow.pop %v5412
        %v5414 = vmul.f32 %v5370, 1.442695
        %v5415 = vpow.pop %v5414
        %v5416 = vmul.f32 %v5371, 1.442695
        %v5417 = vpow.pop %v5416
        %v5418 = vmul.f32 %v5372, 1.442695
        %v5419 = vpow.pop %v5418
        %v5420 = vmul.f32 %v5373, 1.442695
        %v5421 = vpow.pop %v5420
        %v5422 = vmul.f32 %v5374, 1.442695
        %v5423 = vpow.pop %v5422
        %v5424 = vmul.f32 %v5375, 1.442695
        %v5425 = vpow.pop %v5424
        %v5426 = vmul.f32 %v5376, 1.442695
        %v5427 = vpow.pop %v5426
        %v5428 = vmul.f32 %v5377, 1.442695
        %v5429 = vpow.pop %v5428
        %v5430 = vmul.f32 %v5378, 1.442695
        %v5431 = vpow.pop %v5430
        %v5432 = vmul.f32 %v5379, 1.442695
        %v5433 = vpow.pop %v5432
        %v5434 = vmul.f32 %v5380, 1.442695
        %v5435 = vpow.pop %v5434
        %v5436 = vmul.f32 %v5381, 1.442695
        %v5437 = vpow.pop %v5436
        %v5438 = vmul.f32 %v5382, 1.442695
        %v5439 = vpow.pop %v5438
        %v5440 = vmul.f32 %v5383, 1.442695
        %v5441 = vpow.pop %v5440
        %v5442 = vmul.f32 %v5384, 1.442695
        %v5443 = vpow.pop %v5442
        %v5444 = vmul.f32 %v5385, 1.442695
        %v5445 = vpow.pop %v5444
        %v5446 = vmul.f32 %v5386, 1.442695
        %v5447 = vpow.pop %v5446
        %v5448 = vmul.f32 %v5387, 1.442695
        %v5449 = vpow.pop %v5448
        %v5450 = vmul.f32 %v5388, 1.442695
        %v5451 = vpow.pop %v5450
        %v5452 = vmul.f32 %v5389, 1.442695
        %v5453 = vpow.pop %v5452
        %v5454 = vadd.f32 %v5391, 1.0
        %v5455 = vadd.f32 %v5393, 1.0
        %v5456 = vadd.f32 %v5395, 1.0
        %v5457 = vadd.f32 %v5397, 1.0
        %v5458 = vadd.f32 %v5399, 1.0
        %v5459 = vadd.f32 %v5401, 1.0
        %v5460 = vadd.f32 %v5403, 1.0
        %v5461 = vadd.f32 %v5405, 1.0
        %v5462 = vadd.f32 %v5407, 1.0
        %v5463 = vadd.f32 %v5409, 1.0
        %v5464 = vadd.f32 %v5411, 1.0
        %v5465 = vadd.f32 %v5413, 1.0
        %v5466 = vadd.f32 %v5415, 1.0
        %v5467 = vadd.f32 %v5417, 1.0
        %v5468 = vadd.f32 %v5419, 1.0
        %v5469 = vadd.f32 %v5421, 1.0
        %v5470 = vadd.f32 %v5423, 1.0
        %v5471 = vadd.f32 %v5425, 1.0
        %v5472 = vadd.f32 %v5427, 1.0
        %v5473 = vadd.f32 %v5429, 1.0
        %v5474 = vadd.f32 %v5431, 1.0
        %v5475 = vadd.f32 %v5433, 1.0
        %v5476 = vadd.f32 %v5435, 1.0
        %v5477 = vadd.f32 %v5437, 1.0
        %v5478 = vadd.f32 %v5439, 1.0
        %v5479 = vadd.f32 %v5441, 1.0
        %v5480 = vadd.f32 %v5443, 1.0
        %v5481 = vadd.f32 %v5445, 1.0
        %v5482 = vadd.f32 %v5447, 1.0
        %v5483 = vadd.f32 %v5449, 1.0
        %v5484 = vadd.f32 %v5451, 1.0
        %v5485 = vadd.f32 %v5453, 1.0
        %v5486 = vrcp.pop %v5454
        %v5487 = vrcp.pop %v5455
        %v5488 = vrcp.pop %v5456
        %v5489 = vrcp.pop %v5457
        %v5490 = vrcp.pop %v5458
        %v5491 = vrcp.pop %v5459
        %v5492 = vrcp.pop %v5460
        %v5493 = vrcp.pop %v5461
        %v5494 = vrcp.pop %v5462
        %v5495 = vrcp.pop %v5463
        %v5496 = vrcp.pop %v5464
        %v5497 = vrcp.pop %v5465
        %v5498 = vrcp.pop %v5466
        %v5499 = vrcp.pop %v5467
        %v5500 = vrcp.pop %v5468
        %v5501 = vrcp.pop %v5469
        %v5502 = vrcp.pop %v5470
        %v5503 = vrcp.pop %v5471
        %v5504 = vrcp.pop %v5472
        %v5505 = vrcp.pop %v5473
        %v5506 = vrcp.pop %v5474
        %v5507 = vrcp.pop %v5475
        %v5508 = vrcp.pop %v5476
        %v5509 = vrcp.pop %v5477
        %v5510 = vrcp.pop %v5478
        %v5511 = vrcp.pop %v5479
        %v5512 = vrcp.pop %v5480
        %v5513 = vrcp.pop %v5481
        %v5514 = vrcp.pop %v5482
        %v5515 = vrcp.pop %v5483
        %v5516 = vrcp.pop %v5484
        %v5517 = vrcp.pop %v5485
        %v5518 = vsub.f32 0.0, %v5202
        %v5519 = vsub.f32 0.0, %v5206
        %v5520 = vsub.f32 0.0, %v5212
        %v5521 = vsub.f32 0.0, %v5216
        %v5522 = vsub.f32 0.0, %v5222
        %v5523 = vsub.f32 0.0, %v5226
        %v5524 = vsub.f32 0.0, %v5232
        %v5525 = vsub.f32 0.0, %v5236
        %v5526 = vsub.f32 0.0, %v5242
        %v5527 = vsub.f32 0.0, %v5246
        %v5528 = vsub.f32 0.0, %v5252
        %v5529 = vsub.f32 0.0, %v5256
        %v5530 = vsub.f32 0.0, %v5262
        %v5531 = vsub.f32 0.0, %v5266
        %v5532 = vsub.f32 0.0, %v5272
        %v5533 = vsub.f32 0.0, %v5276
        %v5534 = vsub.f32 0.0, %v5282
        %v5535 = vsub.f32 0.0, %v5286
        %v5536 = vsub.f32 0.0, %v5292
        %v5537 = vsub.f32 0.0, %v5296
        %v5538 = vsub.f32 0.0, %v5302
        %v5539 = vsub.f32 0.0, %v5306
        %v5540 = vsub.f32 0.0, %v5312
        %v5541 = vsub.f32 0.0, %v5316
        %v5542 = vsub.f32 0.0, %v5322
        %v5543 = vsub.f32 0.0, %v5326
        %v5544 = vsub.f32 0.0, %v5332
        %v5545 = vsub.f32 0.0, %v5336
        %v5546 = vsub.f32 0.0, %v5342
        %v5547 = vsub.f32 0.0, %v5346
        %v5548 = vsub.f32 0.0, %v5352
        %v5549 = vsub.f32 0.0, %v5356
        %v5550 = vmul.f32 %v5518, 1.442695
        %v5551 = vpow.pop %v5550
        %v5552 = vmul.f32 %v5519, 1.442695
        %v5553 = vpow.pop %v5552
        %v5554 = vmul.f32 %v5520, 1.442695
        %v5555 = vpow.pop %v5554
        %v5556 = vmul.f32 %v5521, 1.442695
        %v5557 = vpow.pop %v5556
        %v5558 = vmul.f32 %v5522, 1.442695
        %v5559 = vpow.pop %v5558
        %v5560 = vmul.f32 %v5523, 1.442695
        %v5561 = vpow.pop %v5560
        %v5562 = vmul.f32 %v5524, 1.442695
        %v5563 = vpow.pop %v5562
        %v5564 = vmul.f32 %v5525, 1.442695
        %v5565 = vpow.pop %v5564
        %v5566 = vmul.f32 %v5526, 1.442695
        %v5567 = vpow.pop %v5566
        %v5568 = vmul.f32 %v5527, 1.442695
        %v5569 = vpow.pop %v5568
        %v5570 = vmul.f32 %v5528, 1.442695
        %v5571 = vpow.pop %v5570
        %v5572 = vmul.f32 %v5529, 1.442695
        %v5573 = vpow.pop %v5572
        %v5574 = vmul.f32 %v5530, 1.442695
        %v5575 = vpow.pop %v5574
        %v5576 = vmul.f32 %v5531, 1.442695
        %v5577 = vpow.pop %v5576
        %v5578 = vmul.f32 %v5532, 1.442695
        %v5579 = vpow.pop %v5578
        %v5580 = vmul.f32 %v5533, 1.442695
        %v5581 = vpow.pop %v5580
        %v5582 = vmul.f32 %v5534, 1.442695
        %v5583 = vpow.pop %v5582
        %v5584 = vmul.f32 %v5535, 1.442695
        %v5585 = vpow.pop %v5584
        %v5586 = vmul.f32 %v5536, 1.442695
        %v5587 = vpow.pop %v5586
        %v5588 = vmul.f32 %v5537, 1.442695
        %v5589 = vpow.pop %v5588
        %v5590 = vmul.f32 %v5538, 1.442695
        %v5591 = vpow.pop %v5590
        %v5592 = vmul.f32 %v5539, 1.442695
        %v5593 = vpow.pop %v5592
        %v5594 = vmul.f32 %v5540, 1.442695
        %v5595 = vpow.pop %v5594
        %v5596 = vmul.f32 %v5541, 1.442695
        %v5597 = vpow.pop %v5596
        %v5598 = vmul.f32 %v5542, 1.442695
        %v5599 = vpow.pop %v5598
        %v5600 = vmul.f32 %v5543, 1.442695
        %v5601 = vpow.pop %v5600
        %v5602 = vmul.f32 %v5544, 1.442695
        %v5603 = vpow.pop %v5602
        %v5604 = vmul.f32 %v5545, 1.442695
        %v5605 = vpow.pop %v5604
        %v5606 = vmul.f32 %v5546, 1.442695
        %v5607 = vpow.pop %v5606
        %v5608 = vmul.f32 %v5547, 1.442695
        %v5609 = vpow.pop %v5608
        %v5610 = vmul.f32 %v5548, 1.442695
        %v5611 = vpow.pop %v5610
        %v5612 = vmul.f32 %v5549, 1.442695
        %v5613 = vpow.pop %v5612
        %v5614 = vadd.f32 %v5551, 1.0
        %v5615 = vadd.f32 %v5553, 1.0
        %v5616 = vadd.f32 %v5555, 1.0
        %v5617 = vadd.f32 %v5557, 1.0
        %v5618 = vadd.f32 %v5559, 1.0
        %v5619 = vadd.f32 %v5561, 1.0
        %v5620 = vadd.f32 %v5563, 1.0
        %v5621 = vadd.f32 %v5565, 1.0
        %v5622 = vadd.f32 %v5567, 1.0
        %v5623 = vadd.f32 %v5569, 1.0
        %v5624 = vadd.f32 %v5571, 1.0
        %v5625 = vadd.f32 %v5573, 1.0
        %v5626 = vadd.f32 %v5575, 1.0
        %v5627 = vadd.f32 %v5577, 1.0
        %v5628 = vadd.f32 %v5579, 1.0
        %v5629 = vadd.f32 %v5581, 1.0
        %v5630 = vadd.f32 %v5583, 1.0
        %v5631 = vadd.f32 %v5585, 1.0
        %v5632 = vadd.f32 %v5587, 1.0
        %v5633 = vadd.f32 %v5589, 1.0
        %v5634 = vadd.f32 %v5591, 1.0
        %v5635 = vadd.f32 %v5593, 1.0
        %v5636 = vadd.f32 %v5595, 1.0
        %v5637 = vadd.f32 %v5597, 1.0
        %v5638 = vadd.f32 %v5599, 1.0
        %v5639 = vadd.f32 %v5601, 1.0
        %v5640 = vadd.f32 %v5603, 1.0
        %v5641 = vadd.f32 %v5605, 1.0
        %v5642 = vadd.f32 %v5607, 1.0
        %v5643 = vadd.f32 %v5609, 1.0
        %v5644 = vadd.f32 %v5611, 1.0
        %v5645 = vadd.f32 %v5613, 1.0
        %v5646 = vrcp.pop %v5614
        %v5647 = vrcp.pop %v5615
        %v5648 = vrcp.pop %v5616
        %v5649 = vrcp.pop %v5617
        %v5650 = vrcp.pop %v5618
        %v5651 = vrcp.pop %v5619
        %v5652 = vrcp.pop %v5620
        %v5653 = vrcp.pop %v5621
        %v5654 = vrcp.pop %v5622
        %v5655 = vrcp.pop %v5623
        %v5656 = vrcp.pop %v5624
        %v5657 = vrcp.pop %v5625
        %v5658 = vrcp.pop %v5626
        %v5659 = vrcp.pop %v5627
        %v5660 = vrcp.pop %v5628
        %v5661 = vrcp.pop %v5629
        %v5662 = vrcp.pop %v5630
        %v5663 = vrcp.pop %v5631
        %v5664 = vrcp.pop %v5632
        %v5665 = vrcp.pop %v5633
        %v5666 = vrcp.pop %v5634
        %v5667 = vrcp.pop %v5635
        %v5668 = vrcp.pop %v5636
        %v5669 = vrcp.pop %v5637
        %v5670 = vrcp.pop %v5638
        %v5671 = vrcp.pop %v5639
        %v5672 = vrcp.pop %v5640
        %v5673 = vrcp.pop %v5641
        %v5674 = vrcp.pop %v5642
        %v5675 = vrcp.pop %v5643
        %v5676 = vrcp.pop %v5644
        %v5677 = vrcp.pop %v5645
        %v5678 = vmul.f32 %v5646, %v451
        %v5679 = vmul.f32 %v5647, %v452
        %v5680 = vmul.f32 %v5648, %v453
        %v5681 = vmul.f32 %v5649, %v454
        %v5682 = vmul.f32 %v5650, %v455
        %v5683 = vmul.f32 %v5651, %v456
        %v5684 = vmul.f32 %v5652, %v457
        %v5685 = vmul.f32 %v5653, %v458
        %v5686 = vmul.f32 %v5654, %v459
        %v5687 = vmul.f32 %v5655, %v460
        %v5688 = vmul.f32 %v5656, %v461
        %v5689 = vmul.f32 %v5657, %v462
        %v5690 = vmul.f32 %v5658, %v463
        %v5691 = vmul.f32 %v5659, %v464
        %v5692 = vmul.f32 %v5660, %v465
        %v5693 = vmul.f32 %v5661, %v466
        %v5694 = vmul.f32 %v5662, %v467
        %v5695 = vmul.f32 %v5663, %v468
        %v5696 = vmul.f32 %v5664, %v469
        %v5697 = vmul.f32 %v5665, %v470
        %v5698 = vmul.f32 %v5666, %v471
        %v5699 = vmul.f32 %v5667, %v472
        %v5700 = vmul.f32 %v5668, %v473
        %v5701 = vmul.f32 %v5669, %v474
        %v5702 = vmul.f32 %v5670, %v475
        %v5703 = vmul.f32 %v5671, %v476
        %v5704 = vmul.f32 %v5672, %v477
        %v5705 = vmul.f32 %v5673, %v478
        %v5706 = vmul.f32 %v5674, %v479
        %v5707 = vmul.f32 %v5675, %v480
        %v5708 = vmul.f32 %v5676, %v481
        %v5709 = vmul.f32 %v5677, %v482
        %5710 = vst [vmem:[%s483 + $0x1] sm:$0xff] %v5678
        %5711 = vst [vmem:[%s483 + $0x9] sm:$0xff] %v5679
        %5712 = vst [vmem:[%s483 + $0x19] sm:$0xff] %v5680
        %5713 = vst [vmem:[%s483 + $0x21] sm:$0xff] %v5681
        %5714 = vst [vmem:[%s483 + $0x31] sm:$0xff] %v5682
        %5715 = vst [vmem:[%s483 + $0x39] sm:$0xff] %v5683
        %5716 = vst [vmem:[%s483 + $0x49] sm:$0xff] %v5684
        %5717 = vst [vmem:[%s483 + $0x51] sm:$0xff] %v5685
        %5718 = vst [vmem:[%s483 + $0x61] sm:$0xff] %v5686
        %5719 = vst [vmem:[%s483 + $0x69] sm:$0xff] %v5687
        %5720 = vst [vmem:[%s483 + $0x79] sm:$0xff] %v5688
        %5721 = vst [vmem:[%s483 + $0x81] sm:$0xff] %v5689
        %5722 = vst [vmem:[%s483 + $0x91] sm:$0xff] %v5690
        %5723 = vst [vmem:[%s483 + $0x99] sm:$0xff] %v5691
        %5724 = vst [vmem:[%s483 + $0xa9] sm:$0xff] %v5692
        %5725 = vst [vmem:[%s483 + $0xb1] sm:$0xff] %v5693
        %5726 = vst [vmem:[%s483 + $0xc1] sm:$0xff] %v5694
        %5727 = vst [vmem:[%s483 + $0xc9] sm:$0xff] %v5695
        %5728 = vst [vmem:[%s483 + $0xd9] sm:$0xff] %v5696
        %5729 = vst [vmem:[%s483 + $0xe1] sm:$0xff] %v5697
        %5730 = vst [vmem:[%s483 + $0xf1] sm:$0xff] %v5698
        %5731 = vst [vmem:[%s483 + $0xf9] sm:$0xff] %v5699
        %5732 = vst [vmem:[%s483 + $0x109] sm:$0xff] %v5700
        %5733 = vst [vmem:[%s483 + $0x111] sm:$0xff] %v5701
        %5734 = vst [vmem:[%s483 + $0x121] sm:$0xff] %v5702
        %5735 = vst [vmem:[%s483 + $0x129] sm:$0xff] %v5703
        %5736 = vst [vmem:[%s483 + $0x139] sm:$0xff] %v5704
        %5737 = vst [vmem:[%s483 + $0x141] sm:$0xff] %v5705
        %5738 = vst [vmem:[%s483 + $0x151] sm:$0xff] %v5706
        %5739 = vst [vmem:[%s483 + $0x159] sm:$0xff] %v5707
        %5740 = vst [vmem:[%s483 + $0x169] sm:$0xff] %v5708
        %5741 = vst [vmem:[%s483 + $0x171] sm:$0xff] %v5709
        %v5742 = vld [vmem:[#allocation2] sm:$0xff]
        %v5743 = vld [vmem:[#allocation2 + $0x8] sm:$0xff]
        %v5744 = vld [vmem:[#allocation2 + $0x18] sm:$0xff]
        %v5745 = vld [vmem:[#allocation2 + $0x20] sm:$0xff]
        %v5746 = vld [vmem:[#allocation2 + $0x30] sm:$0xff]
        %v5747 = vld [vmem:[#allocation2 + $0x38] sm:$0xff]
        %v5748 = vld [vmem:[#allocation2 + $0x48] sm:$0xff]
        %v5749 = vld [vmem:[#allocation2 + $0x50] sm:$0xff]
        %v5750 = vld [vmem:[#allocation2 + $0x60] sm:$0xff]
        %v5751 = vld [vmem:[#allocation2 + $0x68] sm:$0xff]
        %v5752 = vld [vmem:[#allocation2 + $0x78] sm:$0xff]
        %v5753 = vld [vmem:[#allocation2 + $0x80] sm:$0xff]
        %v5754 = vld [vmem:[#allocation2 + $0x90] sm:$0xff]
        %v5755 = vld [vmem:[#allocation2 + $0x98] sm:$0xff]
        %v5756 = vld [vmem:[#allocation2 + $0xa8] sm:$0xff]
        %v5757 = vld [vmem:[#allocation2 + $0xb0] sm:$0xff]
        %v5758 = vld [vmem:[#allocation2 + $0xc0] sm:$0xff]
        %v5759 = vld [vmem:[#allocation2 + $0xc8] sm:$0xff]
        %v5760 = vld [vmem:[#allocation2 + $0xd8] sm:$0xff]
        %v5761 = vld [vmem:[#allocation2 + $0xe0] sm:$0xff]
        %v5762 = vld [vmem:[#allocation2 + $0xf0] sm:$0xff]
        %v5763 = vld [vmem:[#allocation2 + $0xf8] sm:$0xff]
        %v5764 = vld [vmem:[#allocation2 + $0x108] sm:$0xff]
        %v5765 = vld [vmem:[#allocation2 + $0x110] sm:$0xff]
        %v5766 = vld [vmem:[#allocation2 + $0x120] sm:$0xff]
        %v5767 = vld [vmem:[#allocation2 + $0x128] sm:$0xff]
        %v5768 = vld [vmem:[#allocation2 + $0x138] sm:$0xff]
        %v5769 = vld [vmem:[#allocation2 + $0x140] sm:$0xff]
        %v5770 = vld [vmem:[#allocation2 + $0x150] sm:$0xff]
        %v5771 = vld [vmem:[#allocation2 + $0x158] sm:$0xff]
        %v5772 = vld [vmem:[#allocation2 + $0x168] sm:$0xff]
        %v5773 = vld [vmem:[#allocation2 + $0x170] sm:$0xff]
        %v5774 = vld [vmem:[#allocation2 + $0x180] sm:$0xff]
        %v5775 = vld [vmem:[#allocation2 + $0x188] sm:$0xff]
        %v5776 = vld [vmem:[#allocation2 + $0x198] sm:$0xff]
        %v5777 = vld [vmem:[#allocation2 + $0x1a0] sm:$0xff]
        %v5778 = vpack.c.bf16 %v5743, %v5742
        %v5779 = vpack.c.bf16 %v5745, %v5744
        %v5780 = vpack.c.bf16 %v5747, %v5746
        %v5781 = vpack.c.bf16 %v5749, %v5748
        %v5782 = vpack.c.bf16 %v5751, %v5750
        %v5783 = vpack.c.bf16 %v5753, %v5752
        %v5784 = vpack.c.bf16 %v5755, %v5754
        %v5785 = vpack.c.bf16 %v5757, %v5756
        %v5786 = vpack.c.bf16 %v5759, %v5758
        %v5787 = vpack.c.bf16 %v5761, %v5760
        %v5788 = vpack.c.bf16 %v5763, %v5762
        %v5789 = vpack.c.bf16 %v5765, %v5764
        %v5790 = vpack.c.bf16 %v5767, %v5766
        %v5791 = vpack.c.bf16 %v5769, %v5768
        %v5792 = vpack.c.bf16 %v5771, %v5770
        %v5793 = vpack.c.bf16 %v5773, %v5772
        %v5794 = vpack.c.bf16 %v5775, %v5774
        %v5795 = vpack.c.bf16 %v5777, %v5776
        %5796 = vst [vmem:[#allocation4] sm:$0xff] %v5778
        %5797 = vst [vmem:[#allocation4 + $0x18] sm:$0xff] %v5779
        %5798 = vst [vmem:[#allocation4 + $0x30] sm:$0xff] %v5780
        %5799 = vst [vmem:[#allocation4 + $0x48] sm:$0xff] %v5781
        %5800 = vst [vmem:[#allocation4 + $0x60] sm:$0xff] %v5782
        %5801 = vst [vmem:[#allocation4 + $0x78] sm:$0xff] %v5783
        %5802 = vst [vmem:[#allocation4 + $0x90] sm:$0xff] %v5784
        %5803 = vst [vmem:[#allocation4 + $0xa8] sm:$0xff] %v5785
        %5804 = vst [vmem:[#allocation4 + $0xc0] sm:$0xff] %v5786
        %5805 = vst [vmem:[#allocation4 + $0xd8] sm:$0xff] %v5787
        %5806 = vst [vmem:[#allocation4 + $0xf0] sm:$0xff] %v5788
        %5807 = vst [vmem:[#allocation4 + $0x108] sm:$0xff] %v5789
        %5808 = vst [vmem:[#allocation4 + $0x120] sm:$0xff] %v5790
        %5809 = vst [vmem:[#allocation4 + $0x138] sm:$0xff] %v5791
        %5810 = vst [vmem:[#allocation4 + $0x150] sm:$0xff] %v5792
        %5811 = vst [vmem:[#allocation4 + $0x168] sm:$0xff] %v5793
        %5812 = vst [vmem:[#allocation4 + $0x180] sm:$0xff] %v5794
        %5813 = vst [vmem:[#allocation4 + $0x198] sm:$0xff] %v5795
        %v5814 = vld [vmem:[#allocation2 + $0x1] sm:$0xff]
        %v5815 = vld [vmem:[#allocation2 + $0x9] sm:$0xff]
        %v5816 = vld [vmem:[#allocation2 + $0x19] sm:$0xff]
        %v5817 = vld [vmem:[#allocation2 + $0x21] sm:$0xff]
        %v5818 = vld [vmem:[#allocation2 + $0x31] sm:$0xff]
        %v5819 = vld [vmem:[#allocation2 + $0x39] sm:$0xff]
        %v5820 = vld [vmem:[#allocation2 + $0x49] sm:$0xff]
        %v5821 = vld [vmem:[#allocation2 + $0x51] sm:$0xff]
        %v5822 = vld [vmem:[#allocation2 + $0x61] sm:$0xff]
        %v5823 = vld [vmem:[#allocation2 + $0x69] sm:$0xff]
        %v5824 = vld [vmem:[#allocation2 + $0x79] sm:$0xff]
        %v5825 = vld [vmem:[#allocation2 + $0x81] sm:$0xff]
        %v5826 = vld [vmem:[#allocation2 + $0x91] sm:$0xff]
        %v5827 = vld [vmem:[#allocation2 + $0x99] sm:$0xff]
        %v5828 = vld [vmem:[#allocation2 + $0xa9] sm:$0xff]
        %v5829 = vld [vmem:[#allocation2 + $0xb1] sm:$0xff]
        %v5830 = vld [vmem:[#allocation2 + $0xc1] sm:$0xff]
        %v5831 = vld [vmem:[#allocation2 + $0xc9] sm:$0xff]
        %v5832 = vld [vmem:[#allocation2 + $0xd9] sm:$0xff]
        %v5833 = vld [vmem:[#allocation2 + $0xe1] sm:$0xff]
        %v5834 = vld [vmem:[#allocation2 + $0xf1] sm:$0xff]
        %v5835 = vld [vmem:[#allocation2 + $0xf9] sm:$0xff]
        %v5836 = vld [vmem:[#allocation2 + $0x109] sm:$0xff]
        %v5837 = vld [vmem:[#allocation2 + $0x111] sm:$0xff]
        %v5838 = vld [vmem:[#allocation2 + $0x121] sm:$0xff]
        %v5839 = vld [vmem:[#allocation2 + $0x129] sm:$0xff]
        %v5840 = vld [vmem:[#allocation2 + $0x139] sm:$0xff]
        %v5841 = vld [vmem:[#allocation2 + $0x141] sm:$0xff]
        %v5842 = vld [vmem:[#allocation2 + $0x151] sm:$0xff]
        %v5843 = vld [vmem:[#allocation2 + $0x159] sm:$0xff]
        %v5844 = vld [vmem:[#allocation2 + $0x169] sm:$0xff]
        %v5845 = vld [vmem:[#allocation2 + $0x171] sm:$0xff]
        %v5846 = vld [vmem:[#allocation2 + $0x181] sm:$0xff]
        %v5847 = vld [vmem:[#allocation2 + $0x189] sm:$0xff]
        %v5848 = vld [vmem:[#allocation2 + $0x199] sm:$0xff]
        %v5849 = vld [vmem:[#allocation2 + $0x1a1] sm:$0xff]
        %v5850 = vpack.c.bf16 %v5815, %v5814
        %v5851 = vpack.c.bf16 %v5817, %v5816
        %v5852 = vpack.c.bf16 %v5819, %v5818
        %v5853 = vpack.c.bf16 %v5821, %v5820
        %v5854 = vpack.c.bf16 %v5823, %v5822
        %v5855 = vpack.c.bf16 %v5825, %v5824
        %v5856 = vpack.c.bf16 %v5827, %v5826
        %v5857 = vpack.c.bf16 %v5829, %v5828
        %v5858 = vpack.c.bf16 %v5831, %v5830
        %v5859 = vpack.c.bf16 %v5833, %v5832
        %v5860 = vpack.c.bf16 %v5835, %v5834
        %v5861 = vpack.c.bf16 %v5837, %v5836
        %v5862 = vpack.c.bf16 %v5839, %v5838
        %v5863 = vpack.c.bf16 %v5841, %v5840
        %v5864 = vpack.c.bf16 %v5843, %v5842
        %v5865 = vpack.c.bf16 %v5845, %v5844
        %v5866 = vpack.c.bf16 %v5847, %v5846
        %v5867 = vpack.c.bf16 %v5849, %v5848
        %5868 = vst [vmem:[#allocation4 + $0x8] sm:$0xff] %v5850
        %5869 = vst [vmem:[#allocation4 + $0x20] sm:$0xff] %v5851
        %5870 = vst [vmem:[#allocation4 + $0x38] sm:$0xff] %v5852
        %5871 = vst [vmem:[#allocation4 + $0x50] sm:$0xff] %v5853
        %5872 = vst [vmem:[#allocation4 + $0x68] sm:$0xff] %v5854
        %5873 = vst [vmem:[#allocation4 + $0x80] sm:$0xff] %v5855
        %5874 = vst [vmem:[#allocation4 + $0x98] sm:$0xff] %v5856
        %5875 = vst [vmem:[#allocation4 + $0xb0] sm:$0xff] %v5857
        %5876 = vst [vmem:[#allocation4 + $0xc8] sm:$0xff] %v5858
        %5877 = vst [vmem:[#allocation4 + $0xe0] sm:$0xff] %v5859
        %5878 = vst [vmem:[#allocation4 + $0xf8] sm:$0xff] %v5860
        %5879 = vst [vmem:[#allocation4 + $0x110] sm:$0xff] %v5861
        %5880 = vst [vmem:[#allocation4 + $0x128] sm:$0xff] %v5862
        %5881 = vst [vmem:[#allocation4 + $0x140] sm:$0xff] %v5863
        %5882 = vst [vmem:[#allocation4 + $0x158] sm:$0xff] %v5864
        %5883 = vst [vmem:[#allocation4 + $0x170] sm:$0xff] %v5865
        %5884 = vst [vmem:[#allocation4 + $0x188] sm:$0xff] %v5866
        %5885 = vst [vmem:[#allocation4 + $0x1a0] sm:$0xff] %v5867
        %v5886 = vld [vmem:[#allocation2 + $0x2] sm:$0xff]
        %v5887 = vld [vmem:[#allocation2 + $0xa] sm:$0xff]
        %v5888 = vld [vmem:[#allocation2 + $0x1a] sm:$0xff]
        %v5889 = vld [vmem:[#allocation2 + $0x22] sm:$0xff]
        %v5890 = vld [vmem:[#allocation2 + $0x32] sm:$0xff]
        %v5891 = vld [vmem:[#allocation2 + $0x3a] sm:$0xff]
        %v5892 = vld [vmem:[#allocation2 + $0x4a] sm:$0xff]
        %v5893 = vld [vmem:[#allocation2 + $0x52] sm:$0xff]
        %v5894 = vld [vmem:[#allocation2 + $0x62] sm:$0xff]
        %v5895 = vld [vmem:[#allocation2 + $0x6a] sm:$0xff]
        %v5896 = vld [vmem:[#allocation2 + $0x7a] sm:$0xff]
        %v5897 = vld [vmem:[#allocation2 + $0x82] sm:$0xff]
        %v5898 = vld [vmem:[#allocation2 + $0x92] sm:$0xff]
        %v5899 = vld [vmem:[#allocation2 + $0x9a] sm:$0xff]
        %v5900 = vld [vmem:[#allocation2 + $0xaa] sm:$0xff]
        %v5901 = vld [vmem:[#allocation2 + $0xb2] sm:$0xff]
        %v5902 = vld [vmem:[#allocation2 + $0xc2] sm:$0xff]
        %v5903 = vld [vmem:[#allocation2 + $0xca] sm:$0xff]
        %v5904 = vld [vmem:[#allocation2 + $0xda] sm:$0xff]
        %v5905 = vld [vmem:[#allocation2 + $0xe2] sm:$0xff]
        %v5906 = vld [vmem:[#allocation2 + $0xf2] sm:$0xff]
        %v5907 = vld [vmem:[#allocation2 + $0xfa] sm:$0xff]
        %v5908 = vld [vmem:[#allocation2 + $0x10a] sm:$0xff]
        %v5909 = vld [vmem:[#allocation2 + $0x112] sm:$0xff]
        %v5910 = vld [vmem:[#allocation2 + $0x122] sm:$0xff]
        %v5911 = vld [vmem:[#allocation2 + $0x12a] sm:$0xff]
        %v5912 = vld [vmem:[#allocation2 + $0x13a] sm:$0xff]
        %v5913 = vld [vmem:[#allocation2 + $0x142] sm:$0xff]
        %v5914 = vld [vmem:[#allocation2 + $0x152] sm:$0xff]
        %v5915 = vld [vmem:[#allocation2 + $0x15a] sm:$0xff]
        %v5916 = vld [vmem:[#allocation2 + $0x16a] sm:$0xff]
        %v5917 = vld [vmem:[#allocation2 + $0x172] sm:$0xff]
        %v5918 = vld [vmem:[#allocation2 + $0x182] sm:$0xff]
        %v5919 = vld [vmem:[#allocation2 + $0x18a] sm:$0xff]
        %v5920 = vld [vmem:[#allocation2 + $0x19a] sm:$0xff]
        %v5921 = vld [vmem:[#allocation2 + $0x1a2] sm:$0xff]
        %v5922 = vpack.c.bf16 %v5887, %v5886
        %v5923 = vpack.c.bf16 %v5889, %v5888
        %v5924 = vpack.c.bf16 %v5891, %v5890
        %v5925 = vpack.c.bf16 %v5893, %v5892
        %v5926 = vpack.c.bf16 %v5895, %v5894
        %v5927 = vpack.c.bf16 %v5897, %v5896
        %v5928 = vpack.c.bf16 %v5899, %v5898
        %v5929 = vpack.c.bf16 %v5901, %v5900
        %v5930 = vpack.c.bf16 %v5903, %v5902
        %v5931 = vpack.c.bf16 %v5905, %v5904
        %v5932 = vpack.c.bf16 %v5907, %v5906
        %v5933 = vpack.c.bf16 %v5909, %v5908
        %v5934 = vpack.c.bf16 %v5911, %v5910
        %v5935 = vpack.c.bf16 %v5913, %v5912
        %v5936 = vpack.c.bf16 %v5915, %v5914
        %v5937 = vpack.c.bf16 %v5917, %v5916
        %v5938 = vpack.c.bf16 %v5919, %v5918
        %v5939 = vpack.c.bf16 %v5921, %v5920
        %5940 = vst [vmem:[#allocation4 + $0x10] sm:$0xff] %v5922
        %5941 = vst [vmem:[#allocation4 + $0x28] sm:$0xff] %v5923
        %5942 = vst [vmem:[#allocation4 + $0x40] sm:$0xff] %v5924
        %5943 = vst [vmem:[#allocation4 + $0x58] sm:$0xff] %v5925
        %5944 = vst [vmem:[#allocation4 + $0x70] sm:$0xff] %v5926
        %5945 = vst [vmem:[#allocation4 + $0x88] sm:$0xff] %v5927
        %5946 = vst [vmem:[#allocation4 + $0xa0] sm:$0xff] %v5928
        %5947 = vst [vmem:[#allocation4 + $0xb8] sm:$0xff] %v5929
        %5948 = vst [vmem:[#allocation4 + $0xd0] sm:$0xff] %v5930
        %5949 = vst [vmem:[#allocation4 + $0xe8] sm:$0xff] %v5931
        %5950 = vst [vmem:[#allocation4 + $0x100] sm:$0xff] %v5932
        %5951 = vst [vmem:[#allocation4 + $0x118] sm:$0xff] %v5933
        %5952 = vst [vmem:[#allocation4 + $0x130] sm:$0xff] %v5934
        %5953 = vst [vmem:[#allocation4 + $0x148] sm:$0xff] %v5935
        %5954 = vst [vmem:[#allocation4 + $0x160] sm:$0xff] %v5936
        %5955 = vst [vmem:[#allocation4 + $0x178] sm:$0xff] %v5937
        %5956 = vst [vmem:[#allocation4 + $0x190] sm:$0xff] %v5938
        %5957 = vst [vmem:[#allocation4 + $0x1a8] sm:$0xff] %v5939
        %v5958 = vld [vmem:[#allocation4] sm:$0xff]
        %v5959 = vld [vmem:[#allocation4 + $0x8] sm:$0xff]
        %v5960 = vld [vmem:[#allocation4 + $0x10] sm:$0xff]
        %v5961 = vld [vmem:[#allocation4 + $0x18] sm:$0xff]
        %v5962 = vld [vmem:[#allocation4 + $0x20] sm:$0xff]
        %v5963 = vld [vmem:[#allocation4 + $0x28] sm:$0xff]
        %v5964 = vld [vmem:[#allocation4 + $0x30] sm:$0xff]
        %v5965 = vld [vmem:[#allocation4 + $0x38] sm:$0xff]
        %v5966 = vld [vmem:[#allocation4 + $0x40] sm:$0xff]
        %v5967 = vld [vmem:[#allocation4 + $0x48] sm:$0xff]
        %v5968 = vld [vmem:[#allocation4 + $0x50] sm:$0xff]
        %v5969 = vld [vmem:[#allocation4 + $0x58] sm:$0xff]
        %v5970 = vld [vmem:[#allocation4 + $0x60] sm:$0xff]
        %v5971 = vld [vmem:[#allocation4 + $0x68] sm:$0xff]
        %v5972 = vld [vmem:[#allocation4 + $0x70] sm:$0xff]
        %v5973 = vld [vmem:[#allocation4 + $0x78] sm:$0xff]
        %v5974 = vld [vmem:[#allocation4 + $0x80] sm:$0xff]
        %v5975 = vld [vmem:[#allocation4 + $0x88] sm:$0xff]
        %v5976 = vld [vmem:[#allocation4 + $0x90] sm:$0xff]
        %v5977 = vld [vmem:[#allocation4 + $0x98] sm:$0xff]
        %v5978 = vld [vmem:[#allocation4 + $0xa0] sm:$0xff]
        %v5979 = vld [vmem:[#allocation4 + $0xa8] sm:$0xff]
        %v5980 = vld [vmem:[#allocation4 + $0xb0] sm:$0xff]
        %v5981 = vld [vmem:[#allocation4 + $0xb8] sm:$0xff]
        %v5982 = vld [vmem:[#allocation4 + $0xc0] sm:$0xff]
        %v5983 = vld [vmem:[#allocation4 + $0xc8] sm:$0xff]
        %v5984 = vld [vmem:[#allocation4 + $0xd0] sm:$0xff]
        %v5985 = vld [vmem:[#allocation4 + $0xd8] sm:$0xff]
        %v5986 = vld [vmem:[#allocation4 + $0xe0] sm:$0xff]
        %v5987 = vld [vmem:[#allocation4 + $0xe8] sm:$0xff]
        %v5988 = vld [vmem:[#allocation4 + $0xf0] sm:$0xff]
        %v5989 = vld [vmem:[#allocation4 + $0xf8] sm:$0xff]
        %v5990 = vld [vmem:[#allocation4 + $0x100] sm:$0xff]
        %v5991 = vld [vmem:[#allocation4 + $0x108] sm:$0xff]
        %v5992 = vld [vmem:[#allocation4 + $0x110] sm:$0xff]
        %v5993 = vld [vmem:[#allocation4 + $0x118] sm:$0xff]
        %v5994 = vld [vmem:[#allocation4 + $0x120] sm:$0xff]
        %v5995 = vld [vmem:[#allocation4 + $0x128] sm:$0xff]
        %v5996 = vld [vmem:[#allocation4 + $0x130] sm:$0xff]
        %v5997 = vld [vmem:[#allocation4 + $0x138] sm:$0xff]
        %v5998 = vld [vmem:[#allocation4 + $0x140] sm:$0xff]
        %v5999 = vld [vmem:[#allocation4 + $0x148] sm:$0xff]
        %v6000 = vld [vmem:[#allocation4 + $0x150] sm:$0xff]
        %v6001 = vld [vmem:[#allocation4 + $0x158] sm:$0xff]
        %v6002 = vld [vmem:[#allocation4 + $0x160] sm:$0xff]
        %v6003 = vld [vmem:[#allocation4 + $0x168] sm:$0xff]
        %v6004 = vld [vmem:[#allocation4 + $0x170] sm:$0xff]
        %v6005 = vld [vmem:[#allocation4 + $0x178] sm:$0xff]
        %6006 = vst [vmem:[#allocation6] sm:$0xff] %v5958
        %6007 = vst [vmem:[#allocation6 + $0x8] sm:$0xff] %v5959
        %6008 = vst [vmem:[#allocation6 + $0x10] sm:$0xff] %v5960
        %6009 = vst [vmem:[#allocation6 + $0x90] sm:$0xff] %v5961
        %6010 = vst [vmem:[#allocation6 + $0x98] sm:$0xff] %v5962
        %6011 = vst [vmem:[#allocation6 + $0xa0] sm:$0xff] %v5963
        %6012 = vst [vmem:[#allocation6 + $0x120] sm:$0xff] %v5964
        %6013 = vst [vmem:[#allocation6 + $0x128] sm:$0xff] %v5965
        %6014 = vst [vmem:[#allocation6 + $0x130] sm:$0xff] %v5966
        %6015 = vst [vmem:[#allocation6 + $0x1b0] sm:$0xff] %v5967
        %6016 = vst [vmem:[#allocation6 + $0x1b8] sm:$0xff] %v5968
        %6017 = vst [vmem:[#allocation6 + $0x1c0] sm:$0xff] %v5969
        %6018 = vst [vmem:[#allocation6 + $0x240] sm:$0xff] %v5970
        %6019 = vst [vmem:[#allocation6 + $0x248] sm:$0xff] %v5971
        %6020 = vst [vmem:[#allocation6 + $0x250] sm:$0xff] %v5972
        %6021 = vst [vmem:[#allocation6 + $0x2d0] sm:$0xff] %v5973
        %6022 = vst [vmem:[#allocation6 + $0x2d8] sm:$0xff] %v5974
        %6023 = vst [vmem:[#allocation6 + $0x2e0] sm:$0xff] %v5975
        %6024 = vst [vmem:[#allocation6 + $0x360] sm:$0xff] %v5976
        %6025 = vst [vmem:[#allocation6 + $0x368] sm:$0xff] %v5977
        %6026 = vst [vmem:[#allocation6 + $0x370] sm:$0xff] %v5978
        %6027 = vst [vmem:[#allocation6 + $0x3f0] sm:$0xff] %v5979
        %6028 = vst [vmem:[#allocation6 + $0x3f8] sm:$0xff] %v5980
        %6029 = vst [vmem:[#allocation6 + $0x400] sm:$0xff] %v5981
        %6030 = vst [vmem:[#allocation6 + $0x480] sm:$0xff] %v5982
        %6031 = vst [vmem:[#allocation6 + $0x488] sm:$0xff] %v5983
        %6032 = vst [vmem:[#allocation6 + $0x490] sm:$0xff] %v5984
        %6033 = vst [vmem:[#allocation6 + $0x510] sm:$0xff] %v5985
        %6034 = vst [vmem:[#allocation6 + $0x518] sm:$0xff] %v5986
        %6035 = vst [vmem:[#allocation6 + $0x520] sm:$0xff] %v5987
        %6036 = vst [vmem:[#allocation6 + $0x5a0] sm:$0xff] %v5988
        %6037 = vst [vmem:[#allocation6 + $0x5a8] sm:$0xff] %v5989
        %6038 = vst [vmem:[#allocation6 + $0x5b0] sm:$0xff] %v5990
        %6039 = vst [vmem:[#allocation6 + $0x630] sm:$0xff] %v5991
        %6040 = vst [vmem:[#allocation6 + $0x638] sm:$0xff] %v5992
        %6041 = vst [vmem:[#allocation6 + $0x640] sm:$0xff] %v5993
        %6042 = vst [vmem:[#allocation6 + $0x6c0] sm:$0xff] %v5994
        %6043 = vst [vmem:[#allocation6 + $0x6c8] sm:$0xff] %v5995
        %6044 = vst [vmem:[#allocation6 + $0x6d0] sm:$0xff] %v5996
        %6045 = vst [vmem:[#allocation6 + $0x750] sm:$0xff] %v5997
        %6046 = vst [vmem:[#allocation6 + $0x758] sm:$0xff] %v5998
        %6047 = vst [vmem:[#allocation6 + $0x760] sm:$0xff] %v5999
        %6048 = vst [vmem:[#allocation6 + $0x7e0] sm:$0xff] %v6000
        %6049 = vst [vmem:[#allocation6 + $0x7e8] sm:$0xff] %v6001
        %6050 = vst [vmem:[#allocation6 + $0x7f0] sm:$0xff] %v6002
        %6051 = vst [vmem:[#allocation6 + $0x870] sm:$0xff] %v6003
        %6052 = vst [vmem:[#allocation6 + $0x878] sm:$0xff] %v6004
        %6053 = vst [vmem:[#allocation6 + $0x880] sm:$0xff] %v6005
        %v6054 = vld [vmem:[%s1109] sm:$0xff]
        %v6055 = vld [vmem:[%s1109 + $0x8] sm:$0xff]
        %v6056 = vld [vmem:[%s1109 + $0x10] sm:$0xff]
        %v6057 = vld [vmem:[%s1109 + $0x18] sm:$0xff]
        %v6058 = vld [vmem:[%s1109 + $0x20] sm:$0xff]
        %v6059 = vld [vmem:[%s1109 + $0x28] sm:$0xff]
        %v6060 = vld [vmem:[%s1109 + $0x30] sm:$0xff]
        %v6061 = vld [vmem:[%s1109 + $0x38] sm:$0xff]
        %v6062 = vld [vmem:[%s1109 + $0x40] sm:$0xff]
        %v6063 = vld [vmem:[%s1109 + $0x48] sm:$0xff]
        %v6064 = vld [vmem:[%s1109 + $0x50] sm:$0xff]
        %v6065 = vld [vmem:[%s1109 + $0x58] sm:$0xff]
        %v6066 = vld [vmem:[%s1109 + $0x60] sm:$0xff]
        %v6067 = vld [vmem:[%s1109 + $0x68] sm:$0xff]
        %v6068 = vld [vmem:[%s1109 + $0x70] sm:$0xff]
        %v6069 = vld [vmem:[%s1109 + $0x78] sm:$0xff]
        %v6070 = vld [vmem:[%s1109 + $0x80] sm:$0xff]
        %v6071 = vld [vmem:[%s1109 + $0x88] sm:$0xff]
        %v6072 = vld [vmem:[%s1109 + $0x90] sm:$0xff]
        %v6073 = vld [vmem:[%s1109 + $0x98] sm:$0xff]
        %v6074 = vld [vmem:[%s1109 + $0xa0] sm:$0xff]
        %v6075 = vld [vmem:[%s1109 + $0xa8] sm:$0xff]
        %v6076 = vld [vmem:[%s1109 + $0xb0] sm:$0xff]
        %v6077 = vld [vmem:[%s1109 + $0xb8] sm:$0xff]
        %v6078 = vld [vmem:[%s1109 + $0xc0] sm:$0xff]
        %v6079 = vld [vmem:[%s1109 + $0xc8] sm:$0xff]
        %v6080 = vld [vmem:[%s1109 + $0xd0] sm:$0xff]
        %v6081 = vld [vmem:[%s1109 + $0xd8] sm:$0xff]
        %v6082 = vld [vmem:[%s1109 + $0xe0] sm:$0xff]
        %v6083 = vld [vmem:[%s1109 + $0xe8] sm:$0xff]
        %v6084 = vld [vmem:[%s1109 + $0xf0] sm:$0xff]
        %v6085 = vld [vmem:[%s1109 + $0xf8] sm:$0xff]
        %v6086 = vld [vmem:[%s1109 + $0x100] sm:$0xff]
        %v6087 = vld [vmem:[%s1109 + $0x108] sm:$0xff]
        %v6088 = vld [vmem:[%s1109 + $0x110] sm:$0xff]
        %v6089 = vld [vmem:[%s1109 + $0x118] sm:$0xff]
        %v6090 = vld [vmem:[%s1109 + $0x120] sm:$0xff]
        %v6091 = vld [vmem:[%s1109 + $0x128] sm:$0xff]
        %v6092 = vld [vmem:[%s1109 + $0x130] sm:$0xff]
        %v6093 = vld [vmem:[%s1109 + $0x138] sm:$0xff]
        %v6094 = vld [vmem:[%s1109 + $0x140] sm:$0xff]
        %v6095 = vld [vmem:[%s1109 + $0x148] sm:$0xff]
        %v6096 = vld [vmem:[%s1109 + $0x150] sm:$0xff]
        %v6097 = vld [vmem:[%s1109 + $0x158] sm:$0xff]
        %v6098 = vld [vmem:[%s1109 + $0x160] sm:$0xff]
        %v6099 = vld [vmem:[%s1109 + $0x168] sm:$0xff]
        %v6100 = vld [vmem:[%s1109 + $0x170] sm:$0xff]
        %v6101 = vld [vmem:[%s1109 + $0x178] sm:$0xff]
        %6102 = vst [vmem:[#allocation6 + $0x18] sm:$0xff] %v6054
        %6103 = vst [vmem:[#allocation6 + $0x20] sm:$0xff] %v6055
        %6104 = vst [vmem:[#allocation6 + $0x28] sm:$0xff] %v6056
        %6105 = vst [vmem:[#allocation6 + $0xa8] sm:$0xff] %v6057
        %6106 = vst [vmem:[#allocation6 + $0xb0] sm:$0xff] %v6058
        %6107 = vst [vmem:[#allocation6 + $0xb8] sm:$0xff] %v6059
        %6108 = vst [vmem:[#allocation6 + $0x138] sm:$0xff] %v6060
        %6109 = vst [vmem:[#allocation6 + $0x140] sm:$0xff] %v6061
        %6110 = vst [vmem:[#allocation6 + $0x148] sm:$0xff] %v6062
        %6111 = vst [vmem:[#allocation6 + $0x1c8] sm:$0xff] %v6063
        %6112 = vst [vmem:[#allocation6 + $0x1d0] sm:$0xff] %v6064
        %6113 = vst [vmem:[#allocation6 + $0x1d8] sm:$0xff] %v6065
        %6114 = vst [vmem:[#allocation6 + $0x258] sm:$0xff] %v6066
        %6115 = vst [vmem:[#allocation6 + $0x260] sm:$0xff] %v6067
        %6116 = vst [vmem:[#allocation6 + $0x268] sm:$0xff] %v6068
        %6117 = vst [vmem:[#allocation6 + $0x2e8] sm:$0xff] %v6069
        %6118 = vst [vmem:[#allocation6 + $0x2f0] sm:$0xff] %v6070
        %6119 = vst [vmem:[#allocation6 + $0x2f8] sm:$0xff] %v6071
        %6120 = vst [vmem:[#allocation6 + $0x378] sm:$0xff] %v6072
        %6121 = vst [vmem:[#allocation6 + $0x380] sm:$0xff] %v6073
        %6122 = vst [vmem:[#allocation6 + $0x388] sm:$0xff] %v6074
        %6123 = vst [vmem:[#allocation6 + $0x408] sm:$0xff] %v6075
        %6124 = vst [vmem:[#allocation6 + $0x410] sm:$0xff] %v6076
        %6125 = vst [vmem:[#allocation6 + $0x418] sm:$0xff] %v6077
        %6126 = vst [vmem:[#allocation6 + $0x498] sm:$0xff] %v6078
        %6127 = vst [vmem:[#allocation6 + $0x4a0] sm:$0xff] %v6079
        %6128 = vst [vmem:[#allocation6 + $0x4a8] sm:$0xff] %v6080
        %6129 = vst [vmem:[#allocation6 + $0x528] sm:$0xff] %v6081
        %6130 = vst [vmem:[#allocation6 + $0x530] sm:$0xff] %v6082
        %6131 = vst [vmem:[#allocation6 + $0x538] sm:$0xff] %v6083
        %6132 = vst [vmem:[#allocation6 + $0x5b8] sm:$0xff] %v6084
        %6133 = vst [vmem:[#allocation6 + $0x5c0] sm:$0xff] %v6085
        %6134 = vst [vmem:[#allocation6 + $0x5c8] sm:$0xff] %v6086
        %6135 = vst [vmem:[#allocation6 + $0x648] sm:$0xff] %v6087
        %6136 = vst [vmem:[#allocation6 + $0x650] sm:$0xff] %v6088
        %6137 = vst [vmem:[#allocation6 + $0x658] sm:$0xff] %v6089
        %6138 = vst [vmem:[#allocation6 + $0x6d8] sm:$0xff] %v6090
        %6139 = vst [vmem:[#allocation6 + $0x6e0] sm:$0xff] %v6091
        %6140 = vst [vmem:[#allocation6 + $0x6e8] sm:$0xff] %v6092
        %6141 = vst [vmem:[#allocation6 + $0x768] sm:$0xff] %v6093
        %6142 = vst [vmem:[#allocation6 + $0x770] sm:$0xff] %v6094
        %6143 = vst [vmem:[#allocation6 + $0x778] sm:$0xff] %v6095
        %6144 = vst [vmem:[#allocation6 + $0x7f8] sm:$0xff] %v6096
        %6145 = vst [vmem:[#allocation6 + $0x800] sm:$0xff] %v6097
        %6146 = vst [vmem:[#allocation6 + $0x808] sm:$0xff] %v6098
        %6147 = vst [vmem:[#allocation6 + $0x888] sm:$0xff] %v6099
        %6148 = vst [vmem:[#allocation6 + $0x890] sm:$0xff] %v6100
        %6149 = vst [vmem:[#allocation6 + $0x898] sm:$0xff] %v6101
        %v6150 = vld [vmem:[%s1206] sm:$0xff]
        %v6151 = vld [vmem:[%s1206 + $0x8] sm:$0xff]
        %v6152 = vld [vmem:[%s1206 + $0x10] sm:$0xff]
        %v6153 = vld [vmem:[%s1206 + $0x18] sm:$0xff]
        %v6154 = vld [vmem:[%s1206 + $0x20] sm:$0xff]
        %v6155 = vld [vmem:[%s1206 + $0x28] sm:$0xff]
        %v6156 = vld [vmem:[%s1206 + $0x30] sm:$0xff]
        %v6157 = vld [vmem:[%s1206 + $0x38] sm:$0xff]
        %v6158 = vld [vmem:[%s1206 + $0x40] sm:$0xff]
        %v6159 = vld [vmem:[%s1206 + $0x48] sm:$0xff]
        %v6160 = vld [vmem:[%s1206 + $0x50] sm:$0xff]
        %v6161 = vld [vmem:[%s1206 + $0x58] sm:$0xff]
        %v6162 = vld [vmem:[%s1206 + $0x60] sm:$0xff]
        %v6163 = vld [vmem:[%s1206 + $0x68] sm:$0xff]
        %v6164 = vld [vmem:[%s1206 + $0x70] sm:$0xff]
        %v6165 = vld [vmem:[%s1206 + $0x78] sm:$0xff]
        %v6166 = vld [vmem:[%s1206 + $0x80] sm:$0xff]
        %v6167 = vld [vmem:[%s1206 + $0x88] sm:$0xff]
        %v6168 = vld [vmem:[%s1206 + $0x90] sm:$0xff]
        %v6169 = vld [vmem:[%s1206 + $0x98] sm:$0xff]
        %v6170 = vld [vmem:[%s1206 + $0xa0] sm:$0xff]
        %v6171 = vld [vmem:[%s1206 + $0xa8] sm:$0xff]
        %v6172 = vld [vmem:[%s1206 + $0xb0] sm:$0xff]
        %v6173 = vld [vmem:[%s1206 + $0xb8] sm:$0xff]
        %v6174 = vld [vmem:[%s1206 + $0xc0] sm:$0xff]
        %v6175 = vld [vmem:[%s1206 + $0xc8] sm:$0xff]
        %v6176 = vld [vmem:[%s1206 + $0xd0] sm:$0xff]
        %v6177 = vld [vmem:[%s1206 + $0xd8] sm:$0xff]
        %v6178 = vld [vmem:[%s1206 + $0xe0] sm:$0xff]
        %v6179 = vld [vmem:[%s1206 + $0xe8] sm:$0xff]
        %v6180 = vld [vmem:[%s1206 + $0xf0] sm:$0xff]
        %v6181 = vld [vmem:[%s1206 + $0xf8] sm:$0xff]
        %v6182 = vld [vmem:[%s1206 + $0x100] sm:$0xff]
        %v6183 = vld [vmem:[%s1206 + $0x108] sm:$0xff]
        %v6184 = vld [vmem:[%s1206 + $0x110] sm:$0xff]
        %v6185 = vld [vmem:[%s1206 + $0x118] sm:$0xff]
        %v6186 = vld [vmem:[%s1206 + $0x120] sm:$0xff]
        %v6187 = vld [vmem:[%s1206 + $0x128] sm:$0xff]
        %v6188 = vld [vmem:[%s1206 + $0x130] sm:$0xff]
        %v6189 = vld [vmem:[%s1206 + $0x138] sm:$0xff]
        %v6190 = vld [vmem:[%s1206 + $0x140] sm:$0xff]
        %v6191 = vld [vmem:[%s1206 + $0x148] sm:$0xff]
        %v6192 = vld [vmem:[%s1206 + $0x150] sm:$0xff]
        %v6193 = vld [vmem:[%s1206 + $0x158] sm:$0xff]
        %v6194 = vld [vmem:[%s1206 + $0x160] sm:$0xff]
        %v6195 = vld [vmem:[%s1206 + $0x168] sm:$0xff]
        %v6196 = vld [vmem:[%s1206 + $0x170] sm:$0xff]
        %v6197 = vld [vmem:[%s1206 + $0x178] sm:$0xff]
        %6198 = vst [vmem:[#allocation6 + $0x30] sm:$0xff] %v6150
        %6199 = vst [vmem:[#allocation6 + $0x38] sm:$0xff] %v6151
        %6200 = vst [vmem:[#allocation6 + $0x40] sm:$0xff] %v6152
        %6201 = vst [vmem:[#allocation6 + $0xc0] sm:$0xff] %v6153
        %6202 = vst [vmem:[#allocation6 + $0xc8] sm:$0xff] %v6154
        %6203 = vst [vmem:[#allocation6 + $0xd0] sm:$0xff] %v6155
        %6204 = vst [vmem:[#allocation6 + $0x150] sm:$0xff] %v6156
        %6205 = vst [vmem:[#allocation6 + $0x158] sm:$0xff] %v6157
        %6206 = vst [vmem:[#allocation6 + $0x160] sm:$0xff] %v6158
        %6207 = vst [vmem:[#allocation6 + $0x1e0] sm:$0xff] %v6159
        %6208 = vst [vmem:[#allocation6 + $0x1e8] sm:$0xff] %v6160
        %6209 = vst [vmem:[#allocation6 + $0x1f0] sm:$0xff] %v6161
        %6210 = vst [vmem:[#allocation6 + $0x270] sm:$0xff] %v6162
        %6211 = vst [vmem:[#allocation6 + $0x278] sm:$0xff] %v6163
        %6212 = vst [vmem:[#allocation6 + $0x280] sm:$0xff] %v6164
        %6213 = vst [vmem:[#allocation6 + $0x300] sm:$0xff] %v6165
        %6214 = vst [vmem:[#allocation6 + $0x308] sm:$0xff] %v6166
        %6215 = vst [vmem:[#allocation6 + $0x310] sm:$0xff] %v6167
        %6216 = vst [vmem:[#allocation6 + $0x390] sm:$0xff] %v6168
        %6217 = vst [vmem:[#allocation6 + $0x398] sm:$0xff] %v6169
        %6218 = vst [vmem:[#allocation6 + $0x3a0] sm:$0xff] %v6170
        %6219 = vst [vmem:[#allocation6 + $0x420] sm:$0xff] %v6171
        %6220 = vst [vmem:[#allocation6 + $0x428] sm:$0xff] %v6172
        %6221 = vst [vmem:[#allocation6 + $0x430] sm:$0xff] %v6173
        %6222 = vst [vmem:[#allocation6 + $0x4b0] sm:$0xff] %v6174
        %6223 = vst [vmem:[#allocation6 + $0x4b8] sm:$0xff] %v6175
        %6224 = vst [vmem:[#allocation6 + $0x4c0] sm:$0xff] %v6176
        %6225 = vst [vmem:[#allocation6 + $0x540] sm:$0xff] %v6177
        %6226 = vst [vmem:[#allocation6 + $0x548] sm:$0xff] %v6178
        %6227 = vst [vmem:[#allocation6 + $0x550] sm:$0xff] %v6179
        %6228 = vst [vmem:[#allocation6 + $0x5d0] sm:$0xff] %v6180
        %6229 = vst [vmem:[#allocation6 + $0x5d8] sm:$0xff] %v6181
        %6230 = vst [vmem:[#allocation6 + $0x5e0] sm:$0xff] %v6182
        %6231 = vst [vmem:[#allocation6 + $0x660] sm:$0xff] %v6183
        %6232 = vst [vmem:[#allocation6 + $0x668] sm:$0xff] %v6184
        %6233 = vst [vmem:[#allocation6 + $0x670] sm:$0xff] %v6185
        %6234 = vst [vmem:[#allocation6 + $0x6f0] sm:$0xff] %v6186
        %6235 = vst [vmem:[#allocation6 + $0x6f8] sm:$0xff] %v6187
        %6236 = vst [vmem:[#allocation6 + $0x700] sm:$0xff] %v6188
        %6237 = vst [vmem:[#allocation6 + $0x780] sm:$0xff] %v6189
        %6238 = vst [vmem:[#allocation6 + $0x788] sm:$0xff] %v6190
        %6239 = vst [vmem:[#allocation6 + $0x790] sm:$0xff] %v6191
        %6240 = vst [vmem:[#allocation6 + $0x810] sm:$0xff] %v6192
        %6241 = vst [vmem:[#allocation6 + $0x818] sm:$0xff] %v6193
        %6242 = vst [vmem:[#allocation6 + $0x820] sm:$0xff] %v6194
        %6243 = vst [vmem:[#allocation6 + $0x8a0] sm:$0xff] %v6195
        %6244 = vst [vmem:[#allocation6 + $0x8a8] sm:$0xff] %v6196
        %6245 = vst [vmem:[#allocation6 + $0x8b0] sm:$0xff] %v6197
        %v6246 = vld [vmem:[#allocation6] sm:$0xff]
        %v6247 = vld [vmem:[#allocation6 + $0x8] sm:$0xff]
        %v6248 = vld [vmem:[#allocation6 + $0x10] sm:$0xff]
        %v6249 = vld [vmem:[#allocation6 + $0x18] sm:$0xff]
        %v6250 = vld [vmem:[#allocation6 + $0x20] sm:$0xff]
        %v6251 = vld [vmem:[#allocation6 + $0x28] sm:$0xff]
        %v6252 = vld [vmem:[#allocation6 + $0x30] sm:$0xff]
        %v6253 = vld [vmem:[#allocation6 + $0x38] sm:$0xff]
        %v6254 = vld [vmem:[#allocation6 + $0x40] sm:$0xff]
        %v6255 = vld [vmem:[#allocation6 + $0x48] sm:$0xff]
        %v6256 = vld [vmem:[#allocation6 + $0x50] sm:$0xff]
        %v6257 = vld [vmem:[#allocation6 + $0x58] sm:$0xff]
        %v6258 = vld [vmem:[#allocation6 + $0x60] sm:$0xff]
        %v6259 = vld [vmem:[#allocation6 + $0x68] sm:$0xff]
        %v6260 = vld [vmem:[#allocation6 + $0x70] sm:$0xff]
        %v6261 = vld [vmem:[#allocation6 + $0x78] sm:$0xff]
        %v6262 = vld [vmem:[#allocation6 + $0x80] sm:$0xff]
        %v6263 = vld [vmem:[#allocation6 + $0x88] sm:$0xff]
        %v6264 = vld [vmem:[#allocation6 + $0x90] sm:$0xff]
        %v6265 = vld [vmem:[#allocation6 + $0x98] sm:$0xff]
        %v6266 = vld [vmem:[#allocation6 + $0xa0] sm:$0xff]
        %v6267 = vld [vmem:[#allocation6 + $0xa8] sm:$0xff]
        %v6268 = vld [vmem:[#allocation6 + $0xb0] sm:$0xff]
        %v6269 = vld [vmem:[#allocation6 + $0xb8] sm:$0xff]
        %v6270 = vld [vmem:[#allocation6 + $0xc0] sm:$0xff]
        %v6271 = vld [vmem:[#allocation6 + $0xc8] sm:$0xff]
        %v6272 = vld [vmem:[#allocation6 + $0xd0] sm:$0xff]
        %v6273 = vld [vmem:[#allocation6 + $0xd8] sm:$0xff]
        %v6274 = vld [vmem:[#allocation6 + $0xe0] sm:$0xff]
        %v6275 = vld [vmem:[#allocation6 + $0xe8] sm:$0xff]
        %v6276 = vld [vmem:[#allocation6 + $0xf0] sm:$0xff]
        %v6277 = vld [vmem:[#allocation6 + $0xf8] sm:$0xff]
        %v6278 = vld [vmem:[#allocation6 + $0x100] sm:$0xff]
        %v6279 = vld [vmem:[#allocation6 + $0x108] sm:$0xff]
        %v6280 = vld [vmem:[#allocation6 + $0x110] sm:$0xff]
        %v6281 = vld [vmem:[#allocation6 + $0x118] sm:$0xff]
        %v6282 = vld [vmem:[#allocation6 + $0x120] sm:$0xff]
        %v6283 = vld [vmem:[#allocation6 + $0x128] sm:$0xff]
        %v6284 = vld [vmem:[#allocation6 + $0x130] sm:$0xff]
        %v6285 = vld [vmem:[#allocation6 + $0x138] sm:$0xff]
        %v6286 = vld [vmem:[#allocation6 + $0x140] sm:$0xff]
        %v6287 = vld [vmem:[#allocation6 + $0x148] sm:$0xff]
        %v6288 = vld [vmem:[#allocation6 + $0x150] sm:$0xff]
        %v6289 = vld [vmem:[#allocation6 + $0x158] sm:$0xff]
        %v6290 = vld [vmem:[#allocation6 + $0x160] sm:$0xff]
        %v6291 = vld [vmem:[#allocation6 + $0x168] sm:$0xff]
        %v6292 = vld [vmem:[#allocation6 + $0x170] sm:$0xff]
        %v6293 = vld [vmem:[#allocation6 + $0x178] sm:$0xff]
        %v6294 = vld [vmem:[#allocation6 + $0x180] sm:$0xff]
        %v6295 = vld [vmem:[#allocation6 + $0x188] sm:$0xff]
        %v6296 = vld [vmem:[#allocation6 + $0x190] sm:$0xff]
        %v6297 = vld [vmem:[#allocation6 + $0x198] sm:$0xff]
        %v6298 = vld [vmem:[#allocation6 + $0x1a0] sm:$0xff]
        %v6299 = vld [vmem:[#allocation6 + $0x1a8] sm:$0xff]
        %v6300 = vld [vmem:[#allocation6 + $0x1b0] sm:$0xff]
        %v6301 = vld [vmem:[#allocation6 + $0x1b8] sm:$0xff]
        %v6302 = vld [vmem:[#allocation6 + $0x1c0] sm:$0xff]
        %v6303 = vld [vmem:[#allocation6 + $0x1c8] sm:$0xff]
        %v6304 = vld [vmem:[#allocation6 + $0x1d0] sm:$0xff]
        %v6305 = vld [vmem:[#allocation6 + $0x1d8] sm:$0xff]
        %v6306 = vld [vmem:[#allocation6 + $0x1e0] sm:$0xff]
        %v6307 = vld [vmem:[#allocation6 + $0x1e8] sm:$0xff]
        %v6308 = vld [vmem:[#allocation6 + $0x1f0] sm:$0xff]
        %v6309 = vld [vmem:[#allocation6 + $0x1f8] sm:$0xff]
        %v6310 = vld [vmem:[#allocation6 + $0x200] sm:$0xff]
        %v6311 = vld [vmem:[#allocation6 + $0x208] sm:$0xff]
        %v6312 = vld [vmem:[#allocation6 + $0x210] sm:$0xff]
        %v6313 = vld [vmem:[#allocation6 + $0x218] sm:$0xff]
        %v6314 = vld [vmem:[#allocation6 + $0x220] sm:$0xff]
        %v6315 = vld [vmem:[#allocation6 + $0x228] sm:$0xff]
        %v6316 = vld [vmem:[#allocation6 + $0x230] sm:$0xff]
        %v6317 = vld [vmem:[#allocation6 + $0x238] sm:$0xff]
        %v6318 = vld [vmem:[#allocation6 + $0x240] sm:$0xff]
        %v6319 = vld [vmem:[#allocation6 + $0x248] sm:$0xff]
        %v6320 = vld [vmem:[#allocation6 + $0x250] sm:$0xff]
        %v6321 = vld [vmem:[#allocation6 + $0x258] sm:$0xff]
        %v6322 = vld [vmem:[#allocation6 + $0x260] sm:$0xff]
        %v6323 = vld [vmem:[#allocation6 + $0x268] sm:$0xff]
        %v6324 = vld [vmem:[#allocation6 + $0x270] sm:$0xff]
        %v6325 = vld [vmem:[#allocation6 + $0x278] sm:$0xff]
        %v6326 = vld [vmem:[#allocation6 + $0x280] sm:$0xff]
        %v6327 = vld [vmem:[#allocation6 + $0x288] sm:$0xff]
        %v6328 = vld [vmem:[#allocation6 + $0x290] sm:$0xff]
        %v6329 = vld [vmem:[#allocation6 + $0x298] sm:$0xff]
        %v6330 = vld [vmem:[#allocation6 + $0x2a0] sm:$0xff]
        %v6331 = vld [vmem:[#allocation6 + $0x2a8] sm:$0xff]
        %v6332 = vld [vmem:[#allocation6 + $0x2b0] sm:$0xff]
        %v6333 = vld [vmem:[#allocation6 + $0x2b8] sm:$0xff]
        %v6334 = vld [vmem:[#allocation6 + $0x2c0] sm:$0xff]
        %v6335 = vld [vmem:[#allocation6 + $0x2c8] sm:$0xff]
        %v6336 = vld [vmem:[#allocation6 + $0x2d0] sm:$0xff]
        %v6337 = vld [vmem:[#allocation6 + $0x2d8] sm:$0xff]
        %v6338 = vld [vmem:[#allocation6 + $0x2e0] sm:$0xff]
        %v6339 = vld [vmem:[#allocation6 + $0x2e8] sm:$0xff]
        %v6340 = vld [vmem:[#allocation6 + $0x2f0] sm:$0xff]
        %v6341 = vld [vmem:[#allocation6 + $0x2f8] sm:$0xff]
        %v6342 = vld [vmem:[#allocation6 + $0x300] sm:$0xff]
        %v6343 = vld [vmem:[#allocation6 + $0x308] sm:$0xff]
        %v6344 = vld [vmem:[#allocation6 + $0x310] sm:$0xff]
        %v6345 = vld [vmem:[#allocation6 + $0x318] sm:$0xff]
        %v6346 = vld [vmem:[#allocation6 + $0x320] sm:$0xff]
        %v6347 = vld [vmem:[#allocation6 + $0x328] sm:$0xff]
        %v6348 = vld [vmem:[#allocation6 + $0x330] sm:$0xff]
        %v6349 = vld [vmem:[#allocation6 + $0x338] sm:$0xff]
        %v6350 = vld [vmem:[#allocation6 + $0x340] sm:$0xff]
        %v6351 = vld [vmem:[#allocation6 + $0x348] sm:$0xff]
        %v6352 = vld [vmem:[#allocation6 + $0x350] sm:$0xff]
        %v6353 = vld [vmem:[#allocation6 + $0x358] sm:$0xff]
        %v6354 = vld [vmem:[#allocation6 + $0x360] sm:$0xff]
        %v6355 = vld [vmem:[#allocation6 + $0x368] sm:$0xff]
        %v6356 = vld [vmem:[#allocation6 + $0x370] sm:$0xff]
        %v6357 = vld [vmem:[#allocation6 + $0x378] sm:$0xff]
        %v6358 = vld [vmem:[#allocation6 + $0x380] sm:$0xff]
        %v6359 = vld [vmem:[#allocation6 + $0x388] sm:$0xff]
        %v6360 = vld [vmem:[#allocation6 + $0x390] sm:$0xff]
        %v6361 = vld [vmem:[#allocation6 + $0x398] sm:$0xff]
        %v6362 = vld [vmem:[#allocation6 + $0x3a0] sm:$0xff]
        %v6363 = vld [vmem:[#allocation6 + $0x3a8] sm:$0xff]
        %v6364 = vld [vmem:[#allocation6 + $0x3b0] sm:$0xff]
        %v6365 = vld [vmem:[#allocation6 + $0x3b8] sm:$0xff]
        %v6366 = vld [vmem:[#allocation6 + $0x3c0] sm:$0xff]
        %v6367 = vld [vmem:[#allocation6 + $0x3c8] sm:$0xff]
        %v6368 = vld [vmem:[#allocation6 + $0x3d0] sm:$0xff]
        %v6369 = vld [vmem:[#allocation6 + $0x3d8] sm:$0xff]
        %v6370 = vld [vmem:[#allocation6 + $0x3e0] sm:$0xff]
        %v6371 = vld [vmem:[#allocation6 + $0x3e8] sm:$0xff]
        %v6372 = vld [vmem:[#allocation6 + $0x3f0] sm:$0xff]
        %v6373 = vld [vmem:[#allocation6 + $0x3f8] sm:$0xff]
        %v6374 = vld [vmem:[#allocation6 + $0x400] sm:$0xff]
        %v6375 = vld [vmem:[#allocation6 + $0x408] sm:$0xff]
        %v6376 = vld [vmem:[#allocation6 + $0x410] sm:$0xff]
        %v6377 = vld [vmem:[#allocation6 + $0x418] sm:$0xff]
        %v6378 = vld [vmem:[#allocation6 + $0x420] sm:$0xff]
        %v6379 = vld [vmem:[#allocation6 + $0x428] sm:$0xff]
        %v6380 = vld [vmem:[#allocation6 + $0x430] sm:$0xff]
        %v6381 = vld [vmem:[#allocation6 + $0x438] sm:$0xff]
        %v6382 = vld [vmem:[#allocation6 + $0x440] sm:$0xff]
        %v6383 = vld [vmem:[#allocation6 + $0x448] sm:$0xff]
        %v6384 = vld [vmem:[#allocation6 + $0x450] sm:$0xff]
        %v6385 = vld [vmem:[#allocation6 + $0x458] sm:$0xff]
        %v6386 = vld [vmem:[#allocation6 + $0x460] sm:$0xff]
        %v6387 = vld [vmem:[#allocation6 + $0x468] sm:$0xff]
        %v6388 = vld [vmem:[#allocation6 + $0x470] sm:$0xff]
        %v6389 = vld [vmem:[#allocation6 + $0x478] sm:$0xff]
        %v6390 = vld [vmem:[#allocation6 + $0x480] sm:$0xff]
        %v6391 = vld [vmem:[#allocation6 + $0x488] sm:$0xff]
        %v6392 = vld [vmem:[#allocation6 + $0x490] sm:$0xff]
        %v6393 = vld [vmem:[#allocation6 + $0x498] sm:$0xff]
        %v6394 = vld [vmem:[#allocation6 + $0x4a0] sm:$0xff]
        %v6395 = vld [vmem:[#allocation6 + $0x4a8] sm:$0xff]
        %v6396 = vld [vmem:[#allocation6 + $0x4b0] sm:$0xff]
        %v6397 = vld [vmem:[#allocation6 + $0x4b8] sm:$0xff]
        %v6398 = vld [vmem:[#allocation6 + $0x4c0] sm:$0xff]
        %v6399 = vld [vmem:[#allocation6 + $0x4c8] sm:$0xff]
        %v6400 = vld [vmem:[#allocation6 + $0x4d0] sm:$0xff]
        %v6401 = vld [vmem:[#allocation6 + $0x4d8] sm:$0xff]
        %v6402 = vld [vmem:[#allocation6 + $0x4e0] sm:$0xff]
        %v6403 = vld [vmem:[#allocation6 + $0x4e8] sm:$0xff]
        %v6404 = vld [vmem:[#allocation6 + $0x4f0] sm:$0xff]
        %v6405 = vld [vmem:[#allocation6 + $0x4f8] sm:$0xff]
        %v6406 = vld [vmem:[#allocation6 + $0x500] sm:$0xff]
        %v6407 = vld [vmem:[#allocation6 + $0x508] sm:$0xff]
        %v6408 = vld [vmem:[#allocation6 + $0x510] sm:$0xff]
        %v6409 = vld [vmem:[#allocation6 + $0x518] sm:$0xff]
        %v6410 = vld [vmem:[#allocation6 + $0x520] sm:$0xff]
        %v6411 = vld [vmem:[#allocation6 + $0x528] sm:$0xff]
        %v6412 = vld [vmem:[#allocation6 + $0x530] sm:$0xff]
        %v6413 = vld [vmem:[#allocation6 + $0x538] sm:$0xff]
        %v6414 = vld [vmem:[#allocation6 + $0x540] sm:$0xff]
        %v6415 = vld [vmem:[#allocation6 + $0x548] sm:$0xff]
        %v6416 = vld [vmem:[#allocation6 + $0x550] sm:$0xff]
        %v6417 = vld [vmem:[#allocation6 + $0x558] sm:$0xff]
        %v6418 = vld [vmem:[#allocation6 + $0x560] sm:$0xff]
        %v6419 = vld [vmem:[#allocation6 + $0x568] sm:$0xff]
        %v6420 = vld [vmem:[#allocation6 + $0x570] sm:$0xff]
        %v6421 = vld [vmem:[#allocation6 + $0x578] sm:$0xff]
        %v6422 = vld [vmem:[#allocation6 + $0x580] sm:$0xff]
        %v6423 = vld [vmem:[#allocation6 + $0x588] sm:$0xff]
        %v6424 = vld [vmem:[#allocation6 + $0x590] sm:$0xff]
        %v6425 = vld [vmem:[#allocation6 + $0x598] sm:$0xff]
        %v6426 = vld [vmem:[#allocation6 + $0x5a0] sm:$0xff]
        %v6427 = vld [vmem:[#allocation6 + $0x5a8] sm:$0xff]
        %v6428 = vld [vmem:[#allocation6 + $0x5b0] sm:$0xff]
        %v6429 = vld [vmem:[#allocation6 + $0x5b8] sm:$0xff]
        %v6430 = vld [vmem:[#allocation6 + $0x5c0] sm:$0xff]
        %v6431 = vld [vmem:[#allocation6 + $0x5c8] sm:$0xff]
        %v6432 = vld [vmem:[#allocation6 + $0x5d0] sm:$0xff]
        %v6433 = vld [vmem:[#allocation6 + $0x5d8] sm:$0xff]
        %v6434 = vld [vmem:[#allocation6 + $0x5e0] sm:$0xff]
        %v6435 = vld [vmem:[#allocation6 + $0x5e8] sm:$0xff]
        %v6436 = vld [vmem:[#allocation6 + $0x5f0] sm:$0xff]
        %v6437 = vld [vmem:[#allocation6 + $0x5f8] sm:$0xff]
        %v6438 = vld [vmem:[#allocation6 + $0x600] sm:$0xff]
        %v6439 = vld [vmem:[#allocation6 + $0x608] sm:$0xff]
        %v6440 = vld [vmem:[#allocation6 + $0x610] sm:$0xff]
        %v6441 = vld [vmem:[#allocation6 + $0x618] sm:$0xff]
        %v6442 = vld [vmem:[#allocation6 + $0x620] sm:$0xff]
        %v6443 = vld [vmem:[#allocation6 + $0x628] sm:$0xff]
        %v6444 = vld [vmem:[#allocation6 + $0x630] sm:$0xff]
        %v6445 = vld [vmem:[#allocation6 + $0x638] sm:$0xff]
        %v6446 = vld [vmem:[#allocation6 + $0x640] sm:$0xff]
        %v6447 = vld [vmem:[#allocation6 + $0x648] sm:$0xff]
        %v6448 = vld [vmem:[#allocation6 + $0x650] sm:$0xff]
        %v6449 = vld [vmem:[#allocation6 + $0x658] sm:$0xff]
        %v6450 = vld [vmem:[#allocation6 + $0x660] sm:$0xff]
        %v6451 = vld [vmem:[#allocation6 + $0x668] sm:$0xff]
        %v6452 = vld [vmem:[#allocation6 + $0x670] sm:$0xff]
        %v6453 = vld [vmem:[#allocation6 + $0x678] sm:$0xff]
        %v6454 = vld [vmem:[#allocation6 + $0x680] sm:$0xff]
        %v6455 = vld [vmem:[#allocation6 + $0x688] sm:$0xff]
        %v6456 = vld [vmem:[#allocation6 + $0x690] sm:$0xff]
        %v6457 = vld [vmem:[#allocation6 + $0x698] sm:$0xff]
        %v6458 = vld [vmem:[#allocation6 + $0x6a0] sm:$0xff]
        %v6459 = vld [vmem:[#allocation6 + $0x6a8] sm:$0xff]
        %v6460 = vld [vmem:[#allocation6 + $0x6b0] sm:$0xff]
        %v6461 = vld [vmem:[#allocation6 + $0x6b8] sm:$0xff]
        %v6462 = vld [vmem:[#allocation6 + $0x6c0] sm:$0xff]
        %v6463 = vld [vmem:[#allocation6 + $0x6c8] sm:$0xff]
        %v6464 = vld [vmem:[#allocation6 + $0x6d0] sm:$0xff]
        %v6465 = vld [vmem:[#allocation6 + $0x6d8] sm:$0xff]
        %v6466 = vld [vmem:[#allocation6 + $0x6e0] sm:$0xff]
        %v6467 = vld [vmem:[#allocation6 + $0x6e8] sm:$0xff]
        %v6468 = vld [vmem:[#allocation6 + $0x6f0] sm:$0xff]
        %v6469 = vld [vmem:[#allocation6 + $0x6f8] sm:$0xff]
        %v6470 = vld [vmem:[#allocation6 + $0x700] sm:$0xff]
        %v6471 = vld [vmem:[#allocation6 + $0x708] sm:$0xff]
        %v6472 = vld [vmem:[#allocation6 + $0x710] sm:$0xff]
        %v6473 = vld [vmem:[#allocation6 + $0x718] sm:$0xff]
        %v6474 = vld [vmem:[#allocation6 + $0x720] sm:$0xff]
        %v6475 = vld [vmem:[#allocation6 + $0x728] sm:$0xff]
        %v6476 = vld [vmem:[#allocation6 + $0x730] sm:$0xff]
        %v6477 = vld [vmem:[#allocation6 + $0x738] sm:$0xff]
        %v6478 = vld [vmem:[#allocation6 + $0x740] sm:$0xff]
        %v6479 = vld [vmem:[#allocation6 + $0x748] sm:$0xff]
        %v6480 = vld [vmem:[#allocation6 + $0x750] sm:$0xff]
        %v6481 = vld [vmem:[#allocation6 + $0x758] sm:$0xff]
        %v6482 = vld [vmem:[#allocation6 + $0x760] sm:$0xff]
        %v6483 = vld [vmem:[#allocation6 + $0x768] sm:$0xff]
        %v6484 = vld [vmem:[#allocation6 + $0x770] sm:$0xff]
        %v6485 = vld [vmem:[#allocation6 + $0x778] sm:$0xff]
        %v6486 = vld [vmem:[#allocation6 + $0x780] sm:$0xff]
        %v6487 = vld [vmem:[#allocation6 + $0x788] sm:$0xff]
        %v6488 = vld [vmem:[#allocation6 + $0x790] sm:$0xff]
        %v6489 = vld [vmem:[#allocation6 + $0x798] sm:$0xff]
        %v6490 = vld [vmem:[#allocation6 + $0x7a0] sm:$0xff]
        %v6491 = vld [vmem:[#allocation6 + $0x7a8] sm:$0xff]
        %v6492 = vld [vmem:[#allocation6 + $0x7b0] sm:$0xff]
        %v6493 = vld [vmem:[#allocation6 + $0x7b8] sm:$0xff]
        %v6494 = vld [vmem:[#allocation6 + $0x7c0] sm:$0xff]
        %v6495 = vld [vmem:[#allocation6 + $0x7c8] sm:$0xff]
        %v6496 = vld [vmem:[#allocation6 + $0x7d0] sm:$0xff]
        %v6497 = vld [vmem:[#allocation6 + $0x7d8] sm:$0xff]
        %v6498 = vld [vmem:[#allocation6 + $0x7e0] sm:$0xff]
        %v6499 = vld [vmem:[#allocation6 + $0x7e8] sm:$0xff]
        %v6500 = vld [vmem:[#allocation6 + $0x7f0] sm:$0xff]
        %v6501 = vld [vmem:[#allocation6 + $0x7f8] sm:$0xff]
        %v6502 = vld [vmem:[#allocation6 + $0x800] sm:$0xff]
        %v6503 = vld [vmem:[#allocation6 + $0x808] sm:$0xff]
        %v6504 = vld [vmem:[#allocation6 + $0x810] sm:$0xff]
        %v6505 = vld [vmem:[#allocation6 + $0x818] sm:$0xff]
        %v6506 = vld [vmem:[#allocation6 + $0x820] sm:$0xff]
        %v6507 = vld [vmem:[#allocation6 + $0x828] sm:$0xff]
        %v6508 = vld [vmem:[#allocation6 + $0x830] sm:$0xff]
        %v6509 = vld [vmem:[#allocation6 + $0x838] sm:$0xff]
        %v6510 = vld [vmem:[#allocation6 + $0x840] sm:$0xff]
        %v6511 = vld [vmem:[#allocation6 + $0x848] sm:$0xff]
        %v6512 = vld [vmem:[#allocation6 + $0x850] sm:$0xff]
        %v6513 = vld [vmem:[#allocation6 + $0x858] sm:$0xff]
        %v6514 = vld [vmem:[#allocation6 + $0x860] sm:$0xff]
        %v6515 = vld [vmem:[#allocation6 + $0x868] sm:$0xff]
        %v6516 = vld [vmem:[#allocation6 + $0x870] sm:$0xff]
        %v6517 = vld [vmem:[#allocation6 + $0x878] sm:$0xff]
        %v6518 = vld [vmem:[#allocation6 + $0x880] sm:$0xff]
        %v6519 = vld [vmem:[#allocation6 + $0x888] sm:$0xff]
        %v6520 = vld [vmem:[#allocation6 + $0x890] sm:$0xff]
        %v6521 = vld [vmem:[#allocation6 + $0x898] sm:$0xff]
        %v6522 = vld [vmem:[#allocation6 + $0x8a0] sm:$0xff]
        %v6523 = vld [vmem:[#allocation6 + $0x8a8] sm:$0xff]
        %v6524 = vld [vmem:[#allocation6 + $0x8b0] sm:$0xff]
        %v6525 = vld [vmem:[#allocation6 + $0x8b8] sm:$0xff]
        %v6526 = vld [vmem:[#allocation6 + $0x8c0] sm:$0xff]
        %v6527 = vld [vmem:[#allocation6 + $0x8c8] sm:$0xff]
        %v6528 = vld [vmem:[#allocation6 + $0x8d0] sm:$0xff]
        %v6529 = vld [vmem:[#allocation6 + $0x8d8] sm:$0xff]
        %v6530 = vld [vmem:[#allocation6 + $0x8e0] sm:$0xff]
        %v6531 = vld [vmem:[#allocation6 + $0x8e8] sm:$0xff]
        %v6532 = vld [vmem:[#allocation6 + $0x8f0] sm:$0xff]
        %v6533 = vld [vmem:[#allocation6 + $0x8f8] sm:$0xff]
        %v6534 = vld [vmem:[#allocation15] sm:$0xf]
        %v6535 = vld [vmem:[#allocation15 + $0x4] sm:$0xf]
        %v6536 = vld [vmem:[#allocation15 + $0x8] sm:$0xf]
        %v6537 = vld [vmem:[#allocation15 + $0xc] sm:$0xf]
        %v6538 = vld [vmem:[#allocation15 + $0x10] sm:$0xf]
        %v6539 = vld [vmem:[#allocation15 + $0x14] sm:$0xf]
        %v6540 = vld [vmem:[#allocation15 + $0x18] sm:$0xf]
        %v6541 = vld [vmem:[#allocation15 + $0x1c] sm:$0xf]
        %v6542 = vld [vmem:[#allocation15 + $0x20] sm:$0xf]
        %v6543 = vld [vmem:[#allocation15 + $0x24] sm:$0xf]
        %v6544 = vld [vmem:[#allocation15 + $0x28] sm:$0xf]
        %v6545 = vld [vmem:[#allocation15 + $0x2c] sm:$0xf]
        %v6546 = vld [vmem:[#allocation15 + $0x30] sm:$0xf]
        %v6547 = vld [vmem:[#allocation15 + $0x34] sm:$0xf]
        %v6548 = vld [vmem:[#allocation15 + $0x38] sm:$0xf]
        %v6549 = vld [vmem:[#allocation15 + $0x3c] sm:$0xf]
        %v6550 = vld [vmem:[#allocation15 + $0x40] sm:$0xf]
        %v6551 = vld [vmem:[#allocation15 + $0x44] sm:$0xf]
        %v6552 = vld [vmem:[#allocation15 + $0x48] sm:$0xf]
        %v6553 = vld [vmem:[#allocation15 + $0x4c] sm:$0xf]
        %v6554 = vld [vmem:[#allocation15 + $0x50] sm:$0xf]
        %v6555 = vld [vmem:[#allocation15 + $0x54] sm:$0xf]
        %v6556 = vld [vmem:[#allocation15 + $0x58] sm:$0xf]
        %v6557 = vld [vmem:[#allocation15 + $0x5c] sm:$0xf]
        %v6558 = vld [vmem:[#allocation15 + $0x60] sm:$0xf]
        %v6559 = vld [vmem:[#allocation15 + $0x64] sm:$0xf]
        %v6560 = vld [vmem:[#allocation15 + $0x68] sm:$0xf]
        %v6561 = vld [vmem:[#allocation15 + $0x6c] sm:$0xf]
        %v6562 = vld [vmem:[#allocation15 + $0x70] sm:$0xf]
        %v6563 = vld [vmem:[#allocation15 + $0x74] sm:$0xf]
        %v6564 = vld [vmem:[#allocation15 + $0x78] sm:$0xf]
        %v6565 = vld [vmem:[#allocation15 + $0x7c] sm:$0xf]
        %v6566 = vld [vmem:[#allocation15 + $0x80] sm:$0xf]
        %v6567 = vld [vmem:[#allocation15 + $0x84] sm:$0xf]
        %v6568 = vld [vmem:[#allocation15 + $0x88] sm:$0xf]
        %v6569 = vld [vmem:[#allocation15 + $0x8c] sm:$0xf]
        %v6570 = vld [vmem:[#allocation15 + $0x90] sm:$0xf]
        %v6571 = vld [vmem:[#allocation15 + $0x94] sm:$0xf]
        %v6572 = vld [vmem:[#allocation15 + $0x98] sm:$0xf]
        %v6573 = vld [vmem:[#allocation15 + $0x9c] sm:$0xf]
        %v6574 = vld [vmem:[#allocation15 + $0xa0] sm:$0xf]
        %v6575 = vld [vmem:[#allocation15 + $0xa4] sm:$0xf]
        %v6576 = vld [vmem:[#allocation15 + $0xa8] sm:$0xf]
        %v6577 = vld [vmem:[#allocation15 + $0xac] sm:$0xf]
        %v6578 = vld [vmem:[#allocation15 + $0xb0] sm:$0xf]
        %v6579 = vld [vmem:[#allocation15 + $0xb4] sm:$0xf]
        %v6580 = vld [vmem:[#allocation15 + $0xb8] sm:$0xf]
        %v6581 = vld [vmem:[#allocation15 + $0xbc] sm:$0xf]
        %v6582 = vld [vmem:[#allocation15 + $0xc0] sm:$0xf]
        %v6583 = vld [vmem:[#allocation15 + $0xc4] sm:$0xf]
        %v6584 = vld [vmem:[#allocation15 + $0xc8] sm:$0xf]
        %v6585 = vld [vmem:[#allocation15 + $0xcc] sm:$0xf]
        %v6586 = vld [vmem:[#allocation15 + $0xd0] sm:$0xf]
        %v6587 = vld [vmem:[#allocation15 + $0xd4] sm:$0xf]
        %v6588 = vld [vmem:[#allocation15 + $0xd8] sm:$0xf]
        %v6589 = vld [vmem:[#allocation15 + $0xdc] sm:$0xf]
        %v6590 = vld [vmem:[#allocation15 + $0xe0] sm:$0xf]
        %v6591 = vld [vmem:[#allocation15 + $0xe4] sm:$0xf]
        %v6592 = vld [vmem:[#allocation15 + $0xe8] sm:$0xf]
        %v6593 = vld [vmem:[#allocation15 + $0xec] sm:$0xf]
        %v6594 = vld [vmem:[#allocation15 + $0xf0] sm:$0xf]
        %v6595 = vld [vmem:[#allocation15 + $0xf4] sm:$0xf]
        %v6596 = vld [vmem:[#allocation15 + $0xf8] sm:$0xf]
        %v6597 = vld [vmem:[#allocation15 + $0xfc] sm:$0xf]
        %v6598 = vld [vmem:[#allocation15 + $0x100] sm:$0xf]
        %v6599 = vld [vmem:[#allocation15 + $0x104] sm:$0xf]
        %v6600 = vld [vmem:[#allocation15 + $0x108] sm:$0xf]
        %v6601 = vld [vmem:[#allocation15 + $0x10c] sm:$0xf]
        %v6602 = vld [vmem:[#allocation15 + $0x110] sm:$0xf]
        %v6603 = vld [vmem:[#allocation15 + $0x114] sm:$0xf]
        %v6604 = vld [vmem:[#allocation15 + $0x118] sm:$0xf]
        %v6605 = vld [vmem:[#allocation15 + $0x11c] sm:$0xf]
        %v6606 = vld [vmem:[#allocation15 + $0x120] sm:$0xf]
        %v6607 = vld [vmem:[#allocation15 + $0x124] sm:$0xf]
        %v6608 = vld [vmem:[#allocation15 + $0x128] sm:$0xf]
        %v6609 = vld [vmem:[#allocation15 + $0x12c] sm:$0xf]
        %v6610 = vld [vmem:[#allocation15 + $0x130] sm:$0xf]
        %v6611 = vld [vmem:[#allocation15 + $0x134] sm:$0xf]
        %v6612 = vld [vmem:[#allocation15 + $0x138] sm:$0xf]
        %v6613 = vld [vmem:[#allocation15 + $0x13c] sm:$0xf]
        %v6614 = vld [vmem:[#allocation15 + $0x140] sm:$0xf]
        %v6615 = vld [vmem:[#allocation15 + $0x144] sm:$0xf]
        %v6616 = vld [vmem:[#allocation15 + $0x148] sm:$0xf]
        %v6617 = vld [vmem:[#allocation15 + $0x14c] sm:$0xf]
        %v6618 = vld [vmem:[#allocation15 + $0x150] sm:$0xf]
        %v6619 = vld [vmem:[#allocation15 + $0x154] sm:$0xf]
        %v6620 = vld [vmem:[#allocation15 + $0x158] sm:$0xf]
        %v6621 = vld [vmem:[#allocation15 + $0x15c] sm:$0xf]
        %v6622 = vld [vmem:[#allocation15 + $0x160] sm:$0xf]
        %v6623 = vld [vmem:[#allocation15 + $0x164] sm:$0xf]
        %v6624 = vld [vmem:[#allocation15 + $0x168] sm:$0xf]
        %v6625 = vld [vmem:[#allocation15 + $0x16c] sm:$0xf]
        %v6626 = vld [vmem:[#allocation15 + $0x170] sm:$0xf]
        %v6627 = vld [vmem:[#allocation15 + $0x174] sm:$0xf]
        %v6628 = vld [vmem:[#allocation15 + $0x178] sm:$0xf]
        %v6629 = vld [vmem:[#allocation15 + $0x17c] sm:$0xf]
        %v6630 = vld [vmem:[#allocation15 + $0x180] sm:$0xf]
        %v6631 = vld [vmem:[#allocation15 + $0x184] sm:$0xf]
        %v6632 = vld [vmem:[#allocation15 + $0x188] sm:$0xf]
        %v6633 = vld [vmem:[#allocation15 + $0x18c] sm:$0xf]
        %v6634 = vld [vmem:[#allocation15 + $0x190] sm:$0xf]
        %v6635 = vld [vmem:[#allocation15 + $0x194] sm:$0xf]
        %v6636 = vld [vmem:[#allocation15 + $0x198] sm:$0xf]
        %v6637 = vld [vmem:[#allocation15 + $0x19c] sm:$0xf]
        %v6638 = vld [vmem:[#allocation15 + $0x1a0] sm:$0xf]
        %v6639 = vld [vmem:[#allocation15 + $0x1a4] sm:$0xf]
        %v6640 = vld [vmem:[#allocation15 + $0x1a8] sm:$0xf]
        %v6641 = vld [vmem:[#allocation15 + $0x1ac] sm:$0xf]
        %v6642 = vld [vmem:[#allocation15 + $0x1b0] sm:$0xf]
        %v6643 = vld [vmem:[#allocation15 + $0x1b4] sm:$0xf]
        %v6644 = vld [vmem:[#allocation15 + $0x1b8] sm:$0xf]
        %v6645 = vld [vmem:[#allocation15 + $0x1bc] sm:$0xf]
        %v6646 = vld [vmem:[#allocation15 + $0x1c0] sm:$0xf]
        %v6647 = vld [vmem:[#allocation15 + $0x1c4] sm:$0xf]
        %v6648 = vld [vmem:[#allocation15 + $0x1c8] sm:$0xf]
        %v6649 = vld [vmem:[#allocation15 + $0x1cc] sm:$0xf]
        %v6650 = vld [vmem:[#allocation15 + $0x1d0] sm:$0xf]
        %v6651 = vld [vmem:[#allocation15 + $0x1d4] sm:$0xf]
        %v6652 = vld [vmem:[#allocation15 + $0x1d8] sm:$0xf]
        %v6653 = vld [vmem:[#allocation15 + $0x1dc] sm:$0xf]
        %v6654 = vld [vmem:[#allocation15 + $0x1e0] sm:$0xf]
        %v6655 = vld [vmem:[#allocation15 + $0x1e4] sm:$0xf]
        %v6656 = vld [vmem:[#allocation15 + $0x1e8] sm:$0xf]
        %v6657 = vld [vmem:[#allocation15 + $0x1ec] sm:$0xf]
        %v6658 = vld [vmem:[#allocation15 + $0x1f0] sm:$0xf]
        %v6659 = vld [vmem:[#allocation15 + $0x1f4] sm:$0xf]
        %v6660 = vld [vmem:[#allocation15 + $0x1f8] sm:$0xf]
        %v6661 = vld [vmem:[#allocation15 + $0x1fc] sm:$0xf]
        %v6662 = vld [vmem:[#allocation15 + $0x200] sm:$0xf]
        %v6663 = vld [vmem:[#allocation15 + $0x204] sm:$0xf]
        %v6664 = vld [vmem:[#allocation15 + $0x208] sm:$0xf]
        %v6665 = vld [vmem:[#allocation15 + $0x20c] sm:$0xf]
        %v6666 = vld [vmem:[#allocation15 + $0x210] sm:$0xf]
        %v6667 = vld [vmem:[#allocation15 + $0x214] sm:$0xf]
        %v6668 = vld [vmem:[#allocation15 + $0x218] sm:$0xf]
        %v6669 = vld [vmem:[#allocation15 + $0x21c] sm:$0xf]
        %v6670 = vld [vmem:[#allocation15 + $0x220] sm:$0xf]
        %v6671 = vld [vmem:[#allocation15 + $0x224] sm:$0xf]
        %v6672 = vld [vmem:[#allocation15 + $0x228] sm:$0xf]
        %v6673 = vld [vmem:[#allocation15 + $0x22c] sm:$0xf]
        %v6674 = vld [vmem:[#allocation15 + $0x230] sm:$0xf]
        %v6675 = vld [vmem:[#allocation15 + $0x234] sm:$0xf]
        %v6676 = vld [vmem:[#allocation15 + $0x238] sm:$0xf]
        %v6677 = vld [vmem:[#allocation15 + $0x23c] sm:$0xf]
        %v6678 = vld [vmem:[#allocation15 + $0x240] sm:$0xf]
        %v6679 = vld [vmem:[#allocation15 + $0x244] sm:$0xf]
        %v6680 = vld [vmem:[#allocation15 + $0x248] sm:$0xf]
        %v6681 = vld [vmem:[#allocation15 + $0x24c] sm:$0xf]
        %v6682 = vld [vmem:[#allocation15 + $0x250] sm:$0xf]
        %v6683 = vld [vmem:[#allocation15 + $0x254] sm:$0xf]
        %v6684 = vld [vmem:[#allocation15 + $0x258] sm:$0xf]
        %v6685 = vld [vmem:[#allocation15 + $0x25c] sm:$0xf]
        %v6686 = vld [vmem:[#allocation15 + $0x260] sm:$0xf]
        %v6687 = vld [vmem:[#allocation15 + $0x264] sm:$0xf]
        %v6688 = vld [vmem:[#allocation15 + $0x268] sm:$0xf]
        %v6689 = vld [vmem:[#allocation15 + $0x26c] sm:$0xf]
        %v6690 = vld [vmem:[#allocation15 + $0x270] sm:$0xf]
        %v6691 = vld [vmem:[#allocation15 + $0x274] sm:$0xf]
        %v6692 = vld [vmem:[#allocation15 + $0x278] sm:$0xf]
        %v6693 = vld [vmem:[#allocation15 + $0x27c] sm:$0xf]
        %v6694 = vld [vmem:[#allocation15 + $0x280] sm:$0xf]
        %v6695 = vld [vmem:[#allocation15 + $0x284] sm:$0xf]
        %v6696 = vld [vmem:[#allocation15 + $0x288] sm:$0xf]
        %v6697 = vld [vmem:[#allocation15 + $0x28c] sm:$0xf]
        %v6698 = vld [vmem:[#allocation15 + $0x290] sm:$0xf]
        %v6699 = vld [vmem:[#allocation15 + $0x294] sm:$0xf]
        %v6700 = vld [vmem:[#allocation15 + $0x298] sm:$0xf]
        %v6701 = vld [vmem:[#allocation15 + $0x29c] sm:$0xf]
        %v6702 = vld [vmem:[#allocation15 + $0x2a0] sm:$0xf]
        %v6703 = vld [vmem:[#allocation15 + $0x2a4] sm:$0xf]
        %v6704 = vld [vmem:[#allocation15 + $0x2a8] sm:$0xf]
        %v6705 = vld [vmem:[#allocation15 + $0x2ac] sm:$0xf]
        %v6706 = vld [vmem:[#allocation15 + $0x2b0] sm:$0xf]
        %v6707 = vld [vmem:[#allocation15 + $0x2b4] sm:$0xf]
        %v6708 = vld [vmem:[#allocation15 + $0x2b8] sm:$0xf]
        %v6709 = vld [vmem:[#allocation15 + $0x2bc] sm:$0xf]
        %v6710 = vld [vmem:[#allocation15 + $0x2c0] sm:$0xf]
        %v6711 = vld [vmem:[#allocation15 + $0x2c4] sm:$0xf]
        %v6712 = vld [vmem:[#allocation15 + $0x2c8] sm:$0xf]
        %v6713 = vld [vmem:[#allocation15 + $0x2cc] sm:$0xf]
        %v6714 = vld [vmem:[#allocation15 + $0x2d0] sm:$0xf]
        %v6715 = vld [vmem:[#allocation15 + $0x2d4] sm:$0xf]
        %v6716 = vld [vmem:[#allocation15 + $0x2d8] sm:$0xf]
        %v6717 = vld [vmem:[#allocation15 + $0x2dc] sm:$0xf]
        %v6718 = vld [vmem:[#allocation15 + $0x2e0] sm:$0xf]
        %v6719 = vld [vmem:[#allocation15 + $0x2e4] sm:$0xf]
        %v6720 = vld [vmem:[#allocation15 + $0x2e8] sm:$0xf]
        %v6721 = vld [vmem:[#allocation15 + $0x2ec] sm:$0xf]
        %v6722 = vld [vmem:[#allocation15 + $0x2f0] sm:$0xf]
        %v6723 = vld [vmem:[#allocation15 + $0x2f4] sm:$0xf]
        %v6724 = vld [vmem:[#allocation15 + $0x2f8] sm:$0xf]
        %v6725 = vld [vmem:[#allocation15 + $0x2fc] sm:$0xf]
        %v6726 = vld [vmem:[#allocation15 + $0x300] sm:$0xf]
        %v6727 = vld [vmem:[#allocation15 + $0x304] sm:$0xf]
        %v6728 = vld [vmem:[#allocation15 + $0x308] sm:$0xf]
        %v6729 = vld [vmem:[#allocation15 + $0x30c] sm:$0xf]
        %v6730 = vld [vmem:[#allocation15 + $0x310] sm:$0xf]
        %v6731 = vld [vmem:[#allocation15 + $0x314] sm:$0xf]
        %v6732 = vld [vmem:[#allocation15 + $0x318] sm:$0xf]
        %v6733 = vld [vmem:[#allocation15 + $0x31c] sm:$0xf]
        %v6734 = vld [vmem:[#allocation15 + $0x320] sm:$0xf]
        %v6735 = vld [vmem:[#allocation15 + $0x324] sm:$0xf]
        %v6736 = vld [vmem:[#allocation15 + $0x328] sm:$0xf]
        %v6737 = vld [vmem:[#allocation15 + $0x32c] sm:$0xf]
        %v6738 = vld [vmem:[#allocation15 + $0x330] sm:$0xf]
        %v6739 = vld [vmem:[#allocation15 + $0x334] sm:$0xf]
        %v6740 = vld [vmem:[#allocation15 + $0x338] sm:$0xf]
        %v6741 = vld [vmem:[#allocation15 + $0x33c] sm:$0xf]
        %v6742 = vld [vmem:[#allocation15 + $0x340] sm:$0xf]
        %v6743 = vld [vmem:[#allocation15 + $0x344] sm:$0xf]
        %v6744 = vld [vmem:[#allocation15 + $0x348] sm:$0xf]
        %v6745 = vld [vmem:[#allocation15 + $0x34c] sm:$0xf]
        %v6746 = vld [vmem:[#allocation15 + $0x350] sm:$0xf]
        %v6747 = vld [vmem:[#allocation15 + $0x354] sm:$0xf]
        %v6748 = vld [vmem:[#allocation15 + $0x358] sm:$0xf]
        %v6749 = vld [vmem:[#allocation15 + $0x35c] sm:$0xf]
        %v6750 = vld [vmem:[#allocation15 + $0x360] sm:$0xf]
        %v6751 = vld [vmem:[#allocation15 + $0x364] sm:$0xf]
        %v6752 = vld [vmem:[#allocation15 + $0x368] sm:$0xf]
        %v6753 = vld [vmem:[#allocation15 + $0x36c] sm:$0xf]
        %v6754 = vld [vmem:[#allocation15 + $0x370] sm:$0xf]
        %v6755 = vld [vmem:[#allocation15 + $0x374] sm:$0xf]
        %v6756 = vld [vmem:[#allocation15 + $0x378] sm:$0xf]
        %v6757 = vld [vmem:[#allocation15 + $0x37c] sm:$0xf]
        %v6758 = vld [vmem:[#allocation15 + $0x380] sm:$0xf]
        %v6759 = vld [vmem:[#allocation15 + $0x384] sm:$0xf]
        %v6760 = vld [vmem:[#allocation15 + $0x388] sm:$0xf]
        %v6761 = vld [vmem:[#allocation15 + $0x38c] sm:$0xf]
        %v6762 = vld [vmem:[#allocation15 + $0x390] sm:$0xf]
        %v6763 = vld [vmem:[#allocation15 + $0x394] sm:$0xf]
        %v6764 = vld [vmem:[#allocation15 + $0x398] sm:$0xf]
        %v6765 = vld [vmem:[#allocation15 + $0x39c] sm:$0xf]
        %v6766 = vld [vmem:[#allocation15 + $0x3a0] sm:$0xf]
        %v6767 = vld [vmem:[#allocation15 + $0x3a4] sm:$0xf]
        %v6768 = vld [vmem:[#allocation15 + $0x3a8] sm:$0xf]
        %v6769 = vld [vmem:[#allocation15 + $0x3ac] sm:$0xf]
        %v6770 = vld [vmem:[#allocation15 + $0x3b0] sm:$0xf]
        %v6771 = vld [vmem:[#allocation15 + $0x3b4] sm:$0xf]
        %v6772 = vld [vmem:[#allocation15 + $0x3b8] sm:$0xf]
        %v6773 = vld [vmem:[#allocation15 + $0x3bc] sm:$0xf]
        %v6774 = vld [vmem:[#allocation15 + $0x3c0] sm:$0xf]
        %v6775 = vld [vmem:[#allocation15 + $0x3c4] sm:$0xf]
        %v6776 = vld [vmem:[#allocation15 + $0x3c8] sm:$0xf]
        %v6777 = vld [vmem:[#allocation15 + $0x3cc] sm:$0xf]
        %v6778 = vld [vmem:[#allocation15 + $0x3d0] sm:$0xf]
        %v6779 = vld [vmem:[#allocation15 + $0x3d4] sm:$0xf]
        %v6780 = vld [vmem:[#allocation15 + $0x3d8] sm:$0xf]
        %v6781 = vld [vmem:[#allocation15 + $0x3dc] sm:$0xf]
        %v6782 = vld [vmem:[#allocation15 + $0x3e0] sm:$0xf]
        %v6783 = vld [vmem:[#allocation15 + $0x3e4] sm:$0xf]
        %v6784 = vld [vmem:[#allocation15 + $0x3e8] sm:$0xf]
        %v6785 = vld [vmem:[#allocation15 + $0x3ec] sm:$0xf]
        %v6786 = vld [vmem:[#allocation15 + $0x3f0] sm:$0xf]
        %v6787 = vld [vmem:[#allocation15 + $0x3f4] sm:$0xf]
        %v6788 = vld [vmem:[#allocation15 + $0x3f8] sm:$0xf]
        %v6789 = vld [vmem:[#allocation15 + $0x3fc] sm:$0xf]
        %v6790 = vld [vmem:[#allocation15 + $0x400] sm:$0xf]
        %v6791 = vld [vmem:[#allocation15 + $0x404] sm:$0xf]
        %v6792 = vld [vmem:[#allocation15 + $0x408] sm:$0xf]
        %v6793 = vld [vmem:[#allocation15 + $0x40c] sm:$0xf]
        %v6794 = vld [vmem:[#allocation15 + $0x410] sm:$0xf]
        %v6795 = vld [vmem:[#allocation15 + $0x414] sm:$0xf]
        %v6796 = vld [vmem:[#allocation15 + $0x418] sm:$0xf]
        %v6797 = vld [vmem:[#allocation15 + $0x41c] sm:$0xf]
        %v6798 = vld [vmem:[#allocation15 + $0x420] sm:$0xf]
        %v6799 = vld [vmem:[#allocation15 + $0x424] sm:$0xf]
        %v6800 = vld [vmem:[#allocation15 + $0x428] sm:$0xf]
        %v6801 = vld [vmem:[#allocation15 + $0x42c] sm:$0xf]
        %v6802 = vld [vmem:[#allocation15 + $0x430] sm:$0xf]
        %v6803 = vld [vmem:[#allocation15 + $0x434] sm:$0xf]
        %v6804 = vld [vmem:[#allocation15 + $0x438] sm:$0xf]
        %v6805 = vld [vmem:[#allocation15 + $0x43c] sm:$0xf]
        %v6806 = vld [vmem:[#allocation15 + $0x440] sm:$0xf]
        %v6807 = vld [vmem:[#allocation15 + $0x444] sm:$0xf]
        %v6808 = vld [vmem:[#allocation15 + $0x448] sm:$0xf]
        %v6809 = vld [vmem:[#allocation15 + $0x44c] sm:$0xf]
        %v6810 = vld [vmem:[#allocation15 + $0x450] sm:$0xf]
        %v6811 = vld [vmem:[#allocation15 + $0x454] sm:$0xf]
        %v6812 = vld [vmem:[#allocation15 + $0x458] sm:$0xf]
        %v6813 = vld [vmem:[#allocation15 + $0x45c] sm:$0xf]
        %v6814 = vld [vmem:[#allocation15 + $0x460] sm:$0xf]
        %v6815 = vld [vmem:[#allocation15 + $0x464] sm:$0xf]
        %v6816 = vld [vmem:[#allocation15 + $0x468] sm:$0xf]
        %v6817 = vld [vmem:[#allocation15 + $0x46c] sm:$0xf]
        %v6818 = vld [vmem:[#allocation15 + $0x470] sm:$0xf]
        %v6819 = vld [vmem:[#allocation15 + $0x474] sm:$0xf]
        %v6820 = vld [vmem:[#allocation15 + $0x478] sm:$0xf]
        %v6821 = vld [vmem:[#allocation15 + $0x47c] sm:$0xf]
        %v6822 = vld [vmem:[#allocation16] sm:$0x1]
        %v6824 = vlaneseq
        %v6825 = vshrl.u32 %v6824, 7
        %v6826 = vsub.s32 0, %v6825
        %v6827 = vrot.slane %v6822, %v6826
        %v7117 = vunpack.c.l.b16 %v6534
        %v7118 = vunpack.c.l.b16 %v6535
        %v7119 = vunpack.c.l.b16 %v6536
        %v7120 = vunpack.c.l.b16 %v6537
        %v7121 = vunpack.c.l.b16 %v6538
        %v7122 = vunpack.c.l.b16 %v6539
        %v7123 = vunpack.c.l.b16 %v6540
        %v7124 = vunpack.c.l.b16 %v6541
        %v7125 = vunpack.c.l.b16 %v6542
        %v7126 = vunpack.c.l.b16 %v6543
        %v7127 = vunpack.c.l.b16 %v6544
        %v7128 = vunpack.c.l.b16 %v6545
        %v7129 = vunpack.c.l.b16 %v6546
        %v7130 = vunpack.c.l.b16 %v6547
        %v7131 = vunpack.c.l.b16 %v6548
        %v7132 = vunpack.c.l.b16 %v6549
        %v7133 = vunpack.c.l.b16 %v6550
        %v7134 = vunpack.c.l.b16 %v6551
        %v7135 = vunpack.c.l.b16 %v6552
        %v7136 = vunpack.c.l.b16 %v6553
        %v7137 = vunpack.c.l.b16 %v6554
        %v7138 = vunpack.c.l.b16 %v6555
        %v7139 = vunpack.c.l.b16 %v6556
        %v7140 = vunpack.c.l.b16 %v6557
        %v7141 = vunpack.c.l.b16 %v6558
        %v7142 = vunpack.c.l.b16 %v6559
        %v7143 = vunpack.c.l.b16 %v6560
        %v7144 = vunpack.c.l.b16 %v6561
        %v7145 = vunpack.c.l.b16 %v6562
        %v7146 = vunpack.c.l.b16 %v6563
        %v7147 = vunpack.c.l.b16 %v6564
        %v7148 = vunpack.c.l.b16 %v6565
        %v7149 = vunpack.c.l.b16 %v6566
        %v7150 = vunpack.c.l.b16 %v6567
        %v7151 = vunpack.c.l.b16 %v6568
        %v7152 = vunpack.c.l.b16 %v6569
        %v7153 = vunpack.c.l.b16 %v6570
        %v7154 = vunpack.c.l.b16 %v6571
        %v7155 = vunpack.c.l.b16 %v6572
        %v7156 = vunpack.c.l.b16 %v6573
        %v7157 = vunpack.c.l.b16 %v6574
        %v7158 = vunpack.c.l.b16 %v6575
        %v7159 = vunpack.c.l.b16 %v6576
        %v7160 = vunpack.c.l.b16 %v6577
        %v7161 = vunpack.c.l.b16 %v6578
        %v7162 = vunpack.c.l.b16 %v6579
        %v7163 = vunpack.c.l.b16 %v6580
        %v7164 = vunpack.c.l.b16 %v6581
        %v7165 = vunpack.c.l.b16 %v6582
        %v7166 = vunpack.c.l.b16 %v6583
        %v7167 = vunpack.c.l.b16 %v6584
        %v7168 = vunpack.c.l.b16 %v6585
        %v7169 = vunpack.c.l.b16 %v6586
        %v7170 = vunpack.c.l.b16 %v6587
        %v7171 = vunpack.c.l.b16 %v6588
        %v7172 = vunpack.c.l.b16 %v6589
        %v7173 = vunpack.c.l.b16 %v6590
        %v7174 = vunpack.c.l.b16 %v6591
        %v7175 = vunpack.c.l.b16 %v6592
        %v7176 = vunpack.c.l.b16 %v6593
        %v7177 = vunpack.c.l.b16 %v6594
        %v7178 = vunpack.c.l.b16 %v6595
        %v7179 = vunpack.c.l.b16 %v6596
        %v7180 = vunpack.c.l.b16 %v6597
        %v7181 = vunpack.c.l.b16 %v6598
        %v7182 = vunpack.c.l.b16 %v6599
        %v7183 = vunpack.c.l.b16 %v6600
        %v7184 = vunpack.c.l.b16 %v6601
        %v7185 = vunpack.c.l.b16 %v6602
        %v7186 = vunpack.c.l.b16 %v6603
        %v7187 = vunpack.c.l.b16 %v6604
        %v7188 = vunpack.c.l.b16 %v6605
        %v7189 = vunpack.c.l.b16 %v6606
        %v7190 = vunpack.c.l.b16 %v6607
        %v7191 = vunpack.c.l.b16 %v6608
        %v7192 = vunpack.c.l.b16 %v6609
        %v7193 = vunpack.c.l.b16 %v6610
        %v7194 = vunpack.c.l.b16 %v6611
        %v7195 = vunpack.c.l.b16 %v6612
        %v7196 = vunpack.c.l.b16 %v6613
        %v7197 = vunpack.c.l.b16 %v6614
        %v7198 = vunpack.c.l.b16 %v6615
        %v7199 = vunpack.c.l.b16 %v6616
        %v7200 = vunpack.c.l.b16 %v6617
        %v7201 = vunpack.c.l.b16 %v6618
        %v7202 = vunpack.c.l.b16 %v6619
        %v7203 = vunpack.c.l.b16 %v6620
        %v7204 = vunpack.c.l.b16 %v6621
        %v7205 = vunpack.c.l.b16 %v6622
        %v7206 = vunpack.c.l.b16 %v6623
        %v7207 = vunpack.c.l.b16 %v6624
        %v7208 = vunpack.c.l.b16 %v6625
        %v7209 = vunpack.c.l.b16 %v6626
        %v7210 = vunpack.c.l.b16 %v6627
        %v7211 = vunpack.c.l.b16 %v6628
        %v7212 = vunpack.c.l.b16 %v6629
        %v7213 = vunpack.c.l.b16 %v6630
        %v7214 = vunpack.c.l.b16 %v6631
        %v7215 = vunpack.c.l.b16 %v6632
        %v7216 = vunpack.c.l.b16 %v6633
        %v7217 = vunpack.c.l.b16 %v6634
        %v7218 = vunpack.c.l.b16 %v6635
        %v7219 = vunpack.c.l.b16 %v6636
        %v7220 = vunpack.c.l.b16 %v6637
        %v7221 = vunpack.c.l.b16 %v6638
        %v7222 = vunpack.c.l.b16 %v6639
        %v7223 = vunpack.c.l.b16 %v6640
        %v7224 = vunpack.c.l.b16 %v6641
        %v7225 = vunpack.c.l.b16 %v6642
        %v7226 = vunpack.c.l.b16 %v6643
        %v7227 = vunpack.c.l.b16 %v6644
        %v7228 = vunpack.c.l.b16 %v6645
        %v7229 = vunpack.c.l.b16 %v6646
        %v7230 = vunpack.c.l.b16 %v6647
        %v7231 = vunpack.c.l.b16 %v6648
        %v7232 = vunpack.c.l.b16 %v6649
        %v7233 = vunpack.c.l.b16 %v6650
        %v7234 = vunpack.c.l.b16 %v6651
        %v7235 = vunpack.c.l.b16 %v6652
        %v7236 = vunpack.c.l.b16 %v6653
        %v7237 = vunpack.c.l.b16 %v6654
        %v7238 = vunpack.c.l.b16 %v6655
        %v7239 = vunpack.c.l.b16 %v6656
        %v7240 = vunpack.c.l.b16 %v6657
        %v7241 = vunpack.c.l.b16 %v6658
        %v7242 = vunpack.c.l.b16 %v6659
        %v7243 = vunpack.c.l.b16 %v6660
        %v7244 = vunpack.c.l.b16 %v6661
        %v7245 = vunpack.c.l.b16 %v6662
        %v7246 = vunpack.c.l.b16 %v6663
        %v7247 = vunpack.c.l.b16 %v6664
        %v7248 = vunpack.c.l.b16 %v6665
        %v7249 = vunpack.c.l.b16 %v6666
        %v7250 = vunpack.c.l.b16 %v6667
        %v7251 = vunpack.c.l.b16 %v6668
        %v7252 = vunpack.c.l.b16 %v6669
        %v7253 = vunpack.c.l.b16 %v6670
        %v7254 = vunpack.c.l.b16 %v6671
        %v7255 = vunpack.c.l.b16 %v6672
        %v7256 = vunpack.c.l.b16 %v6673
        %v7257 = vunpack.c.l.b16 %v6674
        %v7258 = vunpack.c.l.b16 %v6675
        %v7259 = vunpack.c.l.b16 %v6676
        %v7260 = vunpack.c.l.b16 %v6677
        %v7261 = vunpack.c.l.b16 %v6678
        %v7262 = vunpack.c.l.b16 %v6679
        %v7263 = vunpack.c.l.b16 %v6680
        %v7264 = vunpack.c.l.b16 %v6681
        %v7265 = vunpack.c.l.b16 %v6682
        %v7266 = vunpack.c.l.b16 %v6683
        %v7267 = vunpack.c.l.b16 %v6684
        %v7268 = vunpack.c.l.b16 %v6685
        %v7269 = vunpack.c.l.b16 %v6686
        %v7270 = vunpack.c.l.b16 %v6687
        %v7271 = vunpack.c.l.b16 %v6688
        %v7272 = vunpack.c.l.b16 %v6689
        %v7273 = vunpack.c.l.b16 %v6690
        %v7274 = vunpack.c.l.b16 %v6691
        %v7275 = vunpack.c.l.b16 %v6692
        %v7276 = vunpack.c.l.b16 %v6693
        %v7277 = vunpack.c.l.b16 %v6694
        %v7278 = vunpack.c.l.b16 %v6695
        %v7279 = vunpack.c.l.b16 %v6696
        %v7280 = vunpack.c.l.b16 %v6697
        %v7281 = vunpack.c.l.b16 %v6698
        %v7282 = vunpack.c.l.b16 %v6699
        %v7283 = vunpack.c.l.b16 %v6700
        %v7284 = vunpack.c.l.b16 %v6701
        %v7285 = vunpack.c.l.b16 %v6702
        %v7286 = vunpack.c.l.b16 %v6703
        %v7287 = vunpack.c.l.b16 %v6704
        %v7288 = vunpack.c.l.b16 %v6705
        %v7289 = vunpack.c.l.b16 %v6706
        %v7290 = vunpack.c.l.b16 %v6707
        %v7291 = vunpack.c.l.b16 %v6708
        %v7292 = vunpack.c.l.b16 %v6709
        %v7293 = vunpack.c.l.b16 %v6710
        %v7294 = vunpack.c.l.b16 %v6711
        %v7295 = vunpack.c.l.b16 %v6712
        %v7296 = vunpack.c.l.b16 %v6713
        %v7297 = vunpack.c.l.b16 %v6714
        %v7298 = vunpack.c.l.b16 %v6715
        %v7299 = vunpack.c.l.b16 %v6716
        %v7300 = vunpack.c.l.b16 %v6717
        %v7301 = vunpack.c.l.b16 %v6718
        %v7302 = vunpack.c.l.b16 %v6719
        %v7303 = vunpack.c.l.b16 %v6720
        %v7304 = vunpack.c.l.b16 %v6721
        %v7305 = vunpack.c.l.b16 %v6722
        %v7306 = vunpack.c.l.b16 %v6723
        %v7307 = vunpack.c.l.b16 %v6724
        %v7308 = vunpack.c.l.b16 %v6725
        %v7309 = vunpack.c.l.b16 %v6726
        %v7310 = vunpack.c.l.b16 %v6727
        %v7311 = vunpack.c.l.b16 %v6728
        %v7312 = vunpack.c.l.b16 %v6729
        %v7313 = vunpack.c.l.b16 %v6730
        %v7314 = vunpack.c.l.b16 %v6731
        %v7315 = vunpack.c.l.b16 %v6732
        %v7316 = vunpack.c.l.b16 %v6733
        %v7317 = vunpack.c.l.b16 %v6734
        %v7318 = vunpack.c.l.b16 %v6735
        %v7319 = vunpack.c.l.b16 %v6736
        %v7320 = vunpack.c.l.b16 %v6737
        %v7321 = vunpack.c.l.b16 %v6738
        %v7322 = vunpack.c.l.b16 %v6739
        %v7323 = vunpack.c.l.b16 %v6740
        %v7324 = vunpack.c.l.b16 %v6741
        %v7325 = vunpack.c.l.b16 %v6742
        %v7326 = vunpack.c.l.b16 %v6743
        %v7327 = vunpack.c.l.b16 %v6744
        %v7328 = vunpack.c.l.b16 %v6745
        %v7329 = vunpack.c.l.b16 %v6746
        %v7330 = vunpack.c.l.b16 %v6747
        %v7331 = vunpack.c.l.b16 %v6748
        %v7332 = vunpack.c.l.b16 %v6749
        %v7333 = vunpack.c.l.b16 %v6750
        %v7334 = vunpack.c.l.b16 %v6751
        %v7335 = vunpack.c.l.b16 %v6752
        %v7336 = vunpack.c.l.b16 %v6753
        %v7337 = vunpack.c.l.b16 %v6754
        %v7338 = vunpack.c.l.b16 %v6755
        %v7339 = vunpack.c.l.b16 %v6756
        %v7340 = vunpack.c.l.b16 %v6757
        %v7341 = vunpack.c.l.b16 %v6758
        %v7342 = vunpack.c.l.b16 %v6759
        %v7343 = vunpack.c.l.b16 %v6760
        %v7344 = vunpack.c.l.b16 %v6761
        %v7345 = vunpack.c.l.b16 %v6762
        %v7346 = vunpack.c.l.b16 %v6763
        %v7347 = vunpack.c.l.b16 %v6764
        %v7348 = vunpack.c.l.b16 %v6765
        %v7349 = vunpack.c.l.b16 %v6766
        %v7350 = vunpack.c.l.b16 %v6767
        %v7351 = vunpack.c.l.b16 %v6768
        %v7352 = vunpack.c.l.b16 %v6769
        %v7353 = vunpack.c.l.b16 %v6770
        %v7354 = vunpack.c.l.b16 %v6771
        %v7355 = vunpack.c.l.b16 %v6772
        %v7356 = vunpack.c.l.b16 %v6773
        %v7357 = vunpack.c.l.b16 %v6774
        %v7358 = vunpack.c.l.b16 %v6775
        %v7359 = vunpack.c.l.b16 %v6776
        %v7360 = vunpack.c.l.b16 %v6777
        %v7361 = vunpack.c.l.b16 %v6778
        %v7362 = vunpack.c.l.b16 %v6779
        %v7363 = vunpack.c.l.b16 %v6780
        %v7364 = vunpack.c.l.b16 %v6781
        %v7365 = vunpack.c.l.b16 %v6782
        %v7366 = vunpack.c.l.b16 %v6783
        %v7367 = vunpack.c.l.b16 %v6784
        %v7368 = vunpack.c.l.b16 %v6785
        %v7369 = vunpack.c.l.b16 %v6786
        %v7370 = vunpack.c.l.b16 %v6787
        %v7371 = vunpack.c.l.b16 %v6788
        %v7372 = vunpack.c.l.b16 %v6789
        %v7373 = vunpack.c.l.b16 %v6790
        %v7374 = vunpack.c.l.b16 %v6791
        %v7375 = vunpack.c.l.b16 %v6792
        %v7376 = vunpack.c.l.b16 %v6793
        %v7377 = vunpack.c.l.b16 %v6794
        %v7378 = vunpack.c.l.b16 %v6795
        %v7379 = vunpack.c.l.b16 %v6796
        %v7380 = vunpack.c.l.b16 %v6797
        %v7381 = vunpack.c.l.b16 %v6798
        %v7382 = vunpack.c.l.b16 %v6799
        %v7383 = vunpack.c.l.b16 %v6800
        %v7384 = vunpack.c.l.b16 %v6801
        %v7385 = vunpack.c.l.b16 %v6802
        %v7386 = vunpack.c.l.b16 %v6803
        %v7387 = vunpack.c.l.b16 %v6804
        %v7388 = vunpack.c.l.b16 %v6805
        %v7389 = vunpack.c.l.b16 %v6806
        %v7390 = vunpack.c.l.b16 %v6807
        %v7391 = vunpack.c.l.b16 %v6808
        %v7392 = vunpack.c.l.b16 %v6809
        %v7393 = vunpack.c.l.b16 %v6810
        %v7394 = vunpack.c.l.b16 %v6811
        %v7395 = vunpack.c.l.b16 %v6812
        %v7396 = vunpack.c.l.b16 %v6813
        %v7397 = vunpack.c.l.b16 %v6814
        %v7398 = vunpack.c.l.b16 %v6815
        %v7399 = vunpack.c.l.b16 %v6816
        %v7400 = vunpack.c.l.b16 %v6817
        %v7401 = vunpack.c.l.b16 %v6818
        %v7402 = vunpack.c.l.b16 %v6819
        %v7403 = vunpack.c.l.b16 %v6820
        %v7404 = vunpack.c.l.b16 %v6821
        %v7405 = vpack.c.b16 %v7118, %v7117
        %v7406 = vpack.c.b16 %v7120, %v7119
        %v7407 = vpack.c.b16 %v7122, %v7121
        %v7408 = vpack.c.b16 %v7124, %v7123
        %v7409 = vpack.c.b16 %v7126, %v7125
        %v7410 = vpack.c.b16 %v7128, %v7127
        %v7411 = vpack.c.b16 %v7130, %v7129
        %v7412 = vpack.c.b16 %v7132, %v7131
        %v7413 = vpack.c.b16 %v7134, %v7133
        %v7414 = vpack.c.b16 %v7136, %v7135
        %v7415 = vpack.c.b16 %v7138, %v7137
        %v7416 = vpack.c.b16 %v7140, %v7139
        %v7417 = vpack.c.b16 %v7142, %v7141
        %v7418 = vpack.c.b16 %v7144, %v7143
        %v7419 = vpack.c.b16 %v7146, %v7145
        %v7420 = vpack.c.b16 %v7148, %v7147
        %v7421 = vpack.c.b16 %v7150, %v7149
        %v7422 = vpack.c.b16 %v7152, %v7151
        %v7423 = vpack.c.b16 %v7154, %v7153
        %v7424 = vpack.c.b16 %v7156, %v7155
        %v7425 = vpack.c.b16 %v7158, %v7157
        %v7426 = vpack.c.b16 %v7160, %v7159
        %v7427 = vpack.c.b16 %v7162, %v7161
        %v7428 = vpack.c.b16 %v7164, %v7163
        %v7429 = vpack.c.b16 %v7166, %v7165
        %v7430 = vpack.c.b16 %v7168, %v7167
        %v7431 = vpack.c.b16 %v7170, %v7169
        %v7432 = vpack.c.b16 %v7172, %v7171
        %v7433 = vpack.c.b16 %v7174, %v7173
        %v7434 = vpack.c.b16 %v7176, %v7175
        %v7435 = vpack.c.b16 %v7178, %v7177
        %v7436 = vpack.c.b16 %v7180, %v7179
        %v7437 = vpack.c.b16 %v7182, %v7181
        %v7438 = vpack.c.b16 %v7184, %v7183
        %v7439 = vpack.c.b16 %v7186, %v7185
        %v7440 = vpack.c.b16 %v7188, %v7187
        %v7441 = vpack.c.b16 %v7190, %v7189
        %v7442 = vpack.c.b16 %v7192, %v7191
        %v7443 = vpack.c.b16 %v7194, %v7193
        %v7444 = vpack.c.b16 %v7196, %v7195
        %v7445 = vpack.c.b16 %v7198, %v7197
        %v7446 = vpack.c.b16 %v7200, %v7199
        %v7447 = vpack.c.b16 %v7202, %v7201
        %v7448 = vpack.c.b16 %v7204, %v7203
        %v7449 = vpack.c.b16 %v7206, %v7205
        %v7450 = vpack.c.b16 %v7208, %v7207
        %v7451 = vpack.c.b16 %v7210, %v7209
        %v7452 = vpack.c.b16 %v7212, %v7211
        %v7453 = vpack.c.b16 %v7214, %v7213
        %v7454 = vpack.c.b16 %v7216, %v7215
        %v7455 = vpack.c.b16 %v7218, %v7217
        %v7456 = vpack.c.b16 %v7220, %v7219
        %v7457 = vpack.c.b16 %v7222, %v7221
        %v7458 = vpack.c.b16 %v7224, %v7223
        %v7459 = vpack.c.b16 %v7226, %v7225
        %v7460 = vpack.c.b16 %v7228, %v7227
        %v7461 = vpack.c.b16 %v7230, %v7229
        %v7462 = vpack.c.b16 %v7232, %v7231
        %v7463 = vpack.c.b16 %v7234, %v7233
        %v7464 = vpack.c.b16 %v7236, %v7235
        %v7465 = vpack.c.b16 %v7238, %v7237
        %v7466 = vpack.c.b16 %v7240, %v7239
        %v7467 = vpack.c.b16 %v7242, %v7241
        %v7468 = vpack.c.b16 %v7244, %v7243
        %v7469 = vpack.c.b16 %v7246, %v7245
        %v7470 = vpack.c.b16 %v7248, %v7247
        %v7471 = vpack.c.b16 %v7250, %v7249
        %v7472 = vpack.c.b16 %v7252, %v7251
        %v7473 = vpack.c.b16 %v7254, %v7253
        %v7474 = vpack.c.b16 %v7256, %v7255
        %v7475 = vpack.c.b16 %v7258, %v7257
        %v7476 = vpack.c.b16 %v7260, %v7259
        %v7477 = vpack.c.b16 %v7262, %v7261
        %v7478 = vpack.c.b16 %v7264, %v7263
        %v7479 = vpack.c.b16 %v7266, %v7265
        %v7480 = vpack.c.b16 %v7268, %v7267
        %v7481 = vpack.c.b16 %v7270, %v7269
        %v7482 = vpack.c.b16 %v7272, %v7271
        %v7483 = vpack.c.b16 %v7274, %v7273
        %v7484 = vpack.c.b16 %v7276, %v7275
        %v7485 = vpack.c.b16 %v7278, %v7277
        %v7486 = vpack.c.b16 %v7280, %v7279
        %v7487 = vpack.c.b16 %v7282, %v7281
        %v7488 = vpack.c.b16 %v7284, %v7283
        %v7489 = vpack.c.b16 %v7286, %v7285
        %v7490 = vpack.c.b16 %v7288, %v7287
        %v7491 = vpack.c.b16 %v7290, %v7289
        %v7492 = vpack.c.b16 %v7292, %v7291
        %v7493 = vpack.c.b16 %v7294, %v7293
        %v7494 = vpack.c.b16 %v7296, %v7295
        %v7495 = vpack.c.b16 %v7298, %v7297
        %v7496 = vpack.c.b16 %v7300, %v7299
        %v7497 = vpack.c.b16 %v7302, %v7301
        %v7498 = vpack.c.b16 %v7304, %v7303
        %v7499 = vpack.c.b16 %v7306, %v7305
        %v7500 = vpack.c.b16 %v7308, %v7307
        %v7501 = vpack.c.b16 %v7310, %v7309
        %v7502 = vpack.c.b16 %v7312, %v7311
        %v7503 = vpack.c.b16 %v7314, %v7313
        %v7504 = vpack.c.b16 %v7316, %v7315
        %v7505 = vpack.c.b16 %v7318, %v7317
        %v7506 = vpack.c.b16 %v7320, %v7319
        %v7507 = vpack.c.b16 %v7322, %v7321
        %v7508 = vpack.c.b16 %v7324, %v7323
        %v7509 = vpack.c.b16 %v7326, %v7325
        %v7510 = vpack.c.b16 %v7328, %v7327
        %v7511 = vpack.c.b16 %v7330, %v7329
        %v7512 = vpack.c.b16 %v7332, %v7331
        %v7513 = vpack.c.b16 %v7334, %v7333
        %v7514 = vpack.c.b16 %v7336, %v7335
        %v7515 = vpack.c.b16 %v7338, %v7337
        %v7516 = vpack.c.b16 %v7340, %v7339
        %v7517 = vpack.c.b16 %v7342, %v7341
        %v7518 = vpack.c.b16 %v7344, %v7343
        %v7519 = vpack.c.b16 %v7346, %v7345
        %v7520 = vpack.c.b16 %v7348, %v7347
        %v7521 = vpack.c.b16 %v7350, %v7349
        %v7522 = vpack.c.b16 %v7352, %v7351
        %v7523 = vpack.c.b16 %v7354, %v7353
        %v7524 = vpack.c.b16 %v7356, %v7355
        %v7525 = vpack.c.b16 %v7358, %v7357
        %v7526 = vpack.c.b16 %v7360, %v7359
        %v7527 = vpack.c.b16 %v7362, %v7361
        %v7528 = vpack.c.b16 %v7364, %v7363
        %v7529 = vpack.c.b16 %v7366, %v7365
        %v7530 = vpack.c.b16 %v7368, %v7367
        %v7531 = vpack.c.b16 %v7370, %v7369
        %v7532 = vpack.c.b16 %v7372, %v7371
        %v7533 = vpack.c.b16 %v7374, %v7373
        %v7534 = vpack.c.b16 %v7376, %v7375
        %v7535 = vpack.c.b16 %v7378, %v7377
        %v7536 = vpack.c.b16 %v7380, %v7379
        %v7537 = vpack.c.b16 %v7382, %v7381
        %v7538 = vpack.c.b16 %v7384, %v7383
        %v7539 = vpack.c.b16 %v7386, %v7385
        %v7540 = vpack.c.b16 %v7388, %v7387
        %v7541 = vpack.c.b16 %v7390, %v7389
        %v7542 = vpack.c.b16 %v7392, %v7391
        %v7543 = vpack.c.b16 %v7394, %v7393
        %v7544 = vpack.c.b16 %v7396, %v7395
        %v7545 = vpack.c.b16 %v7398, %v7397
        %v7546 = vpack.c.b16 %v7400, %v7399
        %v7547 = vpack.c.b16 %v7402, %v7401
        %v7548 = vpack.c.b16 %v7404, %v7403
        %7693 = vmatprep.subr.bf16.mxu0 0
        %7694 = vmatpush1.bf16.msra.mxu0 %v7405
        %7695 = vmatprep.subr.bf16.mxu0 0
        %7696 = vmatpush1.bf16.msra.mxu0 %v7406
        %7697 = vmatprep.subr.bf16.mxu0 0
        %7698 = vmatpush1.bf16.msra.mxu0 %v7407
        %7699 = vmatprep.subr.bf16.mxu0 0
        %7700 = vmatpush1.bf16.msra.mxu0 %v7408
        %7701 = vmatprep.subr.bf16.mxu0 0
        %7702 = vmatpush1.bf16.msra.mxu0 %v7409
        %7703 = vmatprep.subr.bf16.mxu0 0
        %7704 = vmatpush1.bf16.msra.mxu0 %v7410
        %7705 = vmatprep.subr.bf16.mxu0 0
        %7706 = vmatpush1.bf16.msra.mxu0 %v7411
        %7707 = vmatprep.subr.bf16.mxu0 0
        %7708 = vmatpush1.bf16.msra.mxu0 %v7412
        %7709 = vmatprep.subr.bf16.mxu0 0
        %7710 = vmatpush1.bf16.msra.mxu0 %v7413
        %7711 = vmatprep.subr.bf16.mxu0 0
        %7712 = vmatpush1.bf16.msra.mxu0 %v7414
        %7713 = vmatprep.subr.bf16.mxu0 0
        %7714 = vmatpush1.bf16.msra.mxu0 %v7415
        %7715 = vmatprep.subr.bf16.mxu0 0
        %7716 = vmatpush1.bf16.msra.mxu0 %v7416
        %7717 = vmatprep.subr.bf16.mxu0 0
        %7718 = vmatpush1.bf16.msra.mxu0 %v7417
        %7719 = vmatprep.subr.bf16.mxu0 0
        %7720 = vmatpush1.bf16.msra.mxu0 %v7418
        %7721 = vmatprep.subr.bf16.mxu0 0
        %7722 = vmatpush1.bf16.msra.mxu0 %v7419
        %7723 = vmatprep.subr.bf16.mxu0 0
        %7724 = vmatpush1.bf16.msra.mxu0 %v7420
        %7725 = vmatprep.mubr.bf16.mxu0 %v6247
        %7726 = vmatmul.mubr.bf16.gmra.mrb[0].mxu0 %v6246
        %v7727 = vpop.f32.mrb[0].mxu0
        %v7728 = vadd.f32 %v6827, %v7727
        %v7729 = vpop.f32.mrb[0].mxu0
        %v7730 = vpop.f32.mrb[0].mxu0
        %v7731 = vadd.f32 %v6827, %v7730
        %v7732 = vpop.f32.mrb[0].mxu0
        %7733 = vmatprep.mubr.bf16.mxu0 %v6265
        %7734 = vmatmul.mubr.bf16.gmra.mrb[0].mxu0 %v6264
        %v7735 = vpop.f32.mrb[0].mxu0
        %v7736 = vadd.f32 %v6827, %v7735
        %v7737 = vpop.f32.mrb[0].mxu0
        %v7738 = vpop.f32.mrb[0].mxu0
        %v7739 = vadd.f32 %v6827, %v7738
        %v7740 = vpop.f32.mrb[0].mxu0
        %7741 = vmatprep.mubr.bf16.mxu0 %v6283
        %7742 = vmatmul.mubr.bf16.gmra.mrb[0].mxu0 %v6282
        %v7743 = vpop.f32.mrb[0].mxu0
        %v7744 = vadd.f32 %v6827, %v7743
        %v7745 = vpop.f32.mrb[0].mxu0
        %v7746 = vpop.f32.mrb[0].mxu0
        %v7747 = vadd.f32 %v6827, %v7746
        %v7748 = vpop.f32.mrb[0].mxu0
        %7749 = vmatprep.mubr.bf16.mxu0 %v6301
        %7750 = vmatmul.mubr.bf16.gmra.mrb[0].mxu0 %v6300
        %v7751 = vpop.f32.mrb[0].mxu0
        %v7752 = vadd.f32 %v6827, %v7751
        %v7753 = vpop.f32.mrb[0].mxu0
        %v7754 = vpop.f32.mrb[0].mxu0
        %v7755 = vadd.f32 %v6827, %v7754
        %v7756 = vpop.f32.mrb[0].mxu0
        %7757 = vmatprep.mubr.bf16.mxu0 %v6319
        %7758 = vmatmul.mubr.bf16.gmra.mrb[0].mxu0 %v6318
        %v7759 = vpop.f32.mrb[0].mxu0
        %v7760 = vadd.f32 %v6827, %v7759
        %v7761 = vpop.f32.mrb[0].mxu0
        %v7762 = vpop.f32.mrb[0].mxu0
        %v7763 = vadd.f32 %v6827, %v7762
        %v7764 = vpop.f32.mrb[0].mxu0
        %7765 = vmatprep.mubr.bf16.mxu0 %v6337
        %7766 = vmatmul.mubr.bf16.gmra.mrb[0].mxu0 %v6336
        %v7767 = vpop.f32.mrb[0].mxu0
        %v7768 = vadd.f32 %v6827, %v7767
        %v7769 = vpop.f32.mrb[0].mxu0
        %v7770 = vpop.f32.mrb[0].mxu0
        %v7771 = vadd.f32 %v6827, %v7770
        %v7772 = vpop.f32.mrb[0].mxu0
        %7773 = vmatprep.mubr.bf16.mxu0 %v6355
        %7774 = vmatmul.mubr.bf16.gmra.mrb[0].mxu0 %v6354
        %v7775 = vpop.f32.mrb[0].mxu0
        %v7776 = vadd.f32 %v6827, %v7775
        %v7777 = vpop.f32.mrb[0].mxu0
        %v7778 = vpop.f32.mrb[0].mxu0
        %v7779 = vadd.f32 %v6827, %v7778
        %v7780 = vpop.f32.mrb[0].mxu0
        %7781 = vmatprep.mubr.bf16.mxu0 %v6373
        %7782 = vmatmul.mubr.bf16.gmra.mrb[0].mxu0 %v6372
        %v7783 = vpop.f32.mrb[0].mxu0
        %v7784 = vadd.f32 %v6827, %v7783
        %v7785 = vpop.f32.mrb[0].mxu0
        %v7786 = vpop.f32.mrb[0].mxu0
        %v7787 = vadd.f32 %v6827, %v7786
        %v7788 = vpop.f32.mrb[0].mxu0
        %7789 = vmatprep.mubr.bf16.mxu0 %v6391
        %7790 = vmatmul.mubr.bf16.gmra.mrb[0].mxu0 %v6390
        %v7791 = vpop.f32.mrb[0].mxu0
        %v7792 = vadd.f32 %v6827, %v7791
        %v7793 = vpop.f32.mrb[0].mxu0
        %v7794 = vpop.f32.mrb[0].mxu0
        %v7795 = vadd.f32 %v6827, %v7794
        %v7796 = vpop.f32.mrb[0].mxu0
        %7797 = vmatprep.mubr.bf16.mxu0 %v6409
        %7798 = vmatmul.mubr.bf16.gmra.mrb[0].mxu0 %v6408
        %v7799 = vpop.f32.mrb[0].mxu0
        %v7800 = vadd.f32 %v6827, %v7799
        %v7801 = vpop.f32.mrb[0].mxu0
        %v7802 = vpop.f32.mrb[0].mxu0
        %v7803 = vadd.f32 %v6827, %v7802
        %v7804 = vpop.f32.mrb[0].mxu0
        %7805 = vmatprep.mubr.bf16.mxu0 %v6427
        %7806 = vmatmul.mubr.bf16.gmra.mrb[0].mxu0 %v6426
        %v7807 = vpop.f32.mrb[0].mxu0
        %v7808 = vadd.f32 %v6827, %v7807
        %v7809 = vpop.f32.mrb[0].mxu0
        %v7810 = vpop.f32.mrb[0].mxu0
        %v7811 = vadd.f32 %v6827, %v7810
        %v7812 = vpop.f32.mrb[0].mxu0
        %7813 = vmatprep.mubr.bf16.mxu0 %v6445
        %7814 = vmatmul.mubr.bf16.gmra.mrb[0].mxu0 %v6444
        %v7815 = vpop.f32.mrb[0].mxu0
        %v7816 = vadd.f32 %v6827, %v7815
        %v7817 = vpop.f32.mrb[0].mxu0
        %v7818 = vpop.f32.mrb[0].mxu0
        %v7819 = vadd.f32 %v6827, %v7818
        %v7820 = vpop.f32.mrb[0].mxu0
        %7821 = vmatprep.mubr.bf16.mxu0 %v6463
        %7822 = vmatmul.mubr.bf16.gmra.mrb[0].mxu0 %v6462
        %v7823 = vpop.f32.mrb[0].mxu0
        %v7824 = vadd.f32 %v6827, %v7823
        %v7825 = vpop.f32.mrb[0].mxu0
        %v7826 = vpop.f32.mrb[0].mxu0
        %v7827 = vadd.f32 %v6827, %v7826
        %v7828 = vpop.f32.mrb[0].mxu0
        %7829 = vmatprep.mubr.bf16.mxu0 %v6481
        %7830 = vmatmul.mubr.bf16.gmra.mrb[0].mxu0 %v6480
        %v7831 = vpop.f32.mrb[0].mxu0
        %v7832 = vadd.f32 %v6827, %v7831
        %v7833 = vpop.f32.mrb[0].mxu0
        %v7834 = vpop.f32.mrb[0].mxu0
        %v7835 = vadd.f32 %v6827, %v7834
        %v7836 = vpop.f32.mrb[0].mxu0
        %7837 = vmatprep.mubr.bf16.mxu0 %v6499
        %7838 = vmatmul.mubr.bf16.gmra.mrb[0].mxu0 %v6498
        %v7839 = vpop.f32.mrb[0].mxu0
        %v7840 = vadd.f32 %v6827, %v7839
        %v7841 = vpop.f32.mrb[0].mxu0
        %v7842 = vpop.f32.mrb[0].mxu0
        %v7843 = vadd.f32 %v6827, %v7842
        %v7844 = vpop.f32.mrb[0].mxu0
        %7845 = vmatprep.mubr.bf16.mxu0 %v6517
        %7846 = vmatmul.mubr.bf16.gmra.mrb[0].mxu0 %v6516
        %v7847 = vpop.f32.mrb[0].mxu0
        %v7848 = vadd.f32 %v6827, %v7847
        %v7849 = vpop.f32.mrb[0].mxu0
        %v7850 = vpop.f32.mrb[0].mxu0
        %v7851 = vadd.f32 %v6827, %v7850
        %v7852 = vpop.f32.mrb[0].mxu0
        %7853 = vdwg.mxu0
        %7854 = vmatprep.subr.bf16.mxu0 0
        %7855 = vmatpush1.bf16.msra.mxu0 %v7421
        %7856 = vmatprep.subr.bf16.mxu0 0
        %7857 = vmatpush1.bf16.msra.mxu0 %v7422
        %7858 = vmatprep.subr.bf16.mxu0 0
        %7859 = vmatpush1.bf16.msra.mxu0 %v7423
        %7860 = vmatprep.subr.bf16.mxu0 0
        %7861 = vmatpush1.bf16.msra.mxu0 %v7424
        %7862 = vmatprep.subr.bf16.mxu0 0
        %7863 = vmatpush1.bf16.msra.mxu0 %v7425
        %7864 = vmatprep.subr.bf16.mxu0 0
        %7865 = vmatpush1.bf16.msra.mxu0 %v7426
        %7866 = vmatprep.subr.bf16.mxu0 0
        %7867 = vmatpush1.bf16.msra.mxu0 %v7427
        %7868 = vmatprep.subr.bf16.mxu0 0
        %7869 = vmatpush1.bf16.msra.mxu0 %v7428
        %7870 = vmatprep.subr.bf16.mxu0 0
        %7871 = vmatpush1.bf16.msra.mxu0 %v7429
        %7872 = vmatprep.subr.bf16.mxu0 0
        %7873 = vmatpush1.bf16.msra.mxu0 %v7430
        %7874 = vmatprep.subr.bf16.mxu0 0
        %7875 = vmatpush1.bf16.msra.mxu0 %v7431
        %7876 = vmatprep.subr.bf16.mxu0 0
        %7877 = vmatpush1.bf16.msra.mxu0 %v7432
        %7878 = vmatprep.subr.bf16.mxu0 0
        %7879 = vmatpush1.bf16.msra.mxu0 %v7433
        %7880 = vmatprep.subr.bf16.mxu0 0
        %7881 = vmatpush1.bf16.msra.mxu0 %v7434
        %7882 = vmatprep.subr.bf16.mxu0 0
        %7883 = vmatpush1.bf16.msra.mxu0 %v7435
        %7884 = vmatprep.subr.bf16.mxu0 0
        %7885 = vmatpush1.bf16.msra.mxu0 %v7436
        %7886 = vmatprep.mubr.bf16.mxu0 %v6249
        %7887 = vmatmul.mubr.bf16.gmra.mrb[0].mxu0 %v6248
        %v7888 = vpop.f32.mrb[0].mxu0
        %v7889 = vadd.f32 %v7728, %v7888
        %v7890 = vpop.f32.mrb[0].mxu0
        %v7891 = vpop.f32.mrb[0].mxu0
        %v7892 = vadd.f32 %v7731, %v7891
        %v7893 = vpop.f32.mrb[0].mxu0
        %7894 = vmatprep.mubr.bf16.mxu0 %v6267
        %7895 = vmatmul.mubr.bf16.gmra.mrb[0].mxu0 %v6266
        %v7896 = vpop.f32.mrb[0].mxu0
        %v7897 = vadd.f32 %v7736, %v7896
        %v7898 = vpop.f32.mrb[0].mxu0
        %v7899 = vpop.f32.mrb[0].mxu0
        %v7900 = vadd.f32 %v7739, %v7899
        %v7901 = vpop.f32.mrb[0].mxu0
        %7902 = vmatprep.mubr.bf16.mxu0 %v6285
        %7903 = vmatmul.mubr.bf16.gmra.mrb[0].mxu0 %v6284
        %v7904 = vpop.f32.mrb[0].mxu0
        %v7905 = vadd.f32 %v7744, %v7904
        %v7906 = vpop.f32.mrb[0].mxu0
        %v7907 = vpop.f32.mrb[0].mxu0
        %v7908 = vadd.f32 %v7747, %v7907
        %v7909 = vpop.f32.mrb[0].mxu0
        %7910 = vmatprep.mubr.bf16.mxu0 %v6303
        %7911 = vmatmul.mubr.bf16.gmra.mrb[0].mxu0 %v6302
        %v7912 = vpop.f32.mrb[0].mxu0
        %v7913 = vadd.f32 %v7752, %v7912
        %v7914 = vpop.f32.mrb[0].mxu0
        %v7915 = vpop.f32.mrb[0].mxu0
        %v7916 = vadd.f32 %v7755, %v7915
        %v7917 = vpop.f32.mrb[0].mxu0
        %7918 = vmatprep.mubr.bf16.mxu0 %v6321
        %7919 = vmatmul.mubr.bf16.gmra.mrb[0].mxu0 %v6320
        %v7920 = vpop.f32.mrb[0].mxu0
        %v7921 = vadd.f32 %v7760, %v7920
        %v7922 = vpop.f32.mrb[0].mxu0
        %v7923 = vpop.f32.mrb[0].mxu0
        %v7924 = vadd.f32 %v7763, %v7923
        %v7925 = vpop.f32.mrb[0].mxu0
        %7926 = vmatprep.mubr.bf16.mxu0 %v6339
        %7927 = vmatmul.mubr.bf16.gmra.mrb[0].mxu0 %v6338
        %v7928 = vpop.f32.mrb[0].mxu0
        %v7929 = vadd.f32 %v7768, %v7928
        %v7930 = vpop.f32.mrb[0].mxu0
        %v7931 = vpop.f32.mrb[0].mxu0
        %v7932 = vadd.f32 %v7771, %v7931
        %v7933 = vpop.f32.mrb[0].mxu0
        %7934 = vmatprep.mubr.bf16.mxu0 %v6357
        %7935 = vmatmul.mubr.bf16.gmra.mrb[0].mxu0 %v6356
        %v7936 = vpop.f32.mrb[0].mxu0
        %v7937 = vadd.f32 %v7776, %v7936
        %v7938 = vpop.f32.mrb[0].mxu0
        %v7939 = vpop.f32.mrb[0].mxu0
        %v7940 = vadd.f32 %v7779, %v7939
        %v7941 = vpop.f32.mrb[0].mxu0
        %7942 = vmatprep.mubr.bf16.mxu0 %v6375
        %7943 = vmatmul.mubr.bf16.gmra.mrb[0].mxu0 %v6374
        %v7944 = vpop.f32.mrb[0].mxu0
        %v7945 = vadd.f32 %v7784, %v7944
        %v7946 = vpop.f32.mrb[0].mxu0
        %v7947 = vpop.f32.mrb[0].mxu0
        %v7948 = vadd.f32 %v7787, %v7947
        %v7949 = vpop.f32.mrb[0].mxu0
        %7950 = vmatprep.mubr.bf16.mxu0 %v6393
        %7951 = vmatmul.mubr.bf16.gmra.mrb[0].mxu0 %v6392
        %v7952 = vpop.f32.mrb[0].mxu0
        %v7953 = vadd.f32 %v7792, %v7952
        %v7954 = vpop.f32.mrb[0].mxu0
        %v7955 = vpop.f32.mrb[0].mxu0
        %v7956 = vadd.f32 %v7795, %v7955
        %v7957 = vpop.f32.mrb[0].mxu0
        %7958 = vmatprep.mubr.bf16.mxu0 %v6411
        %7959 = vmatmul.mubr.bf16.gmra.mrb[0].mxu0 %v6410
        %v7960 = vpop.f32.mrb[0].mxu0
        %v7961 = vadd.f32 %v7800, %v7960
        %v7962 = vpop.f32.mrb[0].mxu0
        %v7963 = vpop.f32.mrb[0].mxu0
        %v7964 = vadd.f32 %v7803, %v7963
        %v7965 = vpop.f32.mrb[0].mxu0
        %7966 = vmatprep.mubr.bf16.mxu0 %v6429
        %7967 = vmatmul.mubr.bf16.gmra.mrb[0].mxu0 %v6428
        %v7968 = vpop.f32.mrb[0].mxu0
        %v7969 = vadd.f32 %v7808, %v7968
        %v7970 = vpop.f32.mrb[0].mxu0
        %v7971 = vpop.f32.mrb[0].mxu0
        %v7972 = vadd.f32 %v7811, %v7971
        %v7973 = vpop.f32.mrb[0].mxu0
        %7974 = vmatprep.mubr.bf16.mxu0 %v6447
        %7975 = vmatmul.mubr.bf16.gmra.mrb[0].mxu0 %v6446
        %v7976 = vpop.f32.mrb[0].mxu0
        %v7977 = vadd.f32 %v7816, %v7976
        %v7978 = vpop.f32.mrb[0].mxu0
        %v7979 = vpop.f32.mrb[0].mxu0
        %v7980 = vadd.f32 %v7819, %v7979
        %v7981 = vpop.f32.mrb[0].mxu0
        %7982 = vmatprep.mubr.bf16.mxu0 %v6465
        %7983 = vmatmul.mubr.bf16.gmra.mrb[0].mxu0 %v6464
        %v7984 = vpop.f32.mrb[0].mxu0
        %v7985 = vadd.f32 %v7824, %v7984
        %v7986 = vpop.f32.mrb[0].mxu0
        %v7987 = vpop.f32.mrb[0].mxu0
        %v7988 = vadd.f32 %v7827, %v7987
        %v7989 = vpop.f32.mrb[0].mxu0
        %7990 = vmatprep.mubr.bf16.mxu0 %v6483
        %7991 = vmatmul.mubr.bf16.gmra.mrb[0].mxu0 %v6482
        %v7992 = vpop.f32.mrb[0].mxu0
        %v7993 = vadd.f32 %v7832, %v7992
        %v7994 = vpop.f32.mrb[0].mxu0
        %v7995 = vpop.f32.mrb[0].mxu0
        %v7996 = vadd.f32 %v7835, %v7995
        %v7997 = vpop.f32.mrb[0].mxu0
        %7998 = vmatprep.mubr.bf16.mxu0 %v6501
        %7999 = vmatmul.mubr.bf16.gmra.mrb[0].mxu0 %v6500
        %v8000 = vpop.f32.mrb[0].mxu0
        %v8001 = vadd.f32 %v7840, %v8000
        %v8002 = vpop.f32.mrb[0].mxu0
        %v8003 = vpop.f32.mrb[0].mxu0
        %v8004 = vadd.f32 %v7843, %v8003
        %v8005 = vpop.f32.mrb[0].mxu0
        %8006 = vmatprep.mubr.bf16.mxu0 %v6519
        %8007 = vmatmul.mubr.bf16.gmra.mrb[0].mxu0 %v6518
        %v8008 = vpop.f32.mrb[0].mxu0
        %v8009 = vadd.f32 %v7848, %v8008
        %v8010 = vpop.f32.mrb[0].mxu0
        %v8011 = vpop.f32.mrb[0].mxu0
        %v8012 = vadd.f32 %v7851, %v8011
        %v8013 = vpop.f32.mrb[0].mxu0
        %8014 = vdwg.mxu0
        %8015 = vmatprep.subr.bf16.mxu0 0
        %8016 = vmatpush1.bf16.msra.mxu0 %v7437
        %8017 = vmatprep.subr.bf16.mxu0 0
        %8018 = vmatpush1.bf16.msra.mxu0 %v7438
        %8019 = vmatprep.subr.bf16.mxu0 0
        %8020 = vmatpush1.bf16.msra.mxu0 %v7439
        %8021 = vmatprep.subr.bf16.mxu0 0
        %8022 = vmatpush1.bf16.msra.mxu0 %v7440
        %8023 = vmatprep.subr.bf16.mxu0 0
        %8024 = vmatpush1.bf16.msra.mxu0 %v7441
        %8025 = vmatprep.subr.bf16.mxu0 0
        %8026 = vmatpush1.bf16.msra.mxu0 %v7442
        %8027 = vmatprep.subr.bf16.mxu0 0
        %8028 = vmatpush1.bf16.msra.mxu0 %v7443
        %8029 = vmatprep.subr.bf16.mxu0 0
        %8030 = vmatpush1.bf16.msra.mxu0 %v7444
        %8031 = vmatprep.subr.bf16.mxu0 0
        %8032 = vmatpush1.bf16.msra.mxu0 %v7445
        %8033 = vmatprep.subr.bf16.mxu0 0
        %8034 = vmatpush1.bf16.msra.mxu0 %v7446
        %8035 = vmatprep.subr.bf16.mxu0 0
        %8036 = vmatpush1.bf16.msra.mxu0 %v7447
        %8037 = vmatprep.subr.bf16.mxu0 0
        %8038 = vmatpush1.bf16.msra.mxu0 %v7448
        %8039 = vmatprep.subr.bf16.mxu0 0
        %8040 = vmatpush1.bf16.msra.mxu0 %v7449
        %8041 = vmatprep.subr.bf16.mxu0 0
        %8042 = vmatpush1.bf16.msra.mxu0 %v7450
        %8043 = vmatprep.subr.bf16.mxu0 0
        %8044 = vmatpush1.bf16.msra.mxu0 %v7451
        %8045 = vmatprep.subr.bf16.mxu0 0
        %8046 = vmatpush1.bf16.msra.mxu0 %v7452
        %8047 = vmatprep.mubr.bf16.mxu0 %v6251
        %8048 = vmatmul.mubr.bf16.gmra.mrb[0].mxu0 %v6250
        %v8049 = vpop.f32.mrb[0].mxu0
        %v8050 = vadd.f32 %v7889, %v8049
        %v8051 = vpop.f32.mrb[0].mxu0
        %v8052 = vpop.f32.mrb[0].mxu0
        %v8053 = vadd.f32 %v7892, %v8052
        %v8054 = vpop.f32.mrb[0].mxu0
        %8055 = vmatprep.mubr.bf16.mxu0 %v6269
        %8056 = vmatmul.mubr.bf16.gmra.mrb[0].mxu0 %v6268
        %v8057 = vpop.f32.mrb[0].mxu0
        %v8058 = vadd.f32 %v7897, %v8057
        %v8059 = vpop.f32.mrb[0].mxu0
        %v8060 = vpop.f32.mrb[0].mxu0
        %v8061 = vadd.f32 %v7900, %v8060
        %v8062 = vpop.f32.mrb[0].mxu0
        %8063 = vmatprep.mubr.bf16.mxu0 %v6287
        %8064 = vmatmul.mubr.bf16.gmra.mrb[0].mxu0 %v6286
        %v8065 = vpop.f32.mrb[0].mxu0
        %v8066 = vadd.f32 %v7905, %v8065
        %v8067 = vpop.f32.mrb[0].mxu0
        %v8068 = vpop.f32.mrb[0].mxu0
        %v8069 = vadd.f32 %v7908, %v8068
        %v8070 = vpop.f32.mrb[0].mxu0
        %8071 = vmatprep.mubr.bf16.mxu0 %v6305
        %8072 = vmatmul.mubr.bf16.gmra.mrb[0].mxu0 %v6304
        %v8073 = vpop.f32.mrb[0].mxu0
        %v8074 = vadd.f32 %v7913, %v8073
        %v8075 = vpop.f32.mrb[0].mxu0
        %v8076 = vpop.f32.mrb[0].mxu0
        %v8077 = vadd.f32 %v7916, %v8076
        %v8078 = vpop.f32.mrb[0].mxu0
        %8079 = vmatprep.mubr.bf16.mxu0 %v6323
        %8080 = vmatmul.mubr.bf16.gmra.mrb[0].mxu0 %v6322
        %v8081 = vpop.f32.mrb[0].mxu0
        %v8082 = vadd.f32 %v7921, %v8081
        %v8083 = vpop.f32.mrb[0].mxu0
        %v8084 = vpop.f32.mrb[0].mxu0
        %v8085 = vadd.f32 %v7924, %v8084
        %v8086 = vpop.f32.mrb[0].mxu0
        %8087 = vmatprep.mubr.bf16.mxu0 %v6341
        %8088 = vmatmul.mubr.bf16.gmra.mrb[0].mxu0 %v6340
        %v8089 = vpop.f32.mrb[0].mxu0
        %v8090 = vadd.f32 %v7929, %v8089
        %v8091 = vpop.f32.mrb[0].mxu0
        %v8092 = vpop.f32.mrb[0].mxu0
        %v8093 = vadd.f32 %v7932, %v8092
        %v8094 = vpop.f32.mrb[0].mxu0
        %8095 = vmatprep.mubr.bf16.mxu0 %v6359
        %8096 = vmatmul.mubr.bf16.gmra.mrb[0].mxu0 %v6358
        %v8097 = vpop.f32.mrb[0].mxu0
        %v8098 = vadd.f32 %v7937, %v8097
        %v8099 = vpop.f32.mrb[0].mxu0
        %v8100 = vpop.f32.mrb[0].mxu0
        %v8101 = vadd.f32 %v7940, %v8100
        %v8102 = vpop.f32.mrb[0].mxu0
        %8103 = vmatprep.mubr.bf16.mxu0 %v6377
        %8104 = vmatmul.mubr.bf16.gmra.mrb[0].mxu0 %v6376
        %v8105 = vpop.f32.mrb[0].mxu0
        %v8106 = vadd.f32 %v7945, %v8105
        %v8107 = vpop.f32.mrb[0].mxu0
        %v8108 = vpop.f32.mrb[0].mxu0
        %v8109 = vadd.f32 %v7948, %v8108
        %v8110 = vpop.f32.mrb[0].mxu0
        %8111 = vmatprep.mubr.bf16.mxu0 %v6395
        %8112 = vmatmul.mubr.bf16.gmra.mrb[0].mxu0 %v6394
        %v8113 = vpop.f32.mrb[0].mxu0
        %v8114 = vadd.f32 %v7953, %v8113
        %v8115 = vpop.f32.mrb[0].mxu0
        %v8116 = vpop.f32.mrb[0].mxu0
        %v8117 = vadd.f32 %v7956, %v8116
        %v8118 = vpop.f32.mrb[0].mxu0
        %8119 = vmatprep.mubr.bf16.mxu0 %v6413
        %8120 = vmatmul.mubr.bf16.gmra.mrb[0].mxu0 %v6412
        %v8121 = vpop.f32.mrb[0].mxu0
        %v8122 = vadd.f32 %v7961, %v8121
        %v8123 = vpop.f32.mrb[0].mxu0
        %v8124 = vpop.f32.mrb[0].mxu0
        %v8125 = vadd.f32 %v7964, %v8124
        %v8126 = vpop.f32.mrb[0].mxu0
        %8127 = vmatprep.mubr.bf16.mxu0 %v6431
        %8128 = vmatmul.mubr.bf16.gmra.mrb[0].mxu0 %v6430
        %v8129 = vpop.f32.mrb[0].mxu0
        %v8130 = vadd.f32 %v7969, %v8129
        %v8131 = vpop.f32.mrb[0].mxu0
        %v8132 = vpop.f32.mrb[0].mxu0
        %v8133 = vadd.f32 %v7972, %v8132
        %v8134 = vpop.f32.mrb[0].mxu0
        %8135 = vmatprep.mubr.bf16.mxu0 %v6449
        %8136 = vmatmul.mubr.bf16.gmra.mrb[0].mxu0 %v6448
        %v8137 = vpop.f32.mrb[0].mxu0
        %v8138 = vadd.f32 %v7977, %v8137
        %v8139 = vpop.f32.mrb[0].mxu0
        %v8140 = vpop.f32.mrb[0].mxu0
        %v8141 = vadd.f32 %v7980, %v8140
        %v8142 = vpop.f32.mrb[0].mxu0
        %8143 = vmatprep.mubr.bf16.mxu0 %v6467
        %8144 = vmatmul.mubr.bf16.gmra.mrb[0].mxu0 %v6466
        %v8145 = vpop.f32.mrb[0].mxu0
        %v8146 = vadd.f32 %v7985, %v8145
        %v8147 = vpop.f32.mrb[0].mxu0
        %v8148 = vpop.f32.mrb[0].mxu0
        %v8149 = vadd.f32 %v7988, %v8148
        %v8150 = vpop.f32.mrb[0].mxu0
        %8151 = vmatprep.mubr.bf16.mxu0 %v6485
        %8152 = vmatmul.mubr.bf16.gmra.mrb[0].mxu0 %v6484
        %v8153 = vpop.f32.mrb[0].mxu0
        %v8154 = vadd.f32 %v7993, %v8153
        %v8155 = vpop.f32.mrb[0].mxu0
        %v8156 = vpop.f32.mrb[0].mxu0
        %v8157 = vadd.f32 %v7996, %v8156
        %v8158 = vpop.f32.mrb[0].mxu0
        %8159 = vmatprep.mubr.bf16.mxu0 %v6503
        %8160 = vmatmul.mubr.bf16.gmra.mrb[0].mxu0 %v6502
        %v8161 = vpop.f32.mrb[0].mxu0
        %v8162 = vadd.f32 %v8001, %v8161
        %v8163 = vpop.f32.mrb[0].mxu0
        %v8164 = vpop.f32.mrb[0].mxu0
        %v8165 = vadd.f32 %v8004, %v8164
        %v8166 = vpop.f32.mrb[0].mxu0
        %8167 = vmatprep.mubr.bf16.mxu0 %v6521
        %8168 = vmatmul.mubr.bf16.gmra.mrb[0].mxu0 %v6520
        %v8169 = vpop.f32.mrb[0].mxu0
        %v8170 = vadd.f32 %v8009, %v8169
        %v8171 = vpop.f32.mrb[0].mxu0
        %v8172 = vpop.f32.mrb[0].mxu0
        %v8173 = vadd.f32 %v8012, %v8172
        %v8174 = vpop.f32.mrb[0].mxu0
        %8175 = vdwg.mxu0
        %8176 = vmatprep.subr.bf16.mxu0 0
        %8177 = vmatpush1.bf16.msra.mxu0 %v7453
        %8178 = vmatprep.subr.bf16.mxu0 0
        %8179 = vmatpush1.bf16.msra.mxu0 %v7454
        %8180 = vmatprep.subr.bf16.mxu0 0
        %8181 = vmatpush1.bf16.msra.mxu0 %v7455
        %8182 = vmatprep.subr.bf16.mxu0 0
        %8183 = vmatpush1.bf16.msra.mxu0 %v7456
        %8184 = vmatprep.subr.bf16.mxu0 0
        %8185 = vmatpush1.bf16.msra.mxu0 %v7457
        %8186 = vmatprep.subr.bf16.mxu0 0
        %8187 = vmatpush1.bf16.msra.mxu0 %v7458
        %8188 = vmatprep.subr.bf16.mxu0 0
        %8189 = vmatpush1.bf16.msra.mxu0 %v7459
        %8190 = vmatprep.subr.bf16.mxu0 0
        %8191 = vmatpush1.bf16.msra.mxu0 %v7460
        %8192 = vmatprep.subr.bf16.mxu0 0
        %8193 = vmatpush1.bf16.msra.mxu0 %v7461
        %8194 = vmatprep.subr.bf16.mxu0 0
        %8195 = vmatpush1.bf16.msra.mxu0 %v7462
        %8196 = vmatprep.subr.bf16.mxu0 0
        %8197 = vmatpush1.bf16.msra.mxu0 %v7463
        %8198 = vmatprep.subr.bf16.mxu0 0
        %8199 = vmatpush1.bf16.msra.mxu0 %v7464
        %8200 = vmatprep.subr.bf16.mxu0 0
        %8201 = vmatpush1.bf16.msra.mxu0 %v7465
        %8202 = vmatprep.subr.bf16.mxu0 0
        %8203 = vmatpush1.bf16.msra.mxu0 %v7466
        %8204 = vmatprep.subr.bf16.mxu0 0
        %8205 = vmatpush1.bf16.msra.mxu0 %v7467
        %8206 = vmatprep.subr.bf16.mxu0 0
        %8207 = vmatpush1.bf16.msra.mxu0 %v7468
        %8208 = vmatprep.mubr.bf16.mxu0 %v6253
        %8209 = vmatmul.mubr.bf16.gmra.mrb[0].mxu0 %v6252
        %v8210 = vpop.f32.mrb[0].mxu0
        %v8211 = vadd.f32 %v8050, %v8210
        %v8212 = vpop.f32.mrb[0].mxu0
        %v8213 = vpop.f32.mrb[0].mxu0
        %v8214 = vadd.f32 %v8053, %v8213
        %v8215 = vpop.f32.mrb[0].mxu0
        %8216 = vmatprep.mubr.bf16.mxu0 %v6271
        %8217 = vmatmul.mubr.bf16.gmra.mrb[0].mxu0 %v6270
        %v8218 = vpop.f32.mrb[0].mxu0
        %v8219 = vadd.f32 %v8058, %v8218
        %v8220 = vpop.f32.mrb[0].mxu0
        %v8221 = vpop.f32.mrb[0].mxu0
        %v8222 = vadd.f32 %v8061, %v8221
        %v8223 = vpop.f32.mrb[0].mxu0
        %8224 = vmatprep.mubr.bf16.mxu0 %v6289
        %8225 = vmatmul.mubr.bf16.gmra.mrb[0].mxu0 %v6288
        %v8226 = vpop.f32.mrb[0].mxu0
        %v8227 = vadd.f32 %v8066, %v8226
        %v8228 = vpop.f32.mrb[0].mxu0
        %v8229 = vpop.f32.mrb[0].mxu0
        %v8230 = vadd.f32 %v8069, %v8229
        %v8231 = vpop.f32.mrb[0].mxu0
        %8232 = vmatprep.mubr.bf16.mxu0 %v6307
        %8233 = vmatmul.mubr.bf16.gmra.mrb[0].mxu0 %v6306
        %v8234 = vpop.f32.mrb[0].mxu0
        %v8235 = vadd.f32 %v8074, %v8234
        %v8236 = vpop.f32.mrb[0].mxu0
        %v8237 = vpop.f32.mrb[0].mxu0
        %v8238 = vadd.f32 %v8077, %v8237
        %v8239 = vpop.f32.mrb[0].mxu0
        %8240 = vmatprep.mubr.bf16.mxu0 %v6325
        %8241 = vmatmul.mubr.bf16.gmra.mrb[0].mxu0 %v6324
        %v8242 = vpop.f32.mrb[0].mxu0
        %v8243 = vadd.f32 %v8082, %v8242
        %v8244 = vpop.f32.mrb[0].mxu0
        %v8245 = vpop.f32.mrb[0].mxu0
        %v8246 = vadd.f32 %v8085, %v8245
        %v8247 = vpop.f32.mrb[0].mxu0
        %8248 = vmatprep.mubr.bf16.mxu0 %v6343
        %8249 = vmatmul.mubr.bf16.gmra.mrb[0].mxu0 %v6342
        %v8250 = vpop.f32.mrb[0].mxu0
        %v8251 = vadd.f32 %v8090, %v8250
        %v8252 = vpop.f32.mrb[0].mxu0
        %v8253 = vpop.f32.mrb[0].mxu0
        %v8254 = vadd.f32 %v8093, %v8253
        %v8255 = vpop.f32.mrb[0].mxu0
        %8256 = vmatprep.mubr.bf16.mxu0 %v6361
        %8257 = vmatmul.mubr.bf16.gmra.mrb[0].mxu0 %v6360
        %v8258 = vpop.f32.mrb[0].mxu0
        %v8259 = vadd.f32 %v8098, %v8258
        %v8260 = vpop.f32.mrb[0].mxu0
        %v8261 = vpop.f32.mrb[0].mxu0
        %v8262 = vadd.f32 %v8101, %v8261
        %v8263 = vpop.f32.mrb[0].mxu0
        %8264 = vmatprep.mubr.bf16.mxu0 %v6379
        %8265 = vmatmul.mubr.bf16.gmra.mrb[0].mxu0 %v6378
        %v8266 = vpop.f32.mrb[0].mxu0
        %v8267 = vadd.f32 %v8106, %v8266
        %v8268 = vpop.f32.mrb[0].mxu0
        %v8269 = vpop.f32.mrb[0].mxu0
        %v8270 = vadd.f32 %v8109, %v8269
        %v8271 = vpop.f32.mrb[0].mxu0
        %8272 = vmatprep.mubr.bf16.mxu0 %v6397
        %8273 = vmatmul.mubr.bf16.gmra.mrb[0].mxu0 %v6396
        %v8274 = vpop.f32.mrb[0].mxu0
        %v8275 = vadd.f32 %v8114, %v8274
        %v8276 = vpop.f32.mrb[0].mxu0
        %v8277 = vpop.f32.mrb[0].mxu0
        %v8278 = vadd.f32 %v8117, %v8277
        %v8279 = vpop.f32.mrb[0].mxu0
        %8280 = vmatprep.mubr.bf16.mxu0 %v6415
        %8281 = vmatmul.mubr.bf16.gmra.mrb[0].mxu0 %v6414
        %v8282 = vpop.f32.mrb[0].mxu0
        %v8283 = vadd.f32 %v8122, %v8282
        %v8284 = vpop.f32.mrb[0].mxu0
        %v8285 = vpop.f32.mrb[0].mxu0
        %v8286 = vadd.f32 %v8125, %v8285
        %v8287 = vpop.f32.mrb[0].mxu0
        %8288 = vmatprep.mubr.bf16.mxu0 %v6433
        %8289 = vmatmul.mubr.bf16.gmra.mrb[0].mxu0 %v6432
        %v8290 = vpop.f32.mrb[0].mxu0
        %v8291 = vadd.f32 %v8130, %v8290
        %v8292 = vpop.f32.mrb[0].mxu0
        %v8293 = vpop.f32.mrb[0].mxu0
        %v8294 = vadd.f32 %v8133, %v8293
        %v8295 = vpop.f32.mrb[0].mxu0
        %8296 = vmatprep.mubr.bf16.mxu0 %v6451
        %8297 = vmatmul.mubr.bf16.gmra.mrb[0].mxu0 %v6450
        %v8298 = vpop.f32.mrb[0].mxu0
        %v8299 = vadd.f32 %v8138, %v8298
        %v8300 = vpop.f32.mrb[0].mxu0
        %v8301 = vpop.f32.mrb[0].mxu0
        %v8302 = vadd.f32 %v8141, %v8301
        %v8303 = vpop.f32.mrb[0].mxu0
        %8304 = vmatprep.mubr.bf16.mxu0 %v6469
        %8305 = vmatmul.mubr.bf16.gmra.mrb[0].mxu0 %v6468
        %v8306 = vpop.f32.mrb[0].mxu0
        %v8307 = vadd.f32 %v8146, %v8306
        %v8308 = vpop.f32.mrb[0].mxu0
        %v8309 = vpop.f32.mrb[0].mxu0
        %v8310 = vadd.f32 %v8149, %v8309
        %v8311 = vpop.f32.mrb[0].mxu0
        %8312 = vmatprep.mubr.bf16.mxu0 %v6487
        %8313 = vmatmul.mubr.bf16.gmra.mrb[0].mxu0 %v6486
        %v8314 = vpop.f32.mrb[0].mxu0
        %v8315 = vadd.f32 %v8154, %v8314
        %v8316 = vpop.f32.mrb[0].mxu0
        %v8317 = vpop.f32.mrb[0].mxu0
        %v8318 = vadd.f32 %v8157, %v8317
        %v8319 = vpop.f32.mrb[0].mxu0
        %8320 = vmatprep.mubr.bf16.mxu0 %v6505
        %8321 = vmatmul.mubr.bf16.gmra.mrb[0].mxu0 %v6504
        %v8322 = vpop.f32.mrb[0].mxu0
        %v8323 = vadd.f32 %v8162, %v8322
        %v8324 = vpop.f32.mrb[0].mxu0
        %v8325 = vpop.f32.mrb[0].mxu0
        %v8326 = vadd.f32 %v8165, %v8325
        %v8327 = vpop.f32.mrb[0].mxu0
        %8328 = vmatprep.mubr.bf16.mxu0 %v6523
        %8329 = vmatmul.mubr.bf16.gmra.mrb[0].mxu0 %v6522
        %v8330 = vpop.f32.mrb[0].mxu0
        %v8331 = vadd.f32 %v8170, %v8330
        %v8332 = vpop.f32.mrb[0].mxu0
        %v8333 = vpop.f32.mrb[0].mxu0
        %v8334 = vadd.f32 %v8173, %v8333
        %v8335 = vpop.f32.mrb[0].mxu0
        %8336 = vdwg.mxu0
        %8337 = vmatprep.subr.bf16.mxu0 0
        %8338 = vmatpush1.bf16.msra.mxu0 %v7469
        %8339 = vmatprep.subr.bf16.mxu0 0
        %8340 = vmatpush1.bf16.msra.mxu0 %v7470
        %8341 = vmatprep.subr.bf16.mxu0 0
        %8342 = vmatpush1.bf16.msra.mxu0 %v7471
        %8343 = vmatprep.subr.bf16.mxu0 0
        %8344 = vmatpush1.bf16.msra.mxu0 %v7472
        %8345 = vmatprep.subr.bf16.mxu0 0
        %8346 = vmatpush1.bf16.msra.mxu0 %v7473
        %8347 = vmatprep.subr.bf16.mxu0 0
        %8348 = vmatpush1.bf16.msra.mxu0 %v7474
        %8349 = vmatprep.subr.bf16.mxu0 0
        %8350 = vmatpush1.bf16.msra.mxu0 %v7475
        %8351 = vmatprep.subr.bf16.mxu0 0
        %8352 = vmatpush1.bf16.msra.mxu0 %v7476
        %8353 = vmatprep.subr.bf16.mxu0 0
        %8354 = vmatpush1.bf16.msra.mxu0 %v7477
        %8355 = vmatprep.subr.bf16.mxu0 0
        %8356 = vmatpush1.bf16.msra.mxu0 %v7478
        %8357 = vmatprep.subr.bf16.mxu0 0
        %8358 = vmatpush1.bf16.msra.mxu0 %v7479
        %8359 = vmatprep.subr.bf16.mxu0 0
        %8360 = vmatpush1.bf16.msra.mxu0 %v7480
        %8361 = vmatprep.subr.bf16.mxu0 0
        %8362 = vmatpush1.bf16.msra.mxu0 %v7481
        %8363 = vmatprep.subr.bf16.mxu0 0
        %8364 = vmatpush1.bf16.msra.mxu0 %v7482
        %8365 = vmatprep.subr.bf16.mxu0 0
        %8366 = vmatpush1.bf16.msra.mxu0 %v7483
        %8367 = vmatprep.subr.bf16.mxu0 0
        %8368 = vmatpush1.bf16.msra.mxu0 %v7484
        %8369 = vmatprep.mubr.bf16.mxu0 %v6255
        %8370 = vmatmul.mubr.bf16.gmra.mrb[0].mxu0 %v6254
        %v8371 = vpop.f32.mrb[0].mxu0
        %v8372 = vadd.f32 %v8211, %v8371
        %v8373 = vpop.f32.mrb[0].mxu0
        %v8374 = vpop.f32.mrb[0].mxu0
        %v8375 = vadd.f32 %v8214, %v8374
        %v8376 = vpop.f32.mrb[0].mxu0
        %8377 = vmatprep.mubr.bf16.mxu0 %v6273
        %8378 = vmatmul.mubr.bf16.gmra.mrb[0].mxu0 %v6272
        %v8379 = vpop.f32.mrb[0].mxu0
        %v8380 = vadd.f32 %v8219, %v8379
        %v8381 = vpop.f32.mrb[0].mxu0
        %v8382 = vpop.f32.mrb[0].mxu0
        %v8383 = vadd.f32 %v8222, %v8382
        %v8384 = vpop.f32.mrb[0].mxu0
        %8385 = vmatprep.mubr.bf16.mxu0 %v6291
        %8386 = vmatmul.mubr.bf16.gmra.mrb[0].mxu0 %v6290
        %v8387 = vpop.f32.mrb[0].mxu0
        %v8388 = vadd.f32 %v8227, %v8387
        %v8389 = vpop.f32.mrb[0].mxu0
        %v8390 = vpop.f32.mrb[0].mxu0
        %v8391 = vadd.f32 %v8230, %v8390
        %v8392 = vpop.f32.mrb[0].mxu0
        %8393 = vmatprep.mubr.bf16.mxu0 %v6309
        %8394 = vmatmul.mubr.bf16.gmra.mrb[0].mxu0 %v6308
        %v8395 = vpop.f32.mrb[0].mxu0
        %v8396 = vadd.f32 %v8235, %v8395
        %v8397 = vpop.f32.mrb[0].mxu0
        %v8398 = vpop.f32.mrb[0].mxu0
        %v8399 = vadd.f32 %v8238, %v8398
        %v8400 = vpop.f32.mrb[0].mxu0
        %8401 = vmatprep.mubr.bf16.mxu0 %v6327
        %8402 = vmatmul.mubr.bf16.gmra.mrb[0].mxu0 %v6326
        %v8403 = vpop.f32.mrb[0].mxu0
        %v8404 = vadd.f32 %v8243, %v8403
        %v8405 = vpop.f32.mrb[0].mxu0
        %v8406 = vpop.f32.mrb[0].mxu0
        %v8407 = vadd.f32 %v8246, %v8406
        %v8408 = vpop.f32.mrb[0].mxu0
        %8409 = vmatprep.mubr.bf16.mxu0 %v6345
        %8410 = vmatmul.mubr.bf16.gmra.mrb[0].mxu0 %v6344
        %v8411 = vpop.f32.mrb[0].mxu0
        %v8412 = vadd.f32 %v8251, %v8411
        %v8413 = vpop.f32.mrb[0].mxu0
        %v8414 = vpop.f32.mrb[0].mxu0
        %v8415 = vadd.f32 %v8254, %v8414
        %v8416 = vpop.f32.mrb[0].mxu0
        %8417 = vmatprep.mubr.bf16.mxu0 %v6363
        %8418 = vmatmul.mubr.bf16.gmra.mrb[0].mxu0 %v6362
        %v8419 = vpop.f32.mrb[0].mxu0
        %v8420 = vadd.f32 %v8259, %v8419
        %v8421 = vpop.f32.mrb[0].mxu0
        %v8422 = vpop.f32.mrb[0].mxu0
        %v8423 = vadd.f32 %v8262, %v8422
        %v8424 = vpop.f32.mrb[0].mxu0
        %8425 = vmatprep.mubr.bf16.mxu0 %v6381
        %8426 = vmatmul.mubr.bf16.gmra.mrb[0].mxu0 %v6380
        %v8427 = vpop.f32.mrb[0].mxu0
        %v8428 = vadd.f32 %v8267, %v8427
        %v8429 = vpop.f32.mrb[0].mxu0
        %v8430 = vpop.f32.mrb[0].mxu0
        %v8431 = vadd.f32 %v8270, %v8430
        %v8432 = vpop.f32.mrb[0].mxu0
        %8433 = vmatprep.mubr.bf16.mxu0 %v6399
        %8434 = vmatmul.mubr.bf16.gmra.mrb[0].mxu0 %v6398
        %v8435 = vpop.f32.mrb[0].mxu0
        %v8436 = vadd.f32 %v8275, %v8435
        %v8437 = vpop.f32.mrb[0].mxu0
        %v8438 = vpop.f32.mrb[0].mxu0
        %v8439 = vadd.f32 %v8278, %v8438
        %v8440 = vpop.f32.mrb[0].mxu0
        %8441 = vmatprep.mubr.bf16.mxu0 %v6417
        %8442 = vmatmul.mubr.bf16.gmra.mrb[0].mxu0 %v6416
        %v8443 = vpop.f32.mrb[0].mxu0
        %v8444 = vadd.f32 %v8283, %v8443
        %v8445 = vpop.f32.mrb[0].mxu0
        %v8446 = vpop.f32.mrb[0].mxu0
        %v8447 = vadd.f32 %v8286, %v8446
        %v8448 = vpop.f32.mrb[0].mxu0
        %8449 = vmatprep.mubr.bf16.mxu0 %v6435
        %8450 = vmatmul.mubr.bf16.gmra.mrb[0].mxu0 %v6434
        %v8451 = vpop.f32.mrb[0].mxu0
        %v8452 = vadd.f32 %v8291, %v8451
        %v8453 = vpop.f32.mrb[0].mxu0
        %v8454 = vpop.f32.mrb[0].mxu0
        %v8455 = vadd.f32 %v8294, %v8454
        %v8456 = vpop.f32.mrb[0].mxu0
        %8457 = vmatprep.mubr.bf16.mxu0 %v6453
        %8458 = vmatmul.mubr.bf16.gmra.mrb[0].mxu0 %v6452
        %v8459 = vpop.f32.mrb[0].mxu0
        %v8460 = vadd.f32 %v8299, %v8459
        %v8461 = vpop.f32.mrb[0].mxu0
        %v8462 = vpop.f32.mrb[0].mxu0
        %v8463 = vadd.f32 %v8302, %v8462
        %v8464 = vpop.f32.mrb[0].mxu0
        %8465 = vmatprep.mubr.bf16.mxu0 %v6471
        %8466 = vmatmul.mubr.bf16.gmra.mrb[0].mxu0 %v6470
        %v8467 = vpop.f32.mrb[0].mxu0
        %v8468 = vadd.f32 %v8307, %v8467
        %v8469 = vpop.f32.mrb[0].mxu0
        %v8470 = vpop.f32.mrb[0].mxu0
        %v8471 = vadd.f32 %v8310, %v8470
        %v8472 = vpop.f32.mrb[0].mxu0
        %8473 = vmatprep.mubr.bf16.mxu0 %v6489
        %8474 = vmatmul.mubr.bf16.gmra.mrb[0].mxu0 %v6488
        %v8475 = vpop.f32.mrb[0].mxu0
        %v8476 = vadd.f32 %v8315, %v8475
        %v8477 = vpop.f32.mrb[0].mxu0
        %v8478 = vpop.f32.mrb[0].mxu0
        %v8479 = vadd.f32 %v8318, %v8478
        %v8480 = vpop.f32.mrb[0].mxu0
        %8481 = vmatprep.mubr.bf16.mxu0 %v6507
        %8482 = vmatmul.mubr.bf16.gmra.mrb[0].mxu0 %v6506
        %v8483 = vpop.f32.mrb[0].mxu0
        %v8484 = vadd.f32 %v8323, %v8483
        %v8485 = vpop.f32.mrb[0].mxu0
        %v8486 = vpop.f32.mrb[0].mxu0
        %v8487 = vadd.f32 %v8326, %v8486
        %v8488 = vpop.f32.mrb[0].mxu0
        %8489 = vmatprep.mubr.bf16.mxu0 %v6525
        %8490 = vmatmul.mubr.bf16.gmra.mrb[0].mxu0 %v6524
        %v8491 = vpop.f32.mrb[0].mxu0
        %v8492 = vadd.f32 %v8331, %v8491
        %v8493 = vpop.f32.mrb[0].mxu0
        %v8494 = vpop.f32.mrb[0].mxu0
        %v8495 = vadd.f32 %v8334, %v8494
        %v8496 = vpop.f32.mrb[0].mxu0
        %8497 = vdwg.mxu0
        %8498 = vmatprep.subr.bf16.mxu0 0
        %8499 = vmatpush1.bf16.msra.mxu0 %v7485
        %8500 = vmatprep.subr.bf16.mxu0 0
        %8501 = vmatpush1.bf16.msra.mxu0 %v7486
        %8502 = vmatprep.subr.bf16.mxu0 0
        %8503 = vmatpush1.bf16.msra.mxu0 %v7487
        %8504 = vmatprep.subr.bf16.mxu0 0
        %8505 = vmatpush1.bf16.msra.mxu0 %v7488
        %8506 = vmatprep.subr.bf16.mxu0 0
        %8507 = vmatpush1.bf16.msra.mxu0 %v7489
        %8508 = vmatprep.subr.bf16.mxu0 0
        %8509 = vmatpush1.bf16.msra.mxu0 %v7490
        %8510 = vmatprep.subr.bf16.mxu0 0
        %8511 = vmatpush1.bf16.msra.mxu0 %v7491
        %8512 = vmatprep.subr.bf16.mxu0 0
        %8513 = vmatpush1.bf16.msra.mxu0 %v7492
        %8514 = vmatprep.subr.bf16.mxu0 0
        %8515 = vmatpush1.bf16.msra.mxu0 %v7493
        %8516 = vmatprep.subr.bf16.mxu0 0
        %8517 = vmatpush1.bf16.msra.mxu0 %v7494
        %8518 = vmatprep.subr.bf16.mxu0 0
        %8519 = vmatpush1.bf16.msra.mxu0 %v7495
        %8520 = vmatprep.subr.bf16.mxu0 0
        %8521 = vmatpush1.bf16.msra.mxu0 %v7496
        %8522 = vmatprep.subr.bf16.mxu0 0
        %8523 = vmatpush1.bf16.msra.mxu0 %v7497
        %8524 = vmatprep.subr.bf16.mxu0 0
        %8525 = vmatpush1.bf16.msra.mxu0 %v7498
        %8526 = vmatprep.subr.bf16.mxu0 0
        %8527 = vmatpush1.bf16.msra.mxu0 %v7499
        %8528 = vmatprep.subr.bf16.mxu0 0
        %8529 = vmatpush1.bf16.msra.mxu0 %v7500
        %8530 = vmatprep.mubr.bf16.mxu0 %v6257
        %8531 = vmatmul.mubr.bf16.gmra.mrb[0].mxu0 %v6256
        %v8532 = vpop.f32.mrb[0].mxu0
        %v8533 = vadd.f32 %v8372, %v8532
        %v8534 = vpop.f32.mrb[0].mxu0
        %v8535 = vpop.f32.mrb[0].mxu0
        %v8536 = vadd.f32 %v8375, %v8535
        %v8537 = vpop.f32.mrb[0].mxu0
        %8538 = vmatprep.mubr.bf16.mxu0 %v6275
        %8539 = vmatmul.mubr.bf16.gmra.mrb[0].mxu0 %v6274
        %v8540 = vpop.f32.mrb[0].mxu0
        %v8541 = vadd.f32 %v8380, %v8540
        %v8542 = vpop.f32.mrb[0].mxu0
        %v8543 = vpop.f32.mrb[0].mxu0
        %v8544 = vadd.f32 %v8383, %v8543
        %v8545 = vpop.f32.mrb[0].mxu0
        %8546 = vmatprep.mubr.bf16.mxu0 %v6293
        %8547 = vmatmul.mubr.bf16.gmra.mrb[0].mxu0 %v6292
        %v8548 = vpop.f32.mrb[0].mxu0
        %v8549 = vadd.f32 %v8388, %v8548
        %v8550 = vpop.f32.mrb[0].mxu0
        %v8551 = vpop.f32.mrb[0].mxu0
        %v8552 = vadd.f32 %v8391, %v8551
        %v8553 = vpop.f32.mrb[0].mxu0
        %8554 = vmatprep.mubr.bf16.mxu0 %v6311
        %8555 = vmatmul.mubr.bf16.gmra.mrb[0].mxu0 %v6310
        %v8556 = vpop.f32.mrb[0].mxu0
        %v8557 = vadd.f32 %v8396, %v8556
        %v8558 = vpop.f32.mrb[0].mxu0
        %v8559 = vpop.f32.mrb[0].mxu0
        %v8560 = vadd.f32 %v8399, %v8559
        %v8561 = vpop.f32.mrb[0].mxu0
        %8562 = vmatprep.mubr.bf16.mxu0 %v6329
        %8563 = vmatmul.mubr.bf16.gmra.mrb[0].mxu0 %v6328
        %v8564 = vpop.f32.mrb[0].mxu0
        %v8565 = vadd.f32 %v8404, %v8564
        %v8566 = vpop.f32.mrb[0].mxu0
        %v8567 = vpop.f32.mrb[0].mxu0
        %v8568 = vadd.f32 %v8407, %v8567
        %v8569 = vpop.f32.mrb[0].mxu0
        %8570 = vmatprep.mubr.bf16.mxu0 %v6347
        %8571 = vmatmul.mubr.bf16.gmra.mrb[0].mxu0 %v6346
        %v8572 = vpop.f32.mrb[0].mxu0
        %v8573 = vadd.f32 %v8412, %v8572
        %v8574 = vpop.f32.mrb[0].mxu0
        %v8575 = vpop.f32.mrb[0].mxu0
        %v8576 = vadd.f32 %v8415, %v8575
        %v8577 = vpop.f32.mrb[0].mxu0
        %8578 = vmatprep.mubr.bf16.mxu0 %v6365
        %8579 = vmatmul.mubr.bf16.gmra.mrb[0].mxu0 %v6364
        %v8580 = vpop.f32.mrb[0].mxu0
        %v8581 = vadd.f32 %v8420, %v8580
        %v8582 = vpop.f32.mrb[0].mxu0
        %v8583 = vpop.f32.mrb[0].mxu0
        %v8584 = vadd.f32 %v8423, %v8583
        %v8585 = vpop.f32.mrb[0].mxu0
        %8586 = vmatprep.mubr.bf16.mxu0 %v6383
        %8587 = vmatmul.mubr.bf16.gmra.mrb[0].mxu0 %v6382
        %v8588 = vpop.f32.mrb[0].mxu0
        %v8589 = vadd.f32 %v8428, %v8588
        %v8590 = vpop.f32.mrb[0].mxu0
        %v8591 = vpop.f32.mrb[0].mxu0
        %v8592 = vadd.f32 %v8431, %v8591
        %v8593 = vpop.f32.mrb[0].mxu0
        %8594 = vmatprep.mubr.bf16.mxu0 %v6401
        %8595 = vmatmul.mubr.bf16.gmra.mrb[0].mxu0 %v6400
        %v8596 = vpop.f32.mrb[0].mxu0
        %v8597 = vadd.f32 %v8436, %v8596
        %v8598 = vpop.f32.mrb[0].mxu0
        %v8599 = vpop.f32.mrb[0].mxu0
        %v8600 = vadd.f32 %v8439, %v8599
        %v8601 = vpop.f32.mrb[0].mxu0
        %8602 = vmatprep.mubr.bf16.mxu0 %v6419
        %8603 = vmatmul.mubr.bf16.gmra.mrb[0].mxu0 %v6418
        %v8604 = vpop.f32.mrb[0].mxu0
        %v8605 = vadd.f32 %v8444, %v8604
        %v8606 = vpop.f32.mrb[0].mxu0
        %v8607 = vpop.f32.mrb[0].mxu0
        %v8608 = vadd.f32 %v8447, %v8607
        %v8609 = vpop.f32.mrb[0].mxu0
        %8610 = vmatprep.mubr.bf16.mxu0 %v6437
        %8611 = vmatmul.mubr.bf16.gmra.mrb[0].mxu0 %v6436
        %v8612 = vpop.f32.mrb[0].mxu0
        %v8613 = vadd.f32 %v8452, %v8612
        %v8614 = vpop.f32.mrb[0].mxu0
        %v8615 = vpop.f32.mrb[0].mxu0
        %v8616 = vadd.f32 %v8455, %v8615
        %v8617 = vpop.f32.mrb[0].mxu0
        %8618 = vmatprep.mubr.bf16.mxu0 %v6455
        %8619 = vmatmul.mubr.bf16.gmra.mrb[0].mxu0 %v6454
        %v8620 = vpop.f32.mrb[0].mxu0
        %v8621 = vadd.f32 %v8460, %v8620
        %v8622 = vpop.f32.mrb[0].mxu0
        %v8623 = vpop.f32.mrb[0].mxu0
        %v8624 = vadd.f32 %v8463, %v8623
        %v8625 = vpop.f32.mrb[0].mxu0
        %8626 = vmatprep.mubr.bf16.mxu0 %v6473
        %8627 = vmatmul.mubr.bf16.gmra.mrb[0].mxu0 %v6472
        %v8628 = vpop.f32.mrb[0].mxu0
        %v8629 = vadd.f32 %v8468, %v8628
        %v8630 = vpop.f32.mrb[0].mxu0
        %v8631 = vpop.f32.mrb[0].mxu0
        %v8632 = vadd.f32 %v8471, %v8631
        %v8633 = vpop.f32.mrb[0].mxu0
        %8634 = vmatprep.mubr.bf16.mxu0 %v6491
        %8635 = vmatmul.mubr.bf16.gmra.mrb[0].mxu0 %v6490
        %v8636 = vpop.f32.mrb[0].mxu0
        %v8637 = vadd.f32 %v8476, %v8636
        %v8638 = vpop.f32.mrb[0].mxu0
        %v8639 = vpop.f32.mrb[0].mxu0
        %v8640 = vadd.f32 %v8479, %v8639
        %v8641 = vpop.f32.mrb[0].mxu0
        %8642 = vmatprep.mubr.bf16.mxu0 %v6509
        %8643 = vmatmul.mubr.bf16.gmra.mrb[0].mxu0 %v6508
        %v8644 = vpop.f32.mrb[0].mxu0
        %v8645 = vadd.f32 %v8484, %v8644
        %v8646 = vpop.f32.mrb[0].mxu0
        %v8647 = vpop.f32.mrb[0].mxu0
        %v8648 = vadd.f32 %v8487, %v8647
        %v8649 = vpop.f32.mrb[0].mxu0
        %8650 = vmatprep.mubr.bf16.mxu0 %v6527
        %8651 = vmatmul.mubr.bf16.gmra.mrb[0].mxu0 %v6526
        %v8652 = vpop.f32.mrb[0].mxu0
        %v8653 = vadd.f32 %v8492, %v8652
        %v8654 = vpop.f32.mrb[0].mxu0
        %v8655 = vpop.f32.mrb[0].mxu0
        %v8656 = vadd.f32 %v8495, %v8655
        %v8657 = vpop.f32.mrb[0].mxu0
        %8658 = vdwg.mxu0
        %8659 = vmatprep.subr.bf16.mxu0 0
        %8660 = vmatpush1.bf16.msra.mxu0 %v7501
        %8661 = vmatprep.subr.bf16.mxu0 0
        %8662 = vmatpush1.bf16.msra.mxu0 %v7502
        %8663 = vmatprep.subr.bf16.mxu0 0
        %8664 = vmatpush1.bf16.msra.mxu0 %v7503
        %8665 = vmatprep.subr.bf16.mxu0 0
        %8666 = vmatpush1.bf16.msra.mxu0 %v7504
        %8667 = vmatprep.subr.bf16.mxu0 0
        %8668 = vmatpush1.bf16.msra.mxu0 %v7505
        %8669 = vmatprep.subr.bf16.mxu0 0
        %8670 = vmatpush1.bf16.msra.mxu0 %v7506
        %8671 = vmatprep.subr.bf16.mxu0 0
        %8672 = vmatpush1.bf16.msra.mxu0 %v7507
        %8673 = vmatprep.subr.bf16.mxu0 0
        %8674 = vmatpush1.bf16.msra.mxu0 %v7508
        %8675 = vmatprep.subr.bf16.mxu0 0
        %8676 = vmatpush1.bf16.msra.mxu0 %v7509
        %8677 = vmatprep.subr.bf16.mxu0 0
        %8678 = vmatpush1.bf16.msra.mxu0 %v7510
        %8679 = vmatprep.subr.bf16.mxu0 0
        %8680 = vmatpush1.bf16.msra.mxu0 %v7511
        %8681 = vmatprep.subr.bf16.mxu0 0
        %8682 = vmatpush1.bf16.msra.mxu0 %v7512
        %8683 = vmatprep.subr.bf16.mxu0 0
        %8684 = vmatpush1.bf16.msra.mxu0 %v7513
        %8685 = vmatprep.subr.bf16.mxu0 0
        %8686 = vmatpush1.bf16.msra.mxu0 %v7514
        %8687 = vmatprep.subr.bf16.mxu0 0
        %8688 = vmatpush1.bf16.msra.mxu0 %v7515
        %8689 = vmatprep.subr.bf16.mxu0 0
        %8690 = vmatpush1.bf16.msra.mxu0 %v7516
        %8691 = vmatprep.mubr.bf16.mxu0 %v6259
        %8692 = vmatmul.mubr.bf16.gmra.mrb[0].mxu0 %v6258
        %v8693 = vpop.f32.mrb[0].mxu0
        %v8694 = vadd.f32 %v8533, %v8693
        %v8695 = vpop.f32.mrb[0].mxu0
        %v8696 = vpop.f32.mrb[0].mxu0
        %v8697 = vadd.f32 %v8536, %v8696
        %v8698 = vpop.f32.mrb[0].mxu0
        %8699 = vmatprep.mubr.bf16.mxu0 %v6277
        %8700 = vmatmul.mubr.bf16.gmra.mrb[0].mxu0 %v6276
        %v8701 = vpop.f32.mrb[0].mxu0
        %v8702 = vadd.f32 %v8541, %v8701
        %v8703 = vpop.f32.mrb[0].mxu0
        %v8704 = vpop.f32.mrb[0].mxu0
        %v8705 = vadd.f32 %v8544, %v8704
        %v8706 = vpop.f32.mrb[0].mxu0
        %8707 = vmatprep.mubr.bf16.mxu0 %v6295
        %8708 = vmatmul.mubr.bf16.gmra.mrb[0].mxu0 %v6294
        %v8709 = vpop.f32.mrb[0].mxu0
        %v8710 = vadd.f32 %v8549, %v8709
        %v8711 = vpop.f32.mrb[0].mxu0
        %v8712 = vpop.f32.mrb[0].mxu0
        %v8713 = vadd.f32 %v8552, %v8712
        %v8714 = vpop.f32.mrb[0].mxu0
        %8715 = vmatprep.mubr.bf16.mxu0 %v6313
        %8716 = vmatmul.mubr.bf16.gmra.mrb[0].mxu0 %v6312
        %v8717 = vpop.f32.mrb[0].mxu0
        %v8718 = vadd.f32 %v8557, %v8717
        %v8719 = vpop.f32.mrb[0].mxu0
        %v8720 = vpop.f32.mrb[0].mxu0
        %v8721 = vadd.f32 %v8560, %v8720
        %v8722 = vpop.f32.mrb[0].mxu0
        %8723 = vmatprep.mubr.bf16.mxu0 %v6331
        %8724 = vmatmul.mubr.bf16.gmra.mrb[0].mxu0 %v6330
        %v8725 = vpop.f32.mrb[0].mxu0
        %v8726 = vadd.f32 %v8565, %v8725
        %v8727 = vpop.f32.mrb[0].mxu0
        %v8728 = vpop.f32.mrb[0].mxu0
        %v8729 = vadd.f32 %v8568, %v8728
        %v8730 = vpop.f32.mrb[0].mxu0
        %8731 = vmatprep.mubr.bf16.mxu0 %v6349
        %8732 = vmatmul.mubr.bf16.gmra.mrb[0].mxu0 %v6348
        %v8733 = vpop.f32.mrb[0].mxu0
        %v8734 = vadd.f32 %v8573, %v8733
        %v8735 = vpop.f32.mrb[0].mxu0
        %v8736 = vpop.f32.mrb[0].mxu0
        %v8737 = vadd.f32 %v8576, %v8736
        %v8738 = vpop.f32.mrb[0].mxu0
        %8739 = vmatprep.mubr.bf16.mxu0 %v6367
        %8740 = vmatmul.mubr.bf16.gmra.mrb[0].mxu0 %v6366
        %v8741 = vpop.f32.mrb[0].mxu0
        %v8742 = vadd.f32 %v8581, %v8741
        %v8743 = vpop.f32.mrb[0].mxu0
        %v8744 = vpop.f32.mrb[0].mxu0
        %v8745 = vadd.f32 %v8584, %v8744
        %v8746 = vpop.f32.mrb[0].mxu0
        %8747 = vmatprep.mubr.bf16.mxu0 %v6385
        %8748 = vmatmul.mubr.bf16.gmra.mrb[0].mxu0 %v6384
        %v8749 = vpop.f32.mrb[0].mxu0
        %v8750 = vadd.f32 %v8589, %v8749
        %v8751 = vpop.f32.mrb[0].mxu0
        %v8752 = vpop.f32.mrb[0].mxu0
        %v8753 = vadd.f32 %v8592, %v8752
        %v8754 = vpop.f32.mrb[0].mxu0
        %8755 = vmatprep.mubr.bf16.mxu0 %v6403
        %8756 = vmatmul.mubr.bf16.gmra.mrb[0].mxu0 %v6402
        %v8757 = vpop.f32.mrb[0].mxu0
        %v8758 = vadd.f32 %v8597, %v8757
        %v8759 = vpop.f32.mrb[0].mxu0
        %v8760 = vpop.f32.mrb[0].mxu0
        %v8761 = vadd.f32 %v8600, %v8760
        %v8762 = vpop.f32.mrb[0].mxu0
        %8763 = vmatprep.mubr.bf16.mxu0 %v6421
        %8764 = vmatmul.mubr.bf16.gmra.mrb[0].mxu0 %v6420
        %v8765 = vpop.f32.mrb[0].mxu0
        %v8766 = vadd.f32 %v8605, %v8765
        %v8767 = vpop.f32.mrb[0].mxu0
        %v8768 = vpop.f32.mrb[0].mxu0
        %v8769 = vadd.f32 %v8608, %v8768
        %v8770 = vpop.f32.mrb[0].mxu0
        %8771 = vmatprep.mubr.bf16.mxu0 %v6439
        %8772 = vmatmul.mubr.bf16.gmra.mrb[0].mxu0 %v6438
        %v8773 = vpop.f32.mrb[0].mxu0
        %v8774 = vadd.f32 %v8613, %v8773
        %v8775 = vpop.f32.mrb[0].mxu0
        %v8776 = vpop.f32.mrb[0].mxu0
        %v8777 = vadd.f32 %v8616, %v8776
        %v8778 = vpop.f32.mrb[0].mxu0
        %8779 = vmatprep.mubr.bf16.mxu0 %v6457
        %8780 = vmatmul.mubr.bf16.gmra.mrb[0].mxu0 %v6456
        %v8781 = vpop.f32.mrb[0].mxu0
        %v8782 = vadd.f32 %v8621, %v8781
        %v8783 = vpop.f32.mrb[0].mxu0
        %v8784 = vpop.f32.mrb[0].mxu0
        %v8785 = vadd.f32 %v8624, %v8784
        %v8786 = vpop.f32.mrb[0].mxu0
        %8787 = vmatprep.mubr.bf16.mxu0 %v6475
        %8788 = vmatmul.mubr.bf16.gmra.mrb[0].mxu0 %v6474
        %v8789 = vpop.f32.mrb[0].mxu0
        %v8790 = vadd.f32 %v8629, %v8789
        %v8791 = vpop.f32.mrb[0].mxu0
        %v8792 = vpop.f32.mrb[0].mxu0
        %v8793 = vadd.f32 %v8632, %v8792
        %v8794 = vpop.f32.mrb[0].mxu0
        %8795 = vmatprep.mubr.bf16.mxu0 %v6493
        %8796 = vmatmul.mubr.bf16.gmra.mrb[0].mxu0 %v6492
        %v8797 = vpop.f32.mrb[0].mxu0
        %v8798 = vadd.f32 %v8637, %v8797
        %v8799 = vpop.f32.mrb[0].mxu0
        %v8800 = vpop.f32.mrb[0].mxu0
        %v8801 = vadd.f32 %v8640, %v8800
        %v8802 = vpop.f32.mrb[0].mxu0
        %8803 = vmatprep.mubr.bf16.mxu0 %v6511
        %8804 = vmatmul.mubr.bf16.gmra.mrb[0].mxu0 %v6510
        %v8805 = vpop.f32.mrb[0].mxu0
        %v8806 = vadd.f32 %v8645, %v8805
        %v8807 = vpop.f32.mrb[0].mxu0
        %v8808 = vpop.f32.mrb[0].mxu0
        %v8809 = vadd.f32 %v8648, %v8808
        %v8810 = vpop.f32.mrb[0].mxu0
        %8811 = vmatprep.mubr.bf16.mxu0 %v6529
        %8812 = vmatmul.mubr.bf16.gmra.mrb[0].mxu0 %v6528
        %v8813 = vpop.f32.mrb[0].mxu0
        %v8814 = vadd.f32 %v8653, %v8813
        %v8815 = vpop.f32.mrb[0].mxu0
        %v8816 = vpop.f32.mrb[0].mxu0
        %v8817 = vadd.f32 %v8656, %v8816
        %v8818 = vpop.f32.mrb[0].mxu0
        %8819 = vdwg.mxu0
        %8820 = vmatprep.subr.bf16.mxu0 0
        %8821 = vmatpush1.bf16.msra.mxu0 %v7517
        %8822 = vmatprep.subr.bf16.mxu0 0
        %8823 = vmatpush1.bf16.msra.mxu0 %v7518
        %8824 = vmatprep.subr.bf16.mxu0 0
        %8825 = vmatpush1.bf16.msra.mxu0 %v7519
        %8826 = vmatprep.subr.bf16.mxu0 0
        %8827 = vmatpush1.bf16.msra.mxu0 %v7520
        %8828 = vmatprep.subr.bf16.mxu0 0
        %8829 = vmatpush1.bf16.msra.mxu0 %v7521
        %8830 = vmatprep.subr.bf16.mxu0 0
        %8831 = vmatpush1.bf16.msra.mxu0 %v7522
        %8832 = vmatprep.subr.bf16.mxu0 0
        %8833 = vmatpush1.bf16.msra.mxu0 %v7523
        %8834 = vmatprep.subr.bf16.mxu0 0
        %8835 = vmatpush1.bf16.msra.mxu0 %v7524
        %8836 = vmatprep.subr.bf16.mxu0 0
        %8837 = vmatpush1.bf16.msra.mxu0 %v7525
        %8838 = vmatprep.subr.bf16.mxu0 0
        %8839 = vmatpush1.bf16.msra.mxu0 %v7526
        %8840 = vmatprep.subr.bf16.mxu0 0
        %8841 = vmatpush1.bf16.msra.mxu0 %v7527
        %8842 = vmatprep.subr.bf16.mxu0 0
        %8843 = vmatpush1.bf16.msra.mxu0 %v7528
        %8844 = vmatprep.subr.bf16.mxu0 0
        %8845 = vmatpush1.bf16.msra.mxu0 %v7529
        %8846 = vmatprep.subr.bf16.mxu0 0
        %8847 = vmatpush1.bf16.msra.mxu0 %v7530
        %8848 = vmatprep.subr.bf16.mxu0 0
        %8849 = vmatpush1.bf16.msra.mxu0 %v7531
        %8850 = vmatprep.subr.bf16.mxu0 0
        %8851 = vmatpush1.bf16.msra.mxu0 %v7532
        %8852 = vmatprep.mubr.bf16.mxu0 %v6261
        %8853 = vmatmul.mubr.bf16.gmra.mrb[0].mxu0 %v6260
        %v8854 = vpop.f32.mrb[0].mxu0
        %v8855 = vadd.f32 %v8694, %v8854
        %v8856 = vpop.f32.mrb[0].mxu0
        %v8857 = vpop.f32.mrb[0].mxu0
        %v8858 = vadd.f32 %v8697, %v8857
        %v8859 = vpop.f32.mrb[0].mxu0
        %8860 = vmatprep.mubr.bf16.mxu0 %v6279
        %8861 = vmatmul.mubr.bf16.gmra.mrb[0].mxu0 %v6278
        %v8862 = vpop.f32.mrb[0].mxu0
        %v8863 = vadd.f32 %v8702, %v8862
        %v8864 = vpop.f32.mrb[0].mxu0
        %v8865 = vpop.f32.mrb[0].mxu0
        %v8866 = vadd.f32 %v8705, %v8865
        %v8867 = vpop.f32.mrb[0].mxu0
        %8868 = vmatprep.mubr.bf16.mxu0 %v6297
        %8869 = vmatmul.mubr.bf16.gmra.mrb[0].mxu0 %v6296
        %v8870 = vpop.f32.mrb[0].mxu0
        %v8871 = vadd.f32 %v8710, %v8870
        %v8872 = vpop.f32.mrb[0].mxu0
        %v8873 = vpop.f32.mrb[0].mxu0
        %v8874 = vadd.f32 %v8713, %v8873
        %v8875 = vpop.f32.mrb[0].mxu0
        %8876 = vmatprep.mubr.bf16.mxu0 %v6315
        %8877 = vmatmul.mubr.bf16.gmra.mrb[0].mxu0 %v6314
        %v8878 = vpop.f32.mrb[0].mxu0
        %v8879 = vadd.f32 %v8718, %v8878
        %v8880 = vpop.f32.mrb[0].mxu0
        %v8881 = vpop.f32.mrb[0].mxu0
        %v8882 = vadd.f32 %v8721, %v8881
        %v8883 = vpop.f32.mrb[0].mxu0
        %8884 = vmatprep.mubr.bf16.mxu0 %v6333
        %8885 = vmatmul.mubr.bf16.gmra.mrb[0].mxu0 %v6332
        %v8886 = vpop.f32.mrb[0].mxu0
        %v8887 = vadd.f32 %v8726, %v8886
        %v8888 = vpop.f32.mrb[0].mxu0
        %v8889 = vpop.f32.mrb[0].mxu0
        %v8890 = vadd.f32 %v8729, %v8889
        %v8891 = vpop.f32.mrb[0].mxu0
        %8892 = vmatprep.mubr.bf16.mxu0 %v6351
        %8893 = vmatmul.mubr.bf16.gmra.mrb[0].mxu0 %v6350
        %v8894 = vpop.f32.mrb[0].mxu0
        %v8895 = vadd.f32 %v8734, %v8894
        %v8896 = vpop.f32.mrb[0].mxu0
        %v8897 = vpop.f32.mrb[0].mxu0
        %v8898 = vadd.f32 %v8737, %v8897
        %v8899 = vpop.f32.mrb[0].mxu0
        %8900 = vmatprep.mubr.bf16.mxu0 %v6369
        %8901 = vmatmul.mubr.bf16.gmra.mrb[0].mxu0 %v6368
        %v8902 = vpop.f32.mrb[0].mxu0
        %v8903 = vadd.f32 %v8742, %v8902
        %v8904 = vpop.f32.mrb[0].mxu0
        %v8905 = vpop.f32.mrb[0].mxu0
        %v8906 = vadd.f32 %v8745, %v8905
        %v8907 = vpop.f32.mrb[0].mxu0
        %8908 = vmatprep.mubr.bf16.mxu0 %v6387
        %8909 = vmatmul.mubr.bf16.gmra.mrb[0].mxu0 %v6386
        %v8910 = vpop.f32.mrb[0].mxu0
        %v8911 = vadd.f32 %v8750, %v8910
        %v8912 = vpop.f32.mrb[0].mxu0
        %v8913 = vpop.f32.mrb[0].mxu0
        %v8914 = vadd.f32 %v8753, %v8913
        %v8915 = vpop.f32.mrb[0].mxu0
        %8916 = vmatprep.mubr.bf16.mxu0 %v6405
        %8917 = vmatmul.mubr.bf16.gmra.mrb[0].mxu0 %v6404
        %v8918 = vpop.f32.mrb[0].mxu0
        %v8919 = vadd.f32 %v8758, %v8918
        %v8920 = vpop.f32.mrb[0].mxu0
        %v8921 = vpop.f32.mrb[0].mxu0
        %v8922 = vadd.f32 %v8761, %v8921
        %v8923 = vpop.f32.mrb[0].mxu0
        %8924 = vmatprep.mubr.bf16.mxu0 %v6423
        %8925 = vmatmul.mubr.bf16.gmra.mrb[0].mxu0 %v6422
        %v8926 = vpop.f32.mrb[0].mxu0
        %v8927 = vadd.f32 %v8766, %v8926
        %v8928 = vpop.f32.mrb[0].mxu0
        %v8929 = vpop.f32.mrb[0].mxu0
        %v8930 = vadd.f32 %v8769, %v8929
        %v8931 = vpop.f32.mrb[0].mxu0
        %8932 = vmatprep.mubr.bf16.mxu0 %v6441
        %8933 = vmatmul.mubr.bf16.gmra.mrb[0].mxu0 %v6440
        %v8934 = vpop.f32.mrb[0].mxu0
        %v8935 = vadd.f32 %v8774, %v8934
        %v8936 = vpop.f32.mrb[0].mxu0
        %v8937 = vpop.f32.mrb[0].mxu0
        %v8938 = vadd.f32 %v8777, %v8937
        %v8939 = vpop.f32.mrb[0].mxu0
        %8940 = vmatprep.mubr.bf16.mxu0 %v6459
        %8941 = vmatmul.mubr.bf16.gmra.mrb[0].mxu0 %v6458
        %v8942 = vpop.f32.mrb[0].mxu0
        %v8943 = vadd.f32 %v8782, %v8942
        %v8944 = vpop.f32.mrb[0].mxu0
        %v8945 = vpop.f32.mrb[0].mxu0
        %v8946 = vadd.f32 %v8785, %v8945
        %v8947 = vpop.f32.mrb[0].mxu0
        %8948 = vmatprep.mubr.bf16.mxu0 %v6477
        %8949 = vmatmul.mubr.bf16.gmra.mrb[0].mxu0 %v6476
        %v8950 = vpop.f32.mrb[0].mxu0
        %v8951 = vadd.f32 %v8790, %v8950
        %v8952 = vpop.f32.mrb[0].mxu0
        %v8953 = vpop.f32.mrb[0].mxu0
        %v8954 = vadd.f32 %v8793, %v8953
        %v8955 = vpop.f32.mrb[0].mxu0
        %8956 = vmatprep.mubr.bf16.mxu0 %v6495
        %8957 = vmatmul.mubr.bf16.gmra.mrb[0].mxu0 %v6494
        %v8958 = vpop.f32.mrb[0].mxu0
        %v8959 = vadd.f32 %v8798, %v8958
        %v8960 = vpop.f32.mrb[0].mxu0
        %v8961 = vpop.f32.mrb[0].mxu0
        %v8962 = vadd.f32 %v8801, %v8961
        %v8963 = vpop.f32.mrb[0].mxu0
        %8964 = vmatprep.mubr.bf16.mxu0 %v6513
        %8965 = vmatmul.mubr.bf16.gmra.mrb[0].mxu0 %v6512
        %v8966 = vpop.f32.mrb[0].mxu0
        %v8967 = vadd.f32 %v8806, %v8966
        %v8968 = vpop.f32.mrb[0].mxu0
        %v8969 = vpop.f32.mrb[0].mxu0
        %v8970 = vadd.f32 %v8809, %v8969
        %v8971 = vpop.f32.mrb[0].mxu0
        %8972 = vmatprep.mubr.bf16.mxu0 %v6531
        %8973 = vmatmul.mubr.bf16.gmra.mrb[0].mxu0 %v6530
        %v8974 = vpop.f32.mrb[0].mxu0
        %v8975 = vadd.f32 %v8814, %v8974
        %v8976 = vpop.f32.mrb[0].mxu0
        %v8977 = vpop.f32.mrb[0].mxu0
        %v8978 = vadd.f32 %v8817, %v8977
        %v8979 = vpop.f32.mrb[0].mxu0
        %8980 = vdwg.mxu0
        %8981 = vmatprep.subr.bf16.mxu0 0
        %8982 = vmatpush1.bf16.msra.mxu0 %v7533
        %8983 = vmatprep.subr.bf16.mxu0 0
        %8984 = vmatpush1.bf16.msra.mxu0 %v7534
        %8985 = vmatprep.subr.bf16.mxu0 0
        %8986 = vmatpush1.bf16.msra.mxu0 %v7535
        %8987 = vmatprep.subr.bf16.mxu0 0
        %8988 = vmatpush1.bf16.msra.mxu0 %v7536
        %8989 = vmatprep.subr.bf16.mxu0 0
        %8990 = vmatpush1.bf16.msra.mxu0 %v7537
        %8991 = vmatprep.subr.bf16.mxu0 0
        %8992 = vmatpush1.bf16.msra.mxu0 %v7538
        %8993 = vmatprep.subr.bf16.mxu0 0
        %8994 = vmatpush1.bf16.msra.mxu0 %v7539
        %8995 = vmatprep.subr.bf16.mxu0 0
        %8996 = vmatpush1.bf16.msra.mxu0 %v7540
        %8997 = vmatprep.subr.bf16.mxu0 0
        %8998 = vmatpush1.bf16.msra.mxu0 %v7541
        %8999 = vmatprep.subr.bf16.mxu0 0
        %9000 = vmatpush1.bf16.msra.mxu0 %v7542
        %9001 = vmatprep.subr.bf16.mxu0 0
        %9002 = vmatpush1.bf16.msra.mxu0 %v7543
        %9003 = vmatprep.subr.bf16.mxu0 0
        %9004 = vmatpush1.bf16.msra.mxu0 %v7544
        %9005 = vmatprep.subr.bf16.mxu0 0
        %9006 = vmatpush1.bf16.msra.mxu0 %v7545
        %9007 = vmatprep.subr.bf16.mxu0 0
        %9008 = vmatpush1.bf16.msra.mxu0 %v7546
        %9009 = vmatprep.subr.bf16.mxu0 0
        %9010 = vmatpush1.bf16.msra.mxu0 %v7547
        %9011 = vmatprep.subr.bf16.mxu0 0
        %9012 = vmatpush1.bf16.msra.mxu0 %v7548
        %9013 = vmatprep.mubr.bf16.mxu0 %v6263
        %9014 = vmatmul.mubr.bf16.gmra.mrb[0].mxu0 %v6262
        %v9015 = vpop.f32.mrb[0].mxu0
        %v9016 = vadd.f32 %v8855, %v9015
        %v9017 = vpop.f32.mrb[0].mxu0
        %v9018 = vpop.f32.mrb[0].mxu0
        %v9019 = vadd.f32 %v8858, %v9018
        %v9020 = vpop.f32.mrb[0].mxu0
        %9021 = vmatprep.mubr.bf16.mxu0 %v6281
        %9022 = vmatmul.mubr.bf16.gmra.mrb[0].mxu0 %v6280
        %v9023 = vpop.f32.mrb[0].mxu0
        %v9024 = vadd.f32 %v8863, %v9023
        %v9025 = vpop.f32.mrb[0].mxu0
        %v9026 = vpop.f32.mrb[0].mxu0
        %v9027 = vadd.f32 %v8866, %v9026
        %v9028 = vpop.f32.mrb[0].mxu0
        %9029 = vmatprep.mubr.bf16.mxu0 %v6299
        %9030 = vmatmul.mubr.bf16.gmra.mrb[0].mxu0 %v6298
        %v9031 = vpop.f32.mrb[0].mxu0
        %v9032 = vadd.f32 %v8871, %v9031
        %v9033 = vpop.f32.mrb[0].mxu0
        %v9034 = vpop.f32.mrb[0].mxu0
        %v9035 = vadd.f32 %v8874, %v9034
        %v9036 = vpop.f32.mrb[0].mxu0
        %9037 = vmatprep.mubr.bf16.mxu0 %v6317
        %9038 = vmatmul.mubr.bf16.gmra.mrb[0].mxu0 %v6316
        %v9039 = vpop.f32.mrb[0].mxu0
        %v9040 = vadd.f32 %v8879, %v9039
        %v9041 = vpop.f32.mrb[0].mxu0
        %v9042 = vpop.f32.mrb[0].mxu0
        %v9043 = vadd.f32 %v8882, %v9042
        %v9044 = vpop.f32.mrb[0].mxu0
        %9045 = vmatprep.mubr.bf16.mxu0 %v6335
        %9046 = vmatmul.mubr.bf16.gmra.mrb[0].mxu0 %v6334
        %v9047 = vpop.f32.mrb[0].mxu0
        %v9048 = vadd.f32 %v8887, %v9047
        %v9049 = vpop.f32.mrb[0].mxu0
        %v9050 = vpop.f32.mrb[0].mxu0
        %v9051 = vadd.f32 %v8890, %v9050
        %v9052 = vpop.f32.mrb[0].mxu0
        %9053 = vmatprep.mubr.bf16.mxu0 %v6353
        %9054 = vmatmul.mubr.bf16.gmra.mrb[0].mxu0 %v6352
        %v9055 = vpop.f32.mrb[0].mxu0
        %v9056 = vadd.f32 %v8895, %v9055
        %v9057 = vpop.f32.mrb[0].mxu0
        %v9058 = vpop.f32.mrb[0].mxu0
        %v9059 = vadd.f32 %v8898, %v9058
        %v9060 = vpop.f32.mrb[0].mxu0
        %9061 = vmatprep.mubr.bf16.mxu0 %v6371
        %9062 = vmatmul.mubr.bf16.gmra.mrb[0].mxu0 %v6370
        %v9063 = vpop.f32.mrb[0].mxu0
        %v9064 = vadd.f32 %v8903, %v9063
        %v9065 = vpop.f32.mrb[0].mxu0
        %v9066 = vpop.f32.mrb[0].mxu0
        %v9067 = vadd.f32 %v8906, %v9066
        %v9068 = vpop.f32.mrb[0].mxu0
        %9069 = vmatprep.mubr.bf16.mxu0 %v6389
        %9070 = vmatmul.mubr.bf16.gmra.mrb[0].mxu0 %v6388
        %v9071 = vpop.f32.mrb[0].mxu0
        %v9072 = vadd.f32 %v8911, %v9071
        %v9073 = vpop.f32.mrb[0].mxu0
        %v9074 = vpop.f32.mrb[0].mxu0
        %v9075 = vadd.f32 %v8914, %v9074
        %v9076 = vpop.f32.mrb[0].mxu0
        %9077 = vmatprep.mubr.bf16.mxu0 %v6407
        %9078 = vmatmul.mubr.bf16.gmra.mrb[0].mxu0 %v6406
        %v9079 = vpop.f32.mrb[0].mxu0
        %v9080 = vadd.f32 %v8919, %v9079
        %v9081 = vpop.f32.mrb[0].mxu0
        %v9082 = vpop.f32.mrb[0].mxu0
        %v9083 = vadd.f32 %v8922, %v9082
        %v9084 = vpop.f32.mrb[0].mxu0
        %9085 = vmatprep.mubr.bf16.mxu0 %v6425
        %9086 = vmatmul.mubr.bf16.gmra.mrb[0].mxu0 %v6424
        %v9087 = vpop.f32.mrb[0].mxu0
        %v9088 = vadd.f32 %v8927, %v9087
        %v9089 = vpop.f32.mrb[0].mxu0
        %v9090 = vpop.f32.mrb[0].mxu0
        %v9091 = vadd.f32 %v8930, %v9090
        %v9092 = vpop.f32.mrb[0].mxu0
        %9093 = vmatprep.mubr.bf16.mxu0 %v6443
        %9094 = vmatmul.mubr.bf16.gmra.mrb[0].mxu0 %v6442
        %v9095 = vpop.f32.mrb[0].mxu0
        %v9096 = vadd.f32 %v8935, %v9095
        %v9097 = vpop.f32.mrb[0].mxu0
        %v9098 = vpop.f32.mrb[0].mxu0
        %v9099 = vadd.f32 %v8938, %v9098
        %v9100 = vpop.f32.mrb[0].mxu0
        %9101 = vmatprep.mubr.bf16.mxu0 %v6461
        %9102 = vmatmul.mubr.bf16.gmra.mrb[0].mxu0 %v6460
        %v9103 = vpop.f32.mrb[0].mxu0
        %v9104 = vadd.f32 %v8943, %v9103
        %v9105 = vpop.f32.mrb[0].mxu0
        %v9106 = vpop.f32.mrb[0].mxu0
        %v9107 = vadd.f32 %v8946, %v9106
        %v9108 = vpop.f32.mrb[0].mxu0
        %9109 = vmatprep.mubr.bf16.mxu0 %v6479
        %9110 = vmatmul.mubr.bf16.gmra.mrb[0].mxu0 %v6478
        %v9111 = vpop.f32.mrb[0].mxu0
        %v9112 = vadd.f32 %v8951, %v9111
        %v9113 = vpop.f32.mrb[0].mxu0
        %v9114 = vpop.f32.mrb[0].mxu0
        %v9115 = vadd.f32 %v8954, %v9114
        %v9116 = vpop.f32.mrb[0].mxu0
        %9117 = vmatprep.mubr.bf16.mxu0 %v6497
        %9118 = vmatmul.mubr.bf16.gmra.mrb[0].mxu0 %v6496
        %v9119 = vpop.f32.mrb[0].mxu0
        %v9120 = vadd.f32 %v8959, %v9119
        %v9121 = vpop.f32.mrb[0].mxu0
        %v9122 = vpop.f32.mrb[0].mxu0
        %v9123 = vadd.f32 %v8962, %v9122
        %v9124 = vpop.f32.mrb[0].mxu0
        %9125 = vmatprep.mubr.bf16.mxu0 %v6515
        %9126 = vmatmul.mubr.bf16.gmra.mrb[0].mxu0 %v6514
        %v9127 = vpop.f32.mrb[0].mxu0
        %v9128 = vadd.f32 %v8967, %v9127
        %v9129 = vpop.f32.mrb[0].mxu0
        %v9130 = vpop.f32.mrb[0].mxu0
        %v9131 = vadd.f32 %v8970, %v9130
        %v9132 = vpop.f32.mrb[0].mxu0
        %9133 = vmatprep.mubr.bf16.mxu0 %v6533
        %9134 = vmatmul.mubr.bf16.gmra.mrb[0].mxu0 %v6532
        %v9135 = vpop.f32.mrb[0].mxu0
        %v9136 = vadd.f32 %v8975, %v9135
        %v9137 = vpop.f32.mrb[0].mxu0
        %v9138 = vpop.f32.mrb[0].mxu0
        %v9139 = vadd.f32 %v8978, %v9138
        %v9140 = vpop.f32.mrb[0].mxu0
        %9141 = vdwg.mxu0
        %v9142 = vtanh.pop %v9016
        %v9143 = vtanh.pop %v9019
        %v9144 = vtanh.pop %v9024
        %v9145 = vtanh.pop %v9027
        %v9146 = vtanh.pop %v9032
        %v9147 = vtanh.pop %v9035
        %v9148 = vtanh.pop %v9040
        %v9149 = vtanh.pop %v9043
        %v9150 = vtanh.pop %v9048
        %v9151 = vtanh.pop %v9051
        %v9152 = vtanh.pop %v9056
        %v9153 = vtanh.pop %v9059
        %v9154 = vtanh.pop %v9064
        %v9155 = vtanh.pop %v9067
        %v9156 = vtanh.pop %v9072
        %v9157 = vtanh.pop %v9075
        %v9158 = vtanh.pop %v9080
        %v9159 = vtanh.pop %v9083
        %v9160 = vtanh.pop %v9088
        %v9161 = vtanh.pop %v9091
        %v9162 = vtanh.pop %v9096
        %v9163 = vtanh.pop %v9099
        %v9164 = vtanh.pop %v9104
        %v9165 = vtanh.pop %v9107
        %v9166 = vtanh.pop %v9112
        %v9167 = vtanh.pop %v9115
        %v9168 = vtanh.pop %v9120
        %v9169 = vtanh.pop %v9123
        %v9170 = vtanh.pop %v9128
        %v9171 = vtanh.pop %v9131
        %v9172 = vtanh.pop %v9136
        %v9173 = vtanh.pop %v9139
        %v9174 = vsub.f32 1.0, %v5486
        %v9175 = vsub.f32 1.0, %v5487
        %v9176 = vsub.f32 1.0, %v5488
        %v9177 = vsub.f32 1.0, %v5489
        %v9178 = vsub.f32 1.0, %v5490
        %v9179 = vsub.f32 1.0, %v5491
        %v9180 = vsub.f32 1.0, %v5492
        %v9181 = vsub.f32 1.0, %v5493
        %v9182 = vsub.f32 1.0, %v5494
        %v9183 = vsub.f32 1.0, %v5495
        %v9184 = vsub.f32 1.0, %v5496
        %v9185 = vsub.f32 1.0, %v5497
        %v9186 = vsub.f32 1.0, %v5498
        %v9187 = vsub.f32 1.0, %v5499
        %v9188 = vsub.f32 1.0, %v5500
        %v9189 = vsub.f32 1.0, %v5501
        %v9190 = vsub.f32 1.0, %v5502
        %v9191 = vsub.f32 1.0, %v5503
        %v9192 = vsub.f32 1.0, %v5504
        %v9193 = vsub.f32 1.0, %v5505
        %v9194 = vsub.f32 1.0, %v5506
        %v9195 = vsub.f32 1.0, %v5507
        %v9196 = vsub.f32 1.0, %v5508
        %v9197 = vsub.f32 1.0, %v5509
        %v9198 = vsub.f32 1.0, %v5510
        %v9199 = vsub.f32 1.0, %v5511
        %v9200 = vsub.f32 1.0, %v5512
        %v9201 = vsub.f32 1.0, %v5513
        %v9202 = vsub.f32 1.0, %v5514
        %v9203 = vsub.f32 1.0, %v5515
        %v9204 = vsub.f32 1.0, %v5516
        %v9205 = vsub.f32 1.0, %v5517
        %v9206 = vmul.f32 %v9174, %v451
        %v9207 = vmul.f32 %v9175, %v452
        %v9208 = vmul.f32 %v9176, %v453
        %v9209 = vmul.f32 %v9177, %v454
        %v9210 = vmul.f32 %v9178, %v455
        %v9211 = vmul.f32 %v9179, %v456
        %v9212 = vmul.f32 %v9180, %v457
        %v9213 = vmul.f32 %v9181, %v458
        %v9214 = vmul.f32 %v9182, %v459
        %v9215 = vmul.f32 %v9183, %v460
        %v9216 = vmul.f32 %v9184, %v461
        %v9217 = vmul.f32 %v9185, %v462
        %v9218 = vmul.f32 %v9186, %v463
        %v9219 = vmul.f32 %v9187, %v464
        %v9220 = vmul.f32 %v9188, %v465
        %v9221 = vmul.f32 %v9189, %v466
        %v9222 = vmul.f32 %v9190, %v467
        %v9223 = vmul.f32 %v9191, %v468
        %v9224 = vmul.f32 %v9192, %v469
        %v9225 = vmul.f32 %v9193, %v470
        %v9226 = vmul.f32 %v9194, %v471
        %v9227 = vmul.f32 %v9195, %v472
        %v9228 = vmul.f32 %v9196, %v473
        %v9229 = vmul.f32 %v9197, %v474
        %v9230 = vmul.f32 %v9198, %v475
        %v9231 = vmul.f32 %v9199, %v476
        %v9232 = vmul.f32 %v9200, %v477
        %v9233 = vmul.f32 %v9201, %v478
        %v9234 = vmul.f32 %v9202, %v479
        %v9235 = vmul.f32 %v9203, %v480
        %v9236 = vmul.f32 %v9204, %v481
        %v9237 = vmul.f32 %v9205, %v482
        %v9238 = vmul.f32 %v5486, %v9142
        %v9239 = vmul.f32 %v5487, %v9143
        %v9240 = vmul.f32 %v5488, %v9144
        %v9241 = vmul.f32 %v5489, %v9145
        %v9242 = vmul.f32 %v5490, %v9146
        %v9243 = vmul.f32 %v5491, %v9147
        %v9244 = vmul.f32 %v5492, %v9148
        %v9245 = vmul.f32 %v5493, %v9149
        %v9246 = vmul.f32 %v5494, %v9150
        %v9247 = vmul.f32 %v5495, %v9151
        %v9248 = vmul.f32 %v5496, %v9152
        %v9249 = vmul.f32 %v5497, %v9153
        %v9250 = vmul.f32 %v5498, %v9154
        %v9251 = vmul.f32 %v5499, %v9155
        %v9252 = vmul.f32 %v5500, %v9156
        %v9253 = vmul.f32 %v5501, %v9157
        %v9254 = vmul.f32 %v5502, %v9158
        %v9255 = vmul.f32 %v5503, %v9159
        %v9256 = vmul.f32 %v5504, %v9160
        %v9257 = vmul.f32 %v5505, %v9161
        %v9258 = vmul.f32 %v5506, %v9162
        %v9259 = vmul.f32 %v5507, %v9163
        %v9260 = vmul.f32 %v5508, %v9164
        %v9261 = vmul.f32 %v5509, %v9165
        %v9262 = vmul.f32 %v5510, %v9166
        %v9263 = vmul.f32 %v5511, %v9167
        %v9264 = vmul.f32 %v5512, %v9168
        %v9265 = vmul.f32 %v5513, %v9169
        %v9266 = vmul.f32 %v5514, %v9170
        %v9267 = vmul.f32 %v5515, %v9171
        %v9268 = vmul.f32 %v5516, %v9172
        %v9269 = vmul.f32 %v5517, %v9173
        %v9270 = vadd.f32 %v9206, %v9238
        %v9271 = vadd.f32 %v9207, %v9239
        %v9272 = vadd.f32 %v9208, %v9240
        %v9273 = vadd.f32 %v9209, %v9241
        %v9274 = vadd.f32 %v9210, %v9242
        %v9275 = vadd.f32 %v9211, %v9243
        %v9276 = vadd.f32 %v9212, %v9244
        %v9277 = vadd.f32 %v9213, %v9245
        %v9278 = vadd.f32 %v9214, %v9246
        %v9279 = vadd.f32 %v9215, %v9247
        %v9280 = vadd.f32 %v9216, %v9248
        %v9281 = vadd.f32 %v9217, %v9249
        %v9282 = vadd.f32 %v9218, %v9250
        %v9283 = vadd.f32 %v9219, %v9251
        %v9284 = vadd.f32 %v9220, %v9252
        %v9285 = vadd.f32 %v9221, %v9253
        %v9286 = vadd.f32 %v9222, %v9254
        %v9287 = vadd.f32 %v9223, %v9255
        %v9288 = vadd.f32 %v9224, %v9256
        %v9289 = vadd.f32 %v9225, %v9257
        %v9290 = vadd.f32 %v9226, %v9258
        %v9291 = vadd.f32 %v9227, %v9259
        %v9292 = vadd.f32 %v9228, %v9260
        %v9293 = vadd.f32 %v9229, %v9261
        %v9294 = vadd.f32 %v9230, %v9262
        %v9295 = vadd.f32 %v9231, %v9263
        %v9296 = vadd.f32 %v9232, %v9264
        %v9297 = vadd.f32 %v9233, %v9265
        %v9298 = vadd.f32 %v9234, %v9266
        %v9299 = vadd.f32 %v9235, %v9267
        %v9300 = vadd.f32 %v9236, %v9268
        %v9301 = vadd.f32 %v9237, %v9269
        %9302 = vst [vmem:[%s363] sm:$0xff] %v9270
        %9303 = vst [vmem:[%s363 + $0x8] sm:$0xff] %v9271
        %9304 = vst [vmem:[%s363 + $0x10] sm:$0xff] %v9272
        %9305 = vst [vmem:[%s363 + $0x18] sm:$0xff] %v9273
        %9306 = vst [vmem:[%s363 + $0x20] sm:$0xff] %v9274
        %9307 = vst [vmem:[%s363 + $0x28] sm:$0xff] %v9275
        %9308 = vst [vmem:[%s363 + $0x30] sm:$0xff] %v9276
        %9309 = vst [vmem:[%s363 + $0x38] sm:$0xff] %v9277
        %9310 = vst [vmem:[%s363 + $0x40] sm:$0xff] %v9278
        %9311 = vst [vmem:[%s363 + $0x48] sm:$0xff] %v9279
        %9312 = vst [vmem:[%s363 + $0x50] sm:$0xff] %v9280
        %9313 = vst [vmem:[%s363 + $0x58] sm:$0xff] %v9281
        %9314 = vst [vmem:[%s363 + $0x60] sm:$0xff] %v9282
        %9315 = vst [vmem:[%s363 + $0x68] sm:$0xff] %v9283
        %9316 = vst [vmem:[%s363 + $0x70] sm:$0xff] %v9284
        %9317 = vst [vmem:[%s363 + $0x78] sm:$0xff] %v9285
        %9318 = vst [vmem:[%s363 + $0x80] sm:$0xff] %v9286
        %9319 = vst [vmem:[%s363 + $0x88] sm:$0xff] %v9287
        %9320 = vst [vmem:[%s363 + $0x90] sm:$0xff] %v9288
        %9321 = vst [vmem:[%s363 + $0x98] sm:$0xff] %v9289
        %9322 = vst [vmem:[%s363 + $0xa0] sm:$0xff] %v9290
        %9323 = vst [vmem:[%s363 + $0xa8] sm:$0xff] %v9291
        %9324 = vst [vmem:[%s363 + $0xb0] sm:$0xff] %v9292
        %9325 = vst [vmem:[%s363 + $0xb8] sm:$0xff] %v9293
        %9326 = vst [vmem:[%s363 + $0xc0] sm:$0xff] %v9294
        %9327 = vst [vmem:[%s363 + $0xc8] sm:$0xff] %v9295
        %9328 = vst [vmem:[%s363 + $0xd0] sm:$0xff] %v9296
        %9329 = vst [vmem:[%s363 + $0xd8] sm:$0xff] %v9297
        %9330 = vst [vmem:[%s363 + $0xe0] sm:$0xff] %v9298
        %9331 = vst [vmem:[%s363 + $0xe8] sm:$0xff] %v9299
        %9332 = vst [vmem:[%s363 + $0xf0] sm:$0xff] %v9300
        %9333 = vst [vmem:[%s363 + $0xf8] sm:$0xff] %v9301
        %s9334 = sand.u32 %s172, 1
        %s9335 = scalar_lea.sflag [#allocation9], %s9334
        %s9336 = sand.u32 %s172, 1
        %s9337 = smul.addr %s9336, 256
        %s9338 = scalar_lea.vmem [#allocation18], %s9337
        // Predicated region
        $region69: #{tpu_custom_call.1} parent=43 // pred_check
          %p9339 = pneg %p182
        $region70: #{tpu_custom_call.1} parent=43 // pred_check_branch
          %9341 = sbr.rel (%p9339) target = $region72
        $region71: #{tpu_custom_call.1} parent=43 // pred_region
          %s9343 = ssub.s32 4096, 4096
          %9344 = vsyncadd %s9335, %s9343
          %s9345 = smul.addr %s28, 32
          %s9346 = smul.addr %s9345, 128
          %s9347 = scalar_lea.hbm %s6, %s9346
          %s9348 = sshll.u32 %s9338, 4
          %s9349 = int_to_ptr.vmem [resolvable:$true] %s9348
          %9354 = dma.vmem_to_hbm [thread:$0]  %s9349, 4096, %s9347, %s9335, 128, 128, 8
        $region72: #{tpu_custom_call.1} parent=43 // pred_fallthru
          _
      $region44: #{tpu_custom_call.1} parent=5 // pred_fallthru
        _
      %p9355 = scmp.le.s32.totalorder 2, %s23
      // Predicated region
      $region73: #{tpu_custom_call.1} parent=5 // pred_check
        %p9356 = pneg %p9355
      $region74: #{tpu_custom_call.1} parent=5 // pred_check_branch
        %9358 = sbr.rel (%p9356) target = $region76
      $region75: #{tpu_custom_call.1} parent=5 // pred_region
        %s9359 = ssub.s32 %s23, 2
        // Predicated region
        $region77: #{tpu_custom_call.1} parent=75 // pred_check
          %p9360 = pneg %p188
        $region78: #{tpu_custom_call.1} parent=75 // pred_check_branch
          %9362 = sbr.rel (%p9360) target = $region80
        $region79: #{tpu_custom_call.1} parent=75 // pred_region
          %s9363 = sand.u32 %s173, 1
          %s9364 = scalar_lea.sflag [#allocation9], %s9363
          %s9365 = sand.u32 %s173, 1
          %s9366 = smul.addr %s9365, 256
          %s9367 = scalar_lea.vmem [#allocation18], %s9366
          %9368 = dma.done %s9364, 4096
        $region80: #{tpu_custom_call.1} parent=75 // pred_fallthru
          _
      $region76: #{tpu_custom_call.1} parent=5 // pred_fallthru
        _
    $region6: #{tpu_custom_call.1} parent=1 // loop_footer
      %s27 = sadd.s32 1, %s23
    $region7: #{tpu_custom_call.1} parent=1 // loop_footer_branch
      %22 = sbr.rel target = $region3
    $region8: #{tpu_custom_call.1} parent=1 // loop_exit
      _
    %9369 = vsyncpa [#allocation8], 1
    %s9370 = scalar_lea.sflag [#allocation8], 1
    %9371 = vsyncpa %s9370, 1
    %9372 = vsyncpa [#allocation11], 1
    %s9373 = scalar_lea.sflag [#allocation11], 1
    %9374 = vsyncpa %s9373, 1
    %9375 = vsyncpa [#allocation14], 1
    %9376 = vsyncpa [#allocation17], 1
    %9377 = vsyncpa [#allocation9], 1
    %s9378 = scalar_lea.sflag [#allocation9], 1
    %9379 = vsyncpa %s9378, 1

</llo_original>
